<compile_context>
chip_gen: v5e
topology: v5e:2x2
jax: 0.10.0
libtpu: 0.0.40
codegen_flags: <defaults>
</compile_context>

<pallas_src>
import math

import jax
import jax.numpy as jnp
from jax.experimental import pallas as pl
from jax.experimental.pallas import tpu as pltpu


# ----------------------------------------------------------------------------
# Parameter / buffer construction (deterministic, in-script)
# ----------------------------------------------------------------------------
def _positional_encoding(max_len, d_model):
    position = jnp.arange(max_len, dtype=jnp.float32)[:, None]
    div_term = jnp.exp(
        jnp.arange(0, d_model, 2, dtype=jnp.float32) * (-math.log(10000.0) / d_model)
    )
    pe = jnp.zeros((max_len, d_model), dtype=jnp.float32)
    pe = pe.at[:, 0::2].set(jnp.sin(position * div_term))
    pe = pe.at[:, 1::2].set(jnp.cos(position * div_term))
    return pe


def init_params(key, d_model, nhead, num_layers, d_ff, max_len):
    keys = jax.random.split(key, 13)

    def nrm(k, shape, scale=0.05):
        return (scale * jax.random.normal(k, shape)).astype(jnp.float32)

    return dict(
        nhead=nhead,
        pe=_positional_encoding(max_len, d_model),                 # [max_len, D]
        cls_token=nrm(keys[0], (1, 1, d_model), 1.0),
        # per-layer weights, stacked along a leading layer axis
        wqkv=nrm(keys[1], (num_layers, d_model, 3 * d_model)),     # in_proj^T
        bqkv=nrm(keys[2], (num_layers, 3 * d_model)),
        wo=nrm(keys[3], (num_layers, d_model, d_model)),           # out_proj^T
        bo=nrm(keys[4], (num_layers, d_model)),
        ln1w=jnp.ones((num_layers, d_model), jnp.float32),
        ln1b=jnp.zeros((num_layers, d_model), jnp.float32),
        w1=nrm(keys[5], (num_layers, d_model, d_ff)),
        b1=nrm(keys[6], (num_layers, d_ff)),
        w2=nrm(keys[7], (num_layers, d_ff, d_model)),
        b2=nrm(keys[8], (num_layers, d_model)),
        ln2w=jnp.ones((num_layers, d_model), jnp.float32),
        ln2b=jnp.zeros((num_layers, d_model), jnp.float32),
        # prediction head
        wp1=nrm(keys[9], (d_model, d_model)),
        bp1=nrm(keys[10], (1, d_model)),
        wp2=nrm(keys[11], (1, d_model)),                           # Linear(D,1) weight^T
        bp2=nrm(keys[12], (1, 1)),
    )


# ----------------------------------------------------------------------------
# Helpers
# ----------------------------------------------------------------------------
def _layer_norm(x, w, b, eps=1e-5):
    mu = jnp.mean(x, axis=-1, keepdims=True)
    var = jnp.mean((x - mu) ** 2, axis=-1, keepdims=True)
    return (x - mu) * jax.lax.rsqrt(var + eps) * w + b


def _pick_batch_block(batch, t_padded, max_rows=1024):
    """Pick Bb | batch with Bb*Tp <= max_rows.

    Prefers >=2 grid steps (so both v7x TensorCores get work and the next
    step's x DMA can overlap compute) and M = Bb*Tp a multiple of 256
    (v6e/v7x MXU row fill), then the largest Bb.
    """
    divisors = [d for d in range(1, batch + 1)
                if batch % d == 0 and d * t_padded <= max_rows]
    if not divisors:
        return 1
    multi_step = [d for d in divisors if batch // d >= 2]
    pool = multi_step if multi_step else divisors
    return max(pool, key=lambda d: ((d * t_padded) % 256 == 0, d))


# ----------------------------------------------------------------------------
# Pallas kernel
# ----------------------------------------------------------------------------
def _make_kernel(num_layers, nhead, d_model, seq_len, t_padded, batch_block):
    D, H = d_model, nhead
    dh = D // H
    S = seq_len
    T = S + 1                           # data tokens + cls
    Tp = t_padded                       # padded to multiple of 8
    Bb = batch_block
    M = Bb * Tp                         # flattened row count per grid step

    def kernel(x_ref, pe_ref, cls_ref,
               wqkv_ref, bqkv_ref, wo_ref, bo_ref,
               ln1w_ref, ln1b_ref, w1_ref, b1_ref, w2_ref, b2_ref,
               ln2w_ref, ln2b_ref,
               wp1_ref, bp1_ref, wp2_ref, bp2_ref,
               out_ref):
        # pe is pre-arranged by the wrapper: rows [0,S) -> pe[1:T] (data),
        # row S -> pe[0] (cls), remaining rows zero.
        pe = pe_ref[...]                                        # [Tp, D] f32

        # ---- aligned token assembly: data rows first, cls at row S ----
        x_rows = x_ref[...] + pe[None, 0:S, :]                  # [Bb, S, D]
        cls_row = cls_ref[...] + pe[S:S + 1, :]                 # [1, D]
        tail = jnp.broadcast_to(cls_row[None, :, :], (Bb, Tp - S, D))
        hf = jnp.concatenate([x_rows, tail], axis=1).reshape(M, D)   # f32

        # additive key mask: positions >= T (duplicate cls / pad rows) masked.
        # Kept in f32 on purpose (-1e30 would saturate in bf16).
        key_ids = jax.lax.broadcasted_iota(jnp.int32, (1, Tp), 1)
        key_mask = jnp.where(key_ids < T, 0.0, -1e30).astype(jnp.float32)

        for l in range(num_layers):
            hb = hf.astype(jnp.bfloat16)                        # bf16 MXU operand

            # ---- fused QKV projection: one [M,D]x[D,3D] matmul + one bias add
            # (1/sqrt(dh) is pre-folded into the q columns on the host) ----
            qkv = jnp.dot(hb, wqkv_ref[l],
                          preferred_element_type=jnp.float32)   # [M, 3D] f32
            qkv = qkv + bqkv_ref[l:l + 1, :]

            # ---- multi-head self-attention (post-norm encoder layer) ----
            heads = []
            for hd in range(H):
                lo = hd * dh
                q3 = qkv[:, lo:lo + dh].reshape(Bb, Tp, dh).astype(jnp.bfloat16)
                k3 = qkv[:, D + lo:D + lo + dh].reshape(Bb, Tp, dh).astype(jnp.bfloat16)
                v3 = qkv[:, 2 * D + lo:2 * D + lo + dh].reshape(Bb, Tp, dh).astype(jnp.bfloat16)

                s = jnp.einsum('bqd,bkd->bqk', q3, k3,
                               preferred_element_type=jnp.float32)   # [Bb,Tp,Tp] f32
                s = s + key_mask
                s = s - jnp.max(s, axis=-1, keepdims=True)
                p = jnp.exp(s)
                p = p * pl.reciprocal(jnp.sum(p, axis=-1, keepdims=True),
                                      approx=True)
                o = jnp.einsum('bqk,bkd->bqd', p.astype(jnp.bfloat16), v3,
                               preferred_element_type=jnp.float32)   # [Bb,Tp,dh]
                heads.append(o.astype(jnp.bfloat16))

            # lane concat of head outputs feeds the out-projection directly
            # (no f32 scratch, no masked per-head stores).
            attn_in = jnp.concatenate(heads, axis=-1).reshape(M, D)   # bf16 [M,D]
            attn = jnp.dot(attn_in, wo_ref[l],
                           preferred_element_type=jnp.float32) + bo_ref[l:l + 1, :]
            hf = _layer_norm(hf + attn, ln1w_ref[l:l + 1, :], ln1b_ref[l:l + 1, :])

            # ---- feed-forward ----
            ff = jnp.dot(hf.astype(jnp.bfloat16), w1_ref[l],
                         preferred_element_type=jnp.float32) + b1_ref[l:l + 1, :]
            ff = jnp.maximum(ff, 0.0)
            ff = jnp.dot(ff.astype(jnp.bfloat16), w2_ref[l],
                         preferred_element_type=jnp.float32) + b2_ref[l:l + 1, :]
            hf = _layer_norm(hf + ff, ln2w_ref[l:l + 1, :], ln2b_ref[l:l + 1, :])

        # ---- prediction head on the CLS token (row S of every sequence) ----
        cls_rep = hf.reshape(Bb, Tp, D)[:, S, :]                # [Bb, D]
        hp = jnp.maximum(
            jnp.dot(cls_rep.astype(jnp.bfloat16), wp1_ref[...],
                    preferred_element_type=jnp.float32) + bp1_ref[...], 0.0)
        logit = jnp.sum(hp * wp2_ref[...], axis=-1, keepdims=True) + bp2_ref[...]
        out_ref[...] = jax.nn.sigmoid(logit)[None, :, :]        # (1, Bb, 1)

    return kernel


# ----------------------------------------------------------------------------
# Wrapper
# ----------------------------------------------------------------------------
def continuous_value_transformer(x, params):
    x = x.astype(jnp.float32)
    B, S, D = x.shape
    H = int(params["nhead"])
    L = params["wqkv"].shape[0]
    d_ff = params["w1"].shape[2]
    assert D % H == 0
    dh = D // H
    T = S + 1
    Tp = ((T + 7) // 8) * 8                      # sublane-aligned sequence length
    Bb = _pick_batch_block(B, Tp)
    G = B // Bb

    # positional encoding re-arranged for aligned in-kernel token assembly:
    # rows [0,S) -> pe[1:T] (data tokens), row S -> pe[0] (cls), rest zero.
    pe_full = params["pe"].astype(jnp.float32)
    pe = jnp.zeros((Tp, D), jnp.float32)
    pe = pe.at[0:S, :].set(pe_full[1:T, :])
    pe = pe.at[S, :].set(pe_full[0, :])
    cls = params["cls_token"].reshape(1, D).astype(jnp.float32)

    # fold the 1/sqrt(dh) attention scale into the q columns of wqkv / bqkv
    scale = 1.0 / math.sqrt(dh)
    wqkv = params["wqkv"].at[:, :, :D].multiply(scale)
    bqkv = params["bqkv"].at[:, :D].multiply(scale)

    bf, f32 = jnp.bfloat16, jnp.float32
    weights = [
        wqkv.astype(bf),            bqkv.astype(f32),
        params["wo"].astype(bf),    params["bo"].astype(f32),
        params["ln1w"].astype(f32), params["ln1b"].astype(f32),
        params["w1"].astype(bf),    params["b1"].astype(f32),
        params["w2"].astype(bf),    params["b2"].astype(f32),
        params["ln2w"].astype(f32), params["ln2b"].astype(f32),
        params["wp1"].astype(bf),   params["bp1"].astype(f32),
        params["wp2"].astype(f32),  params["bp2"].astype(f32),
    ]

    kernel = _make_kernel(L, H, D, S, Tp, Bb)

    # VMEM budget: weights (x2 in case single-buffering is unavailable) plus
    # per-step activations (hf, qkv, scores, FFN intermediate) with headroom.
    M = Bb * Tp
    weight_bytes = (sum(int(w.size) * w.dtype.itemsize for w in weights)
                    + pe.size * 4 + cls.size * 4)
    act_bytes = 4 * (M * D * 4 + M * 3 * D * 4 + Bb * Tp * Tp * 4
                     + M * d_ff * 4 + M * D * 2) + 2 * Bb * S * D * 4
    vmem_limit = int(min(96 * 2**20,
                         max(32 * 2**20, 2 * weight_bytes + act_bytes + (4 << 20))))

    def run(single_buffer):
        def const_spec(a):
            nd = a.ndim
            kw = ({"pipeline_mode": pl.Buffered(buffer_count=1)}
                  if single_buffer else {})
            return pl.BlockSpec(a.shape, lambda i, _nd=nd: (0,) * _nd, **kw)

        in_specs = ([pl.BlockSpec((Bb, S, D), lambda i: (i, 0, 0)),
                     const_spec(pe), const_spec(cls)]
                    + [const_spec(w) for w in weights])
        out = pl.pallas_call(
            kernel,
            out_shape=jax.ShapeDtypeStruct((G, Bb, 1), jnp.float32),
            grid=(G,),
            in_specs=in_specs,
            out_specs=pl.BlockSpec((1, Bb, 1), lambda i: (i, 0, 0)),
            compiler_params=pltpu.CompilerParams(
                dimension_semantics=("parallel",),
                vmem_limit_bytes=vmem_limit),
        )(x, pe, cls, *weights)
        return out

    try:
        # grid-constant inputs single-buffered: halves resident weight VMEM.
        out = run(single_buffer=True)
    except Exception:
        # pipeline_mode=Buffered(1) not supported on this jax/libtpu -> default
        # double-buffered specs (correctness identical, just more VMEM).
        out = run(single_buffer=False)
    return out.reshape(B, 1)


# ----------------------------------------------------------------------------
# Pure-JAX reference (mirrors PyTorch TransformerEncoder post-norm semantics)
# ----------------------------------------------------------------------------
def reference(x, params):
    B, S, D = x.shape
    T = S + 1
    L = params["wqkv"].shape[0]
    H = int(params["nhead"])
    dh = D // H

    cls = jnp.broadcast_to(params["cls_token"], (B, 1, D))
    h = jnp.concatenate([cls, x], axis=1) + params["pe"][None, :T]

    for l in range(L):
        qkv = h @ params["wqkv"][l] + params["bqkv"][l]
        q, k, v = jnp.split(qkv, 3, axis=-1)
        q = q.reshape(B, T, H, dh).transpose(0, 2, 1, 3) / math.sqrt(dh)
        k = k.reshape(B, T, H, dh).transpose(0, 2, 1, 3)
        v = v.reshape(B, T, H, dh).transpose(0, 2, 1, 3)
        s = q @ k.transpose(0, 1, 3, 2)
        p = jax.nn.softmax(s, axis=-1)
        a = (p @ v).transpose(0, 2, 1, 3).reshape(B, T, D)
        a = a @ params["wo"][l] + params["bo"][l]
        h = _layer_norm(h + a, params["ln1w"][l], params["ln1b"][l])
        f = jnp.maximum(h @ params["w1"][l] + params["b1"][l], 0.0)
        f = f @ params["w2"][l] + params["b2"][l]
        h = _layer_norm(h + f, params["ln2w"][l], params["ln2b"][l])

    cls_rep = h[:, 0]
    hp = jnp.maximum(cls_rep @ params["wp1"] + params["bp1"], 0.0)
    logit = hp @ params["wp2"].T + params["bp2"]
    return jax.nn.sigmoid(logit)


# ----------------------------------------------------------------------------
if __name__ == "__main__":
    B, S, D = 2, 8, 32
    nhead, num_layers, d_ff = 8, 2, 128   # small, constructor-compatible sizes

    key = jax.random.PRNGKey(0)
    kx, kp = jax.random.split(key)
    x = jax.random.normal(kx, (B, S, D), dtype=jnp.float32)
    params = init_params(kp, d_model=D, nhead=nhead, num_layers=num_layers,
                         d_ff=d_ff, max_len=S + 1)

    out = jax.block_until_ready(continuous_value_transformer(x, params))
    ref = reference(x, params)

    assert out.shape == (B, 1), out.shape
    assert bool(jnp.all(jnp.isfinite(out)))
    # kernel uses bf16 matmul operands + approx reciprocal -> loose tolerance
    assert bool(jnp.allclose(out, ref, atol=2e-2, rtol=2e-2)), (out, ref)

    print("KERNEL_OK")
</pallas_src>

<mosaic_0001>
module attributes {stable_mosaic.version = 11 : i64} {
  func.func @kernel(%arg0: i32, %arg1: memref<1x8x32xf32, #tpu.memory_space<vmem>>, %arg2: memref<16x32xf32, #tpu.memory_space<vmem>>, %arg3: memref<1x32xf32, #tpu.memory_space<vmem>>, %arg4: memref<2x32x96xbf16, #tpu.memory_space<vmem>>, %arg5: memref<2x96xf32, #tpu.memory_space<vmem>>, %arg6: memref<2x32x32xbf16, #tpu.memory_space<vmem>>, %arg7: memref<2x32xf32, #tpu.memory_space<vmem>>, %arg8: memref<2x32xf32, #tpu.memory_space<vmem>>, %arg9: memref<2x32xf32, #tpu.memory_space<vmem>>, %arg10: memref<2x32x128xbf16, #tpu.memory_space<vmem>>, %arg11: memref<2x128xf32, #tpu.memory_space<vmem>>, %arg12: memref<2x128x32xbf16, #tpu.memory_space<vmem>>, %arg13: memref<2x32xf32, #tpu.memory_space<vmem>>, %arg14: memref<2x32xf32, #tpu.memory_space<vmem>>, %arg15: memref<2x32xf32, #tpu.memory_space<vmem>>, %arg16: memref<32x32xbf16, #tpu.memory_space<vmem>>, %arg17: memref<1x32xf32, #tpu.memory_space<vmem>>, %arg18: memref<1x32xf32, #tpu.memory_space<vmem>>, %arg19: memref<1x1xf32, #tpu.memory_space<vmem>>, %arg20: memref<1x1x1xf32, #tpu.memory_space<vmem>>) attributes {dimension_semantics = [#tpu.dimension_semantics<parallel>], iteration_bounds = array<i64: 2>, scalar_prefetch = 0 : i64, scratch_operands = 0 : i64, tpu.core_type = #tpu.core_type<tc>, window_params = [{transform_indices = @transform_0, window_bounds = array<i64: 1, 8, 32>}, {pipeline_mode = #tpu.pipeline_mode<synchronous>, transform_indices = @transform_1, window_bounds = array<i64: 16, 32>}, {pipeline_mode = #tpu.pipeline_mode<synchronous>, transform_indices = @transform_2, window_bounds = array<i64: 1, 32>}, {pipeline_mode = #tpu.pipeline_mode<synchronous>, transform_indices = @transform_3, window_bounds = array<i64: 2, 32, 96>}, {pipeline_mode = #tpu.pipeline_mode<synchronous>, transform_indices = @transform_4, window_bounds = array<i64: 2, 96>}, {pipeline_mode = #tpu.pipeline_mode<synchronous>, transform_indices = @transform_5, window_bounds = array<i64: 2, 32, 32>}, {pipeline_mode = #tpu.pipeline_mode<synchronous>, transform_indices = @transform_6, window_bounds = array<i64: 2, 32>}, {pipeline_mode = #tpu.pipeline_mode<synchronous>, transform_indices = @transform_7, window_bounds = array<i64: 2, 32>}, {pipeline_mode = #tpu.pipeline_mode<synchronous>, transform_indices = @transform_8, window_bounds = array<i64: 2, 32>}, {pipeline_mode = #tpu.pipeline_mode<synchronous>, transform_indices = @transform_9, window_bounds = array<i64: 2, 32, 128>}, {pipeline_mode = #tpu.pipeline_mode<synchronous>, transform_indices = @transform_10, window_bounds = array<i64: 2, 128>}, {pipeline_mode = #tpu.pipeline_mode<synchronous>, transform_indices = @transform_11, window_bounds = array<i64: 2, 128, 32>}, {pipeline_mode = #tpu.pipeline_mode<synchronous>, transform_indices = @transform_12, window_bounds = array<i64: 2, 32>}, {pipeline_mode = #tpu.pipeline_mode<synchronous>, transform_indices = @transform_13, window_bounds = array<i64: 2, 32>}, {pipeline_mode = #tpu.pipeline_mode<synchronous>, transform_indices = @transform_14, window_bounds = array<i64: 2, 32>}, {pipeline_mode = #tpu.pipeline_mode<synchronous>, transform_indices = @transform_15, window_bounds = array<i64: 32, 32>}, {pipeline_mode = #tpu.pipeline_mode<synchronous>, transform_indices = @transform_16, window_bounds = array<i64: 1, 32>}, {pipeline_mode = #tpu.pipeline_mode<synchronous>, transform_indices = @transform_17, window_bounds = array<i64: 1, 32>}, {pipeline_mode = #tpu.pipeline_mode<synchronous>, transform_indices = @transform_18, window_bounds = array<i64: 1, 1>}, {transform_indices = @transform_19, window_bounds = array<i64: 1, 1, 1>}]} {
    %c0 = arith.constant 0 : index
    %c0_0 = arith.constant 0 : index
    %0 = vector.load %arg2[%c0, %c0_0] : memref<16x32xf32, #tpu.memory_space<vmem>>, vector<16x32xf32>
    %c0_1 = arith.constant 0 : index
    %c0_2 = arith.constant 0 : index
    %c0_3 = arith.constant 0 : index
    %1 = vector.load %arg1[%c0_1, %c0_2, %c0_3] : memref<1x8x32xf32, #tpu.memory_space<vmem>>, vector<1x8x32xf32>
    %2 = vector.extract_strided_slice %0 {offsets = [0, 0], sizes = [8, 32], strides = [1, 1]} : vector<16x32xf32> to vector<8x32xf32>
    %3 = vector.shape_cast %2 : vector<8x32xf32> to vector<1x8x32xf32>
    %4 = arith.addf %1, %3 : vector<1x8x32xf32>
    %c0_4 = arith.constant 0 : index
    %c0_5 = arith.constant 0 : index
    %5 = vector.load %arg3[%c0_4, %c0_5] : memref<1x32xf32, #tpu.memory_space<vmem>>, vector<1x32xf32>
    %6 = vector.extract_strided_slice %0 {offsets = [8, 0], sizes = [1, 32], strides = [1, 1]} : vector<16x32xf32> to vector<1x32xf32>
    %7 = arith.addf %5, %6 : vector<1x32xf32>
    %8 = vector.shape_cast %7 : vector<1x32xf32> to vector<1x1x32xf32>
    %9 = vector.shape_cast %8 : vector<1x1x32xf32> to vector<1x1x32xf32>
    %10 = vector.broadcast %9 : vector<1x1x32xf32> to vector<1x8x32xf32>
    %11 = tpu.concatenate %4, %10 in 1 : vector<1x8x32xf32>, vector<1x8x32xf32> -> vector<1x16x32xf32>
    %12 = vector.shape_cast %11 : vector<1x16x32xf32> to vector<16x32xf32>
    %13 = tpu.iota {dimensions = array<i32: 1>} : vector<1x16xi32>
    %c9_i32 = arith.constant 9 : i32
    %14 = vector.broadcast %c9_i32 : i32 to vector<1x16xi32>
    %15 = arith.cmpi slt, %13, %14 : vector<1x16xi32>
    %cst = arith.constant 0.000000e+00 : f32
    %cst_6 = arith.constant -1.000000e+30 : f32
    %16 = vector.broadcast %cst : f32 to vector<1x16xf32>
    %17 = vector.broadcast %cst_6 : f32 to vector<1x16xf32>
    %18 = arith.select %15, %16, %17 : vector<1x16xi1>, vector<1x16xf32>
    %19 = arith.truncf %12 : vector<16x32xf32> to vector<16x32xbf16>
    %c0_7 = arith.constant 0 : index
    %c0_8 = arith.constant 0 : index
    %c0_9 = arith.constant 0 : index
    %20 = vector.load %arg4[%c0_7, %c0_8, %c0_9] : memref<2x32x96xbf16, #tpu.memory_space<vmem>>, vector<1x32x96xbf16>
    %21 = vector.shape_cast %20 : vector<1x32x96xbf16> to vector<32x96xbf16>
    %cst_10 = arith.constant dense<0.000000e+00> : vector<16x96xf32>
    %22 = tpu.matmul %19, %21, %cst_10 {dimension_numbers = #tpu.dot_dimension_numbers<[1], [0], [0], [1], [0, 0, 1, 1], [], []>} : vector<16x32xbf16>, vector<32x96xbf16>, vector<16x96xf32> -> vector<16x96xf32>
    %c0_11 = arith.constant 0 : index
    %c0_12 = arith.constant 0 : index
    %23 = vector.load %arg5[%c0_11, %c0_12] : memref<2x96xf32, #tpu.memory_space<vmem>>, vector<1x96xf32>
    %24 = vector.broadcast %23 : vector<1x96xf32> to vector<16x96xf32>
    %25 = arith.addf %22, %24 : vector<16x96xf32>
    %26 = vector.extract_strided_slice %25 {offsets = [0, 0], sizes = [16, 4], strides = [1, 1]} : vector<16x96xf32> to vector<16x4xf32>
    %27 = vector.shape_cast %26 : vector<16x4xf32> to vector<1x16x4xf32>
    %28 = arith.truncf %27 : vector<1x16x4xf32> to vector<1x16x4xbf16>
    %29 = vector.extract_strided_slice %25 {offsets = [0, 32], sizes = [16, 4], strides = [1, 1]} : vector<16x96xf32> to vector<16x4xf32>
    %30 = vector.shape_cast %29 : vector<16x4xf32> to vector<1x16x4xf32>
    %31 = arith.truncf %30 : vector<1x16x4xf32> to vector<1x16x4xbf16>
    %32 = vector.extract_strided_slice %25 {offsets = [0, 64], sizes = [16, 4], strides = [1, 1]} : vector<16x96xf32> to vector<16x4xf32>
    %33 = vector.shape_cast %32 : vector<16x4xf32> to vector<1x16x4xf32>
    %34 = arith.truncf %33 : vector<1x16x4xf32> to vector<1x16x4xbf16>
    "tpu.trace_start"() <{level = 10 : i32, message = "bqd,bkd->bqk"}> : () -> ()
    %cst_13 = arith.constant dense<0.000000e+00> : vector<1x16x16xf32>
    %35 = tpu.matmul %28, %31, %cst_13 {dimension_numbers = #tpu.dot_dimension_numbers<[2], [2], [1], [1], [0, 0, 0, 1, 1, 1], [0], [0]>} : vector<1x16x4xbf16>, vector<1x16x4xbf16>, vector<1x16x16xf32> -> vector<1x16x16xf32>
    "tpu.trace_stop"() : () -> ()
    %36 = vector.shape_cast %18 : vector<1x16xf32> to vector<1x1x16xf32>
    %37 = vector.broadcast %36 : vector<1x1x16xf32> to vector<1x16x16xf32>
    %38 = arith.addf %35, %37 : vector<1x16x16xf32>
    %cst_14 = arith.constant dense<0xFF800000> : vector<1x16xf32>
    %39 = vector.multi_reduction <maximumf>, %38, %cst_14 [2] : vector<1x16x16xf32> to vector<1x16xf32>
    %40 = vector.shape_cast %39 : vector<1x16xf32> to vector<1x16x1xf32>
    %41 = vector.broadcast %40 : vector<1x16x1xf32> to vector<1x16x16xf32>
    %42 = arith.subf %38, %41 : vector<1x16x16xf32>
    %43 = math.exp %42 : vector<1x16x16xf32>
    %cst_15 = arith.constant dense<0.000000e+00> : vector<1x16xf32>
    %44 = vector.multi_reduction <add>, %43, %cst_15 [2] : vector<1x16x16xf32> to vector<1x16xf32>
    %45 = vector.shape_cast %44 : vector<1x16xf32> to vector<1x16x1xf32>
    %46 = tpu.reciprocal %45 {approx = true} : vector<1x16x1xf32> -> vector<1x16x1xf32>
    %47 = vector.broadcast %46 : vector<1x16x1xf32> to vector<1x16x16xf32>
    %48 = arith.mulf %43, %47 : vector<1x16x16xf32>
    %49 = arith.truncf %48 : vector<1x16x16xf32> to vector<1x16x16xbf16>
    "tpu.trace_start"() <{level = 10 : i32, message = "bqk,bkd->bqd"}> : () -> ()
    %cst_16 = arith.constant dense<0.000000e+00> : vector<1x16x4xf32>
    %50 = tpu.matmul %49, %34, %cst_16 {dimension_numbers = #tpu.dot_dimension_numbers<[2], [1], [1], [2], [0, 0, 0, 1, 1, 2], [0], [0]>} : vector<1x16x16xbf16>, vector<1x16x4xbf16>, vector<1x16x4xf32> -> vector<1x16x4xf32>
    "tpu.trace_stop"() : () -> ()
    %51 = arith.truncf %50 : vector<1x16x4xf32> to vector<1x16x4xbf16>
    %52 = vector.extract_strided_slice %25 {offsets = [0, 4], sizes = [16, 4], strides = [1, 1]} : vector<16x96xf32> to vector<16x4xf32>
    %53 = vector.shape_cast %52 : vector<16x4xf32> to vector<1x16x4xf32>
    %54 = arith.truncf %53 : vector<1x16x4xf32> to vector<1x16x4xbf16>
    %55 = vector.extract_strided_slice %25 {offsets = [0, 36], sizes = [16, 4], strides = [1, 1]} : vector<16x96xf32> to vector<16x4xf32>
    %56 = vector.shape_cast %55 : vector<16x4xf32> to vector<1x16x4xf32>
    %57 = arith.truncf %56 : vector<1x16x4xf32> to vector<1x16x4xbf16>
    %58 = vector.extract_strided_slice %25 {offsets = [0, 68], sizes = [16, 4], strides = [1, 1]} : vector<16x96xf32> to vector<16x4xf32>
    %59 = vector.shape_cast %58 : vector<16x4xf32> to vector<1x16x4xf32>
    %60 = arith.truncf %59 : vector<1x16x4xf32> to vector<1x16x4xbf16>
    "tpu.trace_start"() <{level = 10 : i32, message = "bqd,bkd->bqk"}> : () -> ()
    %cst_17 = arith.constant dense<0.000000e+00> : vector<1x16x16xf32>
    %61 = tpu.matmul %54, %57, %cst_17 {dimension_numbers = #tpu.dot_dimension_numbers<[2], [2], [1], [1], [0, 0, 0, 1, 1, 1], [0], [0]>} : vector<1x16x4xbf16>, vector<1x16x4xbf16>, vector<1x16x16xf32> -> vector<1x16x16xf32>
    "tpu.trace_stop"() : () -> ()
    %62 = vector.shape_cast %18 : vector<1x16xf32> to vector<1x1x16xf32>
    %63 = vector.broadcast %62 : vector<1x1x16xf32> to vector<1x16x16xf32>
    %64 = arith.addf %61, %63 : vector<1x16x16xf32>
    %cst_18 = arith.constant dense<0xFF800000> : vector<1x16xf32>
    %65 = vector.multi_reduction <maximumf>, %64, %cst_18 [2] : vector<1x16x16xf32> to vector<1x16xf32>
    %66 = vector.shape_cast %65 : vector<1x16xf32> to vector<1x16x1xf32>
    %67 = vector.broadcast %66 : vector<1x16x1xf32> to vector<1x16x16xf32>
    %68 = arith.subf %64, %67 : vector<1x16x16xf32>
    %69 = math.exp %68 : vector<1x16x16xf32>
    %cst_19 = arith.constant dense<0.000000e+00> : vector<1x16xf32>
    %70 = vector.multi_reduction <add>, %69, %cst_19 [2] : vector<1x16x16xf32> to vector<1x16xf32>
    %71 = vector.shape_cast %70 : vector<1x16xf32> to vector<1x16x1xf32>
    %72 = tpu.reciprocal %71 {approx = true} : vector<1x16x1xf32> -> vector<1x16x1xf32>
    %73 = vector.broadcast %72 : vector<1x16x1xf32> to vector<1x16x16xf32>
    %74 = arith.mulf %69, %73 : vector<1x16x16xf32>
    %75 = arith.truncf %74 : vector<1x16x16xf32> to vector<1x16x16xbf16>
    "tpu.trace_start"() <{level = 10 : i32, message = "bqk,bkd->bqd"}> : () -> ()
    %cst_20 = arith.constant dense<0.000000e+00> : vector<1x16x4xf32>
    %76 = tpu.matmul %75, %60, %cst_20 {dimension_numbers = #tpu.dot_dimension_numbers<[2], [1], [1], [2], [0, 0, 0, 1, 1, 2], [0], [0]>} : vector<1x16x16xbf16>, vector<1x16x4xbf16>, vector<1x16x4xf32> -> vector<1x16x4xf32>
    "tpu.trace_stop"() : () -> ()
    %77 = arith.truncf %76 : vector<1x16x4xf32> to vector<1x16x4xbf16>
    %78 = vector.extract_strided_slice %25 {offsets = [0, 8], sizes = [16, 4], strides = [1, 1]} : vector<16x96xf32> to vector<16x4xf32>
    %79 = vector.shape_cast %78 : vector<16x4xf32> to vector<1x16x4xf32>
    %80 = arith.truncf %79 : vector<1x16x4xf32> to vector<1x16x4xbf16>
    %81 = vector.extract_strided_slice %25 {offsets = [0, 40], sizes = [16, 4], strides = [1, 1]} : vector<16x96xf32> to vector<16x4xf32>
    %82 = vector.shape_cast %81 : vector<16x4xf32> to vector<1x16x4xf32>
    %83 = arith.truncf %82 : vector<1x16x4xf32> to vector<1x16x4xbf16>
    %84 = vector.extract_strided_slice %25 {offsets = [0, 72], sizes = [16, 4], strides = [1, 1]} : vector<16x96xf32> to vector<16x4xf32>
    %85 = vector.shape_cast %84 : vector<16x4xf32> to vector<1x16x4xf32>
    %86 = arith.truncf %85 : vector<1x16x4xf32> to vector<1x16x4xbf16>
    "tpu.trace_start"() <{level = 10 : i32, message = "bqd,bkd->bqk"}> : () -> ()
    %cst_21 = arith.constant dense<0.000000e+00> : vector<1x16x16xf32>
    %87 = tpu.matmul %80, %83, %cst_21 {dimension_numbers = #tpu.dot_dimension_numbers<[2], [2], [1], [1], [0, 0, 0, 1, 1, 1], [0], [0]>} : vector<1x16x4xbf16>, vector<1x16x4xbf16>, vector<1x16x16xf32> -> vector<1x16x16xf32>
    "tpu.trace_stop"() : () -> ()
    %88 = vector.shape_cast %18 : vector<1x16xf32> to vector<1x1x16xf32>
    %89 = vector.broadcast %88 : vector<1x1x16xf32> to vector<1x16x16xf32>
    %90 = arith.addf %87, %89 : vector<1x16x16xf32>
    %cst_22 = arith.constant dense<0xFF800000> : vector<1x16xf32>
    %91 = vector.multi_reduction <maximumf>, %90, %cst_22 [2] : vector<1x16x16xf32> to vector<1x16xf32>
    %92 = vector.shape_cast %91 : vector<1x16xf32> to vector<1x16x1xf32>
    %93 = vector.broadcast %92 : vector<1x16x1xf32> to vector<1x16x16xf32>
    %94 = arith.subf %90, %93 : vector<1x16x16xf32>
    %95 = math.exp %94 : vector<1x16x16xf32>
    %cst_23 = arith.constant dense<0.000000e+00> : vector<1x16xf32>
    %96 = vector.multi_reduction <add>, %95, %cst_23 [2] : vector<1x16x16xf32> to vector<1x16xf32>
    %97 = vector.shape_cast %96 : vector<1x16xf32> to vector<1x16x1xf32>
    %98 = tpu.reciprocal %97 {approx = true} : vector<1x16x1xf32> -> vector<1x16x1xf32>
    %99 = vector.broadcast %98 : vector<1x16x1xf32> to vector<1x16x16xf32>
    %100 = arith.mulf %95, %99 : vector<1x16x16xf32>
    %101 = arith.truncf %100 : vector<1x16x16xf32> to vector<1x16x16xbf16>
    "tpu.trace_start"() <{level = 10 : i32, message = "bqk,bkd->bqd"}> : () -> ()
    %cst_24 = arith.constant dense<0.000000e+00> : vector<1x16x4xf32>
    %102 = tpu.matmul %101, %86, %cst_24 {dimension_numbers = #tpu.dot_dimension_numbers<[2], [1], [1], [2], [0, 0, 0, 1, 1, 2], [0], [0]>} : vector<1x16x16xbf16>, vector<1x16x4xbf16>, vector<1x16x4xf32> -> vector<1x16x4xf32>
    "tpu.trace_stop"() : () -> ()
    %103 = arith.truncf %102 : vector<1x16x4xf32> to vector<1x16x4xbf16>
    %104 = vector.extract_strided_slice %25 {offsets = [0, 12], sizes = [16, 4], strides = [1, 1]} : vector<16x96xf32> to vector<16x4xf32>
    %105 = vector.shape_cast %104 : vector<16x4xf32> to vector<1x16x4xf32>
    %106 = arith.truncf %105 : vector<1x16x4xf32> to vector<1x16x4xbf16>
    %107 = vector.extract_strided_slice %25 {offsets = [0, 44], sizes = [16, 4], strides = [1, 1]} : vector<16x96xf32> to vector<16x4xf32>
    %108 = vector.shape_cast %107 : vector<16x4xf32> to vector<1x16x4xf32>
    %109 = arith.truncf %108 : vector<1x16x4xf32> to vector<1x16x4xbf16>
    %110 = vector.extract_strided_slice %25 {offsets = [0, 76], sizes = [16, 4], strides = [1, 1]} : vector<16x96xf32> to vector<16x4xf32>
    %111 = vector.shape_cast %110 : vector<16x4xf32> to vector<1x16x4xf32>
    %112 = arith.truncf %111 : vector<1x16x4xf32> to vector<1x16x4xbf16>
    "tpu.trace_start"() <{level = 10 : i32, message = "bqd,bkd->bqk"}> : () -> ()
    %cst_25 = arith.constant dense<0.000000e+00> : vector<1x16x16xf32>
    %113 = tpu.matmul %106, %109, %cst_25 {dimension_numbers = #tpu.dot_dimension_numbers<[2], [2], [1], [1], [0, 0, 0, 1, 1, 1], [0], [0]>} : vector<1x16x4xbf16>, vector<1x16x4xbf16>, vector<1x16x16xf32> -> vector<1x16x16xf32>
    "tpu.trace_stop"() : () -> ()
    %114 = vector.shape_cast %18 : vector<1x16xf32> to vector<1x1x16xf32>
    %115 = vector.broadcast %114 : vector<1x1x16xf32> to vector<1x16x16xf32>
    %116 = arith.addf %113, %115 : vector<1x16x16xf32>
    %cst_26 = arith.constant dense<0xFF800000> : vector<1x16xf32>
    %117 = vector.multi_reduction <maximumf>, %116, %cst_26 [2] : vector<1x16x16xf32> to vector<1x16xf32>
    %118 = vector.shape_cast %117 : vector<1x16xf32> to vector<1x16x1xf32>
    %119 = vector.broadcast %118 : vector<1x16x1xf32> to vector<1x16x16xf32>
    %120 = arith.subf %116, %119 : vector<1x16x16xf32>
    %121 = math.exp %120 : vector<1x16x16xf32>
    %cst_27 = arith.constant dense<0.000000e+00> : vector<1x16xf32>
    %122 = vector.multi_reduction <add>, %121, %cst_27 [2] : vector<1x16x16xf32> to vector<1x16xf32>
    %123 = vector.shape_cast %122 : vector<1x16xf32> to vector<1x16x1xf32>
    %124 = tpu.reciprocal %123 {approx = true} : vector<1x16x1xf32> -> vector<1x16x1xf32>
    %125 = vector.broadcast %124 : vector<1x16x1xf32> to vector<1x16x16xf32>
    %126 = arith.mulf %121, %125 : vector<1x16x16xf32>
    %127 = arith.truncf %126 : vector<1x16x16xf32> to vector<1x16x16xbf16>
    "tpu.trace_start"() <{level = 10 : i32, message = "bqk,bkd->bqd"}> : () -> ()
    %cst_28 = arith.constant dense<0.000000e+00> : vector<1x16x4xf32>
    %128 = tpu.matmul %127, %112, %cst_28 {dimension_numbers = #tpu.dot_dimension_numbers<[2], [1], [1], [2], [0, 0, 0, 1, 1, 2], [0], [0]>} : vector<1x16x16xbf16>, vector<1x16x4xbf16>, vector<1x16x4xf32> -> vector<1x16x4xf32>
    "tpu.trace_stop"() : () -> ()
    %129 = arith.truncf %128 : vector<1x16x4xf32> to vector<1x16x4xbf16>
    %130 = vector.extract_strided_slice %25 {offsets = [0, 16], sizes = [16, 4], strides = [1, 1]} : vector<16x96xf32> to vector<16x4xf32>
    %131 = vector.shape_cast %130 : vector<16x4xf32> to vector<1x16x4xf32>
    %132 = arith.truncf %131 : vector<1x16x4xf32> to vector<1x16x4xbf16>
    %133 = vector.extract_strided_slice %25 {offsets = [0, 48], sizes = [16, 4], strides = [1, 1]} : vector<16x96xf32> to vector<16x4xf32>
    %134 = vector.shape_cast %133 : vector<16x4xf32> to vector<1x16x4xf32>
    %135 = arith.truncf %134 : vector<1x16x4xf32> to vector<1x16x4xbf16>
    %136 = vector.extract_strided_slice %25 {offsets = [0, 80], sizes = [16, 4], strides = [1, 1]} : vector<16x96xf32> to vector<16x4xf32>
    %137 = vector.shape_cast %136 : vector<16x4xf32> to vector<1x16x4xf32>
    %138 = arith.truncf %137 : vector<1x16x4xf32> to vector<1x16x4xbf16>
    "tpu.trace_start"() <{level = 10 : i32, message = "bqd,bkd->bqk"}> : () -> ()
    %cst_29 = arith.constant dense<0.000000e+00> : vector<1x16x16xf32>
    %139 = tpu.matmul %132, %135, %cst_29 {dimension_numbers = #tpu.dot_dimension_numbers<[2], [2], [1], [1], [0, 0, 0, 1, 1, 1], [0], [0]>} : vector<1x16x4xbf16>, vector<1x16x4xbf16>, vector<1x16x16xf32> -> vector<1x16x16xf32>
    "tpu.trace_stop"() : () -> ()
    %140 = vector.shape_cast %18 : vector<1x16xf32> to vector<1x1x16xf32>
    %141 = vector.broadcast %140 : vector<1x1x16xf32> to vector<1x16x16xf32>
    %142 = arith.addf %139, %141 : vector<1x16x16xf32>
    %cst_30 = arith.constant dense<0xFF800000> : vector<1x16xf32>
    %143 = vector.multi_reduction <maximumf>, %142, %cst_30 [2] : vector<1x16x16xf32> to vector<1x16xf32>
    %144 = vector.shape_cast %143 : vector<1x16xf32> to vector<1x16x1xf32>
    %145 = vector.broadcast %144 : vector<1x16x1xf32> to vector<1x16x16xf32>
    %146 = arith.subf %142, %145 : vector<1x16x16xf32>
    %147 = math.exp %146 : vector<1x16x16xf32>
    %cst_31 = arith.constant dense<0.000000e+00> : vector<1x16xf32>
    %148 = vector.multi_reduction <add>, %147, %cst_31 [2] : vector<1x16x16xf32> to vector<1x16xf32>
    %149 = vector.shape_cast %148 : vector<1x16xf32> to vector<1x16x1xf32>
    %150 = tpu.reciprocal %149 {approx = true} : vector<1x16x1xf32> -> vector<1x16x1xf32>
    %151 = vector.broadcast %150 : vector<1x16x1xf32> to vector<1x16x16xf32>
    %152 = arith.mulf %147, %151 : vector<1x16x16xf32>
    %153 = arith.truncf %152 : vector<1x16x16xf32> to vector<1x16x16xbf16>
    "tpu.trace_start"() <{level = 10 : i32, message = "bqk,bkd->bqd"}> : () -> ()
    %cst_32 = arith.constant dense<0.000000e+00> : vector<1x16x4xf32>
    %154 = tpu.matmul %153, %138, %cst_32 {dimension_numbers = #tpu.dot_dimension_numbers<[2], [1], [1], [2], [0, 0, 0, 1, 1, 2], [0], [0]>} : vector<1x16x16xbf16>, vector<1x16x4xbf16>, vector<1x16x4xf32> -> vector<1x16x4xf32>
    "tpu.trace_stop"() : () -> ()
    %155 = arith.truncf %154 : vector<1x16x4xf32> to vector<1x16x4xbf16>
    %156 = vector.extract_strided_slice %25 {offsets = [0, 20], sizes = [16, 4], strides = [1, 1]} : vector<16x96xf32> to vector<16x4xf32>
    %157 = vector.shape_cast %156 : vector<16x4xf32> to vector<1x16x4xf32>
    %158 = arith.truncf %157 : vector<1x16x4xf32> to vector<1x16x4xbf16>
    %159 = vector.extract_strided_slice %25 {offsets = [0, 52], sizes = [16, 4], strides = [1, 1]} : vector<16x96xf32> to vector<16x4xf32>
    %160 = vector.shape_cast %159 : vector<16x4xf32> to vector<1x16x4xf32>
    %161 = arith.truncf %160 : vector<1x16x4xf32> to vector<1x16x4xbf16>
    %162 = vector.extract_strided_slice %25 {offsets = [0, 84], sizes = [16, 4], strides = [1, 1]} : vector<16x96xf32> to vector<16x4xf32>
    %163 = vector.shape_cast %162 : vector<16x4xf32> to vector<1x16x4xf32>
    %164 = arith.truncf %163 : vector<1x16x4xf32> to vector<1x16x4xbf16>
    "tpu.trace_start"() <{level = 10 : i32, message = "bqd,bkd->bqk"}> : () -> ()
    %cst_33 = arith.constant dense<0.000000e+00> : vector<1x16x16xf32>
    %165 = tpu.matmul %158, %161, %cst_33 {dimension_numbers = #tpu.dot_dimension_numbers<[2], [2], [1], [1], [0, 0, 0, 1, 1, 1], [0], [0]>} : vector<1x16x4xbf16>, vector<1x16x4xbf16>, vector<1x16x16xf32> -> vector<1x16x16xf32>
    "tpu.trace_stop"() : () -> ()
    %166 = vector.shape_cast %18 : vector<1x16xf32> to vector<1x1x16xf32>
    %167 = vector.broadcast %166 : vector<1x1x16xf32> to vector<1x16x16xf32>
    %168 = arith.addf %165, %167 : vector<1x16x16xf32>
    %cst_34 = arith.constant dense<0xFF800000> : vector<1x16xf32>
    %169 = vector.multi_reduction <maximumf>, %168, %cst_34 [2] : vector<1x16x16xf32> to vector<1x16xf32>
    %170 = vector.shape_cast %169 : vector<1x16xf32> to vector<1x16x1xf32>
    %171 = vector.broadcast %170 : vector<1x16x1xf32> to vector<1x16x16xf32>
    %172 = arith.subf %168, %171 : vector<1x16x16xf32>
    %173 = math.exp %172 : vector<1x16x16xf32>
    %cst_35 = arith.constant dense<0.000000e+00> : vector<1x16xf32>
    %174 = vector.multi_reduction <add>, %173, %cst_35 [2] : vector<1x16x16xf32> to vector<1x16xf32>
    %175 = vector.shape_cast %174 : vector<1x16xf32> to vector<1x16x1xf32>
    %176 = tpu.reciprocal %175 {approx = true} : vector<1x16x1xf32> -> vector<1x16x1xf32>
    %177 = vector.broadcast %176 : vector<1x16x1xf32> to vector<1x16x16xf32>
    %178 = arith.mulf %173, %177 : vector<1x16x16xf32>
    %179 = arith.truncf %178 : vector<1x16x16xf32> to vector<1x16x16xbf16>
    "tpu.trace_start"() <{level = 10 : i32, message = "bqk,bkd->bqd"}> : () -> ()
    %cst_36 = arith.constant dense<0.000000e+00> : vector<1x16x4xf32>
    %180 = tpu.matmul %179, %164, %cst_36 {dimension_numbers = #tpu.dot_dimension_numbers<[2], [1], [1], [2], [0, 0, 0, 1, 1, 2], [0], [0]>} : vector<1x16x16xbf16>, vector<1x16x4xbf16>, vector<1x16x4xf32> -> vector<1x16x4xf32>
    "tpu.trace_stop"() : () -> ()
    %181 = arith.truncf %180 : vector<1x16x4xf32> to vector<1x16x4xbf16>
    %182 = vector.extract_strided_slice %25 {offsets = [0, 24], sizes = [16, 4], strides = [1, 1]} : vector<16x96xf32> to vector<16x4xf32>
    %183 = vector.shape_cast %182 : vector<16x4xf32> to vector<1x16x4xf32>
    %184 = arith.truncf %183 : vector<1x16x4xf32> to vector<1x16x4xbf16>
    %185 = vector.extract_strided_slice %25 {offsets = [0, 56], sizes = [16, 4], strides = [1, 1]} : vector<16x96xf32> to vector<16x4xf32>
    %186 = vector.shape_cast %185 : vector<16x4xf32> to vector<1x16x4xf32>
    %187 = arith.truncf %186 : vector<1x16x4xf32> to vector<1x16x4xbf16>
    %188 = vector.extract_strided_slice %25 {offsets = [0, 88], sizes = [16, 4], strides = [1, 1]} : vector<16x96xf32> to vector<16x4xf32>
    %189 = vector.shape_cast %188 : vector<16x4xf32> to vector<1x16x4xf32>
    %190 = arith.truncf %189 : vector<1x16x4xf32> to vector<1x16x4xbf16>
    "tpu.trace_start"() <{level = 10 : i32, message = "bqd,bkd->bqk"}> : () -> ()
    %cst_37 = arith.constant dense<0.000000e+00> : vector<1x16x16xf32>
    %191 = tpu.matmul %184, %187, %cst_37 {dimension_numbers = #tpu.dot_dimension_numbers<[2], [2], [1], [1], [0, 0, 0, 1, 1, 1], [0], [0]>} : vector<1x16x4xbf16>, vector<1x16x4xbf16>, vector<1x16x16xf32> -> vector<1x16x16xf32>
    "tpu.trace_stop"() : () -> ()
    %192 = vector.shape_cast %18 : vector<1x16xf32> to vector<1x1x16xf32>
    %193 = vector.broadcast %192 : vector<1x1x16xf32> to vector<1x16x16xf32>
    %194 = arith.addf %191, %193 : vector<1x16x16xf32>
    %cst_38 = arith.constant dense<0xFF800000> : vector<1x16xf32>
    %195 = vector.multi_reduction <maximumf>, %194, %cst_38 [2] : vector<1x16x16xf32> to vector<1x16xf32>
    %196 = vector.shape_cast %195 : vector<1x16xf32> to vector<1x16x1xf32>
    %197 = vector.broadcast %196 : vector<1x16x1xf32> to vector<1x16x16xf32>
    %198 = arith.subf %194, %197 : vector<1x16x16xf32>
    %199 = math.exp %198 : vector<1x16x16xf32>
    %cst_39 = arith.constant dense<0.000000e+00> : vector<1x16xf32>
    %200 = vector.multi_reduction <add>, %199, %cst_39 [2] : vector<1x16x16xf32> to vector<1x16xf32>
    %201 = vector.shape_cast %200 : vector<1x16xf32> to vector<1x16x1xf32>
    %202 = tpu.reciprocal %201 {approx = true} : vector<1x16x1xf32> -> vector<1x16x1xf32>
    %203 = vector.broadcast %202 : vector<1x16x1xf32> to vector<1x16x16xf32>
    %204 = arith.mulf %199, %203 : vector<1x16x16xf32>
    %205 = arith.truncf %204 : vector<1x16x16xf32> to vector<1x16x16xbf16>
    "tpu.trace_start"() <{level = 10 : i32, message = "bqk,bkd->bqd"}> : () -> ()
    %cst_40 = arith.constant dense<0.000000e+00> : vector<1x16x4xf32>
    %206 = tpu.matmul %205, %190, %cst_40 {dimension_numbers = #tpu.dot_dimension_numbers<[2], [1], [1], [2], [0, 0, 0, 1, 1, 2], [0], [0]>} : vector<1x16x16xbf16>, vector<1x16x4xbf16>, vector<1x16x4xf32> -> vector<1x16x4xf32>
    "tpu.trace_stop"() : () -> ()
    %207 = arith.truncf %206 : vector<1x16x4xf32> to vector<1x16x4xbf16>
    %208 = vector.extract_strided_slice %25 {offsets = [0, 28], sizes = [16, 4], strides = [1, 1]} : vector<16x96xf32> to vector<16x4xf32>
    %209 = vector.shape_cast %208 : vector<16x4xf32> to vector<1x16x4xf32>
    %210 = arith.truncf %209 : vector<1x16x4xf32> to vector<1x16x4xbf16>
    %211 = vector.extract_strided_slice %25 {offsets = [0, 60], sizes = [16, 4], strides = [1, 1]} : vector<16x96xf32> to vector<16x4xf32>
    %212 = vector.shape_cast %211 : vector<16x4xf32> to vector<1x16x4xf32>
    %213 = arith.truncf %212 : vector<1x16x4xf32> to vector<1x16x4xbf16>
    %214 = vector.extract_strided_slice %25 {offsets = [0, 92], sizes = [16, 4], strides = [1, 1]} : vector<16x96xf32> to vector<16x4xf32>
    %215 = vector.shape_cast %214 : vector<16x4xf32> to vector<1x16x4xf32>
    %216 = arith.truncf %215 : vector<1x16x4xf32> to vector<1x16x4xbf16>
    "tpu.trace_start"() <{level = 10 : i32, message = "bqd,bkd->bqk"}> : () -> ()
    %cst_41 = arith.constant dense<0.000000e+00> : vector<1x16x16xf32>
    %217 = tpu.matmul %210, %213, %cst_41 {dimension_numbers = #tpu.dot_dimension_numbers<[2], [2], [1], [1], [0, 0, 0, 1, 1, 1], [0], [0]>} : vector<1x16x4xbf16>, vector<1x16x4xbf16>, vector<1x16x16xf32> -> vector<1x16x16xf32>
    "tpu.trace_stop"() : () -> ()
    %218 = vector.shape_cast %18 : vector<1x16xf32> to vector<1x1x16xf32>
    %219 = vector.broadcast %218 : vector<1x1x16xf32> to vector<1x16x16xf32>
    %220 = arith.addf %217, %219 : vector<1x16x16xf32>
    %cst_42 = arith.constant dense<0xFF800000> : vector<1x16xf32>
    %221 = vector.multi_reduction <maximumf>, %220, %cst_42 [2] : vector<1x16x16xf32> to vector<1x16xf32>
    %222 = vector.shape_cast %221 : vector<1x16xf32> to vector<1x16x1xf32>
    %223 = vector.broadcast %222 : vector<1x16x1xf32> to vector<1x16x16xf32>
    %224 = arith.subf %220, %223 : vector<1x16x16xf32>
    %225 = math.exp %224 : vector<1x16x16xf32>
    %cst_43 = arith.constant dense<0.000000e+00> : vector<1x16xf32>
    %226 = vector.multi_reduction <add>, %225, %cst_43 [2] : vector<1x16x16xf32> to vector<1x16xf32>
    %227 = vector.shape_cast %226 : vector<1x16xf32> to vector<1x16x1xf32>
    %228 = tpu.reciprocal %227 {approx = true} : vector<1x16x1xf32> -> vector<1x16x1xf32>
    %229 = vector.broadcast %228 : vector<1x16x1xf32> to vector<1x16x16xf32>
    %230 = arith.mulf %225, %229 : vector<1x16x16xf32>
    %231 = arith.truncf %230 : vector<1x16x16xf32> to vector<1x16x16xbf16>
    "tpu.trace_start"() <{level = 10 : i32, message = "bqk,bkd->bqd"}> : () -> ()
    %cst_44 = arith.constant dense<0.000000e+00> : vector<1x16x4xf32>
    %232 = tpu.matmul %231, %216, %cst_44 {dimension_numbers = #tpu.dot_dimension_numbers<[2], [1], [1], [2], [0, 0, 0, 1, 1, 2], [0], [0]>} : vector<1x16x16xbf16>, vector<1x16x4xbf16>, vector<1x16x4xf32> -> vector<1x16x4xf32>
    "tpu.trace_stop"() : () -> ()
    %233 = arith.truncf %232 : vector<1x16x4xf32> to vector<1x16x4xbf16>
    %234 = tpu.concatenate %51, %77, %103, %129, %155, %181, %207, %233 in 2 : vector<1x16x4xbf16>, vector<1x16x4xbf16>, vector<1x16x4xbf16>, vector<1x16x4xbf16>, vector<1x16x4xbf16>, vector<1x16x4xbf16>, vector<1x16x4xbf16>, vector<1x16x4xbf16> -> vector<1x16x32xbf16>
    %235 = vector.shape_cast %234 : vector<1x16x32xbf16> to vector<16x32xbf16>
    %c0_45 = arith.constant 0 : index
    %c0_46 = arith.constant 0 : index
    %c0_47 = arith.constant 0 : index
    %236 = vector.load %arg6[%c0_45, %c0_46, %c0_47] : memref<2x32x32xbf16, #tpu.memory_space<vmem>>, vector<1x32x32xbf16>
    %237 = vector.shape_cast %236 : vector<1x32x32xbf16> to vector<32x32xbf16>
    %cst_48 = arith.constant dense<0.000000e+00> : vector<16x32xf32>
    %238 = tpu.matmul %235, %237, %cst_48 {dimension_numbers = #tpu.dot_dimension_numbers<[1], [0], [0], [1], [0, 0, 1, 1], [], []>} : vector<16x32xbf16>, vector<32x32xbf16>, vector<16x32xf32> -> vector<16x32xf32>
    %c0_49 = arith.constant 0 : index
    %c0_50 = arith.constant 0 : index
    %239 = vector.load %arg7[%c0_49, %c0_50] : memref<2x32xf32, #tpu.memory_space<vmem>>, vector<1x32xf32>
    %240 = vector.broadcast %239 : vector<1x32xf32> to vector<16x32xf32>
    %241 = arith.addf %238, %240 : vector<16x32xf32>
    %242 = arith.addf %12, %241 : vector<16x32xf32>
    %c0_51 = arith.constant 0 : index
    %c0_52 = arith.constant 0 : index
    %243 = vector.load %arg8[%c0_51, %c0_52] : memref<2x32xf32, #tpu.memory_space<vmem>>, vector<1x32xf32>
    %c0_53 = arith.constant 0 : index
    %c0_54 = arith.constant 0 : index
    %244 = vector.load %arg9[%c0_53, %c0_54] : memref<2x32xf32, #tpu.memory_space<vmem>>, vector<1x32xf32>
    %cst_55 = arith.constant dense<0.000000e+00> : vector<16xf32>
    %245 = vector.multi_reduction <add>, %242, %cst_55 [1] : vector<16x32xf32> to vector<16xf32>
    %246 = vector.shape_cast %245 : vector<16xf32> to vector<16x1xf32>
    %cst_56 = arith.constant 3.200000e+01 : f32
    %247 = vector.broadcast %cst_56 : f32 to vector<16x1xf32>
    %248 = arith.divf %246, %247 : vector<16x1xf32>
    %249 = vector.broadcast %248 : vector<16x1xf32> to vector<16x32xf32>
    %250 = arith.subf %242, %249 : vector<16x32xf32>
    %251 = arith.mulf %250, %250 : vector<16x32xf32>
    %cst_57 = arith.constant dense<0.000000e+00> : vector<16xf32>
    %252 = vector.multi_reduction <add>, %251, %cst_57 [1] : vector<16x32xf32> to vector<16xf32>
    %253 = vector.shape_cast %252 : vector<16xf32> to vector<16x1xf32>
    %cst_58 = arith.constant 3.200000e+01 : f32
    %254 = vector.broadcast %cst_58 : f32 to vector<16x1xf32>
    %255 = arith.divf %253, %254 : vector<16x1xf32>
    %256 = vector.broadcast %248 : vector<16x1xf32> to vector<16x32xf32>
    %257 = arith.subf %242, %256 : vector<16x32xf32>
    %cst_59 = arith.constant 9.99999974E-6 : f32
    %258 = vector.broadcast %cst_59 : f32 to vector<16x1xf32>
    %259 = arith.addf %255, %258 : vector<16x1xf32>
    %260 = math.rsqrt %259 : vector<16x1xf32>
    %261 = vector.broadcast %260 : vector<16x1xf32> to vector<16x32xf32>
    %262 = arith.mulf %257, %261 : vector<16x32xf32>
    %263 = vector.broadcast %243 : vector<1x32xf32> to vector<16x32xf32>
    %264 = arith.mulf %262, %263 : vector<16x32xf32>
    %265 = vector.broadcast %244 : vector<1x32xf32> to vector<16x32xf32>
    %266 = arith.addf %264, %265 : vector<16x32xf32>
    %267 = arith.truncf %266 : vector<16x32xf32> to vector<16x32xbf16>
    %c0_60 = arith.constant 0 : index
    %c0_61 = arith.constant 0 : index
    %c0_62 = arith.constant 0 : index
    %268 = vector.load %arg10[%c0_60, %c0_61, %c0_62] : memref<2x32x128xbf16, #tpu.memory_space<vmem>>, vector<1x32x128xbf16>
    %269 = vector.shape_cast %268 : vector<1x32x128xbf16> to vector<32x128xbf16>
    %cst_63 = arith.constant dense<0.000000e+00> : vector<16x128xf32>
    %270 = tpu.matmul %267, %269, %cst_63 {dimension_numbers = #tpu.dot_dimension_numbers<[1], [0], [0], [1], [0, 0, 1, 1], [], []>} : vector<16x32xbf16>, vector<32x128xbf16>, vector<16x128xf32> -> vector<16x128xf32>
    %c0_64 = arith.constant 0 : index
    %c0_65 = arith.constant 0 : index
    %271 = vector.load %arg11[%c0_64, %c0_65] : memref<2x128xf32, #tpu.memory_space<vmem>>, vector<1x128xf32>
    %272 = vector.broadcast %271 : vector<1x128xf32> to vector<16x128xf32>
    %273 = arith.addf %270, %272 : vector<16x128xf32>
    %cst_66 = arith.constant 0.000000e+00 : f32
    %274 = vector.broadcast %cst_66 : f32 to vector<16x128xf32>
    %275 = arith.maximumf %273, %274 : vector<16x128xf32>
    %276 = arith.truncf %275 : vector<16x128xf32> to vector<16x128xbf16>
    %c0_67 = arith.constant 0 : index
    %c0_68 = arith.constant 0 : index
    %c0_69 = arith.constant 0 : index
    %277 = vector.load %arg12[%c0_67, %c0_68, %c0_69] : memref<2x128x32xbf16, #tpu.memory_space<vmem>>, vector<1x128x32xbf16>
    %278 = vector.shape_cast %277 : vector<1x128x32xbf16> to vector<128x32xbf16>
    %cst_70 = arith.constant dense<0.000000e+00> : vector<16x32xf32>
    %279 = tpu.matmul %276, %278, %cst_70 {dimension_numbers = #tpu.dot_dimension_numbers<[1], [0], [0], [1], [0, 0, 1, 1], [], []>} : vector<16x128xbf16>, vector<128x32xbf16>, vector<16x32xf32> -> vector<16x32xf32>
    %c0_71 = arith.constant 0 : index
    %c0_72 = arith.constant 0 : index
    %280 = vector.load %arg13[%c0_71, %c0_72] : memref<2x32xf32, #tpu.memory_space<vmem>>, vector<1x32xf32>
    %281 = vector.broadcast %280 : vector<1x32xf32> to vector<16x32xf32>
    %282 = arith.addf %279, %281 : vector<16x32xf32>
    %283 = arith.addf %266, %282 : vector<16x32xf32>
    %c0_73 = arith.constant 0 : index
    %c0_74 = arith.constant 0 : index
    %284 = vector.load %arg14[%c0_73, %c0_74] : memref<2x32xf32, #tpu.memory_space<vmem>>, vector<1x32xf32>
    %c0_75 = arith.constant 0 : index
    %c0_76 = arith.constant 0 : index
    %285 = vector.load %arg15[%c0_75, %c0_76] : memref<2x32xf32, #tpu.memory_space<vmem>>, vector<1x32xf32>
    %cst_77 = arith.constant dense<0.000000e+00> : vector<16xf32>
    %286 = vector.multi_reduction <add>, %283, %cst_77 [1] : vector<16x32xf32> to vector<16xf32>
    %287 = vector.shape_cast %286 : vector<16xf32> to vector<16x1xf32>
    %cst_78 = arith.constant 3.200000e+01 : f32
    %288 = vector.broadcast %cst_78 : f32 to vector<16x1xf32>
    %289 = arith.divf %287, %288 : vector<16x1xf32>
    %290 = vector.broadcast %289 : vector<16x1xf32> to vector<16x32xf32>
    %291 = arith.subf %283, %290 : vector<16x32xf32>
    %292 = arith.mulf %291, %291 : vector<16x32xf32>
    %cst_79 = arith.constant dense<0.000000e+00> : vector<16xf32>
    %293 = vector.multi_reduction <add>, %292, %cst_79 [1] : vector<16x32xf32> to vector<16xf32>
    %294 = vector.shape_cast %293 : vector<16xf32> to vector<16x1xf32>
    %cst_80 = arith.constant 3.200000e+01 : f32
    %295 = vector.broadcast %cst_80 : f32 to vector<16x1xf32>
    %296 = arith.divf %294, %295 : vector<16x1xf32>
    %297 = vector.broadcast %289 : vector<16x1xf32> to vector<16x32xf32>
    %298 = arith.subf %283, %297 : vector<16x32xf32>
    %cst_81 = arith.constant 9.99999974E-6 : f32
    %299 = vector.broadcast %cst_81 : f32 to vector<16x1xf32>
    %300 = arith.addf %296, %299 : vector<16x1xf32>
    %301 = math.rsqrt %300 : vector<16x1xf32>
    %302 = vector.broadcast %301 : vector<16x1xf32> to vector<16x32xf32>
    %303 = arith.mulf %298, %302 : vector<16x32xf32>
    %304 = vector.broadcast %284 : vector<1x32xf32> to vector<16x32xf32>
    %305 = arith.mulf %303, %304 : vector<16x32xf32>
    %306 = vector.broadcast %285 : vector<1x32xf32> to vector<16x32xf32>
    %307 = arith.addf %305, %306 : vector<16x32xf32>
    %308 = arith.truncf %307 : vector<16x32xf32> to vector<16x32xbf16>
    %c1 = arith.constant 1 : index
    %c0_82 = arith.constant 0 : index
    %c0_83 = arith.constant 0 : index
    %309 = vector.load %arg4[%c1, %c0_82, %c0_83] : memref<2x32x96xbf16, #tpu.memory_space<vmem>>, vector<1x32x96xbf16>
    %310 = vector.shape_cast %309 : vector<1x32x96xbf16> to vector<32x96xbf16>
    %cst_84 = arith.constant dense<0.000000e+00> : vector<16x96xf32>
    %311 = tpu.matmul %308, %310, %cst_84 {dimension_numbers = #tpu.dot_dimension_numbers<[1], [0], [0], [1], [0, 0, 1, 1], [], []>} : vector<16x32xbf16>, vector<32x96xbf16>, vector<16x96xf32> -> vector<16x96xf32>
    %c1_85 = arith.constant 1 : index
    %c0_86 = arith.constant 0 : index
    %312 = vector.load %arg5[%c1_85, %c0_86] : memref<2x96xf32, #tpu.memory_space<vmem>>, vector<1x96xf32>
    %313 = vector.broadcast %312 : vector<1x96xf32> to vector<16x96xf32>
    %314 = arith.addf %311, %313 : vector<16x96xf32>
    %315 = vector.extract_strided_slice %314 {offsets = [0, 0], sizes = [16, 4], strides = [1, 1]} : vector<16x96xf32> to vector<16x4xf32>
    %316 = vector.shape_cast %315 : vector<16x4xf32> to vector<1x16x4xf32>
    %317 = arith.truncf %316 : vector<1x16x4xf32> to vector<1x16x4xbf16>
    %318 = vector.extract_strided_slice %314 {offsets = [0, 32], sizes = [16, 4], strides = [1, 1]} : vector<16x96xf32> to vector<16x4xf32>
    %319 = vector.shape_cast %318 : vector<16x4xf32> to vector<1x16x4xf32>
    %320 = arith.truncf %319 : vector<1x16x4xf32> to vector<1x16x4xbf16>
    %321 = vector.extract_strided_slice %314 {offsets = [0, 64], sizes = [16, 4], strides = [1, 1]} : vector<16x96xf32> to vector<16x4xf32>
    %322 = vector.shape_cast %321 : vector<16x4xf32> to vector<1x16x4xf32>
    %323 = arith.truncf %322 : vector<1x16x4xf32> to vector<1x16x4xbf16>
    "tpu.trace_start"() <{level = 10 : i32, message = "bqd,bkd->bqk"}> : () -> ()
    %cst_87 = arith.constant dense<0.000000e+00> : vector<1x16x16xf32>
    %324 = tpu.matmul %317, %320, %cst_87 {dimension_numbers = #tpu.dot_dimension_numbers<[2], [2], [1], [1], [0, 0, 0, 1, 1, 1], [0], [0]>} : vector<1x16x4xbf16>, vector<1x16x4xbf16>, vector<1x16x16xf32> -> vector<1x16x16xf32>
    "tpu.trace_stop"() : () -> ()
    %325 = vector.shape_cast %18 : vector<1x16xf32> to vector<1x1x16xf32>
    %326 = vector.broadcast %325 : vector<1x1x16xf32> to vector<1x16x16xf32>
    %327 = arith.addf %324, %326 : vector<1x16x16xf32>
    %cst_88 = arith.constant dense<0xFF800000> : vector<1x16xf32>
    %328 = vector.multi_reduction <maximumf>, %327, %cst_88 [2] : vector<1x16x16xf32> to vector<1x16xf32>
    %329 = vector.shape_cast %328 : vector<1x16xf32> to vector<1x16x1xf32>
    %330 = vector.broadcast %329 : vector<1x16x1xf32> to vector<1x16x16xf32>
    %331 = arith.subf %327, %330 : vector<1x16x16xf32>
    %332 = math.exp %331 : vector<1x16x16xf32>
    %cst_89 = arith.constant dense<0.000000e+00> : vector<1x16xf32>
    %333 = vector.multi_reduction <add>, %332, %cst_89 [2] : vector<1x16x16xf32> to vector<1x16xf32>
    %334 = vector.shape_cast %333 : vector<1x16xf32> to vector<1x16x1xf32>
    %335 = tpu.reciprocal %334 {approx = true} : vector<1x16x1xf32> -> vector<1x16x1xf32>
    %336 = vector.broadcast %335 : vector<1x16x1xf32> to vector<1x16x16xf32>
    %337 = arith.mulf %332, %336 : vector<1x16x16xf32>
    %338 = arith.truncf %337 : vector<1x16x16xf32> to vector<1x16x16xbf16>
    "tpu.trace_start"() <{level = 10 : i32, message = "bqk,bkd->bqd"}> : () -> ()
    %cst_90 = arith.constant dense<0.000000e+00> : vector<1x16x4xf32>
    %339 = tpu.matmul %338, %323, %cst_90 {dimension_numbers = #tpu.dot_dimension_numbers<[2], [1], [1], [2], [0, 0, 0, 1, 1, 2], [0], [0]>} : vector<1x16x16xbf16>, vector<1x16x4xbf16>, vector<1x16x4xf32> -> vector<1x16x4xf32>
    "tpu.trace_stop"() : () -> ()
    %340 = arith.truncf %339 : vector<1x16x4xf32> to vector<1x16x4xbf16>
    %341 = vector.extract_strided_slice %314 {offsets = [0, 4], sizes = [16, 4], strides = [1, 1]} : vector<16x96xf32> to vector<16x4xf32>
    %342 = vector.shape_cast %341 : vector<16x4xf32> to vector<1x16x4xf32>
    %343 = arith.truncf %342 : vector<1x16x4xf32> to vector<1x16x4xbf16>
    %344 = vector.extract_strided_slice %314 {offsets = [0, 36], sizes = [16, 4], strides = [1, 1]} : vector<16x96xf32> to vector<16x4xf32>
    %345 = vector.shape_cast %344 : vector<16x4xf32> to vector<1x16x4xf32>
    %346 = arith.truncf %345 : vector<1x16x4xf32> to vector<1x16x4xbf16>
    %347 = vector.extract_strided_slice %314 {offsets = [0, 68], sizes = [16, 4], strides = [1, 1]} : vector<16x96xf32> to vector<16x4xf32>
    %348 = vector.shape_cast %347 : vector<16x4xf32> to vector<1x16x4xf32>
    %349 = arith.truncf %348 : vector<1x16x4xf32> to vector<1x16x4xbf16>
    "tpu.trace_start"() <{level = 10 : i32, message = "bqd,bkd->bqk"}> : () -> ()
    %cst_91 = arith.constant dense<0.000000e+00> : vector<1x16x16xf32>
    %350 = tpu.matmul %343, %346, %cst_91 {dimension_numbers = #tpu.dot_dimension_numbers<[2], [2], [1], [1], [0, 0, 0, 1, 1, 1], [0], [0]>} : vector<1x16x4xbf16>, vector<1x16x4xbf16>, vector<1x16x16xf32> -> vector<1x16x16xf32>
    "tpu.trace_stop"() : () -> ()
    %351 = vector.shape_cast %18 : vector<1x16xf32> to vector<1x1x16xf32>
    %352 = vector.broadcast %351 : vector<1x1x16xf32> to vector<1x16x16xf32>
    %353 = arith.addf %350, %352 : vector<1x16x16xf32>
    %cst_92 = arith.constant dense<0xFF800000> : vector<1x16xf32>
    %354 = vector.multi_reduction <maximumf>, %353, %cst_92 [2] : vector<1x16x16xf32> to vector<1x16xf32>
    %355 = vector.shape_cast %354 : vector<1x16xf32> to vector<1x16x1xf32>
    %356 = vector.broadcast %355 : vector<1x16x1xf32> to vector<1x16x16xf32>
    %357 = arith.subf %353, %356 : vector<1x16x16xf32>
    %358 = math.exp %357 : vector<1x16x16xf32>
    %cst_93 = arith.constant dense<0.000000e+00> : vector<1x16xf32>
    %359 = vector.multi_reduction <add>, %358, %cst_93 [2] : vector<1x16x16xf32> to vector<1x16xf32>
    %360 = vector.shape_cast %359 : vector<1x16xf32> to vector<1x16x1xf32>
    %361 = tpu.reciprocal %360 {approx = true} : vector<1x16x1xf32> -> vector<1x16x1xf32>
    %362 = vector.broadcast %361 : vector<1x16x1xf32> to vector<1x16x16xf32>
    %363 = arith.mulf %358, %362 : vector<1x16x16xf32>
    %364 = arith.truncf %363 : vector<1x16x16xf32> to vector<1x16x16xbf16>
    "tpu.trace_start"() <{level = 10 : i32, message = "bqk,bkd->bqd"}> : () -> ()
    %cst_94 = arith.constant dense<0.000000e+00> : vector<1x16x4xf32>
    %365 = tpu.matmul %364, %349, %cst_94 {dimension_numbers = #tpu.dot_dimension_numbers<[2], [1], [1], [2], [0, 0, 0, 1, 1, 2], [0], [0]>} : vector<1x16x16xbf16>, vector<1x16x4xbf16>, vector<1x16x4xf32> -> vector<1x16x4xf32>
    "tpu.trace_stop"() : () -> ()
    %366 = arith.truncf %365 : vector<1x16x4xf32> to vector<1x16x4xbf16>
    %367 = vector.extract_strided_slice %314 {offsets = [0, 8], sizes = [16, 4], strides = [1, 1]} : vector<16x96xf32> to vector<16x4xf32>
    %368 = vector.shape_cast %367 : vector<16x4xf32> to vector<1x16x4xf32>
    %369 = arith.truncf %368 : vector<1x16x4xf32> to vector<1x16x4xbf16>
    %370 = vector.extract_strided_slice %314 {offsets = [0, 40], sizes = [16, 4], strides = [1, 1]} : vector<16x96xf32> to vector<16x4xf32>
    %371 = vector.shape_cast %370 : vector<16x4xf32> to vector<1x16x4xf32>
    %372 = arith.truncf %371 : vector<1x16x4xf32> to vector<1x16x4xbf16>
    %373 = vector.extract_strided_slice %314 {offsets = [0, 72], sizes = [16, 4], strides = [1, 1]} : vector<16x96xf32> to vector<16x4xf32>
    %374 = vector.shape_cast %373 : vector<16x4xf32> to vector<1x16x4xf32>
    %375 = arith.truncf %374 : vector<1x16x4xf32> to vector<1x16x4xbf16>
    "tpu.trace_start"() <{level = 10 : i32, message = "bqd,bkd->bqk"}> : () -> ()
    %cst_95 = arith.constant dense<0.000000e+00> : vector<1x16x16xf32>
    %376 = tpu.matmul %369, %372, %cst_95 {dimension_numbers = #tpu.dot_dimension_numbers<[2], [2], [1], [1], [0, 0, 0, 1, 1, 1], [0], [0]>} : vector<1x16x4xbf16>, vector<1x16x4xbf16>, vector<1x16x16xf32> -> vector<1x16x16xf32>
    "tpu.trace_stop"() : () -> ()
    %377 = vector.shape_cast %18 : vector<1x16xf32> to vector<1x1x16xf32>
    %378 = vector.broadcast %377 : vector<1x1x16xf32> to vector<1x16x16xf32>
    %379 = arith.addf %376, %378 : vector<1x16x16xf32>
    %cst_96 = arith.constant dense<0xFF800000> : vector<1x16xf32>
    %380 = vector.multi_reduction <maximumf>, %379, %cst_96 [2] : vector<1x16x16xf32> to vector<1x16xf32>
    %381 = vector.shape_cast %380 : vector<1x16xf32> to vector<1x16x1xf32>
    %382 = vector.broadcast %381 : vector<1x16x1xf32> to vector<1x16x16xf32>
    %383 = arith.subf %379, %382 : vector<1x16x16xf32>
    %384 = math.exp %383 : vector<1x16x16xf32>
    %cst_97 = arith.constant dense<0.000000e+00> : vector<1x16xf32>
    %385 = vector.multi_reduction <add>, %384, %cst_97 [2] : vector<1x16x16xf32> to vector<1x16xf32>
    %386 = vector.shape_cast %385 : vector<1x16xf32> to vector<1x16x1xf32>
    %387 = tpu.reciprocal %386 {approx = true} : vector<1x16x1xf32> -> vector<1x16x1xf32>
    %388 = vector.broadcast %387 : vector<1x16x1xf32> to vector<1x16x16xf32>
    %389 = arith.mulf %384, %388 : vector<1x16x16xf32>
    %390 = arith.truncf %389 : vector<1x16x16xf32> to vector<1x16x16xbf16>
    "tpu.trace_start"() <{level = 10 : i32, message = "bqk,bkd->bqd"}> : () -> ()
    %cst_98 = arith.constant dense<0.000000e+00> : vector<1x16x4xf32>
    %391 = tpu.matmul %390, %375, %cst_98 {dimension_numbers = #tpu.dot_dimension_numbers<[2], [1], [1], [2], [0, 0, 0, 1, 1, 2], [0], [0]>} : vector<1x16x16xbf16>, vector<1x16x4xbf16>, vector<1x16x4xf32> -> vector<1x16x4xf32>
    "tpu.trace_stop"() : () -> ()
    %392 = arith.truncf %391 : vector<1x16x4xf32> to vector<1x16x4xbf16>
    %393 = vector.extract_strided_slice %314 {offsets = [0, 12], sizes = [16, 4], strides = [1, 1]} : vector<16x96xf32> to vector<16x4xf32>
    %394 = vector.shape_cast %393 : vector<16x4xf32> to vector<1x16x4xf32>
    %395 = arith.truncf %394 : vector<1x16x4xf32> to vector<1x16x4xbf16>
    %396 = vector.extract_strided_slice %314 {offsets = [0, 44], sizes = [16, 4], strides = [1, 1]} : vector<16x96xf32> to vector<16x4xf32>
    %397 = vector.shape_cast %396 : vector<16x4xf32> to vector<1x16x4xf32>
    %398 = arith.truncf %397 : vector<1x16x4xf32> to vector<1x16x4xbf16>
    %399 = vector.extract_strided_slice %314 {offsets = [0, 76], sizes = [16, 4], strides = [1, 1]} : vector<16x96xf32> to vector<16x4xf32>
    %400 = vector.shape_cast %399 : vector<16x4xf32> to vector<1x16x4xf32>
    %401 = arith.truncf %400 : vector<1x16x4xf32> to vector<1x16x4xbf16>
    "tpu.trace_start"() <{level = 10 : i32, message = "bqd,bkd->bqk"}> : () -> ()
    %cst_99 = arith.constant dense<0.000000e+00> : vector<1x16x16xf32>
    %402 = tpu.matmul %395, %398, %cst_99 {dimension_numbers = #tpu.dot_dimension_numbers<[2], [2], [1], [1], [0, 0, 0, 1, 1, 1], [0], [0]>} : vector<1x16x4xbf16>, vector<1x16x4xbf16>, vector<1x16x16xf32> -> vector<1x16x16xf32>
    "tpu.trace_stop"() : () -> ()
    %403 = vector.shape_cast %18 : vector<1x16xf32> to vector<1x1x16xf32>
    %404 = vector.broadcast %403 : vector<1x1x16xf32> to vector<1x16x16xf32>
    %405 = arith.addf %402, %404 : vector<1x16x16xf32>
    %cst_100 = arith.constant dense<0xFF800000> : vector<1x16xf32>
    %406 = vector.multi_reduction <maximumf>, %405, %cst_100 [2] : vector<1x16x16xf32> to vector<1x16xf32>
    %407 = vector.shape_cast %406 : vector<1x16xf32> to vector<1x16x1xf32>
    %408 = vector.broadcast %407 : vector<1x16x1xf32> to vector<1x16x16xf32>
    %409 = arith.subf %405, %408 : vector<1x16x16xf32>
    %410 = math.exp %409 : vector<1x16x16xf32>
    %cst_101 = arith.constant dense<0.000000e+00> : vector<1x16xf32>
    %411 = vector.multi_reduction <add>, %410, %cst_101 [2] : vector<1x16x16xf32> to vector<1x16xf32>
    %412 = vector.shape_cast %411 : vector<1x16xf32> to vector<1x16x1xf32>
    %413 = tpu.reciprocal %412 {approx = true} : vector<1x16x1xf32> -> vector<1x16x1xf32>
    %414 = vector.broadcast %413 : vector<1x16x1xf32> to vector<1x16x16xf32>
    %415 = arith.mulf %410, %414 : vector<1x16x16xf32>
    %416 = arith.truncf %415 : vector<1x16x16xf32> to vector<1x16x16xbf16>
    "tpu.trace_start"() <{level = 10 : i32, message = "bqk,bkd->bqd"}> : () -> ()
    %cst_102 = arith.constant dense<0.000000e+00> : vector<1x16x4xf32>
    %417 = tpu.matmul %416, %401, %cst_102 {dimension_numbers = #tpu.dot_dimension_numbers<[2], [1], [1], [2], [0, 0, 0, 1, 1, 2], [0], [0]>} : vector<1x16x16xbf16>, vector<1x16x4xbf16>, vector<1x16x4xf32> -> vector<1x16x4xf32>
    "tpu.trace_stop"() : () -> ()
    %418 = arith.truncf %417 : vector<1x16x4xf32> to vector<1x16x4xbf16>
    %419 = vector.extract_strided_slice %314 {offsets = [0, 16], sizes = [16, 4], strides = [1, 1]} : vector<16x96xf32> to vector<16x4xf32>
    %420 = vector.shape_cast %419 : vector<16x4xf32> to vector<1x16x4xf32>
    %421 = arith.truncf %420 : vector<1x16x4xf32> to vector<1x16x4xbf16>
    %422 = vector.extract_strided_slice %314 {offsets = [0, 48], sizes = [16, 4], strides = [1, 1]} : vector<16x96xf32> to vector<16x4xf32>
    %423 = vector.shape_cast %422 : vector<16x4xf32> to vector<1x16x4xf32>
    %424 = arith.truncf %423 : vector<1x16x4xf32> to vector<1x16x4xbf16>
    %425 = vector.extract_strided_slice %314 {offsets = [0, 80], sizes = [16, 4], strides = [1, 1]} : vector<16x96xf32> to vector<16x4xf32>
    %426 = vector.shape_cast %425 : vector<16x4xf32> to vector<1x16x4xf32>
    %427 = arith.truncf %426 : vector<1x16x4xf32> to vector<1x16x4xbf16>
    "tpu.trace_start"() <{level = 10 : i32, message = "bqd,bkd->bqk"}> : () -> ()
    %cst_103 = arith.constant dense<0.000000e+00> : vector<1x16x16xf32>
    %428 = tpu.matmul %421, %424, %cst_103 {dimension_numbers = #tpu.dot_dimension_numbers<[2], [2], [1], [1], [0, 0, 0, 1, 1, 1], [0], [0]>} : vector<1x16x4xbf16>, vector<1x16x4xbf16>, vector<1x16x16xf32> -> vector<1x16x16xf32>
    "tpu.trace_stop"() : () -> ()
    %429 = vector.shape_cast %18 : vector<1x16xf32> to vector<1x1x16xf32>
    %430 = vector.broadcast %429 : vector<1x1x16xf32> to vector<1x16x16xf32>
    %431 = arith.addf %428, %430 : vector<1x16x16xf32>
    %cst_104 = arith.constant dense<0xFF800000> : vector<1x16xf32>
    %432 = vector.multi_reduction <maximumf>, %431, %cst_104 [2] : vector<1x16x16xf32> to vector<1x16xf32>
    %433 = vector.shape_cast %432 : vector<1x16xf32> to vector<1x16x1xf32>
    %434 = vector.broadcast %433 : vector<1x16x1xf32> to vector<1x16x16xf32>
    %435 = arith.subf %431, %434 : vector<1x16x16xf32>
    %436 = math.exp %435 : vector<1x16x16xf32>
    %cst_105 = arith.constant dense<0.000000e+00> : vector<1x16xf32>
    %437 = vector.multi_reduction <add>, %436, %cst_105 [2] : vector<1x16x16xf32> to vector<1x16xf32>
    %438 = vector.shape_cast %437 : vector<1x16xf32> to vector<1x16x1xf32>
    %439 = tpu.reciprocal %438 {approx = true} : vector<1x16x1xf32> -> vector<1x16x1xf32>
    %440 = vector.broadcast %439 : vector<1x16x1xf32> to vector<1x16x16xf32>
    %441 = arith.mulf %436, %440 : vector<1x16x16xf32>
    %442 = arith.truncf %441 : vector<1x16x16xf32> to vector<1x16x16xbf16>
    "tpu.trace_start"() <{level = 10 : i32, message = "bqk,bkd->bqd"}> : () -> ()
    %cst_106 = arith.constant dense<0.000000e+00> : vector<1x16x4xf32>
    %443 = tpu.matmul %442, %427, %cst_106 {dimension_numbers = #tpu.dot_dimension_numbers<[2], [1], [1], [2], [0, 0, 0, 1, 1, 2], [0], [0]>} : vector<1x16x16xbf16>, vector<1x16x4xbf16>, vector<1x16x4xf32> -> vector<1x16x4xf32>
    "tpu.trace_stop"() : () -> ()
    %444 = arith.truncf %443 : vector<1x16x4xf32> to vector<1x16x4xbf16>
    %445 = vector.extract_strided_slice %314 {offsets = [0, 20], sizes = [16, 4], strides = [1, 1]} : vector<16x96xf32> to vector<16x4xf32>
    %446 = vector.shape_cast %445 : vector<16x4xf32> to vector<1x16x4xf32>
    %447 = arith.truncf %446 : vector<1x16x4xf32> to vector<1x16x4xbf16>
    %448 = vector.extract_strided_slice %314 {offsets = [0, 52], sizes = [16, 4], strides = [1, 1]} : vector<16x96xf32> to vector<16x4xf32>
    %449 = vector.shape_cast %448 : vector<16x4xf32> to vector<1x16x4xf32>
    %450 = arith.truncf %449 : vector<1x16x4xf32> to vector<1x16x4xbf16>
    %451 = vector.extract_strided_slice %314 {offsets = [0, 84], sizes = [16, 4], strides = [1, 1]} : vector<16x96xf32> to vector<16x4xf32>
    %452 = vector.shape_cast %451 : vector<16x4xf32> to vector<1x16x4xf32>
    %453 = arith.truncf %452 : vector<1x16x4xf32> to vector<1x16x4xbf16>
    "tpu.trace_start"() <{level = 10 : i32, message = "bqd,bkd->bqk"}> : () -> ()
    %cst_107 = arith.constant dense<0.000000e+00> : vector<1x16x16xf32>
    %454 = tpu.matmul %447, %450, %cst_107 {dimension_numbers = #tpu.dot_dimension_numbers<[2], [2], [1], [1], [0, 0, 0, 1, 1, 1], [0], [0]>} : vector<1x16x4xbf16>, vector<1x16x4xbf16>, vector<1x16x16xf32> -> vector<1x16x16xf32>
    "tpu.trace_stop"() : () -> ()
    %455 = vector.shape_cast %18 : vector<1x16xf32> to vector<1x1x16xf32>
    %456 = vector.broadcast %455 : vector<1x1x16xf32> to vector<1x16x16xf32>
    %457 = arith.addf %454, %456 : vector<1x16x16xf32>
    %cst_108 = arith.constant dense<0xFF800000> : vector<1x16xf32>
    %458 = vector.multi_reduction <maximumf>, %457, %cst_108 [2] : vector<1x16x16xf32> to vector<1x16xf32>
    %459 = vector.shape_cast %458 : vector<1x16xf32> to vector<1x16x1xf32>
    %460 = vector.broadcast %459 : vector<1x16x1xf32> to vector<1x16x16xf32>
    %461 = arith.subf %457, %460 : vector<1x16x16xf32>
    %462 = math.exp %461 : vector<1x16x16xf32>
    %cst_109 = arith.constant dense<0.000000e+00> : vector<1x16xf32>
    %463 = vector.multi_reduction <add>, %462, %cst_109 [2] : vector<1x16x16xf32> to vector<1x16xf32>
    %464 = vector.shape_cast %463 : vector<1x16xf32> to vector<1x16x1xf32>
    %465 = tpu.reciprocal %464 {approx = true} : vector<1x16x1xf32> -> vector<1x16x1xf32>
    %466 = vector.broadcast %465 : vector<1x16x1xf32> to vector<1x16x16xf32>
    %467 = arith.mulf %462, %466 : vector<1x16x16xf32>
    %468 = arith.truncf %467 : vector<1x16x16xf32> to vector<1x16x16xbf16>
    "tpu.trace_start"() <{level = 10 : i32, message = "bqk,bkd->bqd"}> : () -> ()
    %cst_110 = arith.constant dense<0.000000e+00> : vector<1x16x4xf32>
    %469 = tpu.matmul %468, %453, %cst_110 {dimension_numbers = #tpu.dot_dimension_numbers<[2], [1], [1], [2], [0, 0, 0, 1, 1, 2], [0], [0]>} : vector<1x16x16xbf16>, vector<1x16x4xbf16>, vector<1x16x4xf32> -> vector<1x16x4xf32>
    "tpu.trace_stop"() : () -> ()
    %470 = arith.truncf %469 : vector<1x16x4xf32> to vector<1x16x4xbf16>
    %471 = vector.extract_strided_slice %314 {offsets = [0, 24], sizes = [16, 4], strides = [1, 1]} : vector<16x96xf32> to vector<16x4xf32>
    %472 = vector.shape_cast %471 : vector<16x4xf32> to vector<1x16x4xf32>
    %473 = arith.truncf %472 : vector<1x16x4xf32> to vector<1x16x4xbf16>
    %474 = vector.extract_strided_slice %314 {offsets = [0, 56], sizes = [16, 4], strides = [1, 1]} : vector<16x96xf32> to vector<16x4xf32>
    %475 = vector.shape_cast %474 : vector<16x4xf32> to vector<1x16x4xf32>
    %476 = arith.truncf %475 : vector<1x16x4xf32> to vector<1x16x4xbf16>
    %477 = vector.extract_strided_slice %314 {offsets = [0, 88], sizes = [16, 4], strides = [1, 1]} : vector<16x96xf32> to vector<16x4xf32>
    %478 = vector.shape_cast %477 : vector<16x4xf32> to vector<1x16x4xf32>
    %479 = arith.truncf %478 : vector<1x16x4xf32> to vector<1x16x4xbf16>
    "tpu.trace_start"() <{level = 10 : i32, message = "bqd,bkd->bqk"}> : () -> ()
    %cst_111 = arith.constant dense<0.000000e+00> : vector<1x16x16xf32>
    %480 = tpu.matmul %473, %476, %cst_111 {dimension_numbers = #tpu.dot_dimension_numbers<[2], [2], [1], [1], [0, 0, 0, 1, 1, 1], [0], [0]>} : vector<1x16x4xbf16>, vector<1x16x4xbf16>, vector<1x16x16xf32> -> vector<1x16x16xf32>
    "tpu.trace_stop"() : () -> ()
    %481 = vector.shape_cast %18 : vector<1x16xf32> to vector<1x1x16xf32>
    %482 = vector.broadcast %481 : vector<1x1x16xf32> to vector<1x16x16xf32>
    %483 = arith.addf %480, %482 : vector<1x16x16xf32>
    %cst_112 = arith.constant dense<0xFF800000> : vector<1x16xf32>
    %484 = vector.multi_reduction <maximumf>, %483, %cst_112 [2] : vector<1x16x16xf32> to vector<1x16xf32>
    %485 = vector.shape_cast %484 : vector<1x16xf32> to vector<1x16x1xf32>
    %486 = vector.broadcast %485 : vector<1x16x1xf32> to vector<1x16x16xf32>
    %487 = arith.subf %483, %486 : vector<1x16x16xf32>
    %488 = math.exp %487 : vector<1x16x16xf32>
    %cst_113 = arith.constant dense<0.000000e+00> : vector<1x16xf32>
    %489 = vector.multi_reduction <add>, %488, %cst_113 [2] : vector<1x16x16xf32> to vector<1x16xf32>
    %490 = vector.shape_cast %489 : vector<1x16xf32> to vector<1x16x1xf32>
    %491 = tpu.reciprocal %490 {approx = true} : vector<1x16x1xf32> -> vector<1x16x1xf32>
    %492 = vector.broadcast %491 : vector<1x16x1xf32> to vector<1x16x16xf32>
    %493 = arith.mulf %488, %492 : vector<1x16x16xf32>
    %494 = arith.truncf %493 : vector<1x16x16xf32> to vector<1x16x16xbf16>
    "tpu.trace_start"() <{level = 10 : i32, message = "bqk,bkd->bqd"}> : () -> ()
    %cst_114 = arith.constant dense<0.000000e+00> : vector<1x16x4xf32>
    %495 = tpu.matmul %494, %479, %cst_114 {dimension_numbers = #tpu.dot_dimension_numbers<[2], [1], [1], [2], [0, 0, 0, 1, 1, 2], [0], [0]>} : vector<1x16x16xbf16>, vector<1x16x4xbf16>, vector<1x16x4xf32> -> vector<1x16x4xf32>
    "tpu.trace_stop"() : () -> ()
    %496 = arith.truncf %495 : vector<1x16x4xf32> to vector<1x16x4xbf16>
    %497 = vector.extract_strided_slice %314 {offsets = [0, 28], sizes = [16, 4], strides = [1, 1]} : vector<16x96xf32> to vector<16x4xf32>
    %498 = vector.shape_cast %497 : vector<16x4xf32> to vector<1x16x4xf32>
    %499 = arith.truncf %498 : vector<1x16x4xf32> to vector<1x16x4xbf16>
    %500 = vector.extract_strided_slice %314 {offsets = [0, 60], sizes = [16, 4], strides = [1, 1]} : vector<16x96xf32> to vector<16x4xf32>
    %501 = vector.shape_cast %500 : vector<16x4xf32> to vector<1x16x4xf32>
    %502 = arith.truncf %501 : vector<1x16x4xf32> to vector<1x16x4xbf16>
    %503 = vector.extract_strided_slice %314 {offsets = [0, 92], sizes = [16, 4], strides = [1, 1]} : vector<16x96xf32> to vector<16x4xf32>
    %504 = vector.shape_cast %503 : vector<16x4xf32> to vector<1x16x4xf32>
    %505 = arith.truncf %504 : vector<1x16x4xf32> to vector<1x16x4xbf16>
    "tpu.trace_start"() <{level = 10 : i32, message = "bqd,bkd->bqk"}> : () -> ()
    %cst_115 = arith.constant dense<0.000000e+00> : vector<1x16x16xf32>
    %506 = tpu.matmul %499, %502, %cst_115 {dimension_numbers = #tpu.dot_dimension_numbers<[2], [2], [1], [1], [0, 0, 0, 1, 1, 1], [0], [0]>} : vector<1x16x4xbf16>, vector<1x16x4xbf16>, vector<1x16x16xf32> -> vector<1x16x16xf32>
    "tpu.trace_stop"() : () -> ()
    %507 = vector.shape_cast %18 : vector<1x16xf32> to vector<1x1x16xf32>
    %508 = vector.broadcast %507 : vector<1x1x16xf32> to vector<1x16x16xf32>
    %509 = arith.addf %506, %508 : vector<1x16x16xf32>
    %cst_116 = arith.constant dense<0xFF800000> : vector<1x16xf32>
    %510 = vector.multi_reduction <maximumf>, %509, %cst_116 [2] : vector<1x16x16xf32> to vector<1x16xf32>
    %511 = vector.shape_cast %510 : vector<1x16xf32> to vector<1x16x1xf32>
    %512 = vector.broadcast %511 : vector<1x16x1xf32> to vector<1x16x16xf32>
    %513 = arith.subf %509, %512 : vector<1x16x16xf32>
    %514 = math.exp %513 : vector<1x16x16xf32>
    %cst_117 = arith.constant dense<0.000000e+00> : vector<1x16xf32>
    %515 = vector.multi_reduction <add>, %514, %cst_117 [2] : vector<1x16x16xf32> to vector<1x16xf32>
    %516 = vector.shape_cast %515 : vector<1x16xf32> to vector<1x16x1xf32>
    %517 = tpu.reciprocal %516 {approx = true} : vector<1x16x1xf32> -> vector<1x16x1xf32>
    %518 = vector.broadcast %517 : vector<1x16x1xf32> to vector<1x16x16xf32>
    %519 = arith.mulf %514, %518 : vector<1x16x16xf32>
    %520 = arith.truncf %519 : vector<1x16x16xf32> to vector<1x16x16xbf16>
    "tpu.trace_start"() <{level = 10 : i32, message = "bqk,bkd->bqd"}> : () -> ()
    %cst_118 = arith.constant dense<0.000000e+00> : vector<1x16x4xf32>
    %521 = tpu.matmul %520, %505, %cst_118 {dimension_numbers = #tpu.dot_dimension_numbers<[2], [1], [1], [2], [0, 0, 0, 1, 1, 2], [0], [0]>} : vector<1x16x16xbf16>, vector<1x16x4xbf16>, vector<1x16x4xf32> -> vector<1x16x4xf32>
    "tpu.trace_stop"() : () -> ()
    %522 = arith.truncf %521 : vector<1x16x4xf32> to vector<1x16x4xbf16>
    %523 = tpu.concatenate %340, %366, %392, %418, %444, %470, %496, %522 in 2 : vector<1x16x4xbf16>, vector<1x16x4xbf16>, vector<1x16x4xbf16>, vector<1x16x4xbf16>, vector<1x16x4xbf16>, vector<1x16x4xbf16>, vector<1x16x4xbf16>, vector<1x16x4xbf16> -> vector<1x16x32xbf16>
    %524 = vector.shape_cast %523 : vector<1x16x32xbf16> to vector<16x32xbf16>
    %c1_119 = arith.constant 1 : index
    %c0_120 = arith.constant 0 : index
    %c0_121 = arith.constant 0 : index
    %525 = vector.load %arg6[%c1_119, %c0_120, %c0_121] : memref<2x32x32xbf16, #tpu.memory_space<vmem>>, vector<1x32x32xbf16>
    %526 = vector.shape_cast %525 : vector<1x32x32xbf16> to vector<32x32xbf16>
    %cst_122 = arith.constant dense<0.000000e+00> : vector<16x32xf32>
    %527 = tpu.matmul %524, %526, %cst_122 {dimension_numbers = #tpu.dot_dimension_numbers<[1], [0], [0], [1], [0, 0, 1, 1], [], []>} : vector<16x32xbf16>, vector<32x32xbf16>, vector<16x32xf32> -> vector<16x32xf32>
    %c1_123 = arith.constant 1 : index
    %c0_124 = arith.constant 0 : index
    %528 = vector.load %arg7[%c1_123, %c0_124] : memref<2x32xf32, #tpu.memory_space<vmem>>, vector<1x32xf32>
    %529 = vector.broadcast %528 : vector<1x32xf32> to vector<16x32xf32>
    %530 = arith.addf %527, %529 : vector<16x32xf32>
    %531 = arith.addf %307, %530 : vector<16x32xf32>
    %c1_125 = arith.constant 1 : index
    %c0_126 = arith.constant 0 : index
    %532 = vector.load %arg8[%c1_125, %c0_126] : memref<2x32xf32, #tpu.memory_space<vmem>>, vector<1x32xf32>
    %c1_127 = arith.constant 1 : index
    %c0_128 = arith.constant 0 : index
    %533 = vector.load %arg9[%c1_127, %c0_128] : memref<2x32xf32, #tpu.memory_space<vmem>>, vector<1x32xf32>
    %cst_129 = arith.constant dense<0.000000e+00> : vector<16xf32>
    %534 = vector.multi_reduction <add>, %531, %cst_129 [1] : vector<16x32xf32> to vector<16xf32>
    %535 = vector.shape_cast %534 : vector<16xf32> to vector<16x1xf32>
    %cst_130 = arith.constant 3.200000e+01 : f32
    %536 = vector.broadcast %cst_130 : f32 to vector<16x1xf32>
    %537 = arith.divf %535, %536 : vector<16x1xf32>
    %538 = vector.broadcast %537 : vector<16x1xf32> to vector<16x32xf32>
    %539 = arith.subf %531, %538 : vector<16x32xf32>
    %540 = arith.mulf %539, %539 : vector<16x32xf32>
    %cst_131 = arith.constant dense<0.000000e+00> : vector<16xf32>
    %541 = vector.multi_reduction <add>, %540, %cst_131 [1] : vector<16x32xf32> to vector<16xf32>
    %542 = vector.shape_cast %541 : vector<16xf32> to vector<16x1xf32>
    %cst_132 = arith.constant 3.200000e+01 : f32
    %543 = vector.broadcast %cst_132 : f32 to vector<16x1xf32>
    %544 = arith.divf %542, %543 : vector<16x1xf32>
    %545 = vector.broadcast %537 : vector<16x1xf32> to vector<16x32xf32>
    %546 = arith.subf %531, %545 : vector<16x32xf32>
    %cst_133 = arith.constant 9.99999974E-6 : f32
    %547 = vector.broadcast %cst_133 : f32 to vector<16x1xf32>
    %548 = arith.addf %544, %547 : vector<16x1xf32>
    %549 = math.rsqrt %548 : vector<16x1xf32>
    %550 = vector.broadcast %549 : vector<16x1xf32> to vector<16x32xf32>
    %551 = arith.mulf %546, %550 : vector<16x32xf32>
    %552 = vector.broadcast %532 : vector<1x32xf32> to vector<16x32xf32>
    %553 = arith.mulf %551, %552 : vector<16x32xf32>
    %554 = vector.broadcast %533 : vector<1x32xf32> to vector<16x32xf32>
    %555 = arith.addf %553, %554 : vector<16x32xf32>
    %556 = arith.truncf %555 : vector<16x32xf32> to vector<16x32xbf16>
    %c1_134 = arith.constant 1 : index
    %c0_135 = arith.constant 0 : index
    %c0_136 = arith.constant 0 : index
    %557 = vector.load %arg10[%c1_134, %c0_135, %c0_136] : memref<2x32x128xbf16, #tpu.memory_space<vmem>>, vector<1x32x128xbf16>
    %558 = vector.shape_cast %557 : vector<1x32x128xbf16> to vector<32x128xbf16>
    %cst_137 = arith.constant dense<0.000000e+00> : vector<16x128xf32>
    %559 = tpu.matmul %556, %558, %cst_137 {dimension_numbers = #tpu.dot_dimension_numbers<[1], [0], [0], [1], [0, 0, 1, 1], [], []>} : vector<16x32xbf16>, vector<32x128xbf16>, vector<16x128xf32> -> vector<16x128xf32>
    %c1_138 = arith.constant 1 : index
    %c0_139 = arith.constant 0 : index
    %560 = vector.load %arg11[%c1_138, %c0_139] : memref<2x128xf32, #tpu.memory_space<vmem>>, vector<1x128xf32>
    %561 = vector.broadcast %560 : vector<1x128xf32> to vector<16x128xf32>
    %562 = arith.addf %559, %561 : vector<16x128xf32>
    %cst_140 = arith.constant 0.000000e+00 : f32
    %563 = vector.broadcast %cst_140 : f32 to vector<16x128xf32>
    %564 = arith.maximumf %562, %563 : vector<16x128xf32>
    %565 = arith.truncf %564 : vector<16x128xf32> to vector<16x128xbf16>
    %c1_141 = arith.constant 1 : index
    %c0_142 = arith.constant 0 : index
    %c0_143 = arith.constant 0 : index
    %566 = vector.load %arg12[%c1_141, %c0_142, %c0_143] : memref<2x128x32xbf16, #tpu.memory_space<vmem>>, vector<1x128x32xbf16>
    %567 = vector.shape_cast %566 : vector<1x128x32xbf16> to vector<128x32xbf16>
    %cst_144 = arith.constant dense<0.000000e+00> : vector<16x32xf32>
    %568 = tpu.matmul %565, %567, %cst_144 {dimension_numbers = #tpu.dot_dimension_numbers<[1], [0], [0], [1], [0, 0, 1, 1], [], []>} : vector<16x128xbf16>, vector<128x32xbf16>, vector<16x32xf32> -> vector<16x32xf32>
    %c1_145 = arith.constant 1 : index
    %c0_146 = arith.constant 0 : index
    %569 = vector.load %arg13[%c1_145, %c0_146] : memref<2x32xf32, #tpu.memory_space<vmem>>, vector<1x32xf32>
    %570 = vector.broadcast %569 : vector<1x32xf32> to vector<16x32xf32>
    %571 = arith.addf %568, %570 : vector<16x32xf32>
    %572 = arith.addf %555, %571 : vector<16x32xf32>
    %c1_147 = arith.constant 1 : index
    %c0_148 = arith.constant 0 : index
    %573 = vector.load %arg14[%c1_147, %c0_148] : memref<2x32xf32, #tpu.memory_space<vmem>>, vector<1x32xf32>
    %c1_149 = arith.constant 1 : index
    %c0_150 = arith.constant 0 : index
    %574 = vector.load %arg15[%c1_149, %c0_150] : memref<2x32xf32, #tpu.memory_space<vmem>>, vector<1x32xf32>
    %cst_151 = arith.constant dense<0.000000e+00> : vector<16xf32>
    %575 = vector.multi_reduction <add>, %572, %cst_151 [1] : vector<16x32xf32> to vector<16xf32>
    %576 = vector.shape_cast %575 : vector<16xf32> to vector<16x1xf32>
    %cst_152 = arith.constant 3.200000e+01 : f32
    %577 = vector.broadcast %cst_152 : f32 to vector<16x1xf32>
    %578 = arith.divf %576, %577 : vector<16x1xf32>
    %579 = vector.broadcast %578 : vector<16x1xf32> to vector<16x32xf32>
    %580 = arith.subf %572, %579 : vector<16x32xf32>
    %581 = arith.mulf %580, %580 : vector<16x32xf32>
    %cst_153 = arith.constant dense<0.000000e+00> : vector<16xf32>
    %582 = vector.multi_reduction <add>, %581, %cst_153 [1] : vector<16x32xf32> to vector<16xf32>
    %583 = vector.shape_cast %582 : vector<16xf32> to vector<16x1xf32>
    %cst_154 = arith.constant 3.200000e+01 : f32
    %584 = vector.broadcast %cst_154 : f32 to vector<16x1xf32>
    %585 = arith.divf %583, %584 : vector<16x1xf32>
    %586 = vector.broadcast %578 : vector<16x1xf32> to vector<16x32xf32>
    %587 = arith.subf %572, %586 : vector<16x32xf32>
    %cst_155 = arith.constant 9.99999974E-6 : f32
    %588 = vector.broadcast %cst_155 : f32 to vector<16x1xf32>
    %589 = arith.addf %585, %588 : vector<16x1xf32>
    %590 = math.rsqrt %589 : vector<16x1xf32>
    %591 = vector.broadcast %590 : vector<16x1xf32> to vector<16x32xf32>
    %592 = arith.mulf %587, %591 : vector<16x32xf32>
    %593 = vector.broadcast %573 : vector<1x32xf32> to vector<16x32xf32>
    %594 = arith.mulf %592, %593 : vector<16x32xf32>
    %595 = vector.broadcast %574 : vector<1x32xf32> to vector<16x32xf32>
    %596 = arith.addf %594, %595 : vector<16x32xf32>
    %597 = vector.shape_cast %596 : vector<16x32xf32> to vector<1x16x32xf32>
    %598 = vector.extract_strided_slice %597 {offsets = [0, 8, 0], sizes = [1, 1, 32], strides = [1, 1, 1]} : vector<1x16x32xf32> to vector<1x1x32xf32>
    %599 = vector.shape_cast %598 : vector<1x1x32xf32> to vector<1x32xf32>
    %600 = arith.truncf %599 : vector<1x32xf32> to vector<1x32xbf16>
    %c0_156 = arith.constant 0 : index
    %c0_157 = arith.constant 0 : index
    %601 = vector.load %arg16[%c0_156, %c0_157] : memref<32x32xbf16, #tpu.memory_space<vmem>>, vector<32x32xbf16>
    %cst_158 = arith.constant dense<0.000000e+00> : vector<1x32xf32>
    %602 = tpu.matmul %600, %601, %cst_158 {dimension_numbers = #tpu.dot_dimension_numbers<[1], [0], [0], [1], [0, 0, 1, 1], [], []>} : vector<1x32xbf16>, vector<32x32xbf16>, vector<1x32xf32> -> vector<1x32xf32>
    %c0_159 = arith.constant 0 : index
    %c0_160 = arith.constant 0 : index
    %603 = vector.load %arg17[%c0_159, %c0_160] : memref<1x32xf32, #tpu.memory_space<vmem>>, vector<1x32xf32>
    %604 = arith.addf %602, %603 : vector<1x32xf32>
    %cst_161 = arith.constant 0.000000e+00 : f32
    %605 = vector.broadcast %cst_161 : f32 to vector<1x32xf32>
    %606 = arith.maximumf %604, %605 : vector<1x32xf32>
    %c0_162 = arith.constant 0 : index
    %c0_163 = arith.constant 0 : index
    %607 = vector.load %arg18[%c0_162, %c0_163] : memref<1x32xf32, #tpu.memory_space<vmem>>, vector<1x32xf32>
    %608 = arith.mulf %606, %607 : vector<1x32xf32>
    %cst_164 = arith.constant dense<0.000000e+00> : vector<1xf32>
    %609 = vector.multi_reduction <add>, %608, %cst_164 [1] : vector<1x32xf32> to vector<1xf32>
    %610 = vector.shape_cast %609 : vector<1xf32> to vector<1x1xf32>
    %c0_165 = arith.constant 0 : index
    %c0_166 = arith.constant 0 : index
    %611 = vector.load %arg19[%c0_165, %c0_166] : memref<1x1xf32, #tpu.memory_space<vmem>>, vector<1x1xf32>
    %612 = arith.addf %610, %611 : vector<1x1xf32>
    %613 = arith.negf %612 : vector<1x1xf32>
    %614 = math.exp %613 : vector<1x1xf32>
    %cst_167 = arith.constant 1.000000e+00 : f32
    %615 = vector.broadcast %cst_167 : f32 to vector<1x1xf32>
    %616 = arith.addf %615, %614 : vector<1x1xf32>
    %617 = arith.divf %615, %616 : vector<1x1xf32>
    %618 = vector.shape_cast %617 : vector<1x1xf32> to vector<1x1x1xf32>
    %c0_168 = arith.constant 0 : index
    %c0_169 = arith.constant 0 : index
    %c0_170 = arith.constant 0 : index
    %619 = vector.load %arg20[%c0_168, %c0_169, %c0_170] : memref<1x1x1xf32, #tpu.memory_space<vmem>>, vector<1x1x1xf32>
    tpu.vector_store %arg20[%c0_168, %c0_169, %c0_170], %618 {strides = array<i32>} : memref<1x1x1xf32, #tpu.memory_space<vmem>>, vector<1x1x1xf32>,
    return
  }
  func.func @transform_0(%arg0: i32) -> (i32, i32, i32) {
    %c0_i32 = arith.constant 0 : i32
    %c0_i32_0 = arith.constant 0 : i32
    %c0_i32_1 = arith.constant 0 : i32
    return %arg0, %c0_i32, %c0_i32_0 : i32, i32, i32
  }
  func.func @transform_1(%arg0: i32) -> (i32, i32) {
    %c0_i32 = arith.constant 0 : i32
    %c0_i32_0 = arith.constant 0 : i32
    %c0_i32_1 = arith.constant 0 : i32
    return %c0_i32, %c0_i32_0 : i32, i32
  }
  func.func @transform_2(%arg0: i32) -> (i32, i32) {
    %c0_i32 = arith.constant 0 : i32
    %c0_i32_0 = arith.constant 0 : i32
    %c0_i32_1 = arith.constant 0 : i32
    return %c0_i32, %c0_i32_0 : i32, i32
  }
  func.func @transform_3(%arg0: i32) -> (i32, i32, i32) {
    %c0_i32 = arith.constant 0 : i32
    %c0_i32_0 = arith.constant 0 : i32
    %c0_i32_1 = arith.constant 0 : i32
    %c0_i32_2 = arith.constant 0 : i32
    return %c0_i32, %c0_i32_0, %c0_i32_1 : i32, i32, i32
  }
  func.func @transform_4(%arg0: i32) -> (i32, i32) {
    %c0_i32 = arith.constant 0 : i32
    %c0_i32_0 = arith.constant 0 : i32
    %c0_i32_1 = arith.constant 0 : i32
    return %c0_i32, %c0_i32_0 : i32, i32
  }
  func.func @transform_5(%arg0: i32) -> (i32, i32, i32) {
    %c0_i32 = arith.constant 0 : i32
    %c0_i32_0 = arith.constant 0 : i32
    %c0_i32_1 = arith.constant 0 : i32
    %c0_i32_2 = arith.constant 0 : i32
    return %c0_i32, %c0_i32_0, %c0_i32_1 : i32, i32, i32
  }
  func.func @transform_6(%arg0: i32) -> (i32, i32) {
    %c0_i32 = arith.constant 0 : i32
    %c0_i32_0 = arith.constant 0 : i32
    %c0_i32_1 = arith.constant 0 : i32
    return %c0_i32, %c0_i32_0 : i32, i32
  }
  func.func @transform_7(%arg0: i32) -> (i32, i32) {
    %c0_i32 = arith.constant 0 : i32
    %c0_i32_0 = arith.constant 0 : i32
    %c0_i32_1 = arith.constant 0 : i32
    return %c0_i32, %c0_i32_0 : i32, i32
  }
  func.func @transform_8(%arg0: i32) -> (i32, i32) {
    %c0_i32 = arith.constant 0 : i32
    %c0_i32_0 = arith.constant 0 : i32
    %c0_i32_1 = arith.constant 0 : i32
    return %c0_i32, %c0_i32_0 : i32, i32
  }
  func.func @transform_9(%arg0: i32) -> (i32, i32, i32) {
    %c0_i32 = arith.constant 0 : i32
    %c0_i32_0 = arith.constant 0 : i32
    %c0_i32_1 = arith.constant 0 : i32
    %c0_i32_2 = arith.constant 0 : i32
    return %c0_i32, %c0_i32_0, %c0_i32_1 : i32, i32, i32
  }
  func.func @transform_10(%arg0: i32) -> (i32, i32) {
    %c0_i32 = arith.constant 0 : i32
    %c0_i32_0 = arith.constant 0 : i32
    %c0_i32_1 = arith.constant 0 : i32
    return %c0_i32, %c0_i32_0 : i32, i32
  }
  func.func @transform_11(%arg0: i32) -> (i32, i32, i32) {
    %c0_i32 = arith.constant 0 : i32
    %c0_i32_0 = arith.constant 0 : i32
    %c0_i32_1 = arith.constant 0 : i32
    %c0_i32_2 = arith.constant 0 : i32
    return %c0_i32, %c0_i32_0, %c0_i32_1 : i32, i32, i32
  }
  func.func @transform_12(%arg0: i32) -> (i32, i32) {
    %c0_i32 = arith.constant 0 : i32
    %c0_i32_0 = arith.constant 0 : i32
    %c0_i32_1 = arith.constant 0 : i32
    return %c0_i32, %c0_i32_0 : i32, i32
  }
  func.func @transform_13(%arg0: i32) -> (i32, i32) {
    %c0_i32 = arith.constant 0 : i32
    %c0_i32_0 = arith.constant 0 : i32
    %c0_i32_1 = arith.constant 0 : i32
    return %c0_i32, %c0_i32_0 : i32, i32
  }
  func.func @transform_14(%arg0: i32) -> (i32, i32) {
    %c0_i32 = arith.constant 0 : i32
    %c0_i32_0 = arith.constant 0 : i32
    %c0_i32_1 = arith.constant 0 : i32
    return %c0_i32, %c0_i32_0 : i32, i32
  }
  func.func @transform_15(%arg0: i32) -> (i32, i32) {
    %c0_i32 = arith.constant 0 : i32
    %c0_i32_0 = arith.constant 0 : i32
    %c0_i32_1 = arith.constant 0 : i32
    return %c0_i32, %c0_i32_0 : i32, i32
  }
  func.func @transform_16(%arg0: i32) -> (i32, i32) {
    %c0_i32 = arith.constant 0 : i32
    %c0_i32_0 = arith.constant 0 : i32
    %c0_i32_1 = arith.constant 0 : i32
    return %c0_i32, %c0_i32_0 : i32, i32
  }
  func.func @transform_17(%arg0: i32) -> (i32, i32) {
    %c0_i32 = arith.constant 0 : i32
    %c0_i32_0 = arith.constant 0 : i32
    %c0_i32_1 = arith.constant 0 : i32
    return %c0_i32, %c0_i32_0 : i32, i32
  }
  func.func @transform_18(%arg0: i32) -> (i32, i32) {
    %c0_i32 = arith.constant 0 : i32
    %c0_i32_0 = arith.constant 0 : i32
    %c0_i32_1 = arith.constant 0 : i32
    return %c0_i32, %c0_i32_0 : i32, i32
  }
  func.func @transform_19(%arg0: i32) -> (i32, i32, i32) {
    %c0_i32 = arith.constant 0 : i32
    %c0_i32_0 = arith.constant 0 : i32
    %c0_i32_1 = arith.constant 0 : i32
    return %arg0, %c0_i32, %c0_i32_0 : i32, i32, i32
  }
}

module attributes {stable_mosaic.version = 11 : i64} {
  func.func @kernel(%arg0: i32, %arg1: memref<1x8x32xf32, #tpu.memory_space<vmem>>, %arg2: memref<16x32xf32, #tpu.memory_space<vmem>>, %arg3: memref<1x32xf32, #tpu.memory_space<vmem>>, %arg4: memref<2x32x96xbf16, #tpu.memory_space<vmem>>, %arg5: memref<2x96xf32, #tpu.memory_space<vmem>>, %arg6: memref<2x32x32xbf16, #tpu.memory_space<vmem>>, %arg7: memref<2x32xf32, #tpu.memory_space<vmem>>, %arg8: memref<2x32xf32, #tpu.memory_space<vmem>>, %arg9: memref<2x32xf32, #tpu.memory_space<vmem>>, %arg10: memref<2x32x128xbf16, #tpu.memory_space<vmem>>, %arg11: memref<2x128xf32, #tpu.memory_space<vmem>>, %arg12: memref<2x128x32xbf16, #tpu.memory_space<vmem>>, %arg13: memref<2x32xf32, #tpu.memory_space<vmem>>, %arg14: memref<2x32xf32, #tpu.memory_space<vmem>>, %arg15: memref<2x32xf32, #tpu.memory_space<vmem>>, %arg16: memref<32x32xbf16, #tpu.memory_space<vmem>>, %arg17: memref<1x32xf32, #tpu.memory_space<vmem>>, %arg18: memref<1x32xf32, #tpu.memory_space<vmem>>, %arg19: memref<1x1xf32, #tpu.memory_space<vmem>>, %arg20: memref<1x1x1xf32, #tpu.memory_space<vmem>>) attributes {dimension_semantics = [#tpu.dimension_semantics<parallel>], iteration_bounds = array<i64: 2>, scalar_prefetch = 0 : i64, scratch_operands = 0 : i64, tpu.core_type = #tpu.core_type<tc>, window_params = [{transform_indices = @transform_0, window_bounds = array<i64: 1, 8, 32>}, {pipeline_mode = #tpu.pipeline_mode<synchronous>, transform_indices = @transform_1, window_bounds = array<i64: 16, 32>}, {pipeline_mode = #tpu.pipeline_mode<synchronous>, transform_indices = @transform_2, window_bounds = array<i64: 1, 32>}, {pipeline_mode = #tpu.pipeline_mode<synchronous>, transform_indices = @transform_3, window_bounds = array<i64: 2, 32, 96>}, {pipeline_mode = #tpu.pipeline_mode<synchronous>, transform_indices = @transform_4, window_bounds = array<i64: 2, 96>}, {pipeline_mode = #tpu.pipeline_mode<synchronous>, transform_indices = @transform_5, window_bounds = array<i64: 2, 32, 32>}, {pipeline_mode = #tpu.pipeline_mode<synchronous>, transform_indices = @transform_6, window_bounds = array<i64: 2, 32>}, {pipeline_mode = #tpu.pipeline_mode<synchronous>, transform_indices = @transform_7, window_bounds = array<i64: 2, 32>}, {pipeline_mode = #tpu.pipeline_mode<synchronous>, transform_indices = @transform_8, window_bounds = array<i64: 2, 32>}, {pipeline_mode = #tpu.pipeline_mode<synchronous>, transform_indices = @transform_9, window_bounds = array<i64: 2, 32, 128>}, {pipeline_mode = #tpu.pipeline_mode<synchronous>, transform_indices = @transform_10, window_bounds = array<i64: 2, 128>}, {pipeline_mode = #tpu.pipeline_mode<synchronous>, transform_indices = @transform_11, window_bounds = array<i64: 2, 128, 32>}, {pipeline_mode = #tpu.pipeline_mode<synchronous>, transform_indices = @transform_12, window_bounds = array<i64: 2, 32>}, {pipeline_mode = #tpu.pipeline_mode<synchronous>, transform_indices = @transform_13, window_bounds = array<i64: 2, 32>}, {pipeline_mode = #tpu.pipeline_mode<synchronous>, transform_indices = @transform_14, window_bounds = array<i64: 2, 32>}, {pipeline_mode = #tpu.pipeline_mode<synchronous>, transform_indices = @transform_15, window_bounds = array<i64: 32, 32>}, {pipeline_mode = #tpu.pipeline_mode<synchronous>, transform_indices = @transform_16, window_bounds = array<i64: 1, 32>}, {pipeline_mode = #tpu.pipeline_mode<synchronous>, transform_indices = @transform_17, window_bounds = array<i64: 1, 32>}, {pipeline_mode = #tpu.pipeline_mode<synchronous>, transform_indices = @transform_18, window_bounds = array<i64: 1, 1>}, {transform_indices = @transform_19, window_bounds = array<i64: 1, 1, 1>}]} {
    %c0 = arith.constant 0 : index
    %c0_0 = arith.constant 0 : index
    %0 = vector.load %arg2[%c0, %c0_0] : memref<16x32xf32, #tpu.memory_space<vmem>>, vector<16x32xf32>
    %c0_1 = arith.constant 0 : index
    %c0_2 = arith.constant 0 : index
    %c0_3 = arith.constant 0 : index
    %1 = vector.load %arg1[%c0_1, %c0_2, %c0_3] : memref<1x8x32xf32, #tpu.memory_space<vmem>>, vector<1x8x32xf32>
    %2 = vector.extract_strided_slice %0 {offsets = [0, 0], sizes = [8, 32], strides = [1, 1]} : vector<16x32xf32> to vector<8x32xf32>
    %3 = vector.shape_cast %2 : vector<8x32xf32> to vector<1x8x32xf32>
    %4 = arith.addf %1, %3 : vector<1x8x32xf32>
    %c0_4 = arith.constant 0 : index
    %c0_5 = arith.constant 0 : index
    %5 = vector.load %arg3[%c0_4, %c0_5] : memref<1x32xf32, #tpu.memory_space<vmem>>, vector<1x32xf32>
    %6 = vector.extract_strided_slice %0 {offsets = [8, 0], sizes = [1, 32], strides = [1, 1]} : vector<16x32xf32> to vector<1x32xf32>
    %7 = arith.addf %5, %6 : vector<1x32xf32>
    %8 = vector.shape_cast %7 : vector<1x32xf32> to vector<1x1x32xf32>
    %9 = vector.shape_cast %8 : vector<1x1x32xf32> to vector<1x1x32xf32>
    %10 = vector.broadcast %9 : vector<1x1x32xf32> to vector<1x8x32xf32>
    %11 = tpu.concatenate %4, %10 in 1 : vector<1x8x32xf32>, vector<1x8x32xf32> -> vector<1x16x32xf32>
    %12 = vector.shape_cast %11 : vector<1x16x32xf32> to vector<16x32xf32>
    %13 = tpu.iota {dimensions = array<i32: 1>} : vector<1x16xi32>
    %c9_i32 = arith.constant 9 : i32
    %14 = vector.broadcast %c9_i32 : i32 to vector<1x16xi32>
    %15 = arith.cmpi slt, %13, %14 : vector<1x16xi32>
    %cst = arith.constant 0.000000e+00 : f32
    %cst_6 = arith.constant -1.000000e+30 : f32
    %16 = vector.broadcast %cst : f32 to vector<1x16xf32>
    %17 = vector.broadcast %cst_6 : f32 to vector<1x16xf32>
    %18 = arith.select %15, %16, %17 : vector<1x16xi1>, vector<1x16xf32>
    %19 = arith.truncf %12 : vector<16x32xf32> to vector<16x32xbf16>
    %c0_7 = arith.constant 0 : index
    %c0_8 = arith.constant 0 : index
    %c0_9 = arith.constant 0 : index
    %20 = vector.load %arg4[%c0_7, %c0_8, %c0_9] : memref<2x32x96xbf16, #tpu.memory_space<vmem>>, vector<1x32x96xbf16>
    %21 = vector.shape_cast %20 : vector<1x32x96xbf16> to vector<32x96xbf16>
    %cst_10 = arith.constant dense<0.000000e+00> : vector<16x96xf32>
    %22 = tpu.matmul %19, %21, %cst_10 {dimension_numbers = #tpu.dot_dimension_numbers<[1], [0], [0], [1], [0, 0, 1, 1], [], []>} : vector<16x32xbf16>, vector<32x96xbf16>, vector<16x96xf32> -> vector<16x96xf32>
    %c0_11 = arith.constant 0 : index
    %c0_12 = arith.constant 0 : index
    %23 = vector.load %arg5[%c0_11, %c0_12] : memref<2x96xf32, #tpu.memory_space<vmem>>, vector<1x96xf32>
    %24 = vector.broadcast %23 : vector<1x96xf32> to vector<16x96xf32>
    %25 = arith.addf %22, %24 : vector<16x96xf32>
    %26 = vector.extract_strided_slice %25 {offsets = [0, 0], sizes = [16, 4], strides = [1, 1]} : vector<16x96xf32> to vector<16x4xf32>
    %27 = vector.shape_cast %26 : vector<16x4xf32> to vector<1x16x4xf32>
    %28 = arith.truncf %27 : vector<1x16x4xf32> to vector<1x16x4xbf16>
    %29 = vector.extract_strided_slice %25 {offsets = [0, 32], sizes = [16, 4], strides = [1, 1]} : vector<16x96xf32> to vector<16x4xf32>
    %30 = vector.shape_cast %29 : vector<16x4xf32> to vector<1x16x4xf32>
    %31 = arith.truncf %30 : vector<1x16x4xf32> to vector<1x16x4xbf16>
    %32 = vector.extract_strided_slice %25 {offsets = [0, 64], sizes = [16, 4], strides = [1, 1]} : vector<16x96xf32> to vector<16x4xf32>
    %33 = vector.shape_cast %32 : vector<16x4xf32> to vector<1x16x4xf32>
    %34 = arith.truncf %33 : vector<1x16x4xf32> to vector<1x16x4xbf16>
    "tpu.trace_start"() <{level = 10 : i32, message = "bqd,bkd->bqk"}> : () -> ()
    %cst_13 = arith.constant dense<0.000000e+00> : vector<1x16x16xf32>
    %35 = tpu.matmul %28, %31, %cst_13 {dimension_numbers = #tpu.dot_dimension_numbers<[2], [2], [1], [1], [0, 0, 0, 1, 1, 1], [0], [0]>} : vector<1x16x4xbf16>, vector<1x16x4xbf16>, vector<1x16x16xf32> -> vector<1x16x16xf32>
    "tpu.trace_stop"() : () -> ()
    %36 = vector.shape_cast %18 : vector<1x16xf32> to vector<1x1x16xf32>
    %37 = vector.broadcast %36 : vector<1x1x16xf32> to vector<1x16x16xf32>
    %38 = arith.addf %35, %37 : vector<1x16x16xf32>
    %cst_14 = arith.constant dense<0xFF800000> : vector<1x16xf32>
    %39 = vector.multi_reduction <maximumf>, %38, %cst_14 [2] : vector<1x16x16xf32> to vector<1x16xf32>
    %40 = vector.shape_cast %39 : vector<1x16xf32> to vector<1x16x1xf32>
    %41 = vector.broadcast %40 : vector<1x16x1xf32> to vector<1x16x16xf32>
    %42 = arith.subf %38, %41 : vector<1x16x16xf32>
    %43 = math.exp %42 : vector<1x16x16xf32>
    %cst_15 = arith.constant dense<0.000000e+00> : vector<1x16xf32>
    %44 = vector.multi_reduction <add>, %43, %cst_15 [2] : vector<1x16x16xf32> to vector<1x16xf32>
    %45 = vector.shape_cast %44 : vector<1x16xf32> to vector<1x16x1xf32>
    %46 = tpu.reciprocal %45 {approx = true} : vector<1x16x1xf32> -> vector<1x16x1xf32>
    %47 = vector.broadcast %46 : vector<1x16x1xf32> to vector<1x16x16xf32>
    %48 = arith.mulf %43, %47 : vector<1x16x16xf32>
    %49 = arith.truncf %48 : vector<1x16x16xf32> to vector<1x16x16xbf16>
    "tpu.trace_start"() <{level = 10 : i32, message = "bqk,bkd->bqd"}> : () -> ()
    %cst_16 = arith.constant dense<0.000000e+00> : vector<1x16x4xf32>
    %50 = tpu.matmul %49, %34, %cst_16 {dimension_numbers = #tpu.dot_dimension_numbers<[2], [1], [1], [2], [0, 0, 0, 1, 1, 2], [0], [0]>} : vector<1x16x16xbf16>, vector<1x16x4xbf16>, vector<1x16x4xf32> -> vector<1x16x4xf32>
    "tpu.trace_stop"() : () -> ()
    %51 = arith.truncf %50 : vector<1x16x4xf32> to vector<1x16x4xbf16>
    %52 = vector.extract_strided_slice %25 {offsets = [0, 4], sizes = [16, 4], strides = [1, 1]} : vector<16x96xf32> to vector<16x4xf32>
    %53 = vector.shape_cast %52 : vector<16x4xf32> to vector<1x16x4xf32>
    %54 = arith.truncf %53 : vector<1x16x4xf32> to vector<1x16x4xbf16>
    %55 = vector.extract_strided_slice %25 {offsets = [0, 36], sizes = [16, 4], strides = [1, 1]} : vector<16x96xf32> to vector<16x4xf32>
    %56 = vector.shape_cast %55 : vector<16x4xf32> to vector<1x16x4xf32>
    %57 = arith.truncf %56 : vector<1x16x4xf32> to vector<1x16x4xbf16>
    %58 = vector.extract_strided_slice %25 {offsets = [0, 68], sizes = [16, 4], strides = [1, 1]} : vector<16x96xf32> to vector<16x4xf32>
    %59 = vector.shape_cast %58 : vector<16x4xf32> to vector<1x16x4xf32>
    %60 = arith.truncf %59 : vector<1x16x4xf32> to vector<1x16x4xbf16>
    "tpu.trace_start"() <{level = 10 : i32, message = "bqd,bkd->bqk"}> : () -> ()
    %cst_17 = arith.constant dense<0.000000e+00> : vector<1x16x16xf32>
    %61 = tpu.matmul %54, %57, %cst_17 {dimension_numbers = #tpu.dot_dimension_numbers<[2], [2], [1], [1], [0, 0, 0, 1, 1, 1], [0], [0]>} : vector<1x16x4xbf16>, vector<1x16x4xbf16>, vector<1x16x16xf32> -> vector<1x16x16xf32>
    "tpu.trace_stop"() : () -> ()
    %62 = vector.shape_cast %18 : vector<1x16xf32> to vector<1x1x16xf32>
    %63 = vector.broadcast %62 : vector<1x1x16xf32> to vector<1x16x16xf32>
    %64 = arith.addf %61, %63 : vector<1x16x16xf32>
    %cst_18 = arith.constant dense<0xFF800000> : vector<1x16xf32>
    %65 = vector.multi_reduction <maximumf>, %64, %cst_18 [2] : vector<1x16x16xf32> to vector<1x16xf32>
    %66 = vector.shape_cast %65 : vector<1x16xf32> to vector<1x16x1xf32>
    %67 = vector.broadcast %66 : vector<1x16x1xf32> to vector<1x16x16xf32>
    %68 = arith.subf %64, %67 : vector<1x16x16xf32>
    %69 = math.exp %68 : vector<1x16x16xf32>
    %cst_19 = arith.constant dense<0.000000e+00> : vector<1x16xf32>
    %70 = vector.multi_reduction <add>, %69, %cst_19 [2] : vector<1x16x16xf32> to vector<1x16xf32>
    %71 = vector.shape_cast %70 : vector<1x16xf32> to vector<1x16x1xf32>
    %72 = tpu.reciprocal %71 {approx = true} : vector<1x16x1xf32> -> vector<1x16x1xf32>
    %73 = vector.broadcast %72 : vector<1x16x1xf32> to vector<1x16x16xf32>
    %74 = arith.mulf %69, %73 : vector<1x16x16xf32>
    %75 = arith.truncf %74 : vector<1x16x16xf32> to vector<1x16x16xbf16>
    "tpu.trace_start"() <{level = 10 : i32, message = "bqk,bkd->bqd"}> : () -> ()
    %cst_20 = arith.constant dense<0.000000e+00> : vector<1x16x4xf32>
    %76 = tpu.matmul %75, %60, %cst_20 {dimension_numbers = #tpu.dot_dimension_numbers<[2], [1], [1], [2], [0, 0, 0, 1, 1, 2], [0], [0]>} : vector<1x16x16xbf16>, vector<1x16x4xbf16>, vector<1x16x4xf32> -> vector<1x16x4xf32>
    "tpu.trace_stop"() : () -> ()
    %77 = arith.truncf %76 : vector<1x16x4xf32> to vector<1x16x4xbf16>
    %78 = vector.extract_strided_slice %25 {offsets = [0, 8], sizes = [16, 4], strides = [1, 1]} : vector<16x96xf32> to vector<16x4xf32>
    %79 = vector.shape_cast %78 : vector<16x4xf32> to vector<1x16x4xf32>
    %80 = arith.truncf %79 : vector<1x16x4xf32> to vector<1x16x4xbf16>
    %81 = vector.extract_strided_slice %25 {offsets = [0, 40], sizes = [16, 4], strides = [1, 1]} : vector<16x96xf32> to vector<16x4xf32>
    %82 = vector.shape_cast %81 : vector<16x4xf32> to vector<1x16x4xf32>
    %83 = arith.truncf %82 : vector<1x16x4xf32> to vector<1x16x4xbf16>
    %84 = vector.extract_strided_slice %25 {offsets = [0, 72], sizes = [16, 4], strides = [1, 1]} : vector<16x96xf32> to vector<16x4xf32>
    %85 = vector.shape_cast %84 : vector<16x4xf32> to vector<1x16x4xf32>
    %86 = arith.truncf %85 : vector<1x16x4xf32> to vector<1x16x4xbf16>
    "tpu.trace_start"() <{level = 10 : i32, message = "bqd,bkd->bqk"}> : () -> ()
    %cst_21 = arith.constant dense<0.000000e+00> : vector<1x16x16xf32>
    %87 = tpu.matmul %80, %83, %cst_21 {dimension_numbers = #tpu.dot_dimension_numbers<[2], [2], [1], [1], [0, 0, 0, 1, 1, 1], [0], [0]>} : vector<1x16x4xbf16>, vector<1x16x4xbf16>, vector<1x16x16xf32> -> vector<1x16x16xf32>
    "tpu.trace_stop"() : () -> ()
    %88 = vector.shape_cast %18 : vector<1x16xf32> to vector<1x1x16xf32>
    %89 = vector.broadcast %88 : vector<1x1x16xf32> to vector<1x16x16xf32>
    %90 = arith.addf %87, %89 : vector<1x16x16xf32>
    %cst_22 = arith.constant dense<0xFF800000> : vector<1x16xf32>
    %91 = vector.multi_reduction <maximumf>, %90, %cst_22 [2] : vector<1x16x16xf32> to vector<1x16xf32>
    %92 = vector.shape_cast %91 : vector<1x16xf32> to vector<1x16x1xf32>
    %93 = vector.broadcast %92 : vector<1x16x1xf32> to vector<1x16x16xf32>
    %94 = arith.subf %90, %93 : vector<1x16x16xf32>
    %95 = math.exp %94 : vector<1x16x16xf32>
    %cst_23 = arith.constant dense<0.000000e+00> : vector<1x16xf32>
    %96 = vector.multi_reduction <add>, %95, %cst_23 [2] : vector<1x16x16xf32> to vector<1x16xf32>
    %97 = vector.shape_cast %96 : vector<1x16xf32> to vector<1x16x1xf32>
    %98 = tpu.reciprocal %97 {approx = true} : vector<1x16x1xf32> -> vector<1x16x1xf32>
    %99 = vector.broadcast %98 : vector<1x16x1xf32> to vector<1x16x16xf32>
    %100 = arith.mulf %95, %99 : vector<1x16x16xf32>
    %101 = arith.truncf %100 : vector<1x16x16xf32> to vector<1x16x16xbf16>
    "tpu.trace_start"() <{level = 10 : i32, message = "bqk,bkd->bqd"}> : () -> ()
    %cst_24 = arith.constant dense<0.000000e+00> : vector<1x16x4xf32>
    %102 = tpu.matmul %101, %86, %cst_24 {dimension_numbers = #tpu.dot_dimension_numbers<[2], [1], [1], [2], [0, 0, 0, 1, 1, 2], [0], [0]>} : vector<1x16x16xbf16>, vector<1x16x4xbf16>, vector<1x16x4xf32> -> vector<1x16x4xf32>
    "tpu.trace_stop"() : () -> ()
    %103 = arith.truncf %102 : vector<1x16x4xf32> to vector<1x16x4xbf16>
    %104 = vector.extract_strided_slice %25 {offsets = [0, 12], sizes = [16, 4], strides = [1, 1]} : vector<16x96xf32> to vector<16x4xf32>
    %105 = vector.shape_cast %104 : vector<16x4xf32> to vector<1x16x4xf32>
    %106 = arith.truncf %105 : vector<1x16x4xf32> to vector<1x16x4xbf16>
    %107 = vector.extract_strided_slice %25 {offsets = [0, 44], sizes = [16, 4], strides = [1, 1]} : vector<16x96xf32> to vector<16x4xf32>
    %108 = vector.shape_cast %107 : vector<16x4xf32> to vector<1x16x4xf32>
    %109 = arith.truncf %108 : vector<1x16x4xf32> to vector<1x16x4xbf16>
    %110 = vector.extract_strided_slice %25 {offsets = [0, 76], sizes = [16, 4], strides = [1, 1]} : vector<16x96xf32> to vector<16x4xf32>
    %111 = vector.shape_cast %110 : vector<16x4xf32> to vector<1x16x4xf32>
    %112 = arith.truncf %111 : vector<1x16x4xf32> to vector<1x16x4xbf16>
    "tpu.trace_start"() <{level = 10 : i32, message = "bqd,bkd->bqk"}> : () -> ()
    %cst_25 = arith.constant dense<0.000000e+00> : vector<1x16x16xf32>
    %113 = tpu.matmul %106, %109, %cst_25 {dimension_numbers = #tpu.dot_dimension_numbers<[2], [2], [1], [1], [0, 0, 0, 1, 1, 1], [0], [0]>} : vector<1x16x4xbf16>, vector<1x16x4xbf16>, vector<1x16x16xf32> -> vector<1x16x16xf32>
    "tpu.trace_stop"() : () -> ()
    %114 = vector.shape_cast %18 : vector<1x16xf32> to vector<1x1x16xf32>
    %115 = vector.broadcast %114 : vector<1x1x16xf32> to vector<1x16x16xf32>
    %116 = arith.addf %113, %115 : vector<1x16x16xf32>
    %cst_26 = arith.constant dense<0xFF800000> : vector<1x16xf32>
    %117 = vector.multi_reduction <maximumf>, %116, %cst_26 [2] : vector<1x16x16xf32> to vector<1x16xf32>
    %118 = vector.shape_cast %117 : vector<1x16xf32> to vector<1x16x1xf32>
    %119 = vector.broadcast %118 : vector<1x16x1xf32> to vector<1x16x16xf32>
    %120 = arith.subf %116, %119 : vector<1x16x16xf32>
    %121 = math.exp %120 : vector<1x16x16xf32>
    %cst_27 = arith.constant dense<0.000000e+00> : vector<1x16xf32>
    %122 = vector.multi_reduction <add>, %121, %cst_27 [2] : vector<1x16x16xf32> to vector<1x16xf32>
    %123 = vector.shape_cast %122 : vector<1x16xf32> to vector<1x16x1xf32>
    %124 = tpu.reciprocal %123 {approx = true} : vector<1x16x1xf32> -> vector<1x16x1xf32>
    %125 = vector.broadcast %124 : vector<1x16x1xf32> to vector<1x16x16xf32>
    %126 = arith.mulf %121, %125 : vector<1x16x16xf32>
    %127 = arith.truncf %126 : vector<1x16x16xf32> to vector<1x16x16xbf16>
    "tpu.trace_start"() <{level = 10 : i32, message = "bqk,bkd->bqd"}> : () -> ()
    %cst_28 = arith.constant dense<0.000000e+00> : vector<1x16x4xf32>
    %128 = tpu.matmul %127, %112, %cst_28 {dimension_numbers = #tpu.dot_dimension_numbers<[2], [1], [1], [2], [0, 0, 0, 1, 1, 2], [0], [0]>} : vector<1x16x16xbf16>, vector<1x16x4xbf16>, vector<1x16x4xf32> -> vector<1x16x4xf32>
    "tpu.trace_stop"() : () -> ()
    %129 = arith.truncf %128 : vector<1x16x4xf32> to vector<1x16x4xbf16>
    %130 = vector.extract_strided_slice %25 {offsets = [0, 16], sizes = [16, 4], strides = [1, 1]} : vector<16x96xf32> to vector<16x4xf32>
    %131 = vector.shape_cast %130 : vector<16x4xf32> to vector<1x16x4xf32>
    %132 = arith.truncf %131 : vector<1x16x4xf32> to vector<1x16x4xbf16>
    %133 = vector.extract_strided_slice %25 {offsets = [0, 48], sizes = [16, 4], strides = [1, 1]} : vector<16x96xf32> to vector<16x4xf32>
    %134 = vector.shape_cast %133 : vector<16x4xf32> to vector<1x16x4xf32>
    %135 = arith.truncf %134 : vector<1x16x4xf32> to vector<1x16x4xbf16>
    %136 = vector.extract_strided_slice %25 {offsets = [0, 80], sizes = [16, 4], strides = [1, 1]} : vector<16x96xf32> to vector<16x4xf32>
    %137 = vector.shape_cast %136 : vector<16x4xf32> to vector<1x16x4xf32>
    %138 = arith.truncf %137 : vector<1x16x4xf32> to vector<1x16x4xbf16>
    "tpu.trace_start"() <{level = 10 : i32, message = "bqd,bkd->bqk"}> : () -> ()
    %cst_29 = arith.constant dense<0.000000e+00> : vector<1x16x16xf32>
    %139 = tpu.matmul %132, %135, %cst_29 {dimension_numbers = #tpu.dot_dimension_numbers<[2], [2], [1], [1], [0, 0, 0, 1, 1, 1], [0], [0]>} : vector<1x16x4xbf16>, vector<1x16x4xbf16>, vector<1x16x16xf32> -> vector<1x16x16xf32>
    "tpu.trace_stop"() : () -> ()
    %140 = vector.shape_cast %18 : vector<1x16xf32> to vector<1x1x16xf32>
    %141 = vector.broadcast %140 : vector<1x1x16xf32> to vector<1x16x16xf32>
    %142 = arith.addf %139, %141 : vector<1x16x16xf32>
    %cst_30 = arith.constant dense<0xFF800000> : vector<1x16xf32>
    %143 = vector.multi_reduction <maximumf>, %142, %cst_30 [2] : vector<1x16x16xf32> to vector<1x16xf32>
    %144 = vector.shape_cast %143 : vector<1x16xf32> to vector<1x16x1xf32>
    %145 = vector.broadcast %144 : vector<1x16x1xf32> to vector<1x16x16xf32>
    %146 = arith.subf %142, %145 : vector<1x16x16xf32>
    %147 = math.exp %146 : vector<1x16x16xf32>
    %cst_31 = arith.constant dense<0.000000e+00> : vector<1x16xf32>
    %148 = vector.multi_reduction <add>, %147, %cst_31 [2] : vector<1x16x16xf32> to vector<1x16xf32>
    %149 = vector.shape_cast %148 : vector<1x16xf32> to vector<1x16x1xf32>
    %150 = tpu.reciprocal %149 {approx = true} : vector<1x16x1xf32> -> vector<1x16x1xf32>
    %151 = vector.broadcast %150 : vector<1x16x1xf32> to vector<1x16x16xf32>
    %152 = arith.mulf %147, %151 : vector<1x16x16xf32>
    %153 = arith.truncf %152 : vector<1x16x16xf32> to vector<1x16x16xbf16>
    "tpu.trace_start"() <{level = 10 : i32, message = "bqk,bkd->bqd"}> : () -> ()
    %cst_32 = arith.constant dense<0.000000e+00> : vector<1x16x4xf32>
    %154 = tpu.matmul %153, %138, %cst_32 {dimension_numbers = #tpu.dot_dimension_numbers<[2], [1], [1], [2], [0, 0, 0, 1, 1, 2], [0], [0]>} : vector<1x16x16xbf16>, vector<1x16x4xbf16>, vector<1x16x4xf32> -> vector<1x16x4xf32>
    "tpu.trace_stop"() : () -> ()
    %155 = arith.truncf %154 : vector<1x16x4xf32> to vector<1x16x4xbf16>
    %156 = vector.extract_strided_slice %25 {offsets = [0, 20], sizes = [16, 4], strides = [1, 1]} : vector<16x96xf32> to vector<16x4xf32>
    %157 = vector.shape_cast %156 : vector<16x4xf32> to vector<1x16x4xf32>
    %158 = arith.truncf %157 : vector<1x16x4xf32> to vector<1x16x4xbf16>
    %159 = vector.extract_strided_slice %25 {offsets = [0, 52], sizes = [16, 4], strides = [1, 1]} : vector<16x96xf32> to vector<16x4xf32>
    %160 = vector.shape_cast %159 : vector<16x4xf32> to vector<1x16x4xf32>
    %161 = arith.truncf %160 : vector<1x16x4xf32> to vector<1x16x4xbf16>
    %162 = vector.extract_strided_slice %25 {offsets = [0, 84], sizes = [16, 4], strides = [1, 1]} : vector<16x96xf32> to vector<16x4xf32>
    %163 = vector.shape_cast %162 : vector<16x4xf32> to vector<1x16x4xf32>
    %164 = arith.truncf %163 : vector<1x16x4xf32> to vector<1x16x4xbf16>
    "tpu.trace_start"() <{level = 10 : i32, message = "bqd,bkd->bqk"}> : () -> ()
    %cst_33 = arith.constant dense<0.000000e+00> : vector<1x16x16xf32>
    %165 = tpu.matmul %158, %161, %cst_33 {dimension_numbers = #tpu.dot_dimension_numbers<[2], [2], [1], [1], [0, 0, 0, 1, 1, 1], [0], [0]>} : vector<1x16x4xbf16>, vector<1x16x4xbf16>, vector<1x16x16xf32> -> vector<1x16x16xf32>
    "tpu.trace_stop"() : () -> ()
    %166 = vector.shape_cast %18 : vector<1x16xf32> to vector<1x1x16xf32>
    %167 = vector.broadcast %166 : vector<1x1x16xf32> to vector<1x16x16xf32>
    %168 = arith.addf %165, %167 : vector<1x16x16xf32>
    %cst_34 = arith.constant dense<0xFF800000> : vector<1x16xf32>
    %169 = vector.multi_reduction <maximumf>, %168, %cst_34 [2] : vector<1x16x16xf32> to vector<1x16xf32>
    %170 = vector.shape_cast %169 : vector<1x16xf32> to vector<1x16x1xf32>
    %171 = vector.broadcast %170 : vector<1x16x1xf32> to vector<1x16x16xf32>
    %172 = arith.subf %168, %171 : vector<1x16x16xf32>
    %173 = math.exp %172 : vector<1x16x16xf32>
    %cst_35 = arith.constant dense<0.000000e+00> : vector<1x16xf32>
    %174 = vector.multi_reduction <add>, %173, %cst_35 [2] : vector<1x16x16xf32> to vector<1x16xf32>
    %175 = vector.shape_cast %174 : vector<1x16xf32> to vector<1x16x1xf32>
    %176 = tpu.reciprocal %175 {approx = true} : vector<1x16x1xf32> -> vector<1x16x1xf32>
    %177 = vector.broadcast %176 : vector<1x16x1xf32> to vector<1x16x16xf32>
    %178 = arith.mulf %173, %177 : vector<1x16x16xf32>
    %179 = arith.truncf %178 : vector<1x16x16xf32> to vector<1x16x16xbf16>
    "tpu.trace_start"() <{level = 10 : i32, message = "bqk,bkd->bqd"}> : () -> ()
    %cst_36 = arith.constant dense<0.000000e+00> : vector<1x16x4xf32>
    %180 = tpu.matmul %179, %164, %cst_36 {dimension_numbers = #tpu.dot_dimension_numbers<[2], [1], [1], [2], [0, 0, 0, 1, 1, 2], [0], [0]>} : vector<1x16x16xbf16>, vector<1x16x4xbf16>, vector<1x16x4xf32> -> vector<1x16x4xf32>
    "tpu.trace_stop"() : () -> ()
    %181 = arith.truncf %180 : vector<1x16x4xf32> to vector<1x16x4xbf16>
    %182 = vector.extract_strided_slice %25 {offsets = [0, 24], sizes = [16, 4], strides = [1, 1]} : vector<16x96xf32> to vector<16x4xf32>
    %183 = vector.shape_cast %182 : vector<16x4xf32> to vector<1x16x4xf32>
    %184 = arith.truncf %183 : vector<1x16x4xf32> to vector<1x16x4xbf16>
    %185 = vector.extract_strided_slice %25 {offsets = [0, 56], sizes = [16, 4], strides = [1, 1]} : vector<16x96xf32> to vector<16x4xf32>
    %186 = vector.shape_cast %185 : vector<16x4xf32> to vector<1x16x4xf32>
    %187 = arith.truncf %186 : vector<1x16x4xf32> to vector<1x16x4xbf16>
    %188 = vector.extract_strided_slice %25 {offsets = [0, 88], sizes = [16, 4], strides = [1, 1]} : vector<16x96xf32> to vector<16x4xf32>
    %189 = vector.shape_cast %188 : vector<16x4xf32> to vector<1x16x4xf32>
    %190 = arith.truncf %189 : vector<1x16x4xf32> to vector<1x16x4xbf16>
    "tpu.trace_start"() <{level = 10 : i32, message = "bqd,bkd->bqk"}> : () -> ()
    %cst_37 = arith.constant dense<0.000000e+00> : vector<1x16x16xf32>
    %191 = tpu.matmul %184, %187, %cst_37 {dimension_numbers = #tpu.dot_dimension_numbers<[2], [2], [1], [1], [0, 0, 0, 1, 1, 1], [0], [0]>} : vector<1x16x4xbf16>, vector<1x16x4xbf16>, vector<1x16x16xf32> -> vector<1x16x16xf32>
    "tpu.trace_stop"() : () -> ()
    %192 = vector.shape_cast %18 : vector<1x16xf32> to vector<1x1x16xf32>
    %193 = vector.broadcast %192 : vector<1x1x16xf32> to vector<1x16x16xf32>
    %194 = arith.addf %191, %193 : vector<1x16x16xf32>
    %cst_38 = arith.constant dense<0xFF800000> : vector<1x16xf32>
    %195 = vector.multi_reduction <maximumf>, %194, %cst_38 [2] : vector<1x16x16xf32> to vector<1x16xf32>
    %196 = vector.shape_cast %195 : vector<1x16xf32> to vector<1x16x1xf32>
    %197 = vector.broadcast %196 : vector<1x16x1xf32> to vector<1x16x16xf32>
    %198 = arith.subf %194, %197 : vector<1x16x16xf32>
    %199 = math.exp %198 : vector<1x16x16xf32>
    %cst_39 = arith.constant dense<0.000000e+00> : vector<1x16xf32>
    %200 = vector.multi_reduction <add>, %199, %cst_39 [2] : vector<1x16x16xf32> to vector<1x16xf32>
    %201 = vector.shape_cast %200 : vector<1x16xf32> to vector<1x16x1xf32>
    %202 = tpu.reciprocal %201 {approx = true} : vector<1x16x1xf32> -> vector<1x16x1xf32>
    %203 = vector.broadcast %202 : vector<1x16x1xf32> to vector<1x16x16xf32>
    %204 = arith.mulf %199, %203 : vector<1x16x16xf32>
    %205 = arith.truncf %204 : vector<1x16x16xf32> to vector<1x16x16xbf16>
    "tpu.trace_start"() <{level = 10 : i32, message = "bqk,bkd->bqd"}> : () -> ()
    %cst_40 = arith.constant dense<0.000000e+00> : vector<1x16x4xf32>
    %206 = tpu.matmul %205, %190, %cst_40 {dimension_numbers = #tpu.dot_dimension_numbers<[2], [1], [1], [2], [0, 0, 0, 1, 1, 2], [0], [0]>} : vector<1x16x16xbf16>, vector<1x16x4xbf16>, vector<1x16x4xf32> -> vector<1x16x4xf32>
    "tpu.trace_stop"() : () -> ()
    %207 = arith.truncf %206 : vector<1x16x4xf32> to vector<1x16x4xbf16>
    %208 = vector.extract_strided_slice %25 {offsets = [0, 28], sizes = [16, 4], strides = [1, 1]} : vector<16x96xf32> to vector<16x4xf32>
    %209 = vector.shape_cast %208 : vector<16x4xf32> to vector<1x16x4xf32>
    %210 = arith.truncf %209 : vector<1x16x4xf32> to vector<1x16x4xbf16>
    %211 = vector.extract_strided_slice %25 {offsets = [0, 60], sizes = [16, 4], strides = [1, 1]} : vector<16x96xf32> to vector<16x4xf32>
    %212 = vector.shape_cast %211 : vector<16x4xf32> to vector<1x16x4xf32>
    %213 = arith.truncf %212 : vector<1x16x4xf32> to vector<1x16x4xbf16>
    %214 = vector.extract_strided_slice %25 {offsets = [0, 92], sizes = [16, 4], strides = [1, 1]} : vector<16x96xf32> to vector<16x4xf32>
    %215 = vector.shape_cast %214 : vector<16x4xf32> to vector<1x16x4xf32>
    %216 = arith.truncf %215 : vector<1x16x4xf32> to vector<1x16x4xbf16>
    "tpu.trace_start"() <{level = 10 : i32, message = "bqd,bkd->bqk"}> : () -> ()
    %cst_41 = arith.constant dense<0.000000e+00> : vector<1x16x16xf32>
    %217 = tpu.matmul %210, %213, %cst_41 {dimension_numbers = #tpu.dot_dimension_numbers<[2], [2], [1], [1], [0, 0, 0, 1, 1, 1], [0], [0]>} : vector<1x16x4xbf16>, vector<1x16x4xbf16>, vector<1x16x16xf32> -> vector<1x16x16xf32>
    "tpu.trace_stop"() : () -> ()
    %218 = vector.shape_cast %18 : vector<1x16xf32> to vector<1x1x16xf32>
    %219 = vector.broadcast %218 : vector<1x1x16xf32> to vector<1x16x16xf32>
    %220 = arith.addf %217, %219 : vector<1x16x16xf32>
    %cst_42 = arith.constant dense<0xFF800000> : vector<1x16xf32>
    %221 = vector.multi_reduction <maximumf>, %220, %cst_42 [2] : vector<1x16x16xf32> to vector<1x16xf32>
    %222 = vector.shape_cast %221 : vector<1x16xf32> to vector<1x16x1xf32>
    %223 = vector.broadcast %222 : vector<1x16x1xf32> to vector<1x16x16xf32>
    %224 = arith.subf %220, %223 : vector<1x16x16xf32>
    %225 = math.exp %224 : vector<1x16x16xf32>
    %cst_43 = arith.constant dense<0.000000e+00> : vector<1x16xf32>
    %226 = vector.multi_reduction <add>, %225, %cst_43 [2] : vector<1x16x16xf32> to vector<1x16xf32>
    %227 = vector.shape_cast %226 : vector<1x16xf32> to vector<1x16x1xf32>
    %228 = tpu.reciprocal %227 {approx = true} : vector<1x16x1xf32> -> vector<1x16x1xf32>
    %229 = vector.broadcast %228 : vector<1x16x1xf32> to vector<1x16x16xf32>
    %230 = arith.mulf %225, %229 : vector<1x16x16xf32>
    %231 = arith.truncf %230 : vector<1x16x16xf32> to vector<1x16x16xbf16>
    "tpu.trace_start"() <{level = 10 : i32, message = "bqk,bkd->bqd"}> : () -> ()
    %cst_44 = arith.constant dense<0.000000e+00> : vector<1x16x4xf32>
    %232 = tpu.matmul %231, %216, %cst_44 {dimension_numbers = #tpu.dot_dimension_numbers<[2], [1], [1], [2], [0, 0, 0, 1, 1, 2], [0], [0]>} : vector<1x16x16xbf16>, vector<1x16x4xbf16>, vector<1x16x4xf32> -> vector<1x16x4xf32>
    "tpu.trace_stop"() : () -> ()
    %233 = arith.truncf %232 : vector<1x16x4xf32> to vector<1x16x4xbf16>
    %234 = tpu.concatenate %51, %77, %103, %129, %155, %181, %207, %233 in 2 : vector<1x16x4xbf16>, vector<1x16x4xbf16>, vector<1x16x4xbf16>, vector<1x16x4xbf16>, vector<1x16x4xbf16>, vector<1x16x4xbf16>, vector<1x16x4xbf16>, vector<1x16x4xbf16> -> vector<1x16x32xbf16>
    %235 = vector.shape_cast %234 : vector<1x16x32xbf16> to vector<16x32xbf16>
    %c0_45 = arith.constant 0 : index
    %c0_46 = arith.constant 0 : index
    %c0_47 = arith.constant 0 : index
    %236 = vector.load %arg6[%c0_45, %c0_46, %c0_47] : memref<2x32x32xbf16, #tpu.memory_space<vmem>>, vector<1x32x32xbf16>
    %237 = vector.shape_cast %236 : vector<1x32x32xbf16> to vector<32x32xbf16>
    %cst_48 = arith.constant dense<0.000000e+00> : vector<16x32xf32>
    %238 = tpu.matmul %235, %237, %cst_48 {dimension_numbers = #tpu.dot_dimension_numbers<[1], [0], [0], [1], [0, 0, 1, 1], [], []>} : vector<16x32xbf16>, vector<32x32xbf16>, vector<16x32xf32> -> vector<16x32xf32>
    %c0_49 = arith.constant 0 : index
    %c0_50 = arith.constant 0 : index
    %239 = vector.load %arg7[%c0_49, %c0_50] : memref<2x32xf32, #tpu.memory_space<vmem>>, vector<1x32xf32>
    %240 = vector.broadcast %239 : vector<1x32xf32> to vector<16x32xf32>
    %241 = arith.addf %238, %240 : vector<16x32xf32>
    %242 = arith.addf %12, %241 : vector<16x32xf32>
    %c0_51 = arith.constant 0 : index
    %c0_52 = arith.constant 0 : index
    %243 = vector.load %arg8[%c0_51, %c0_52] : memref<2x32xf32, #tpu.memory_space<vmem>>, vector<1x32xf32>
    %c0_53 = arith.constant 0 : index
    %c0_54 = arith.constant 0 : index
    %244 = vector.load %arg9[%c0_53, %c0_54] : memref<2x32xf32, #tpu.memory_space<vmem>>, vector<1x32xf32>
    %cst_55 = arith.constant dense<0.000000e+00> : vector<16xf32>
    %245 = vector.multi_reduction <add>, %242, %cst_55 [1] : vector<16x32xf32> to vector<16xf32>
    %246 = vector.shape_cast %245 : vector<16xf32> to vector<16x1xf32>
    %cst_56 = arith.constant 3.200000e+01 : f32
    %247 = vector.broadcast %cst_56 : f32 to vector<16x1xf32>
    %248 = arith.divf %246, %247 : vector<16x1xf32>
    %249 = vector.broadcast %248 : vector<16x1xf32> to vector<16x32xf32>
    %250 = arith.subf %242, %249 : vector<16x32xf32>
    %251 = arith.mulf %250, %250 : vector<16x32xf32>
    %cst_57 = arith.constant dense<0.000000e+00> : vector<16xf32>
    %252 = vector.multi_reduction <add>, %251, %cst_57 [1] : vector<16x32xf32> to vector<16xf32>
    %253 = vector.shape_cast %252 : vector<16xf32> to vector<16x1xf32>
    %cst_58 = arith.constant 3.200000e+01 : f32
    %254 = vector.broadcast %cst_58 : f32 to vector<16x1xf32>
    %255 = arith.divf %253, %254 : vector<16x1xf32>
    %256 = vector.broadcast %248 : vector<16x1xf32> to vector<16x32xf32>
    %257 = arith.subf %242, %256 : vector<16x32xf32>
    %cst_59 = arith.constant 9.99999974E-6 : f32
    %258 = vector.broadcast %cst_59 : f32 to vector<16x1xf32>
    %259 = arith.addf %255, %258 : vector<16x1xf32>
    %260 = math.rsqrt %259 : vector<16x1xf32>
    %261 = vector.broadcast %260 : vector<16x1xf32> to vector<16x32xf32>
    %262 = arith.mulf %257, %261 : vector<16x32xf32>
    %263 = vector.broadcast %243 : vector<1x32xf32> to vector<16x32xf32>
    %264 = arith.mulf %262, %263 : vector<16x32xf32>
    %265 = vector.broadcast %244 : vector<1x32xf32> to vector<16x32xf32>
    %266 = arith.addf %264, %265 : vector<16x32xf32>
    %267 = arith.truncf %266 : vector<16x32xf32> to vector<16x32xbf16>
    %c0_60 = arith.constant 0 : index
    %c0_61 = arith.constant 0 : index
    %c0_62 = arith.constant 0 : index
    %268 = vector.load %arg10[%c0_60, %c0_61, %c0_62] : memref<2x32x128xbf16, #tpu.memory_space<vmem>>, vector<1x32x128xbf16>
    %269 = vector.shape_cast %268 : vector<1x32x128xbf16> to vector<32x128xbf16>
    %cst_63 = arith.constant dense<0.000000e+00> : vector<16x128xf32>
    %270 = tpu.matmul %267, %269, %cst_63 {dimension_numbers = #tpu.dot_dimension_numbers<[1], [0], [0], [1], [0, 0, 1, 1], [], []>} : vector<16x32xbf16>, vector<32x128xbf16>, vector<16x128xf32> -> vector<16x128xf32>
    %c0_64 = arith.constant 0 : index
    %c0_65 = arith.constant 0 : index
    %271 = vector.load %arg11[%c0_64, %c0_65] : memref<2x128xf32, #tpu.memory_space<vmem>>, vector<1x128xf32>
    %272 = vector.broadcast %271 : vector<1x128xf32> to vector<16x128xf32>
    %273 = arith.addf %270, %272 : vector<16x128xf32>
    %cst_66 = arith.constant 0.000000e+00 : f32
    %274 = vector.broadcast %cst_66 : f32 to vector<16x128xf32>
    %275 = arith.maximumf %273, %274 : vector<16x128xf32>
    %276 = arith.truncf %275 : vector<16x128xf32> to vector<16x128xbf16>
    %c0_67 = arith.constant 0 : index
    %c0_68 = arith.constant 0 : index
    %c0_69 = arith.constant 0 : index
    %277 = vector.load %arg12[%c0_67, %c0_68, %c0_69] : memref<2x128x32xbf16, #tpu.memory_space<vmem>>, vector<1x128x32xbf16>
    %278 = vector.shape_cast %277 : vector<1x128x32xbf16> to vector<128x32xbf16>
    %cst_70 = arith.constant dense<0.000000e+00> : vector<16x32xf32>
    %279 = tpu.matmul %276, %278, %cst_70 {dimension_numbers = #tpu.dot_dimension_numbers<[1], [0], [0], [1], [0, 0, 1, 1], [], []>} : vector<16x128xbf16>, vector<128x32xbf16>, vector<16x32xf32> -> vector<16x32xf32>
    %c0_71 = arith.constant 0 : index
    %c0_72 = arith.constant 0 : index
    %280 = vector.load %arg13[%c0_71, %c0_72] : memref<2x32xf32, #tpu.memory_space<vmem>>, vector<1x32xf32>
    %281 = vector.broadcast %280 : vector<1x32xf32> to vector<16x32xf32>
    %282 = arith.addf %279, %281 : vector<16x32xf32>
    %283 = arith.addf %266, %282 : vector<16x32xf32>
    %c0_73 = arith.constant 0 : index
    %c0_74 = arith.constant 0 : index
    %284 = vector.load %arg14[%c0_73, %c0_74] : memref<2x32xf32, #tpu.memory_space<vmem>>, vector<1x32xf32>
    %c0_75 = arith.constant 0 : index
    %c0_76 = arith.constant 0 : index
    %285 = vector.load %arg15[%c0_75, %c0_76] : memref<2x32xf32, #tpu.memory_space<vmem>>, vector<1x32xf32>
    %cst_77 = arith.constant dense<0.000000e+00> : vector<16xf32>
    %286 = vector.multi_reduction <add>, %283, %cst_77 [1] : vector<16x32xf32> to vector<16xf32>
    %287 = vector.shape_cast %286 : vector<16xf32> to vector<16x1xf32>
    %cst_78 = arith.constant 3.200000e+01 : f32
    %288 = vector.broadcast %cst_78 : f32 to vector<16x1xf32>
    %289 = arith.divf %287, %288 : vector<16x1xf32>
    %290 = vector.broadcast %289 : vector<16x1xf32> to vector<16x32xf32>
    %291 = arith.subf %283, %290 : vector<16x32xf32>
    %292 = arith.mulf %291, %291 : vector<16x32xf32>
    %cst_79 = arith.constant dense<0.000000e+00> : vector<16xf32>
    %293 = vector.multi_reduction <add>, %292, %cst_79 [1] : vector<16x32xf32> to vector<16xf32>
    %294 = vector.shape_cast %293 : vector<16xf32> to vector<16x1xf32>
    %cst_80 = arith.constant 3.200000e+01 : f32
    %295 = vector.broadcast %cst_80 : f32 to vector<16x1xf32>
    %296 = arith.divf %294, %295 : vector<16x1xf32>
    %297 = vector.broadcast %289 : vector<16x1xf32> to vector<16x32xf32>
    %298 = arith.subf %283, %297 : vector<16x32xf32>
    %cst_81 = arith.constant 9.99999974E-6 : f32
    %299 = vector.broadcast %cst_81 : f32 to vector<16x1xf32>
    %300 = arith.addf %296, %299 : vector<16x1xf32>
    %301 = math.rsqrt %300 : vector<16x1xf32>
    %302 = vector.broadcast %301 : vector<16x1xf32> to vector<16x32xf32>
    %303 = arith.mulf %298, %302 : vector<16x32xf32>
    %304 = vector.broadcast %284 : vector<1x32xf32> to vector<16x32xf32>
    %305 = arith.mulf %303, %304 : vector<16x32xf32>
    %306 = vector.broadcast %285 : vector<1x32xf32> to vector<16x32xf32>
    %307 = arith.addf %305, %306 : vector<16x32xf32>
    %308 = arith.truncf %307 : vector<16x32xf32> to vector<16x32xbf16>
    %c1 = arith.constant 1 : index
    %c0_82 = arith.constant 0 : index
    %c0_83 = arith.constant 0 : index
    %309 = vector.load %arg4[%c1, %c0_82, %c0_83] : memref<2x32x96xbf16, #tpu.memory_space<vmem>>, vector<1x32x96xbf16>
    %310 = vector.shape_cast %309 : vector<1x32x96xbf16> to vector<32x96xbf16>
    %cst_84 = arith.constant dense<0.000000e+00> : vector<16x96xf32>
    %311 = tpu.matmul %308, %310, %cst_84 {dimension_numbers = #tpu.dot_dimension_numbers<[1], [0], [0], [1], [0, 0, 1, 1], [], []>} : vector<16x32xbf16>, vector<32x96xbf16>, vector<16x96xf32> -> vector<16x96xf32>
    %c1_85 = arith.constant 1 : index
    %c0_86 = arith.constant 0 : index
    %312 = vector.load %arg5[%c1_85, %c0_86] : memref<2x96xf32, #tpu.memory_space<vmem>>, vector<1x96xf32>
    %313 = vector.broadcast %312 : vector<1x96xf32> to vector<16x96xf32>
    %314 = arith.addf %311, %313 : vector<16x96xf32>
    %315 = vector.extract_strided_slice %314 {offsets = [0, 0], sizes = [16, 4], strides = [1, 1]} : vector<16x96xf32> to vector<16x4xf32>
    %316 = vector.shape_cast %315 : vector<16x4xf32> to vector<1x16x4xf32>
    %317 = arith.truncf %316 : vector<1x16x4xf32> to vector<1x16x4xbf16>
    %318 = vector.extract_strided_slice %314 {offsets = [0, 32], sizes = [16, 4], strides = [1, 1]} : vector<16x96xf32> to vector<16x4xf32>
    %319 = vector.shape_cast %318 : vector<16x4xf32> to vector<1x16x4xf32>
    %320 = arith.truncf %319 : vector<1x16x4xf32> to vector<1x16x4xbf16>
    %321 = vector.extract_strided_slice %314 {offsets = [0, 64], sizes = [16, 4], strides = [1, 1]} : vector<16x96xf32> to vector<16x4xf32>
    %322 = vector.shape_cast %321 : vector<16x4xf32> to vector<1x16x4xf32>
    %323 = arith.truncf %322 : vector<1x16x4xf32> to vector<1x16x4xbf16>
    "tpu.trace_start"() <{level = 10 : i32, message = "bqd,bkd->bqk"}> : () -> ()
    %cst_87 = arith.constant dense<0.000000e+00> : vector<1x16x16xf32>
    %324 = tpu.matmul %317, %320, %cst_87 {dimension_numbers = #tpu.dot_dimension_numbers<[2], [2], [1], [1], [0, 0, 0, 1, 1, 1], [0], [0]>} : vector<1x16x4xbf16>, vector<1x16x4xbf16>, vector<1x16x16xf32> -> vector<1x16x16xf32>
    "tpu.trace_stop"() : () -> ()
    %325 = vector.shape_cast %18 : vector<1x16xf32> to vector<1x1x16xf32>
    %326 = vector.broadcast %325 : vector<1x1x16xf32> to vector<1x16x16xf32>
    %327 = arith.addf %324, %326 : vector<1x16x16xf32>
    %cst_88 = arith.constant dense<0xFF800000> : vector<1x16xf32>
    %328 = vector.multi_reduction <maximumf>, %327, %cst_88 [2] : vector<1x16x16xf32> to vector<1x16xf32>
    %329 = vector.shape_cast %328 : vector<1x16xf32> to vector<1x16x1xf32>
    %330 = vector.broadcast %329 : vector<1x16x1xf32> to vector<1x16x16xf32>
    %331 = arith.subf %327, %330 : vector<1x16x16xf32>
    %332 = math.exp %331 : vector<1x16x16xf32>
    %cst_89 = arith.constant dense<0.000000e+00> : vector<1x16xf32>
    %333 = vector.multi_reduction <add>, %332, %cst_89 [2] : vector<1x16x16xf32> to vector<1x16xf32>
    %334 = vector.shape_cast %333 : vector<1x16xf32> to vector<1x16x1xf32>
    %335 = tpu.reciprocal %334 {approx = true} : vector<1x16x1xf32> -> vector<1x16x1xf32>
    %336 = vector.broadcast %335 : vector<1x16x1xf32> to vector<1x16x16xf32>
    %337 = arith.mulf %332, %336 : vector<1x16x16xf32>
    %338 = arith.truncf %337 : vector<1x16x16xf32> to vector<1x16x16xbf16>
    "tpu.trace_start"() <{level = 10 : i32, message = "bqk,bkd->bqd"}> : () -> ()
    %cst_90 = arith.constant dense<0.000000e+00> : vector<1x16x4xf32>
    %339 = tpu.matmul %338, %323, %cst_90 {dimension_numbers = #tpu.dot_dimension_numbers<[2], [1], [1], [2], [0, 0, 0, 1, 1, 2], [0], [0]>} : vector<1x16x16xbf16>, vector<1x16x4xbf16>, vector<1x16x4xf32> -> vector<1x16x4xf32>
    "tpu.trace_stop"() : () -> ()
    %340 = arith.truncf %339 : vector<1x16x4xf32> to vector<1x16x4xbf16>
    %341 = vector.extract_strided_slice %314 {offsets = [0, 4], sizes = [16, 4], strides = [1, 1]} : vector<16x96xf32> to vector<16x4xf32>
    %342 = vector.shape_cast %341 : vector<16x4xf32> to vector<1x16x4xf32>
    %343 = arith.truncf %342 : vector<1x16x4xf32> to vector<1x16x4xbf16>
    %344 = vector.extract_strided_slice %314 {offsets = [0, 36], sizes = [16, 4], strides = [1, 1]} : vector<16x96xf32> to vector<16x4xf32>
    %345 = vector.shape_cast %344 : vector<16x4xf32> to vector<1x16x4xf32>
    %346 = arith.truncf %345 : vector<1x16x4xf32> to vector<1x16x4xbf16>
    %347 = vector.extract_strided_slice %314 {offsets = [0, 68], sizes = [16, 4], strides = [1, 1]} : vector<16x96xf32> to vector<16x4xf32>
    %348 = vector.shape_cast %347 : vector<16x4xf32> to vector<1x16x4xf32>
    %349 = arith.truncf %348 : vector<1x16x4xf32> to vector<1x16x4xbf16>
    "tpu.trace_start"() <{level = 10 : i32, message = "bqd,bkd->bqk"}> : () -> ()
    %cst_91 = arith.constant dense<0.000000e+00> : vector<1x16x16xf32>
    %350 = tpu.matmul %343, %346, %cst_91 {dimension_numbers = #tpu.dot_dimension_numbers<[2], [2], [1], [1], [0, 0, 0, 1, 1, 1], [0], [0]>} : vector<1x16x4xbf16>, vector<1x16x4xbf16>, vector<1x16x16xf32> -> vector<1x16x16xf32>
    "tpu.trace_stop"() : () -> ()
    %351 = vector.shape_cast %18 : vector<1x16xf32> to vector<1x1x16xf32>
    %352 = vector.broadcast %351 : vector<1x1x16xf32> to vector<1x16x16xf32>
    %353 = arith.addf %350, %352 : vector<1x16x16xf32>
    %cst_92 = arith.constant dense<0xFF800000> : vector<1x16xf32>
    %354 = vector.multi_reduction <maximumf>, %353, %cst_92 [2] : vector<1x16x16xf32> to vector<1x16xf32>
    %355 = vector.shape_cast %354 : vector<1x16xf32> to vector<1x16x1xf32>
    %356 = vector.broadcast %355 : vector<1x16x1xf32> to vector<1x16x16xf32>
    %357 = arith.subf %353, %356 : vector<1x16x16xf32>
    %358 = math.exp %357 : vector<1x16x16xf32>
    %cst_93 = arith.constant dense<0.000000e+00> : vector<1x16xf32>
    %359 = vector.multi_reduction <add>, %358, %cst_93 [2] : vector<1x16x16xf32> to vector<1x16xf32>
    %360 = vector.shape_cast %359 : vector<1x16xf32> to vector<1x16x1xf32>
    %361 = tpu.reciprocal %360 {approx = true} : vector<1x16x1xf32> -> vector<1x16x1xf32>
    %362 = vector.broadcast %361 : vector<1x16x1xf32> to vector<1x16x16xf32>
    %363 = arith.mulf %358, %362 : vector<1x16x16xf32>
    %364 = arith.truncf %363 : vector<1x16x16xf32> to vector<1x16x16xbf16>
    "tpu.trace_start"() <{level = 10 : i32, message = "bqk,bkd->bqd"}> : () -> ()
    %cst_94 = arith.constant dense<0.000000e+00> : vector<1x16x4xf32>
    %365 = tpu.matmul %364, %349, %cst_94 {dimension_numbers = #tpu.dot_dimension_numbers<[2], [1], [1], [2], [0, 0, 0, 1, 1, 2], [0], [0]>} : vector<1x16x16xbf16>, vector<1x16x4xbf16>, vector<1x16x4xf32> -> vector<1x16x4xf32>
    "tpu.trace_stop"() : () -> ()
    %366 = arith.truncf %365 : vector<1x16x4xf32> to vector<1x16x4xbf16>
    %367 = vector.extract_strided_slice %314 {offsets = [0, 8], sizes = [16, 4], strides = [1, 1]} : vector<16x96xf32> to vector<16x4xf32>
    %368 = vector.shape_cast %367 : vector<16x4xf32> to vector<1x16x4xf32>
    %369 = arith.truncf %368 : vector<1x16x4xf32> to vector<1x16x4xbf16>
    %370 = vector.extract_strided_slice %314 {offsets = [0, 40], sizes = [16, 4], strides = [1, 1]} : vector<16x96xf32> to vector<16x4xf32>
    %371 = vector.shape_cast %370 : vector<16x4xf32> to vector<1x16x4xf32>
    %372 = arith.truncf %371 : vector<1x16x4xf32> to vector<1x16x4xbf16>
    %373 = vector.extract_strided_slice %314 {offsets = [0, 72], sizes = [16, 4], strides = [1, 1]} : vector<16x96xf32> to vector<16x4xf32>
    %374 = vector.shape_cast %373 : vector<16x4xf32> to vector<1x16x4xf32>
    %375 = arith.truncf %374 : vector<1x16x4xf32> to vector<1x16x4xbf16>
    "tpu.trace_start"() <{level = 10 : i32, message = "bqd,bkd->bqk"}> : () -> ()
    %cst_95 = arith.constant dense<0.000000e+00> : vector<1x16x16xf32>
    %376 = tpu.matmul %369, %372, %cst_95 {dimension_numbers = #tpu.dot_dimension_numbers<[2], [2], [1], [1], [0, 0, 0, 1, 1, 1], [0], [0]>} : vector<1x16x4xbf16>, vector<1x16x4xbf16>, vector<1x16x16xf32> -> vector<1x16x16xf32>
    "tpu.trace_stop"() : () -> ()
    %377 = vector.shape_cast %18 : vector<1x16xf32> to vector<1x1x16xf32>
    %378 = vector.broadcast %377 : vector<1x1x16xf32> to vector<1x16x16xf32>
    %379 = arith.addf %376, %378 : vector<1x16x16xf32>
    %cst_96 = arith.constant dense<0xFF800000> : vector<1x16xf32>
    %380 = vector.multi_reduction <maximumf>, %379, %cst_96 [2] : vector<1x16x16xf32> to vector<1x16xf32>
    %381 = vector.shape_cast %380 : vector<1x16xf32> to vector<1x16x1xf32>
    %382 = vector.broadcast %381 : vector<1x16x1xf32> to vector<1x16x16xf32>
    %383 = arith.subf %379, %382 : vector<1x16x16xf32>
    %384 = math.exp %383 : vector<1x16x16xf32>
    %cst_97 = arith.constant dense<0.000000e+00> : vector<1x16xf32>
    %385 = vector.multi_reduction <add>, %384, %cst_97 [2] : vector<1x16x16xf32> to vector<1x16xf32>
    %386 = vector.shape_cast %385 : vector<1x16xf32> to vector<1x16x1xf32>
    %387 = tpu.reciprocal %386 {approx = true} : vector<1x16x1xf32> -> vector<1x16x1xf32>
    %388 = vector.broadcast %387 : vector<1x16x1xf32> to vector<1x16x16xf32>
    %389 = arith.mulf %384, %388 : vector<1x16x16xf32>
    %390 = arith.truncf %389 : vector<1x16x16xf32> to vector<1x16x16xbf16>
    "tpu.trace_start"() <{level = 10 : i32, message = "bqk,bkd->bqd"}> : () -> ()
    %cst_98 = arith.constant dense<0.000000e+00> : vector<1x16x4xf32>
    %391 = tpu.matmul %390, %375, %cst_98 {dimension_numbers = #tpu.dot_dimension_numbers<[2], [1], [1], [2], [0, 0, 0, 1, 1, 2], [0], [0]>} : vector<1x16x16xbf16>, vector<1x16x4xbf16>, vector<1x16x4xf32> -> vector<1x16x4xf32>
    "tpu.trace_stop"() : () -> ()
    %392 = arith.truncf %391 : vector<1x16x4xf32> to vector<1x16x4xbf16>
    %393 = vector.extract_strided_slice %314 {offsets = [0, 12], sizes = [16, 4], strides = [1, 1]} : vector<16x96xf32> to vector<16x4xf32>
    %394 = vector.shape_cast %393 : vector<16x4xf32> to vector<1x16x4xf32>
    %395 = arith.truncf %394 : vector<1x16x4xf32> to vector<1x16x4xbf16>
    %396 = vector.extract_strided_slice %314 {offsets = [0, 44], sizes = [16, 4], strides = [1, 1]} : vector<16x96xf32> to vector<16x4xf32>
    %397 = vector.shape_cast %396 : vector<16x4xf32> to vector<1x16x4xf32>
    %398 = arith.truncf %397 : vector<1x16x4xf32> to vector<1x16x4xbf16>
    %399 = vector.extract_strided_slice %314 {offsets = [0, 76], sizes = [16, 4], strides = [1, 1]} : vector<16x96xf32> to vector<16x4xf32>
    %400 = vector.shape_cast %399 : vector<16x4xf32> to vector<1x16x4xf32>
    %401 = arith.truncf %400 : vector<1x16x4xf32> to vector<1x16x4xbf16>
    "tpu.trace_start"() <{level = 10 : i32, message = "bqd,bkd->bqk"}> : () -> ()
    %cst_99 = arith.constant dense<0.000000e+00> : vector<1x16x16xf32>
    %402 = tpu.matmul %395, %398, %cst_99 {dimension_numbers = #tpu.dot_dimension_numbers<[2], [2], [1], [1], [0, 0, 0, 1, 1, 1], [0], [0]>} : vector<1x16x4xbf16>, vector<1x16x4xbf16>, vector<1x16x16xf32> -> vector<1x16x16xf32>
    "tpu.trace_stop"() : () -> ()
    %403 = vector.shape_cast %18 : vector<1x16xf32> to vector<1x1x16xf32>
    %404 = vector.broadcast %403 : vector<1x1x16xf32> to vector<1x16x16xf32>
    %405 = arith.addf %402, %404 : vector<1x16x16xf32>
    %cst_100 = arith.constant dense<0xFF800000> : vector<1x16xf32>
    %406 = vector.multi_reduction <maximumf>, %405, %cst_100 [2] : vector<1x16x16xf32> to vector<1x16xf32>
    %407 = vector.shape_cast %406 : vector<1x16xf32> to vector<1x16x1xf32>
    %408 = vector.broadcast %407 : vector<1x16x1xf32> to vector<1x16x16xf32>
    %409 = arith.subf %405, %408 : vector<1x16x16xf32>
    %410 = math.exp %409 : vector<1x16x16xf32>
    %cst_101 = arith.constant dense<0.000000e+00> : vector<1x16xf32>
    %411 = vector.multi_reduction <add>, %410, %cst_101 [2] : vector<1x16x16xf32> to vector<1x16xf32>
    %412 = vector.shape_cast %411 : vector<1x16xf32> to vector<1x16x1xf32>
    %413 = tpu.reciprocal %412 {approx = true} : vector<1x16x1xf32> -> vector<1x16x1xf32>
    %414 = vector.broadcast %413 : vector<1x16x1xf32> to vector<1x16x16xf32>
    %415 = arith.mulf %410, %414 : vector<1x16x16xf32>
    %416 = arith.truncf %415 : vector<1x16x16xf32> to vector<1x16x16xbf16>
    "tpu.trace_start"() <{level = 10 : i32, message = "bqk,bkd->bqd"}> : () -> ()
    %cst_102 = arith.constant dense<0.000000e+00> : vector<1x16x4xf32>
    %417 = tpu.matmul %416, %401, %cst_102 {dimension_numbers = #tpu.dot_dimension_numbers<[2], [1], [1], [2], [0, 0, 0, 1, 1, 2], [0], [0]>} : vector<1x16x16xbf16>, vector<1x16x4xbf16>, vector<1x16x4xf32> -> vector<1x16x4xf32>
    "tpu.trace_stop"() : () -> ()
    %418 = arith.truncf %417 : vector<1x16x4xf32> to vector<1x16x4xbf16>
    %419 = vector.extract_strided_slice %314 {offsets = [0, 16], sizes = [16, 4], strides = [1, 1]} : vector<16x96xf32> to vector<16x4xf32>
    %420 = vector.shape_cast %419 : vector<16x4xf32> to vector<1x16x4xf32>
    %421 = arith.truncf %420 : vector<1x16x4xf32> to vector<1x16x4xbf16>
    %422 = vector.extract_strided_slice %314 {offsets = [0, 48], sizes = [16, 4], strides = [1, 1]} : vector<16x96xf32> to vector<16x4xf32>
    %423 = vector.shape_cast %422 : vector<16x4xf32> to vector<1x16x4xf32>
    %424 = arith.truncf %423 : vector<1x16x4xf32> to vector<1x16x4xbf16>
    %425 = vector.extract_strided_slice %314 {offsets = [0, 80], sizes = [16, 4], strides = [1, 1]} : vector<16x96xf32> to vector<16x4xf32>
    %426 = vector.shape_cast %425 : vector<16x4xf32> to vector<1x16x4xf32>
    %427 = arith.truncf %426 : vector<1x16x4xf32> to vector<1x16x4xbf16>
    "tpu.trace_start"() <{level = 10 : i32, message = "bqd,bkd->bqk"}> : () -> ()
    %cst_103 = arith.constant dense<0.000000e+00> : vector<1x16x16xf32>
    %428 = tpu.matmul %421, %424, %cst_103 {dimension_numbers = #tpu.dot_dimension_numbers<[2], [2], [1], [1], [0, 0, 0, 1, 1, 1], [0], [0]>} : vector<1x16x4xbf16>, vector<1x16x4xbf16>, vector<1x16x16xf32> -> vector<1x16x16xf32>
    "tpu.trace_stop"() : () -> ()
    %429 = vector.shape_cast %18 : vector<1x16xf32> to vector<1x1x16xf32>
    %430 = vector.broadcast %429 : vector<1x1x16xf32> to vector<1x16x16xf32>
    %431 = arith.addf %428, %430 : vector<1x16x16xf32>
    %cst_104 = arith.constant dense<0xFF800000> : vector<1x16xf32>
    %432 = vector.multi_reduction <maximumf>, %431, %cst_104 [2] : vector<1x16x16xf32> to vector<1x16xf32>
    %433 = vector.shape_cast %432 : vector<1x16xf32> to vector<1x16x1xf32>
    %434 = vector.broadcast %433 : vector<1x16x1xf32> to vector<1x16x16xf32>
    %435 = arith.subf %431, %434 : vector<1x16x16xf32>
    %436 = math.exp %435 : vector<1x16x16xf32>
    %cst_105 = arith.constant dense<0.000000e+00> : vector<1x16xf32>
    %437 = vector.multi_reduction <add>, %436, %cst_105 [2] : vector<1x16x16xf32> to vector<1x16xf32>
    %438 = vector.shape_cast %437 : vector<1x16xf32> to vector<1x16x1xf32>
    %439 = tpu.reciprocal %438 {approx = true} : vector<1x16x1xf32> -> vector<1x16x1xf32>
    %440 = vector.broadcast %439 : vector<1x16x1xf32> to vector<1x16x16xf32>
    %441 = arith.mulf %436, %440 : vector<1x16x16xf32>
    %442 = arith.truncf %441 : vector<1x16x16xf32> to vector<1x16x16xbf16>
    "tpu.trace_start"() <{level = 10 : i32, message = "bqk,bkd->bqd"}> : () -> ()
    %cst_106 = arith.constant dense<0.000000e+00> : vector<1x16x4xf32>
    %443 = tpu.matmul %442, %427, %cst_106 {dimension_numbers = #tpu.dot_dimension_numbers<[2], [1], [1], [2], [0, 0, 0, 1, 1, 2], [0], [0]>} : vector<1x16x16xbf16>, vector<1x16x4xbf16>, vector<1x16x4xf32> -> vector<1x16x4xf32>
    "tpu.trace_stop"() : () -> ()
    %444 = arith.truncf %443 : vector<1x16x4xf32> to vector<1x16x4xbf16>
    %445 = vector.extract_strided_slice %314 {offsets = [0, 20], sizes = [16, 4], strides = [1, 1]} : vector<16x96xf32> to vector<16x4xf32>
    %446 = vector.shape_cast %445 : vector<16x4xf32> to vector<1x16x4xf32>
    %447 = arith.truncf %446 : vector<1x16x4xf32> to vector<1x16x4xbf16>
    %448 = vector.extract_strided_slice %314 {offsets = [0, 52], sizes = [16, 4], strides = [1, 1]} : vector<16x96xf32> to vector<16x4xf32>
    %449 = vector.shape_cast %448 : vector<16x4xf32> to vector<1x16x4xf32>
    %450 = arith.truncf %449 : vector<1x16x4xf32> to vector<1x16x4xbf16>
    %451 = vector.extract_strided_slice %314 {offsets = [0, 84], sizes = [16, 4], strides = [1, 1]} : vector<16x96xf32> to vector<16x4xf32>
    %452 = vector.shape_cast %451 : vector<16x4xf32> to vector<1x16x4xf32>
    %453 = arith.truncf %452 : vector<1x16x4xf32> to vector<1x16x4xbf16>
    "tpu.trace_start"() <{level = 10 : i32, message = "bqd,bkd->bqk"}> : () -> ()
    %cst_107 = arith.constant dense<0.000000e+00> : vector<1x16x16xf32>
    %454 = tpu.matmul %447, %450, %cst_107 {dimension_numbers = #tpu.dot_dimension_numbers<[2], [2], [1], [1], [0, 0, 0, 1, 1, 1], [0], [0]>} : vector<1x16x4xbf16>, vector<1x16x4xbf16>, vector<1x16x16xf32> -> vector<1x16x16xf32>
    "tpu.trace_stop"() : () -> ()
    %455 = vector.shape_cast %18 : vector<1x16xf32> to vector<1x1x16xf32>
    %456 = vector.broadcast %455 : vector<1x1x16xf32> to vector<1x16x16xf32>
    %457 = arith.addf %454, %456 : vector<1x16x16xf32>
    %cst_108 = arith.constant dense<0xFF800000> : vector<1x16xf32>
    %458 = vector.multi_reduction <maximumf>, %457, %cst_108 [2] : vector<1x16x16xf32> to vector<1x16xf32>
    %459 = vector.shape_cast %458 : vector<1x16xf32> to vector<1x16x1xf32>
    %460 = vector.broadcast %459 : vector<1x16x1xf32> to vector<1x16x16xf32>
    %461 = arith.subf %457, %460 : vector<1x16x16xf32>
    %462 = math.exp %461 : vector<1x16x16xf32>
    %cst_109 = arith.constant dense<0.000000e+00> : vector<1x16xf32>
    %463 = vector.multi_reduction <add>, %462, %cst_109 [2] : vector<1x16x16xf32> to vector<1x16xf32>
    %464 = vector.shape_cast %463 : vector<1x16xf32> to vector<1x16x1xf32>
    %465 = tpu.reciprocal %464 {approx = true} : vector<1x16x1xf32> -> vector<1x16x1xf32>
    %466 = vector.broadcast %465 : vector<1x16x1xf32> to vector<1x16x16xf32>
    %467 = arith.mulf %462, %466 : vector<1x16x16xf32>
    %468 = arith.truncf %467 : vector<1x16x16xf32> to vector<1x16x16xbf16>
    "tpu.trace_start"() <{level = 10 : i32, message = "bqk,bkd->bqd"}> : () -> ()
    %cst_110 = arith.constant dense<0.000000e+00> : vector<1x16x4xf32>
    %469 = tpu.matmul %468, %453, %cst_110 {dimension_numbers = #tpu.dot_dimension_numbers<[2], [1], [1], [2], [0, 0, 0, 1, 1, 2], [0], [0]>} : vector<1x16x16xbf16>, vector<1x16x4xbf16>, vector<1x16x4xf32> -> vector<1x16x4xf32>
    "tpu.trace_stop"() : () -> ()
    %470 = arith.truncf %469 : vector<1x16x4xf32> to vector<1x16x4xbf16>
    %471 = vector.extract_strided_slice %314 {offsets = [0, 24], sizes = [16, 4], strides = [1, 1]} : vector<16x96xf32> to vector<16x4xf32>
    %472 = vector.shape_cast %471 : vector<16x4xf32> to vector<1x16x4xf32>
    %473 = arith.truncf %472 : vector<1x16x4xf32> to vector<1x16x4xbf16>
    %474 = vector.extract_strided_slice %314 {offsets = [0, 56], sizes = [16, 4], strides = [1, 1]} : vector<16x96xf32> to vector<16x4xf32>
    %475 = vector.shape_cast %474 : vector<16x4xf32> to vector<1x16x4xf32>
    %476 = arith.truncf %475 : vector<1x16x4xf32> to vector<1x16x4xbf16>
    %477 = vector.extract_strided_slice %314 {offsets = [0, 88], sizes = [16, 4], strides = [1, 1]} : vector<16x96xf32> to vector<16x4xf32>
    %478 = vector.shape_cast %477 : vector<16x4xf32> to vector<1x16x4xf32>
    %479 = arith.truncf %478 : vector<1x16x4xf32> to vector<1x16x4xbf16>
    "tpu.trace_start"() <{level = 10 : i32, message = "bqd,bkd->bqk"}> : () -> ()
    %cst_111 = arith.constant dense<0.000000e+00> : vector<1x16x16xf32>
    %480 = tpu.matmul %473, %476, %cst_111 {dimension_numbers = #tpu.dot_dimension_numbers<[2], [2], [1], [1], [0, 0, 0, 1, 1, 1], [0], [0]>} : vector<1x16x4xbf16>, vector<1x16x4xbf16>, vector<1x16x16xf32> -> vector<1x16x16xf32>
    "tpu.trace_stop"() : () -> ()
    %481 = vector.shape_cast %18 : vector<1x16xf32> to vector<1x1x16xf32>
    %482 = vector.broadcast %481 : vector<1x1x16xf32> to vector<1x16x16xf32>
    %483 = arith.addf %480, %482 : vector<1x16x16xf32>
    %cst_112 = arith.constant dense<0xFF800000> : vector<1x16xf32>
    %484 = vector.multi_reduction <maximumf>, %483, %cst_112 [2] : vector<1x16x16xf32> to vector<1x16xf32>
    %485 = vector.shape_cast %484 : vector<1x16xf32> to vector<1x16x1xf32>
    %486 = vector.broadcast %485 : vector<1x16x1xf32> to vector<1x16x16xf32>
    %487 = arith.subf %483, %486 : vector<1x16x16xf32>
    %488 = math.exp %487 : vector<1x16x16xf32>
    %cst_113 = arith.constant dense<0.000000e+00> : vector<1x16xf32>
    %489 = vector.multi_reduction <add>, %488, %cst_113 [2] : vector<1x16x16xf32> to vector<1x16xf32>
    %490 = vector.shape_cast %489 : vector<1x16xf32> to vector<1x16x1xf32>
    %491 = tpu.reciprocal %490 {approx = true} : vector<1x16x1xf32> -> vector<1x16x1xf32>
    %492 = vector.broadcast %491 : vector<1x16x1xf32> to vector<1x16x16xf32>
    %493 = arith.mulf %488, %492 : vector<1x16x16xf32>
    %494 = arith.truncf %493 : vector<1x16x16xf32> to vector<1x16x16xbf16>
    "tpu.trace_start"() <{level = 10 : i32, message = "bqk,bkd->bqd"}> : () -> ()
    %cst_114 = arith.constant dense<0.000000e+00> : vector<1x16x4xf32>
    %495 = tpu.matmul %494, %479, %cst_114 {dimension_numbers = #tpu.dot_dimension_numbers<[2], [1], [1], [2], [0, 0, 0, 1, 1, 2], [0], [0]>} : vector<1x16x16xbf16>, vector<1x16x4xbf16>, vector<1x16x4xf32> -> vector<1x16x4xf32>
    "tpu.trace_stop"() : () -> ()
    %496 = arith.truncf %495 : vector<1x16x4xf32> to vector<1x16x4xbf16>
    %497 = vector.extract_strided_slice %314 {offsets = [0, 28], sizes = [16, 4], strides = [1, 1]} : vector<16x96xf32> to vector<16x4xf32>
    %498 = vector.shape_cast %497 : vector<16x4xf32> to vector<1x16x4xf32>
    %499 = arith.truncf %498 : vector<1x16x4xf32> to vector<1x16x4xbf16>
    %500 = vector.extract_strided_slice %314 {offsets = [0, 60], sizes = [16, 4], strides = [1, 1]} : vector<16x96xf32> to vector<16x4xf32>
    %501 = vector.shape_cast %500 : vector<16x4xf32> to vector<1x16x4xf32>
    %502 = arith.truncf %501 : vector<1x16x4xf32> to vector<1x16x4xbf16>
    %503 = vector.extract_strided_slice %314 {offsets = [0, 92], sizes = [16, 4], strides = [1, 1]} : vector<16x96xf32> to vector<16x4xf32>
    %504 = vector.shape_cast %503 : vector<16x4xf32> to vector<1x16x4xf32>
    %505 = arith.truncf %504 : vector<1x16x4xf32> to vector<1x16x4xbf16>
    "tpu.trace_start"() <{level = 10 : i32, message = "bqd,bkd->bqk"}> : () -> ()
    %cst_115 = arith.constant dense<0.000000e+00> : vector<1x16x16xf32>
    %506 = tpu.matmul %499, %502, %cst_115 {dimension_numbers = #tpu.dot_dimension_numbers<[2], [2], [1], [1], [0, 0, 0, 1, 1, 1], [0], [0]>} : vector<1x16x4xbf16>, vector<1x16x4xbf16>, vector<1x16x16xf32> -> vector<1x16x16xf32>
    "tpu.trace_stop"() : () -> ()
    %507 = vector.shape_cast %18 : vector<1x16xf32> to vector<1x1x16xf32>
    %508 = vector.broadcast %507 : vector<1x1x16xf32> to vector<1x16x16xf32>
    %509 = arith.addf %506, %508 : vector<1x16x16xf32>
    %cst_116 = arith.constant dense<0xFF800000> : vector<1x16xf32>
    %510 = vector.multi_reduction <maximumf>, %509, %cst_116 [2] : vector<1x16x16xf32> to vector<1x16xf32>
    %511 = vector.shape_cast %510 : vector<1x16xf32> to vector<1x16x1xf32>
    %512 = vector.broadcast %511 : vector<1x16x1xf32> to vector<1x16x16xf32>
    %513 = arith.subf %509, %512 : vector<1x16x16xf32>
    %514 = math.exp %513 : vector<1x16x16xf32>
    %cst_117 = arith.constant dense<0.000000e+00> : vector<1x16xf32>
    %515 = vector.multi_reduction <add>, %514, %cst_117 [2] : vector<1x16x16xf32> to vector<1x16xf32>
    %516 = vector.shape_cast %515 : vector<1x16xf32> to vector<1x16x1xf32>
    %517 = tpu.reciprocal %516 {approx = true} : vector<1x16x1xf32> -> vector<1x16x1xf32>
    %518 = vector.broadcast %517 : vector<1x16x1xf32> to vector<1x16x16xf32>
    %519 = arith.mulf %514, %518 : vector<1x16x16xf32>
    %520 = arith.truncf %519 : vector<1x16x16xf32> to vector<1x16x16xbf16>
    "tpu.trace_start"() <{level = 10 : i32, message = "bqk,bkd->bqd"}> : () -> ()
    %cst_118 = arith.constant dense<0.000000e+00> : vector<1x16x4xf32>
    %521 = tpu.matmul %520, %505, %cst_118 {dimension_numbers = #tpu.dot_dimension_numbers<[2], [1], [1], [2], [0, 0, 0, 1, 1, 2], [0], [0]>} : vector<1x16x16xbf16>, vector<1x16x4xbf16>, vector<1x16x4xf32> -> vector<1x16x4xf32>
    "tpu.trace_stop"() : () -> ()
    %522 = arith.truncf %521 : vector<1x16x4xf32> to vector<1x16x4xbf16>
    %523 = tpu.concatenate %340, %366, %392, %418, %444, %470, %496, %522 in 2 : vector<1x16x4xbf16>, vector<1x16x4xbf16>, vector<1x16x4xbf16>, vector<1x16x4xbf16>, vector<1x16x4xbf16>, vector<1x16x4xbf16>, vector<1x16x4xbf16>, vector<1x16x4xbf16> -> vector<1x16x32xbf16>
    %524 = vector.shape_cast %523 : vector<1x16x32xbf16> to vector<16x32xbf16>
    %c1_119 = arith.constant 1 : index
    %c0_120 = arith.constant 0 : index
    %c0_121 = arith.constant 0 : index
    %525 = vector.load %arg6[%c1_119, %c0_120, %c0_121] : memref<2x32x32xbf16, #tpu.memory_space<vmem>>, vector<1x32x32xbf16>
    %526 = vector.shape_cast %525 : vector<1x32x32xbf16> to vector<32x32xbf16>
    %cst_122 = arith.constant dense<0.000000e+00> : vector<16x32xf32>
    %527 = tpu.matmul %524, %526, %cst_122 {dimension_numbers = #tpu.dot_dimension_numbers<[1], [0], [0], [1], [0, 0, 1, 1], [], []>} : vector<16x32xbf16>, vector<32x32xbf16>, vector<16x32xf32> -> vector<16x32xf32>
    %c1_123 = arith.constant 1 : index
    %c0_124 = arith.constant 0 : index
    %528 = vector.load %arg7[%c1_123, %c0_124] : memref<2x32xf32, #tpu.memory_space<vmem>>, vector<1x32xf32>
    %529 = vector.broadcast %528 : vector<1x32xf32> to vector<16x32xf32>
    %530 = arith.addf %527, %529 : vector<16x32xf32>
    %531 = arith.addf %307, %530 : vector<16x32xf32>
    %c1_125 = arith.constant 1 : index
    %c0_126 = arith.constant 0 : index
    %532 = vector.load %arg8[%c1_125, %c0_126] : memref<2x32xf32, #tpu.memory_space<vmem>>, vector<1x32xf32>
    %c1_127 = arith.constant 1 : index
    %c0_128 = arith.constant 0 : index
    %533 = vector.load %arg9[%c1_127, %c0_128] : memref<2x32xf32, #tpu.memory_space<vmem>>, vector<1x32xf32>
    %cst_129 = arith.constant dense<0.000000e+00> : vector<16xf32>
    %534 = vector.multi_reduction <add>, %531, %cst_129 [1] : vector<16x32xf32> to vector<16xf32>
    %535 = vector.shape_cast %534 : vector<16xf32> to vector<16x1xf32>
    %cst_130 = arith.constant 3.200000e+01 : f32
    %536 = vector.broadcast %cst_130 : f32 to vector<16x1xf32>
    %537 = arith.divf %535, %536 : vector<16x1xf32>
    %538 = vector.broadcast %537 : vector<16x1xf32> to vector<16x32xf32>
    %539 = arith.subf %531, %538 : vector<16x32xf32>
    %540 = arith.mulf %539, %539 : vector<16x32xf32>
    %cst_131 = arith.constant dense<0.000000e+00> : vector<16xf32>
    %541 = vector.multi_reduction <add>, %540, %cst_131 [1] : vector<16x32xf32> to vector<16xf32>
    %542 = vector.shape_cast %541 : vector<16xf32> to vector<16x1xf32>
    %cst_132 = arith.constant 3.200000e+01 : f32
    %543 = vector.broadcast %cst_132 : f32 to vector<16x1xf32>
    %544 = arith.divf %542, %543 : vector<16x1xf32>
    %545 = vector.broadcast %537 : vector<16x1xf32> to vector<16x32xf32>
    %546 = arith.subf %531, %545 : vector<16x32xf32>
    %cst_133 = arith.constant 9.99999974E-6 : f32
    %547 = vector.broadcast %cst_133 : f32 to vector<16x1xf32>
    %548 = arith.addf %544, %547 : vector<16x1xf32>
    %549 = math.rsqrt %548 : vector<16x1xf32>
    %550 = vector.broadcast %549 : vector<16x1xf32> to vector<16x32xf32>
    %551 = arith.mulf %546, %550 : vector<16x32xf32>
    %552 = vector.broadcast %532 : vector<1x32xf32> to vector<16x32xf32>
    %553 = arith.mulf %551, %552 : vector<16x32xf32>
    %554 = vector.broadcast %533 : vector<1x32xf32> to vector<16x32xf32>
    %555 = arith.addf %553, %554 : vector<16x32xf32>
    %556 = arith.truncf %555 : vector<16x32xf32> to vector<16x32xbf16>
    %c1_134 = arith.constant 1 : index
    %c0_135 = arith.constant 0 : index
    %c0_136 = arith.constant 0 : index
    %557 = vector.load %arg10[%c1_134, %c0_135, %c0_136] : memref<2x32x128xbf16, #tpu.memory_space<vmem>>, vector<1x32x128xbf16>
    %558 = vector.shape_cast %557 : vector<1x32x128xbf16> to vector<32x128xbf16>
    %cst_137 = arith.constant dense<0.000000e+00> : vector<16x128xf32>
    %559 = tpu.matmul %556, %558, %cst_137 {dimension_numbers = #tpu.dot_dimension_numbers<[1], [0], [0], [1], [0, 0, 1, 1], [], []>} : vector<16x32xbf16>, vector<32x128xbf16>, vector<16x128xf32> -> vector<16x128xf32>
    %c1_138 = arith.constant 1 : index
    %c0_139 = arith.constant 0 : index
    %560 = vector.load %arg11[%c1_138, %c0_139] : memref<2x128xf32, #tpu.memory_space<vmem>>, vector<1x128xf32>
    %561 = vector.broadcast %560 : vector<1x128xf32> to vector<16x128xf32>
    %562 = arith.addf %559, %561 : vector<16x128xf32>
    %cst_140 = arith.constant 0.000000e+00 : f32
    %563 = vector.broadcast %cst_140 : f32 to vector<16x128xf32>
    %564 = arith.maximumf %562, %563 : vector<16x128xf32>
    %565 = arith.truncf %564 : vector<16x128xf32> to vector<16x128xbf16>
    %c1_141 = arith.constant 1 : index
    %c0_142 = arith.constant 0 : index
    %c0_143 = arith.constant 0 : index
    %566 = vector.load %arg12[%c1_141, %c0_142, %c0_143] : memref<2x128x32xbf16, #tpu.memory_space<vmem>>, vector<1x128x32xbf16>
    %567 = vector.shape_cast %566 : vector<1x128x32xbf16> to vector<128x32xbf16>
    %cst_144 = arith.constant dense<0.000000e+00> : vector<16x32xf32>
    %568 = tpu.matmul %565, %567, %cst_144 {dimension_numbers = #tpu.dot_dimension_numbers<[1], [0], [0], [1], [0, 0, 1, 1], [], []>} : vector<16x128xbf16>, vector<128x32xbf16>, vector<16x32xf32> -> vector<16x32xf32>
    %c1_145 = arith.constant 1 : index
    %c0_146 = arith.constant 0 : index
    %569 = vector.load %arg13[%c1_145, %c0_146] : memref<2x32xf32, #tpu.memory_space<vmem>>, vector<1x32xf32>
    %570 = vector.broadcast %569 : vector<1x32xf32> to vector<16x32xf32>
    %571 = arith.addf %568, %570 : vector<16x32xf32>
    %572 = arith.addf %555, %571 : vector<16x32xf32>
    %c1_147 = arith.constant 1 : index
    %c0_148 = arith.constant 0 : index
    %573 = vector.load %arg14[%c1_147, %c0_148] : memref<2x32xf32, #tpu.memory_space<vmem>>, vector<1x32xf32>
    %c1_149 = arith.constant 1 : index
    %c0_150 = arith.constant 0 : index
    %574 = vector.load %arg15[%c1_149, %c0_150] : memref<2x32xf32, #tpu.memory_space<vmem>>, vector<1x32xf32>
    %cst_151 = arith.constant dense<0.000000e+00> : vector<16xf32>
    %575 = vector.multi_reduction <add>, %572, %cst_151 [1] : vector<16x32xf32> to vector<16xf32>
    %576 = vector.shape_cast %575 : vector<16xf32> to vector<16x1xf32>
    %cst_152 = arith.constant 3.200000e+01 : f32
    %577 = vector.broadcast %cst_152 : f32 to vector<16x1xf32>
    %578 = arith.divf %576, %577 : vector<16x1xf32>
    %579 = vector.broadcast %578 : vector<16x1xf32> to vector<16x32xf32>
    %580 = arith.subf %572, %579 : vector<16x32xf32>
    %581 = arith.mulf %580, %580 : vector<16x32xf32>
    %cst_153 = arith.constant dense<0.000000e+00> : vector<16xf32>
    %582 = vector.multi_reduction <add>, %581, %cst_153 [1] : vector<16x32xf32> to vector<16xf32>
    %583 = vector.shape_cast %582 : vector<16xf32> to vector<16x1xf32>
    %cst_154 = arith.constant 3.200000e+01 : f32
    %584 = vector.broadcast %cst_154 : f32 to vector<16x1xf32>
    %585 = arith.divf %583, %584 : vector<16x1xf32>
    %586 = vector.broadcast %578 : vector<16x1xf32> to vector<16x32xf32>
    %587 = arith.subf %572, %586 : vector<16x32xf32>
    %cst_155 = arith.constant 9.99999974E-6 : f32
    %588 = vector.broadcast %cst_155 : f32 to vector<16x1xf32>
    %589 = arith.addf %585, %588 : vector<16x1xf32>
    %590 = math.rsqrt %589 : vector<16x1xf32>
    %591 = vector.broadcast %590 : vector<16x1xf32> to vector<16x32xf32>
    %592 = arith.mulf %587, %591 : vector<16x32xf32>
    %593 = vector.broadcast %573 : vector<1x32xf32> to vector<16x32xf32>
    %594 = arith.mulf %592, %593 : vector<16x32xf32>
    %595 = vector.broadcast %574 : vector<1x32xf32> to vector<16x32xf32>
    %596 = arith.addf %594, %595 : vector<16x32xf32>
    %597 = vector.shape_cast %596 : vector<16x32xf32> to vector<1x16x32xf32>
    %598 = vector.extract_strided_slice %597 {offsets = [0, 8, 0], sizes = [1, 1, 32], strides = [1, 1, 1]} : vector<1x16x32xf32> to vector<1x1x32xf32>
    %599 = vector.shape_cast %598 : vector<1x1x32xf32> to vector<1x32xf32>
    %600 = arith.truncf %599 : vector<1x32xf32> to vector<1x32xbf16>
    %c0_156 = arith.constant 0 : index
    %c0_157 = arith.constant 0 : index
    %601 = vector.load %arg16[%c0_156, %c0_157] : memref<32x32xbf16, #tpu.memory_space<vmem>>, vector<32x32xbf16>
    %cst_158 = arith.constant dense<0.000000e+00> : vector<1x32xf32>
    %602 = tpu.matmul %600, %601, %cst_158 {dimension_numbers = #tpu.dot_dimension_numbers<[1], [0], [0], [1], [0, 0, 1, 1], [], []>} : vector<1x32xbf16>, vector<32x32xbf16>, vector<1x32xf32> -> vector<1x32xf32>
    %c0_159 = arith.constant 0 : index
    %c0_160 = arith.constant 0 : index
    %603 = vector.load %arg17[%c0_159, %c0_160] : memref<1x32xf32, #tpu.memory_space<vmem>>, vector<1x32xf32>
    %604 = arith.addf %602, %603 : vector<1x32xf32>
    %cst_161 = arith.constant 0.000000e+00 : f32
    %605 = vector.broadcast %cst_161 : f32 to vector<1x32xf32>
    %606 = arith.maximumf %604, %605 : vector<1x32xf32>
    %c0_162 = arith.constant 0 : index
    %c0_163 = arith.constant 0 : index
    %607 = vector.load %arg18[%c0_162, %c0_163] : memref<1x32xf32, #tpu.memory_space<vmem>>, vector<1x32xf32>
    %608 = arith.mulf %606, %607 : vector<1x32xf32>
    %cst_164 = arith.constant dense<0.000000e+00> : vector<1xf32>
    %609 = vector.multi_reduction <add>, %608, %cst_164 [1] : vector<1x32xf32> to vector<1xf32>
    %610 = vector.shape_cast %609 : vector<1xf32> to vector<1x1xf32>
    %c0_165 = arith.constant 0 : index
    %c0_166 = arith.constant 0 : index
    %611 = vector.load %arg19[%c0_165, %c0_166] : memref<1x1xf32, #tpu.memory_space<vmem>>, vector<1x1xf32>
    %612 = arith.addf %610, %611 : vector<1x1xf32>
    %613 = arith.negf %612 : vector<1x1xf32>
    %614 = math.exp %613 : vector<1x1xf32>
    %cst_167 = arith.constant 1.000000e+00 : f32
    %615 = vector.broadcast %cst_167 : f32 to vector<1x1xf32>
    %616 = arith.addf %615, %614 : vector<1x1xf32>
    %617 = arith.divf %615, %616 : vector<1x1xf32>
    %618 = vector.shape_cast %617 : vector<1x1xf32> to vector<1x1x1xf32>
    %c0_168 = arith.constant 0 : index
    %c0_169 = arith.constant 0 : index
    %c0_170 = arith.constant 0 : index
    %619 = vector.load %arg20[%c0_168, %c0_169, %c0_170] : memref<1x1x1xf32, #tpu.memory_space<vmem>>, vector<1x1x1xf32>
    tpu.vector_store %arg20[%c0_168, %c0_169, %c0_170], %618 {strides = array<i32>} : memref<1x1x1xf32, #tpu.memory_space<vmem>>, vector<1x1x1xf32>,
    return
  }
  func.func @transform_0(%arg0: i32) -> (i32, i32, i32) {
    %c0_i32 = arith.constant 0 : i32
    %c0_i32_0 = arith.constant 0 : i32
    %c0_i32_1 = arith.constant 0 : i32
    return %arg0, %c0_i32, %c0_i32_0 : i32, i32, i32
  }
  func.func @transform_1(%arg0: i32) -> (i32, i32) {
    %c0_i32 = arith.constant 0 : i32
    %c0_i32_0 = arith.constant 0 : i32
    %c0_i32_1 = arith.constant 0 : i32
    return %c0_i32, %c0_i32_0 : i32, i32
  }
  func.func @transform_2(%arg0: i32) -> (i32, i32) {
    %c0_i32 = arith.constant 0 : i32
    %c0_i32_0 = arith.constant 0 : i32
    %c0_i32_1 = arith.constant 0 : i32
    return %c0_i32, %c0_i32_0 : i32, i32
  }
  func.func @transform_3(%arg0: i32) -> (i32, i32, i32) {
    %c0_i32 = arith.constant 0 : i32
    %c0_i32_0 = arith.constant 0 : i32
    %c0_i32_1 = arith.constant 0 : i32
    %c0_i32_2 = arith.constant 0 : i32
    return %c0_i32, %c0_i32_0, %c0_i32_1 : i32, i32, i32
  }
  func.func @transform_4(%arg0: i32) -> (i32, i32) {
    %c0_i32 = arith.constant 0 : i32
    %c0_i32_0 = arith.constant 0 : i32
    %c0_i32_1 = arith.constant 0 : i32
    return %c0_i32, %c0_i32_0 : i32, i32
  }
  func.func @transform_5(%arg0: i32) -> (i32, i32, i32) {
    %c0_i32 = arith.constant 0 : i32
    %c0_i32_0 = arith.constant 0 : i32
    %c0_i32_1 = arith.constant 0 : i32
    %c0_i32_2 = arith.constant 0 : i32
    return %c0_i32, %c0_i32_0, %c0_i32_1 : i32, i32, i32
  }
  func.func @transform_6(%arg0: i32) -> (i32, i32) {
    %c0_i32 = arith.constant 0 : i32
    %c0_i32_0 = arith.constant 0 : i32
    %c0_i32_1 = arith.constant 0 : i32
    return %c0_i32, %c0_i32_0 : i32, i32
  }
  func.func @transform_7(%arg0: i32) -> (i32, i32) {
    %c0_i32 = arith.constant 0 : i32
    %c0_i32_0 = arith.constant 0 : i32
    %c0_i32_1 = arith.constant 0 : i32
    return %c0_i32, %c0_i32_0 : i32, i32
  }
  func.func @transform_8(%arg0: i32) -> (i32, i32) {
    %c0_i32 = arith.constant 0 : i32
    %c0_i32_0 = arith.constant 0 : i32
    %c0_i32_1 = arith.constant 0 : i32
    return %c0_i32, %c0_i32_0 : i32, i32
  }
  func.func @transform_9(%arg0: i32) -> (i32, i32, i32) {
    %c0_i32 = arith.constant 0 : i32
    %c0_i32_0 = arith.constant 0 : i32
    %c0_i32_1 = arith.constant 0 : i32
    %c0_i32_2 = arith.constant 0 : i32
    return %c0_i32, %c0_i32_0, %c0_i32_1 : i32, i32, i32
  }
  func.func @transform_10(%arg0: i32) -> (i32, i32) {
    %c0_i32 = arith.constant 0 : i32
    %c0_i32_0 = arith.constant 0 : i32
    %c0_i32_1 = arith.constant 0 : i32
    return %c0_i32, %c0_i32_0 : i32, i32
  }
  func.func @transform_11(%arg0: i32) -> (i32, i32, i32) {
    %c0_i32 = arith.constant 0 : i32
    %c0_i32_0 = arith.constant 0 : i32
    %c0_i32_1 = arith.constant 0 : i32
    %c0_i32_2 = arith.constant 0 : i32
    return %c0_i32, %c0_i32_0, %c0_i32_1 : i32, i32, i32
  }
  func.func @transform_12(%arg0: i32) -> (i32, i32) {
    %c0_i32 = arith.constant 0 : i32
    %c0_i32_0 = arith.constant 0 : i32
    %c0_i32_1 = arith.constant 0 : i32
    return %c0_i32, %c0_i32_0 : i32, i32
  }
  func.func @transform_13(%arg0: i32) -> (i32, i32) {
    %c0_i32 = arith.constant 0 : i32
    %c0_i32_0 = arith.constant 0 : i32
    %c0_i32_1 = arith.constant 0 : i32
    return %c0_i32, %c0_i32_0 : i32, i32
  }
  func.func @transform_14(%arg0: i32) -> (i32, i32) {
    %c0_i32 = arith.constant 0 : i32
    %c0_i32_0 = arith.constant 0 : i32
    %c0_i32_1 = arith.constant 0 : i32
    return %c0_i32, %c0_i32_0 : i32, i32
  }
  func.func @transform_15(%arg0: i32) -> (i32, i32) {
    %c0_i32 = arith.constant 0 : i32
    %c0_i32_0 = arith.constant 0 : i32
    %c0_i32_1 = arith.constant 0 : i32
    return %c0_i32, %c0_i32_0 : i32, i32
  }
  func.func @transform_16(%arg0: i32) -> (i32, i32) {
    %c0_i32 = arith.constant 0 : i32
    %c0_i32_0 = arith.constant 0 : i32
    %c0_i32_1 = arith.constant 0 : i32
    return %c0_i32, %c0_i32_0 : i32, i32
  }
  func.func @transform_17(%arg0: i32) -> (i32, i32) {
    %c0_i32 = arith.constant 0 : i32
    %c0_i32_0 = arith.constant 0 : i32
    %c0_i32_1 = arith.constant 0 : i32
    return %c0_i32, %c0_i32_0 : i32, i32
  }
  func.func @transform_18(%arg0: i32) -> (i32, i32) {
    %c0_i32 = arith.constant 0 : i32
    %c0_i32_0 = arith.constant 0 : i32
    %c0_i32_1 = arith.constant 0 : i32
    return %c0_i32, %c0_i32_0 : i32, i32
  }
  func.func @transform_19(%arg0: i32) -> (i32, i32, i32) {
    %c0_i32 = arith.constant 0 : i32
    %c0_i32_0 = arith.constant 0 : i32
    %c0_i32_1 = arith.constant 0 : i32
    return %arg0, %c0_i32, %c0_i32_0 : i32, i32, i32
  }
}

</mosaic_0001>

<llo_original>
// kernel: tpu_custom_call.1
$region0: #{tpu_custom_call.1}
  #allocation0 [shape = 'u32[]', space=smem, size = 0x4, offset = 0x4, fixed_abs, tag = 'smem constant byte address 0x4 - core index']
  #allocation1 [shape = 'u32[72,128]{1,0:T(1,128)}', space=vmem, size = 0x9000, scoped, tag = 'internal scratch']
  #allocation2 [shape = 'f32[1,1]{1,0:T(1,128)S(1)}', space=vmem, size = 0x200, scoped, tag = 'scoped memory for tpu_custom_call.1']
  %s0 = inlined_call_operand.vmem [shape: f32[2,8,32], index: 0, kind: input, shape index: {}]
  %s1 = inlined_call_operand.vmem [shape: f32[16,32], index: 1, kind: input, shape index: {}]
  %s2 = inlined_call_operand.vmem [shape: f32[1,32], index: 2, kind: input, shape index: {}]
  %s3 = inlined_call_operand.vmem [shape: bf16[2,32,96], index: 3, kind: input, shape index: {}]
  %s4 = inlined_call_operand.vmem [shape: f32[2,96], index: 4, kind: input, shape index: {}]
  %s5 = inlined_call_operand.vmem [shape: bf16[2,32,32], index: 5, kind: input, shape index: {}]
  %s6 = inlined_call_operand.vmem [shape: f32[2,32], index: 6, kind: input, shape index: {}]
  %s7 = inlined_call_operand.vmem [shape: f32[2,32], index: 7, kind: input, shape index: {}]
  %s8 = inlined_call_operand.vmem [shape: f32[2,32], index: 8, kind: input, shape index: {}]
  %s9 = inlined_call_operand.vmem [shape: bf16[2,32,128], index: 9, kind: input, shape index: {}]
  %s10 = inlined_call_operand.vmem [shape: f32[2,128], index: 10, kind: input, shape index: {}]
  %s11 = inlined_call_operand.vmem [shape: bf16[2,128,32], index: 11, kind: input, shape index: {}]
  %s12 = inlined_call_operand.vmem [shape: f32[2,32], index: 12, kind: input, shape index: {}]
  %s13 = inlined_call_operand.vmem [shape: f32[2,32], index: 13, kind: input, shape index: {}]
  %s14 = inlined_call_operand.vmem [shape: f32[2,32], index: 14, kind: input, shape index: {}]
  %s15 = inlined_call_operand.vmem [shape: bf16[32,32], index: 15, kind: input, shape index: {}]
  %s16 = inlined_call_operand.vmem [shape: f32[1,32], index: 16, kind: input, shape index: {}]
  %s17 = inlined_call_operand.vmem [shape: f32[1,32], index: 17, kind: input, shape index: {}]
  %s18 = inlined_call_operand.<no memory space> [shape: f32[1,1], index: 18, kind: input, shape index: {}]
  %s19 = inlined_call_operand.vmem [shape: f32[2,1,1], index: 19, kind: output, shape index: {}]
  %s20 = sld [smem:[#allocation0]]
  $region109: #{tpu_custom_call.1} parent=0
    _
  %s22 = ssub.s32 1, %s20
  %s23 = scalar_select 0, %s22, %s20
  %v24 = vstv %s18
  %25 = vst [vmem:[#allocation2] sm:$0x1] %v24
  loop: start=0, step=1, limit=4
  $region2: #{tpu_custom_call.1} parent=0 // loop_pre_header
    _
  $region3: #{tpu_custom_call.1} parent=0 // loop_header
    %s27 = sphi 0, %s31
    %p28 = scmp.ge.s32.totalorder %s27, 4
    %s37 = sphi 0, %s39
    %s40 = sphi 0, %s37
    %s41 = sphi 0, %s40
    %s57 = sphi 0, %s41
    %s61 = sphi 0, %s61
    %s63 = sphi 0, %s61
    %s64 = sphi 0, %s63
    %s78 = sphi 0, %s64
    %s82 = sphi 0, %s82
    %s84 = sphi 0, %s82
    %s85 = sphi 0, %s84
    %s99 = sphi 0, %s85
    %s103 = sphi 0, %s103
    %s105 = sphi 0, %s103
    %s106 = sphi 0, %s105
    %s120 = sphi 0, %s106
    %s124 = sphi 0, %s124
    %s126 = sphi 0, %s124
    %s127 = sphi 0, %s126
    %s141 = sphi 0, %s127
    %s145 = sphi 0, %s145
    %s147 = sphi 0, %s145
    %s148 = sphi 0, %s147
    %s162 = sphi 0, %s148
    %s166 = sphi 0, %s166
    %s168 = sphi 0, %s166
    %s169 = sphi 0, %s168
    %s183 = sphi 0, %s169
    %s187 = sphi 0, %s187
    %s189 = sphi 0, %s187
    %s190 = sphi 0, %s189
    %s204 = sphi 0, %s190
    %s208 = sphi 0, %s208
    %s210 = sphi 0, %s208
    %s211 = sphi 0, %s210
    %s225 = sphi 0, %s211
    %s229 = sphi 0, %s229
    %s231 = sphi 0, %s229
    %s232 = sphi 0, %s231
    %s246 = sphi 0, %s232
    %s250 = sphi 0, %s250
    %s252 = sphi 0, %s250
    %s253 = sphi 0, %s252
    %s267 = sphi 0, %s253
    %s271 = sphi 0, %s271
    %s273 = sphi 0, %s271
    %s274 = sphi 0, %s273
    %s288 = sphi 0, %s274
    %s292 = sphi 0, %s292
    %s294 = sphi 0, %s292
    %s295 = sphi 0, %s294
    %s309 = sphi 0, %s295
    %s313 = sphi 0, %s313
    %s315 = sphi 0, %s313
    %s316 = sphi 0, %s315
    %s330 = sphi 0, %s316
    %s334 = sphi 0, %s334
    %s336 = sphi 0, %s334
    %s337 = sphi 0, %s336
    %s351 = sphi 0, %s337
    %s355 = sphi 0, %s355
    %s357 = sphi 0, %s355
    %s358 = sphi 0, %s357
    %s372 = sphi 0, %s358
    %s376 = sphi 0, %s376
    %s378 = sphi 0, %s376
    %s379 = sphi 0, %s378
    %s393 = sphi 0, %s379
    %s397 = sphi 0, %s397
    %s399 = sphi 0, %s397
    %s400 = sphi 0, %s399
    %s414 = sphi 0, %s400
    %s418 = sphi 0, %s418
    %s420 = sphi 0, %s418
    %s421 = sphi 0, %s420
    %s435 = sphi 0, %s421
    %s441 = sphi 0, %s443
    %s444 = sphi 0, %s441
    %s445 = sphi 0, %s444
    %s461 = sphi 0, %s445
  $region4: #{tpu_custom_call.1} parent=0 // loop_header_branch
    %30 = sbr.rel (%p28) target = $region8
  $region5: #{tpu_custom_call.1} parent=0 // loop_body
    %s32 = ssub.s32 %s27, 1
    %s33 = ssub.s32 %s27, 2
    %s34 = sadd.s32 %s27, 1
    %s35 = ssub.s32 %s27, %s34
    %p36 = scmp.eq.s32.totalorder %s35, 0
    %s38 = sadd.s32 %s37, 1
    %s39 = scalar_select %p36, %s37, %s38
    %p42 = pneg %p36
    %p43 = scmp.eq.s32.totalorder %s27, 1
    %p44 = por %p42, %p43
    %p45 = scmp.ne.s32.totalorder %s37, %s40
    %p46 = scmp.eq.s32.totalorder %s27, 0
    %p47 = por %p45, %p46
    %p48 = scmp.ne.s32.totalorder %s37, %s40
    %p49 = scmp.eq.s32.totalorder %s32, 1
    %p50 = por %p48, %p49
    %p51 = scmp.ne.s32.totalorder %s40, %s41
    %p52 = scmp.eq.s32.totalorder %s32, 0
    %p53 = por %p51, %p52
    %p54 = scmp.ne.s32.totalorder %s40, %s41
    %p55 = scmp.eq.s32.totalorder %s33, 1
    %p56 = por %p54, %p55
    %p58 = scmp.ne.s32.totalorder %s41, %s57
    %p59 = scmp.eq.s32.totalorder %s33, 0
    %p60 = por %p58, %p59
    %s62 = sadd.s32 %s61, 1
    %p65 = scmp.eq.s32.totalorder %s27, 1
    %p66 = scmp.ne.s32.totalorder %s61, %s63
    %p67 = scmp.eq.s32.totalorder %s27, 0
    %p68 = por %p66, %p67
    %p69 = scmp.ne.s32.totalorder %s61, %s63
    %p70 = scmp.eq.s32.totalorder %s32, 1
    %p71 = por %p69, %p70
    %p72 = scmp.ne.s32.totalorder %s63, %s64
    %p73 = scmp.eq.s32.totalorder %s32, 0
    %p74 = por %p72, %p73
    %p75 = scmp.ne.s32.totalorder %s63, %s64
    %p76 = scmp.eq.s32.totalorder %s33, 1
    %p77 = por %p75, %p76
    %p79 = scmp.ne.s32.totalorder %s64, %s78
    %p80 = scmp.eq.s32.totalorder %s33, 0
    %p81 = por %p79, %p80
    %s83 = sadd.s32 %s82, 1
    %p86 = scmp.eq.s32.totalorder %s27, 1
    %p87 = scmp.ne.s32.totalorder %s82, %s84
    %p88 = scmp.eq.s32.totalorder %s27, 0
    %p89 = por %p87, %p88
    %p90 = scmp.ne.s32.totalorder %s82, %s84
    %p91 = scmp.eq.s32.totalorder %s32, 1
    %p92 = por %p90, %p91
    %p93 = scmp.ne.s32.totalorder %s84, %s85
    %p94 = scmp.eq.s32.totalorder %s32, 0
    %p95 = por %p93, %p94
    %p96 = scmp.ne.s32.totalorder %s84, %s85
    %p97 = scmp.eq.s32.totalorder %s33, 1
    %p98 = por %p96, %p97
    %p100 = scmp.ne.s32.totalorder %s85, %s99
    %p101 = scmp.eq.s32.totalorder %s33, 0
    %p102 = por %p100, %p101
    %s104 = sadd.s32 %s103, 1
    %p107 = scmp.eq.s32.totalorder %s27, 1
    %p108 = scmp.ne.s32.totalorder %s103, %s105
    %p109 = scmp.eq.s32.totalorder %s27, 0
    %p110 = por %p108, %p109
    %p111 = scmp.ne.s32.totalorder %s103, %s105
    %p112 = scmp.eq.s32.totalorder %s32, 1
    %p113 = por %p111, %p112
    %p114 = scmp.ne.s32.totalorder %s105, %s106
    %p115 = scmp.eq.s32.totalorder %s32, 0
    %p116 = por %p114, %p115
    %p117 = scmp.ne.s32.totalorder %s105, %s106
    %p118 = scmp.eq.s32.totalorder %s33, 1
    %p119 = por %p117, %p118
    %p121 = scmp.ne.s32.totalorder %s106, %s120
    %p122 = scmp.eq.s32.totalorder %s33, 0
    %p123 = por %p121, %p122
    %s125 = sadd.s32 %s124, 1
    %p128 = scmp.eq.s32.totalorder %s27, 1
    %p129 = scmp.ne.s32.totalorder %s124, %s126
    %p130 = scmp.eq.s32.totalorder %s27, 0
    %p131 = por %p129, %p130
    %p132 = scmp.ne.s32.totalorder %s124, %s126
    %p133 = scmp.eq.s32.totalorder %s32, 1
    %p134 = por %p132, %p133
    %p135 = scmp.ne.s32.totalorder %s126, %s127
    %p136 = scmp.eq.s32.totalorder %s32, 0
    %p137 = por %p135, %p136
    %p138 = scmp.ne.s32.totalorder %s126, %s127
    %p139 = scmp.eq.s32.totalorder %s33, 1
    %p140 = por %p138, %p139
    %p142 = scmp.ne.s32.totalorder %s127, %s141
    %p143 = scmp.eq.s32.totalorder %s33, 0
    %p144 = por %p142, %p143
    %s146 = sadd.s32 %s145, 1
    %p149 = scmp.eq.s32.totalorder %s27, 1
    %p150 = scmp.ne.s32.totalorder %s145, %s147
    %p151 = scmp.eq.s32.totalorder %s27, 0
    %p152 = por %p150, %p151
    %p153 = scmp.ne.s32.totalorder %s145, %s147
    %p154 = scmp.eq.s32.totalorder %s32, 1
    %p155 = por %p153, %p154
    %p156 = scmp.ne.s32.totalorder %s147, %s148
    %p157 = scmp.eq.s32.totalorder %s32, 0
    %p158 = por %p156, %p157
    %p159 = scmp.ne.s32.totalorder %s147, %s148
    %p160 = scmp.eq.s32.totalorder %s33, 1
    %p161 = por %p159, %p160
    %p163 = scmp.ne.s32.totalorder %s148, %s162
    %p164 = scmp.eq.s32.totalorder %s33, 0
    %p165 = por %p163, %p164
    %s167 = sadd.s32 %s166, 1
    %p170 = scmp.eq.s32.totalorder %s27, 1
    %p171 = scmp.ne.s32.totalorder %s166, %s168
    %p172 = scmp.eq.s32.totalorder %s27, 0
    %p173 = por %p171, %p172
    %p174 = scmp.ne.s32.totalorder %s166, %s168
    %p175 = scmp.eq.s32.totalorder %s32, 1
    %p176 = por %p174, %p175
    %p177 = scmp.ne.s32.totalorder %s168, %s169
    %p178 = scmp.eq.s32.totalorder %s32, 0
    %p179 = por %p177, %p178
    %p180 = scmp.ne.s32.totalorder %s168, %s169
    %p181 = scmp.eq.s32.totalorder %s33, 1
    %p182 = por %p180, %p181
    %p184 = scmp.ne.s32.totalorder %s169, %s183
    %p185 = scmp.eq.s32.totalorder %s33, 0
    %p186 = por %p184, %p185
    %s188 = sadd.s32 %s187, 1
    %p191 = scmp.eq.s32.totalorder %s27, 1
    %p192 = scmp.ne.s32.totalorder %s187, %s189
    %p193 = scmp.eq.s32.totalorder %s27, 0
    %p194 = por %p192, %p193
    %p195 = scmp.ne.s32.totalorder %s187, %s189
    %p196 = scmp.eq.s32.totalorder %s32, 1
    %p197 = por %p195, %p196
    %p198 = scmp.ne.s32.totalorder %s189, %s190
    %p199 = scmp.eq.s32.totalorder %s32, 0
    %p200 = por %p198, %p199
    %p201 = scmp.ne.s32.totalorder %s189, %s190
    %p202 = scmp.eq.s32.totalorder %s33, 1
    %p203 = por %p201, %p202
    %p205 = scmp.ne.s32.totalorder %s190, %s204
    %p206 = scmp.eq.s32.totalorder %s33, 0
    %p207 = por %p205, %p206
    %s209 = sadd.s32 %s208, 1
    %p212 = scmp.eq.s32.totalorder %s27, 1
    %p213 = scmp.ne.s32.totalorder %s208, %s210
    %p214 = scmp.eq.s32.totalorder %s27, 0
    %p215 = por %p213, %p214
    %p216 = scmp.ne.s32.totalorder %s208, %s210
    %p217 = scmp.eq.s32.totalorder %s32, 1
    %p218 = por %p216, %p217
    %p219 = scmp.ne.s32.totalorder %s210, %s211
    %p220 = scmp.eq.s32.totalorder %s32, 0
    %p221 = por %p219, %p220
    %p222 = scmp.ne.s32.totalorder %s210, %s211
    %p223 = scmp.eq.s32.totalorder %s33, 1
    %p224 = por %p222, %p223
    %p226 = scmp.ne.s32.totalorder %s211, %s225
    %p227 = scmp.eq.s32.totalorder %s33, 0
    %p228 = por %p226, %p227
    %s230 = sadd.s32 %s229, 1
    %p233 = scmp.eq.s32.totalorder %s27, 1
    %p234 = scmp.ne.s32.totalorder %s229, %s231
    %p235 = scmp.eq.s32.totalorder %s27, 0
    %p236 = por %p234, %p235
    %p237 = scmp.ne.s32.totalorder %s229, %s231
    %p238 = scmp.eq.s32.totalorder %s32, 1
    %p239 = por %p237, %p238
    %p240 = scmp.ne.s32.totalorder %s231, %s232
    %p241 = scmp.eq.s32.totalorder %s32, 0
    %p242 = por %p240, %p241
    %p243 = scmp.ne.s32.totalorder %s231, %s232
    %p244 = scmp.eq.s32.totalorder %s33, 1
    %p245 = por %p243, %p244
    %p247 = scmp.ne.s32.totalorder %s232, %s246
    %p248 = scmp.eq.s32.totalorder %s33, 0
    %p249 = por %p247, %p248
    %s251 = sadd.s32 %s250, 1
    %p254 = scmp.eq.s32.totalorder %s27, 1
    %p255 = scmp.ne.s32.totalorder %s250, %s252
    %p256 = scmp.eq.s32.totalorder %s27, 0
    %p257 = por %p255, %p256
    %p258 = scmp.ne.s32.totalorder %s250, %s252
    %p259 = scmp.eq.s32.totalorder %s32, 1
    %p260 = por %p258, %p259
    %p261 = scmp.ne.s32.totalorder %s252, %s253
    %p262 = scmp.eq.s32.totalorder %s32, 0
    %p263 = por %p261, %p262
    %p264 = scmp.ne.s32.totalorder %s252, %s253
    %p265 = scmp.eq.s32.totalorder %s33, 1
    %p266 = por %p264, %p265
    %p268 = scmp.ne.s32.totalorder %s253, %s267
    %p269 = scmp.eq.s32.totalorder %s33, 0
    %p270 = por %p268, %p269
    %s272 = sadd.s32 %s271, 1
    %p275 = scmp.eq.s32.totalorder %s27, 1
    %p276 = scmp.ne.s32.totalorder %s271, %s273
    %p277 = scmp.eq.s32.totalorder %s27, 0
    %p278 = por %p276, %p277
    %p279 = scmp.ne.s32.totalorder %s271, %s273
    %p280 = scmp.eq.s32.totalorder %s32, 1
    %p281 = por %p279, %p280
    %p282 = scmp.ne.s32.totalorder %s273, %s274
    %p283 = scmp.eq.s32.totalorder %s32, 0
    %p284 = por %p282, %p283
    %p285 = scmp.ne.s32.totalorder %s273, %s274
    %p286 = scmp.eq.s32.totalorder %s33, 1
    %p287 = por %p285, %p286
    %p289 = scmp.ne.s32.totalorder %s274, %s288
    %p290 = scmp.eq.s32.totalorder %s33, 0
    %p291 = por %p289, %p290
    %s293 = sadd.s32 %s292, 1
    %p296 = scmp.eq.s32.totalorder %s27, 1
    %p297 = scmp.ne.s32.totalorder %s292, %s294
    %p298 = scmp.eq.s32.totalorder %s27, 0
    %p299 = por %p297, %p298
    %p300 = scmp.ne.s32.totalorder %s292, %s294
    %p301 = scmp.eq.s32.totalorder %s32, 1
    %p302 = por %p300, %p301
    %p303 = scmp.ne.s32.totalorder %s294, %s295
    %p304 = scmp.eq.s32.totalorder %s32, 0
    %p305 = por %p303, %p304
    %p306 = scmp.ne.s32.totalorder %s294, %s295
    %p307 = scmp.eq.s32.totalorder %s33, 1
    %p308 = por %p306, %p307
    %p310 = scmp.ne.s32.totalorder %s295, %s309
    %p311 = scmp.eq.s32.totalorder %s33, 0
    %p312 = por %p310, %p311
    %s314 = sadd.s32 %s313, 1
    %p317 = scmp.eq.s32.totalorder %s27, 1
    %p318 = scmp.ne.s32.totalorder %s313, %s315
    %p319 = scmp.eq.s32.totalorder %s27, 0
    %p320 = por %p318, %p319
    %p321 = scmp.ne.s32.totalorder %s313, %s315
    %p322 = scmp.eq.s32.totalorder %s32, 1
    %p323 = por %p321, %p322
    %p324 = scmp.ne.s32.totalorder %s315, %s316
    %p325 = scmp.eq.s32.totalorder %s32, 0
    %p326 = por %p324, %p325
    %p327 = scmp.ne.s32.totalorder %s315, %s316
    %p328 = scmp.eq.s32.totalorder %s33, 1
    %p329 = por %p327, %p328
    %p331 = scmp.ne.s32.totalorder %s316, %s330
    %p332 = scmp.eq.s32.totalorder %s33, 0
    %p333 = por %p331, %p332
    %s335 = sadd.s32 %s334, 1
    %p338 = scmp.eq.s32.totalorder %s27, 1
    %p339 = scmp.ne.s32.totalorder %s334, %s336
    %p340 = scmp.eq.s32.totalorder %s27, 0
    %p341 = por %p339, %p340
    %p342 = scmp.ne.s32.totalorder %s334, %s336
    %p343 = scmp.eq.s32.totalorder %s32, 1
    %p344 = por %p342, %p343
    %p345 = scmp.ne.s32.totalorder %s336, %s337
    %p346 = scmp.eq.s32.totalorder %s32, 0
    %p347 = por %p345, %p346
    %p348 = scmp.ne.s32.totalorder %s336, %s337
    %p349 = scmp.eq.s32.totalorder %s33, 1
    %p350 = por %p348, %p349
    %p352 = scmp.ne.s32.totalorder %s337, %s351
    %p353 = scmp.eq.s32.totalorder %s33, 0
    %p354 = por %p352, %p353
    %s356 = sadd.s32 %s355, 1
    %p359 = scmp.eq.s32.totalorder %s27, 1
    %p360 = scmp.ne.s32.totalorder %s355, %s357
    %p361 = scmp.eq.s32.totalorder %s27, 0
    %p362 = por %p360, %p361
    %p363 = scmp.ne.s32.totalorder %s355, %s357
    %p364 = scmp.eq.s32.totalorder %s32, 1
    %p365 = por %p363, %p364
    %p366 = scmp.ne.s32.totalorder %s357, %s358
    %p367 = scmp.eq.s32.totalorder %s32, 0
    %p368 = por %p366, %p367
    %p369 = scmp.ne.s32.totalorder %s357, %s358
    %p370 = scmp.eq.s32.totalorder %s33, 1
    %p371 = por %p369, %p370
    %p373 = scmp.ne.s32.totalorder %s358, %s372
    %p374 = scmp.eq.s32.totalorder %s33, 0
    %p375 = por %p373, %p374
    %s377 = sadd.s32 %s376, 1
    %p380 = scmp.eq.s32.totalorder %s27, 1
    %p381 = scmp.ne.s32.totalorder %s376, %s378
    %p382 = scmp.eq.s32.totalorder %s27, 0
    %p383 = por %p381, %p382
    %p384 = scmp.ne.s32.totalorder %s376, %s378
    %p385 = scmp.eq.s32.totalorder %s32, 1
    %p386 = por %p384, %p385
    %p387 = scmp.ne.s32.totalorder %s378, %s379
    %p388 = scmp.eq.s32.totalorder %s32, 0
    %p389 = por %p387, %p388
    %p390 = scmp.ne.s32.totalorder %s378, %s379
    %p391 = scmp.eq.s32.totalorder %s33, 1
    %p392 = por %p390, %p391
    %p394 = scmp.ne.s32.totalorder %s379, %s393
    %p395 = scmp.eq.s32.totalorder %s33, 0
    %p396 = por %p394, %p395
    %s398 = sadd.s32 %s397, 1
    %p401 = scmp.eq.s32.totalorder %s27, 1
    %p402 = scmp.ne.s32.totalorder %s397, %s399
    %p403 = scmp.eq.s32.totalorder %s27, 0
    %p404 = por %p402, %p403
    %p405 = scmp.ne.s32.totalorder %s397, %s399
    %p406 = scmp.eq.s32.totalorder %s32, 1
    %p407 = por %p405, %p406
    %p408 = scmp.ne.s32.totalorder %s399, %s400
    %p409 = scmp.eq.s32.totalorder %s32, 0
    %p410 = por %p408, %p409
    %p411 = scmp.ne.s32.totalorder %s399, %s400
    %p412 = scmp.eq.s32.totalorder %s33, 1
    %p413 = por %p411, %p412
    %p415 = scmp.ne.s32.totalorder %s400, %s414
    %p416 = scmp.eq.s32.totalorder %s33, 0
    %p417 = por %p415, %p416
    %s419 = sadd.s32 %s418, 1
    %p422 = scmp.eq.s32.totalorder %s27, 1
    %p423 = scmp.ne.s32.totalorder %s418, %s420
    %p424 = scmp.eq.s32.totalorder %s27, 0
    %p425 = por %p423, %p424
    %p426 = scmp.ne.s32.totalorder %s418, %s420
    %p427 = scmp.eq.s32.totalorder %s32, 1
    %p428 = por %p426, %p427
    %p429 = scmp.ne.s32.totalorder %s420, %s421
    %p430 = scmp.eq.s32.totalorder %s32, 0
    %p431 = por %p429, %p430
    %p432 = scmp.ne.s32.totalorder %s420, %s421
    %p433 = scmp.eq.s32.totalorder %s33, 1
    %p434 = por %p432, %p433
    %p436 = scmp.ne.s32.totalorder %s421, %s435
    %p437 = scmp.eq.s32.totalorder %s33, 0
    %p438 = por %p436, %p437
    %s439 = ssub.s32 %s27, %s34
    %p440 = scmp.eq.s32.totalorder %s439, 0
    %s442 = sadd.s32 %s441, 1
    %s443 = scalar_select %p440, %s441, %s442
    %p446 = pneg %p440
    %p447 = scmp.eq.s32.totalorder %s27, 1
    %p448 = por %p446, %p447
    %p449 = scmp.ne.s32.totalorder %s441, %s444
    %p450 = scmp.eq.s32.totalorder %s27, 0
    %p451 = por %p449, %p450
    %p452 = scmp.ne.s32.totalorder %s441, %s444
    %p453 = scmp.eq.s32.totalorder %s32, 1
    %p454 = por %p452, %p453
    %p455 = scmp.ne.s32.totalorder %s444, %s445
    %p456 = scmp.eq.s32.totalorder %s32, 0
    %p457 = por %p455, %p456
    %p458 = scmp.ne.s32.totalorder %s444, %s445
    %p459 = scmp.eq.s32.totalorder %s33, 1
    %p460 = por %p458, %p459
    %p462 = scmp.ne.s32.totalorder %s445, %s461
    %p463 = scmp.eq.s32.totalorder %s33, 0
    %p464 = por %p462, %p463
    %p465 = scmp.le.s32.totalorder 1, %s27
    %p466 = scmp.lt.s32.totalorder %s27, 3
    %p467 = pnand %p465, %p466
    %p468 = pneg %p467
    // Predicated region
    $region9: #{tpu_custom_call.1} parent=5 // pred_check
      _
    $region10: #{tpu_custom_call.1} parent=5 // pred_check_branch
      %470 = sbr.rel (%p467) target = $region12
    $region11: #{tpu_custom_call.1} parent=5 // pred_region
      %s471 = ssub.s32 %s27, 1
      // Predicated region
      $region13: #{tpu_custom_call.1} parent=11 // pred_check
        %p472 = pneg %p74
      $region14: #{tpu_custom_call.1} parent=11 // pred_check_branch
        %474 = sbr.rel (%p472) target = $region16
      $region15: #{tpu_custom_call.1} parent=11 // pred_region
        _
      $region16: #{tpu_custom_call.1} parent=11 // pred_fallthru
        _
      // Predicated region
      $region17: #{tpu_custom_call.1} parent=11 // pred_check
        %p475 = pneg %p95
      $region18: #{tpu_custom_call.1} parent=11 // pred_check_branch
        %477 = sbr.rel (%p475) target = $region20
      $region19: #{tpu_custom_call.1} parent=11 // pred_region
        _
      $region20: #{tpu_custom_call.1} parent=11 // pred_fallthru
        _
      // Predicated region
      $region21: #{tpu_custom_call.1} parent=11 // pred_check
        %p478 = pneg %p116
      $region22: #{tpu_custom_call.1} parent=11 // pred_check_branch
        %480 = sbr.rel (%p478) target = $region24
      $region23: #{tpu_custom_call.1} parent=11 // pred_region
        _
      $region24: #{tpu_custom_call.1} parent=11 // pred_fallthru
        _
      // Predicated region
      $region25: #{tpu_custom_call.1} parent=11 // pred_check
        %p481 = pneg %p137
      $region26: #{tpu_custom_call.1} parent=11 // pred_check_branch
        %483 = sbr.rel (%p481) target = $region28
      $region27: #{tpu_custom_call.1} parent=11 // pred_region
        _
      $region28: #{tpu_custom_call.1} parent=11 // pred_fallthru
        _
      // Predicated region
      $region29: #{tpu_custom_call.1} parent=11 // pred_check
        %p484 = pneg %p158
      $region30: #{tpu_custom_call.1} parent=11 // pred_check_branch
        %486 = sbr.rel (%p484) target = $region32
      $region31: #{tpu_custom_call.1} parent=11 // pred_region
        _
      $region32: #{tpu_custom_call.1} parent=11 // pred_fallthru
        _
      // Predicated region
      $region33: #{tpu_custom_call.1} parent=11 // pred_check
        %p487 = pneg %p179
      $region34: #{tpu_custom_call.1} parent=11 // pred_check_branch
        %489 = sbr.rel (%p487) target = $region36
      $region35: #{tpu_custom_call.1} parent=11 // pred_region
        _
      $region36: #{tpu_custom_call.1} parent=11 // pred_fallthru
        _
      // Predicated region
      $region37: #{tpu_custom_call.1} parent=11 // pred_check
        %p490 = pneg %p200
      $region38: #{tpu_custom_call.1} parent=11 // pred_check_branch
        %492 = sbr.rel (%p490) target = $region40
      $region39: #{tpu_custom_call.1} parent=11 // pred_region
        _
      $region40: #{tpu_custom_call.1} parent=11 // pred_fallthru
        _
      // Predicated region
      $region41: #{tpu_custom_call.1} parent=11 // pred_check
        %p493 = pneg %p221
      $region42: #{tpu_custom_call.1} parent=11 // pred_check_branch
        %495 = sbr.rel (%p493) target = $region44
      $region43: #{tpu_custom_call.1} parent=11 // pred_region
        _
      $region44: #{tpu_custom_call.1} parent=11 // pred_fallthru
        _
      // Predicated region
      $region45: #{tpu_custom_call.1} parent=11 // pred_check
        %p496 = pneg %p242
      $region46: #{tpu_custom_call.1} parent=11 // pred_check_branch
        %498 = sbr.rel (%p496) target = $region48
      $region47: #{tpu_custom_call.1} parent=11 // pred_region
        _
      $region48: #{tpu_custom_call.1} parent=11 // pred_fallthru
        _
      // Predicated region
      $region49: #{tpu_custom_call.1} parent=11 // pred_check
        %p499 = pneg %p263
      $region50: #{tpu_custom_call.1} parent=11 // pred_check_branch
        %501 = sbr.rel (%p499) target = $region52
      $region51: #{tpu_custom_call.1} parent=11 // pred_region
        _
      $region52: #{tpu_custom_call.1} parent=11 // pred_fallthru
        _
      // Predicated region
      $region53: #{tpu_custom_call.1} parent=11 // pred_check
        %p502 = pneg %p284
      $region54: #{tpu_custom_call.1} parent=11 // pred_check_branch
        %504 = sbr.rel (%p502) target = $region56
      $region55: #{tpu_custom_call.1} parent=11 // pred_region
        _
      $region56: #{tpu_custom_call.1} parent=11 // pred_fallthru
        _
      // Predicated region
      $region57: #{tpu_custom_call.1} parent=11 // pred_check
        %p505 = pneg %p305
      $region58: #{tpu_custom_call.1} parent=11 // pred_check_branch
        %507 = sbr.rel (%p505) target = $region60
      $region59: #{tpu_custom_call.1} parent=11 // pred_region
        _
      $region60: #{tpu_custom_call.1} parent=11 // pred_fallthru
        _
      // Predicated region
      $region61: #{tpu_custom_call.1} parent=11 // pred_check
        %p508 = pneg %p326
      $region62: #{tpu_custom_call.1} parent=11 // pred_check_branch
        %510 = sbr.rel (%p508) target = $region64
      $region63: #{tpu_custom_call.1} parent=11 // pred_region
        _
      $region64: #{tpu_custom_call.1} parent=11 // pred_fallthru
        _
      // Predicated region
      $region65: #{tpu_custom_call.1} parent=11 // pred_check
        %p511 = pneg %p347
      $region66: #{tpu_custom_call.1} parent=11 // pred_check_branch
        %513 = sbr.rel (%p511) target = $region68
      $region67: #{tpu_custom_call.1} parent=11 // pred_region
        _
      $region68: #{tpu_custom_call.1} parent=11 // pred_fallthru
        _
      // Predicated region
      $region69: #{tpu_custom_call.1} parent=11 // pred_check
        %p514 = pneg %p368
      $region70: #{tpu_custom_call.1} parent=11 // pred_check_branch
        %516 = sbr.rel (%p514) target = $region72
      $region71: #{tpu_custom_call.1} parent=11 // pred_region
        _
      $region72: #{tpu_custom_call.1} parent=11 // pred_fallthru
        _
      // Predicated region
      $region73: #{tpu_custom_call.1} parent=11 // pred_check
        %p517 = pneg %p389
      $region74: #{tpu_custom_call.1} parent=11 // pred_check_branch
        %519 = sbr.rel (%p517) target = $region76
      $region75: #{tpu_custom_call.1} parent=11 // pred_region
        _
      $region76: #{tpu_custom_call.1} parent=11 // pred_fallthru
        _
      // Predicated region
      $region77: #{tpu_custom_call.1} parent=11 // pred_check
        %p520 = pneg %p410
      $region78: #{tpu_custom_call.1} parent=11 // pred_check_branch
        %522 = sbr.rel (%p520) target = $region80
      $region79: #{tpu_custom_call.1} parent=11 // pred_region
        _
      $region80: #{tpu_custom_call.1} parent=11 // pred_fallthru
        _
      // Predicated region
      $region81: #{tpu_custom_call.1} parent=11 // pred_check
        %p523 = pneg %p431
      $region82: #{tpu_custom_call.1} parent=11 // pred_check_branch
        %525 = sbr.rel (%p523) target = $region84
      $region83: #{tpu_custom_call.1} parent=11 // pred_region
        _
      $region84: #{tpu_custom_call.1} parent=11 // pred_fallthru
        _
    $region12: #{tpu_custom_call.1} parent=5 // pred_fallthru
      _
    %p526 = scmp.lt.s32.totalorder %s27, 2
    // Predicated region
    $region85: #{tpu_custom_call.1} parent=5 // pred_check
      %p527 = pneg %p526
    $region86: #{tpu_custom_call.1} parent=5 // pred_check_branch
      %529 = sbr.rel (%p527) target = $region88
    $region87: #{tpu_custom_call.1} parent=5 // pred_region
      // Predicated region
      $region89: #{tpu_custom_call.1} parent=87 // pred_check
        %p530 = pneg %p47
      $region90: #{tpu_custom_call.1} parent=87 // pred_check_branch
        %532 = sbr.rel (%p530) target = $region92
      $region91: #{tpu_custom_call.1} parent=87 // pred_region
        %p533 = scmp.lt.s32.totalorder %s27, 1
        %s534 = scalar_select %p533, %s27, 1
        %s535 = smul.addr %s534, 8
        %s536 = scalar_lea.vmem %s0, %s535
      $region92: #{tpu_custom_call.1} parent=87 // pred_fallthru
        _
    $region88: #{tpu_custom_call.1} parent=5 // pred_fallthru
      _
    %p537 = scmp.le.s32.totalorder 1, %s27
    %p538 = scmp.lt.s32.totalorder %s27, 3
    %p539 = pnand %p537, %p538
    %p540 = pneg %p539
    // Predicated region
    $region93: #{tpu_custom_call.1} parent=5 // pred_check
      _
    $region94: #{tpu_custom_call.1} parent=5 // pred_check_branch
      %542 = sbr.rel (%p539) target = $region96
    $region95: #{tpu_custom_call.1} parent=5 // pred_region
      %s543 = ssub.s32 %s27, 1
      %p544 = scmp.lt.s32.totalorder %s32, 1
      %s545 = scalar_select %p544, %s32, 1
      %s546 = smul.addr %s545, 8
      %s547 = scalar_lea.vmem %s0, %s546
      %p548 = pneg %p53
      %p549 = pneg %p50
      %p550 = pneg %p74
      %p551 = pneg %p71
      %p552 = pneg %p95
      %p553 = pneg %p92
      %p554 = pneg %p116
      %p555 = pneg %p113
      %p556 = pneg %p137
      %p557 = pneg %p134
      %p558 = pneg %p158
      %p559 = pneg %p155
      %p560 = pneg %p179
      %p561 = pneg %p176
      %p562 = pneg %p200
      %p563 = pneg %p197
      %p564 = pneg %p221
      %p565 = pneg %p218
      %p566 = pneg %p242
      %p567 = pneg %p239
      %p568 = pneg %p263
      %p569 = pneg %p260
      %p570 = pneg %p284
      %p571 = pneg %p281
      %p572 = pneg %p305
      %p573 = pneg %p302
      %p574 = pneg %p326
      %p575 = pneg %p323
      %p576 = pneg %p347
      %p577 = pneg %p344
      %p578 = pneg %p368
      %p579 = pneg %p365
      %p580 = pneg %p389
      %p581 = pneg %p386
      %p582 = pneg %p410
      %p583 = pneg %p407
      %p584 = pneg %p431
      %p585 = pneg %p428
      %p586 = pneg %p457
      %p587 = pneg %p454
      %p588 = scmp.lt.s32.totalorder %s32, 1
      %s589 = scalar_select %p588, %s32, 1
      %s590 = scalar_lea.vmem %s19, %s589
      %p591 = scmp.lt.s32.totalorder %s32, 1
      %s592 = scalar_select %p591, %s32, 1
      %s593 = smul.addr %s592, 8
      %s594 = scalar_lea.vmem %s0, %s593
      %p595 = scmp.lt.s32.totalorder %s32, 1
      %s596 = scalar_select %p595, %s32, 1
      %s597 = scalar_lea.vmem %s19, %s596
      %v599 = vld [vmem:[%s1] sm:$0xff]
      %v600 = vld [vmem:[%s1 + $0x8] sm:$0xff]
      %v601 = vld [vmem:[%s594] sm:$0xff]
      %v602 = vadd.f32 %v601, %v599
      %v603 = vld [vmem:[%s2] sm:$0x1]
      %v604 = vadd.f32 %v603, %v600
      %v606 = vperm.slane %v604, 0
      %v608 = vlaneseq
      %v609 = vand.u32 %v608, 127
      %vm610 = vcmp.lt.s32.totalorder %v609, 9
      %v611 = vsel %vm610, 0.0, -1e+30
      %v612 = vpack.c.bf16 %v606, %v602
      %v613 = vld [vmem:[%s3] sm:$0xf]
      %v614 = vld [vmem:[%s3 + $0x4] sm:$0xf]
      %v615 = vld [vmem:[%s3 + $0x8] sm:$0xf]
      %v616 = vld [vmem:[%s3 + $0xc] sm:$0xf]
      %v617 = vld [vmem:[%s4] sm:$0x1]
      %v618 = vperm.slane %v617, 0
      %v623 = vunpack.c.l.b16 %v613
      %v624 = vunpack.c.l.b16 %v614
      %v625 = vunpack.c.l.b16 %v615
      %v626 = vunpack.c.l.b16 %v616
      %v627 = vpack.c.b16 %v624, %v623
      %v628 = vpack.c.b16 %v626, %v625
      %vm631 = vcmask 261120
      %v633 = vsel %vm631, %v612, 0
      %635 = vmatpush.bf16.msra.mxu0 0
      %636 = vmatpush.bf16.msra.mxu0 0
      %637 = vmatpush.bf16.msra.mxu0 0
      %638 = vmatpush.bf16.msra.mxu0 0
      %639 = vmatpush.bf16.msra.mxu0 0
      %640 = vmatpush.bf16.msra.mxu0 0
      %641 = vmatpush.bf16.msra.mxu0 %v628
      %642 = vmatpush.bf16.msra.mxu0 %v627
      %643 = vmatmul.bf16.gmra.mxu0 %v633
      %v644 = vpop.f32.mrf.mxu0
      %v645 = vadd.f32 %v618, %v644
      %v646 = vpop.f32.mrf.mxu0
      %v647 = vadd.f32 %v618, %v646
      %648 = vdwg.mxu0
      %v649 = vpack.c.bf16 %v645, %v645
      %v650 = vpack.c.bf16 %v647, %v647
      %v653 = vunpack.c.l.b16 %v649
      %v654 = vunpack.c.l.b16 %v650
      %v655 = vpack.c.b16 %v654, %v653
      %656 = vrot.lane.b32.xlu0 %v655, 96
      %v657 = vpop.permute.xlu0 %656
      %vm658 = vcmask 31744
      %v660 = vsel %vm658, %v655, 0
      %v663 = vsel %vm658, %v657, 0
      %665 = vmatpush.bf16.xpose.msra.mxu0 0
      %666 = vmatpush.bf16.xpose.msra.mxu0 0
      %667 = vmatpush.bf16.xpose.msra.mxu0 0
      %668 = vmatpush.bf16.xpose.msra.mxu0 0
      %669 = vmatpush.bf16.xpose.msra.mxu0 0
      %670 = vmatpush.bf16.xpose.msra.mxu0 0
      %671 = vmatpush.bf16.xpose.msra.mxu0 0
      %672 = vmatpush.bf16.xpose.msra.mxu0 %v663
      %673 = vmatmul.bf16.gmra.mxu0 %v660
      %v674 = vpop.f32.mrf.mxu0
      %v675 = vadd.f32 %v611, %v674
      %v676 = vpop.f32.mrf.mxu0
      %v677 = vadd.f32 %v611, %v676
      %678 = vdwg.mxu0
      %vm679 = vcmask 130048
      %v680 = vsel %vm679, %v675, -inf
      %681 = vmax.xlane.f32.xlu0 %v680
      %v682 = vpop.xlane.xlu0 %681
      %v683 = vsel %vm679, %v677, -inf
      %684 = vmax.xlane.f32.xlu0 %v683
      %v685 = vpop.xlane.xlu0 %684
      %v686 = vsub.f32 %v675, %v682
      %v687 = vsub.f32 %v677, %v685
      %v688 = vmul.f32 %v686, 1.442695
      %v689 = vpow.pop %v688
      %v690 = vmul.f32 %v687, 1.442695
      %v691 = vpow.pop %v690
      %v692 = vsel %vm679, %v689, 0.0
      %693 = vadd.xlane.f32.xlu0 %v692
      %v694 = vpop.xlane.xlu0 %693
      %v695 = vsel %vm679, %v691, 0.0
      %696 = vadd.xlane.f32.xlu0 %v695
      %v697 = vpop.xlane.xlu0 %696
      %v698 = vrcp.pop %v694
      %v699 = vrcp.pop %v697
      %v700 = vmul.f32 %v689, %v698
      %v701 = vmul.f32 %v691, %v699
      %v702 = vpack.c.bf16 %v700, %v700
      %v703 = vpack.c.bf16 %v701, %v701
      %v706 = vunpack.c.l.b16 %v702
      %v707 = vunpack.c.l.b16 %v703
      %v708 = vpack.c.b16 %v707, %v706
      %709 = vrot.lane.b32.xlu0 %v655, 64
      %v710 = vpop.permute.xlu0 %709
      %v713 = vsel %vm679, %v708, 0
      %715 = vmatpush.bf16.msra.mxu0 0
      %716 = vmatpush.bf16.msra.mxu0 0
      %717 = vmatpush.bf16.msra.mxu0 0
      %718 = vmatpush.bf16.msra.mxu0 0
      %719 = vmatpush.bf16.msra.mxu0 0
      %720 = vmatpush.bf16.msra.mxu0 0
      %721 = vmatpush.bf16.msra.mxu0 0
      %722 = vmatpush.bf16.msra.mxu0 %v710
      %723 = vmatmul.bf16.gmra.mxu0 %v713
      %v724 = vpop.f32.mrf.mxu0
      %v725 = vadd.f32 0.0, %v724
      %v726 = vpop.f32.mrf.mxu0
      %v727 = vadd.f32 0.0, %v726
      %728 = vdwg.mxu0
      %v729 = vpack.c.bf16 %v725, %v725
      %v730 = vpack.c.bf16 %v727, %v727
      %731 = vrot.lane.b32.xlu0 %v655, 124
      %v732 = vpop.permute.xlu0 %731
      %733 = vrot.lane.b32.xlu0 %v655, 92
      %v734 = vpop.permute.xlu0 %733
      %v736 = vsel %vm658, %v732, 0
      %v739 = vsel %vm658, %v734, 0
      %741 = vmatpush.bf16.xpose.msra.mxu0 0
      %742 = vmatpush.bf16.xpose.msra.mxu0 0
      %743 = vmatpush.bf16.xpose.msra.mxu0 0
      %744 = vmatpush.bf16.xpose.msra.mxu0 0
      %745 = vmatpush.bf16.xpose.msra.mxu0 0
      %746 = vmatpush.bf16.xpose.msra.mxu0 0
      %747 = vmatpush.bf16.xpose.msra.mxu0 0
      %748 = vmatpush.bf16.xpose.msra.mxu0 %v739
      %749 = vmatmul.bf16.gmra.mxu0 %v736
      %v750 = vpop.f32.mrf.mxu0
      %v751 = vadd.f32 %v611, %v750
      %v752 = vpop.f32.mrf.mxu0
      %v753 = vadd.f32 %v611, %v752
      %754 = vdwg.mxu0
      %v755 = vsel %vm679, %v751, -inf
      %756 = vmax.xlane.f32.xlu0 %v755
      %v757 = vpop.xlane.xlu0 %756
      %v758 = vsel %vm679, %v753, -inf
      %759 = vmax.xlane.f32.xlu0 %v758
      %v760 = vpop.xlane.xlu0 %759
      %v761 = vsub.f32 %v751, %v757
      %v762 = vsub.f32 %v753, %v760
      %v763 = vmul.f32 %v761, 1.442695
      %v764 = vpow.pop %v763
      %v765 = vmul.f32 %v762, 1.442695
      %v766 = vpow.pop %v765
      %v767 = vsel %vm679, %v764, 0.0
      %768 = vadd.xlane.f32.xlu0 %v767
      %v769 = vpop.xlane.xlu0 %768
      %v770 = vsel %vm679, %v766, 0.0
      %771 = vadd.xlane.f32.xlu0 %v770
      %v772 = vpop.xlane.xlu0 %771
      %v773 = vrcp.pop %v769
      %v774 = vrcp.pop %v772
      %v775 = vmul.f32 %v764, %v773
      %v776 = vmul.f32 %v766, %v774
      %v777 = vpack.c.bf16 %v775, %v775
      %v778 = vpack.c.bf16 %v776, %v776
      %v781 = vunpack.c.l.b16 %v777
      %v782 = vunpack.c.l.b16 %v778
      %v783 = vpack.c.b16 %v782, %v781
      %784 = vrot.lane.b32.xlu0 %v655, 60
      %v785 = vpop.permute.xlu0 %784
      %v788 = vsel %vm679, %v783, 0
      %790 = vmatpush.bf16.msra.mxu0 0
      %791 = vmatpush.bf16.msra.mxu0 0
      %792 = vmatpush.bf16.msra.mxu0 0
      %793 = vmatpush.bf16.msra.mxu0 0
      %794 = vmatpush.bf16.msra.mxu0 0
      %795 = vmatpush.bf16.msra.mxu0 0
      %796 = vmatpush.bf16.msra.mxu0 0
      %797 = vmatpush.bf16.msra.mxu0 %v785
      %798 = vmatmul.bf16.gmra.mxu0 %v788
      %v799 = vpop.f32.mrf.mxu0
      %v800 = vadd.f32 0.0, %v799
      %v801 = vpop.f32.mrf.mxu0
      %v802 = vadd.f32 0.0, %v801
      %803 = vdwg.mxu0
      %v804 = vpack.c.bf16 %v800, %v800
      %v805 = vpack.c.bf16 %v802, %v802
      %806 = vrot.lane.b32.xlu0 %v655, 120
      %v807 = vpop.permute.xlu0 %806
      %808 = vrot.lane.b32.xlu0 %v655, 88
      %v809 = vpop.permute.xlu0 %808
      %v811 = vsel %vm658, %v807, 0
      %v814 = vsel %vm658, %v809, 0
      %816 = vmatpush.bf16.xpose.msra.mxu0 0
      %817 = vmatpush.bf16.xpose.msra.mxu0 0
      %818 = vmatpush.bf16.xpose.msra.mxu0 0
      %819 = vmatpush.bf16.xpose.msra.mxu0 0
      %820 = vmatpush.bf16.xpose.msra.mxu0 0
      %821 = vmatpush.bf16.xpose.msra.mxu0 0
      %822 = vmatpush.bf16.xpose.msra.mxu0 0
      %823 = vmatpush.bf16.xpose.msra.mxu0 %v814
      %824 = vmatmul.bf16.gmra.mxu0 %v811
      %v825 = vpop.f32.mrf.mxu0
      %v826 = vadd.f32 %v611, %v825
      %v827 = vpop.f32.mrf.mxu0
      %v828 = vadd.f32 %v611, %v827
      %829 = vdwg.mxu0
      %v830 = vsel %vm679, %v826, -inf
      %831 = vmax.xlane.f32.xlu0 %v830
      %v832 = vpop.xlane.xlu0 %831
      %v833 = vsel %vm679, %v828, -inf
      %834 = vmax.xlane.f32.xlu0 %v833
      %v835 = vpop.xlane.xlu0 %834
      %v836 = vsub.f32 %v826, %v832
      %v837 = vsub.f32 %v828, %v835
      %v838 = vmul.f32 %v836, 1.442695
      %v839 = vpow.pop %v838
      %v840 = vmul.f32 %v837, 1.442695
      %v841 = vpow.pop %v840
      %v842 = vsel %vm679, %v839, 0.0
      %843 = vadd.xlane.f32.xlu0 %v842
      %v844 = vpop.xlane.xlu0 %843
      %v845 = vsel %vm679, %v841, 0.0
      %846 = vadd.xlane.f32.xlu0 %v845
      %v847 = vpop.xlane.xlu0 %846
      %v848 = vrcp.pop %v844
      %v849 = vrcp.pop %v847
      %v850 = vmul.f32 %v839, %v848
      %v851 = vmul.f32 %v841, %v849
      %v852 = vpack.c.bf16 %v850, %v850
      %v853 = vpack.c.bf16 %v851, %v851
      %v856 = vunpack.c.l.b16 %v852
      %v857 = vunpack.c.l.b16 %v853
      %v858 = vpack.c.b16 %v857, %v856
      %859 = vrot.lane.b32.xlu0 %v655, 56
      %v860 = vpop.permute.xlu0 %859
      %v863 = vsel %vm679, %v858, 0
      %865 = vmatpush.bf16.msra.mxu0 0
      %866 = vmatpush.bf16.msra.mxu0 0
      %867 = vmatpush.bf16.msra.mxu0 0
      %868 = vmatpush.bf16.msra.mxu0 0
      %869 = vmatpush.bf16.msra.mxu0 0
      %870 = vmatpush.bf16.msra.mxu0 0
      %871 = vmatpush.bf16.msra.mxu0 0
      %872 = vmatpush.bf16.msra.mxu0 %v860
      %873 = vmatmul.bf16.gmra.mxu0 %v863
      %v874 = vpop.f32.mrf.mxu0
      %v875 = vadd.f32 0.0, %v874
      %v876 = vpop.f32.mrf.mxu0
      %v877 = vadd.f32 0.0, %v876
      %878 = vdwg.mxu0
      %v879 = vpack.c.bf16 %v875, %v875
      %v880 = vpack.c.bf16 %v877, %v877
      %881 = vrot.lane.b32.xlu0 %v655, 116
      %v882 = vpop.permute.xlu0 %881
      %883 = vrot.lane.b32.xlu0 %v655, 84
      %v884 = vpop.permute.xlu0 %883
      %v886 = vsel %vm658, %v882, 0
      %v889 = vsel %vm658, %v884, 0
      %891 = vmatpush.bf16.xpose.msra.mxu0 0
      %892 = vmatpush.bf16.xpose.msra.mxu0 0
      %893 = vmatpush.bf16.xpose.msra.mxu0 0
      %894 = vmatpush.bf16.xpose.msra.mxu0 0
      %895 = vmatpush.bf16.xpose.msra.mxu0 0
      %896 = vmatpush.bf16.xpose.msra.mxu0 0
      %897 = vmatpush.bf16.xpose.msra.mxu0 0
      %898 = vmatpush.bf16.xpose.msra.mxu0 %v889
      %899 = vmatmul.bf16.gmra.mxu0 %v886
      %v900 = vpop.f32.mrf.mxu0
      %v901 = vadd.f32 %v611, %v900
      %v902 = vpop.f32.mrf.mxu0
      %v903 = vadd.f32 %v611, %v902
      %904 = vdwg.mxu0
      %v905 = vsel %vm679, %v901, -inf
      %906 = vmax.xlane.f32.xlu0 %v905
      %v907 = vpop.xlane.xlu0 %906
      %v908 = vsel %vm679, %v903, -inf
      %909 = vmax.xlane.f32.xlu0 %v908
      %v910 = vpop.xlane.xlu0 %909
      %v911 = vsub.f32 %v901, %v907
      %v912 = vsub.f32 %v903, %v910
      %v913 = vmul.f32 %v911, 1.442695
      %v914 = vpow.pop %v913
      %v915 = vmul.f32 %v912, 1.442695
      %v916 = vpow.pop %v915
      %v917 = vsel %vm679, %v914, 0.0
      %918 = vadd.xlane.f32.xlu0 %v917
      %v919 = vpop.xlane.xlu0 %918
      %v920 = vsel %vm679, %v916, 0.0
      %921 = vadd.xlane.f32.xlu0 %v920
      %v922 = vpop.xlane.xlu0 %921
      %v923 = vrcp.pop %v919
      %v924 = vrcp.pop %v922
      %v925 = vmul.f32 %v914, %v923
      %v926 = vmul.f32 %v916, %v924
      %v927 = vpack.c.bf16 %v925, %v925
      %v928 = vpack.c.bf16 %v926, %v926
      %v931 = vunpack.c.l.b16 %v927
      %v932 = vunpack.c.l.b16 %v928
      %v933 = vpack.c.b16 %v932, %v931
      %934 = vrot.lane.b32.xlu0 %v655, 52
      %v935 = vpop.permute.xlu0 %934
      %v938 = vsel %vm679, %v933, 0
      %940 = vmatpush.bf16.msra.mxu0 0
      %941 = vmatpush.bf16.msra.mxu0 0
      %942 = vmatpush.bf16.msra.mxu0 0
      %943 = vmatpush.bf16.msra.mxu0 0
      %944 = vmatpush.bf16.msra.mxu0 0
      %945 = vmatpush.bf16.msra.mxu0 0
      %946 = vmatpush.bf16.msra.mxu0 0
      %947 = vmatpush.bf16.msra.mxu0 %v935
      %948 = vmatmul.bf16.gmra.mxu0 %v938
      %v949 = vpop.f32.mrf.mxu0
      %v950 = vadd.f32 0.0, %v949
      %v951 = vpop.f32.mrf.mxu0
      %v952 = vadd.f32 0.0, %v951
      %953 = vdwg.mxu0
      %v954 = vpack.c.bf16 %v950, %v950
      %v955 = vpack.c.bf16 %v952, %v952
      %956 = vrot.lane.b32.xlu0 %v655, 112
      %v957 = vpop.permute.xlu0 %956
      %958 = vrot.lane.b32.xlu0 %v655, 80
      %v959 = vpop.permute.xlu0 %958
      %v961 = vsel %vm658, %v957, 0
      %v964 = vsel %vm658, %v959, 0
      %966 = vmatpush.bf16.xpose.msra.mxu0 0
      %967 = vmatpush.bf16.xpose.msra.mxu0 0
      %968 = vmatpush.bf16.xpose.msra.mxu0 0
      %969 = vmatpush.bf16.xpose.msra.mxu0 0
      %970 = vmatpush.bf16.xpose.msra.mxu0 0
      %971 = vmatpush.bf16.xpose.msra.mxu0 0
      %972 = vmatpush.bf16.xpose.msra.mxu0 0
      %973 = vmatpush.bf16.xpose.msra.mxu0 %v964
      %974 = vmatmul.bf16.gmra.mxu0 %v961
      %v975 = vpop.f32.mrf.mxu0
      %v976 = vadd.f32 %v611, %v975
      %v977 = vpop.f32.mrf.mxu0
      %v978 = vadd.f32 %v611, %v977
      %979 = vdwg.mxu0
      %v980 = vsel %vm679, %v976, -inf
      %981 = vmax.xlane.f32.xlu0 %v980
      %v982 = vpop.xlane.xlu0 %981
      %v983 = vsel %vm679, %v978, -inf
      %984 = vmax.xlane.f32.xlu0 %v983
      %v985 = vpop.xlane.xlu0 %984
      %v986 = vsub.f32 %v976, %v982
      %v987 = vsub.f32 %v978, %v985
      %v988 = vmul.f32 %v986, 1.442695
      %v989 = vpow.pop %v988
      %v990 = vmul.f32 %v987, 1.442695
      %v991 = vpow.pop %v990
      %v992 = vsel %vm679, %v989, 0.0
      %993 = vadd.xlane.f32.xlu0 %v992
      %v994 = vpop.xlane.xlu0 %993
      %v995 = vsel %vm679, %v991, 0.0
      %996 = vadd.xlane.f32.xlu0 %v995
      %v997 = vpop.xlane.xlu0 %996
      %v998 = vrcp.pop %v994
      %v999 = vrcp.pop %v997
      %v1000 = vmul.f32 %v989, %v998
      %v1001 = vmul.f32 %v991, %v999
      %v1002 = vpack.c.bf16 %v1000, %v1000
      %v1003 = vpack.c.bf16 %v1001, %v1001
      %v1006 = vunpack.c.l.b16 %v1002
      %v1007 = vunpack.c.l.b16 %v1003
      %v1008 = vpack.c.b16 %v1007, %v1006
      %1009 = vrot.lane.b32.xlu0 %v655, 48
      %v1010 = vpop.permute.xlu0 %1009
      %v1013 = vsel %vm679, %v1008, 0
      %1015 = vmatpush.bf16.msra.mxu0 0
      %1016 = vmatpush.bf16.msra.mxu0 0
      %1017 = vmatpush.bf16.msra.mxu0 0
      %1018 = vmatpush.bf16.msra.mxu0 0
      %1019 = vmatpush.bf16.msra.mxu0 0
      %1020 = vmatpush.bf16.msra.mxu0 0
      %1021 = vmatpush.bf16.msra.mxu0 0
      %1022 = vmatpush.bf16.msra.mxu0 %v1010
      %1023 = vmatmul.bf16.gmra.mxu0 %v1013
      %v1024 = vpop.f32.mrf.mxu0
      %v1025 = vadd.f32 0.0, %v1024
      %v1026 = vpop.f32.mrf.mxu0
      %v1027 = vadd.f32 0.0, %v1026
      %1028 = vdwg.mxu0
      %v1029 = vpack.c.bf16 %v1025, %v1025
      %v1030 = vpack.c.bf16 %v1027, %v1027
      %1031 = vrot.lane.b32.xlu0 %v655, 108
      %v1032 = vpop.permute.xlu0 %1031
      %1033 = vrot.lane.b32.xlu0 %v655, 76
      %v1034 = vpop.permute.xlu0 %1033
      %v1036 = vsel %vm658, %v1032, 0
      %v1039 = vsel %vm658, %v1034, 0
      %1041 = vmatpush.bf16.xpose.msra.mxu0 0
      %1042 = vmatpush.bf16.xpose.msra.mxu0 0
      %1043 = vmatpush.bf16.xpose.msra.mxu0 0
      %1044 = vmatpush.bf16.xpose.msra.mxu0 0
      %1045 = vmatpush.bf16.xpose.msra.mxu0 0
      %1046 = vmatpush.bf16.xpose.msra.mxu0 0
      %1047 = vmatpush.bf16.xpose.msra.mxu0 0
      %1048 = vmatpush.bf16.xpose.msra.mxu0 %v1039
      %1049 = vmatmul.bf16.gmra.mxu0 %v1036
      %v1050 = vpop.f32.mrf.mxu0
      %v1051 = vadd.f32 %v611, %v1050
      %v1052 = vpop.f32.mrf.mxu0
      %v1053 = vadd.f32 %v611, %v1052
      %1054 = vdwg.mxu0
      %v1055 = vsel %vm679, %v1051, -inf
      %1056 = vmax.xlane.f32.xlu0 %v1055
      %v1057 = vpop.xlane.xlu0 %1056
      %v1058 = vsel %vm679, %v1053, -inf
      %1059 = vmax.xlane.f32.xlu0 %v1058
      %v1060 = vpop.xlane.xlu0 %1059
      %v1061 = vsub.f32 %v1051, %v1057
      %v1062 = vsub.f32 %v1053, %v1060
      %v1063 = vmul.f32 %v1061, 1.442695
      %v1064 = vpow.pop %v1063
      %v1065 = vmul.f32 %v1062, 1.442695
      %v1066 = vpow.pop %v1065
      %v1067 = vsel %vm679, %v1064, 0.0
      %1068 = vadd.xlane.f32.xlu0 %v1067
      %v1069 = vpop.xlane.xlu0 %1068
      %v1070 = vsel %vm679, %v1066, 0.0
      %1071 = vadd.xlane.f32.xlu0 %v1070
      %v1072 = vpop.xlane.xlu0 %1071
      %v1073 = vrcp.pop %v1069
      %v1074 = vrcp.pop %v1072
      %v1075 = vmul.f32 %v1064, %v1073
      %v1076 = vmul.f32 %v1066, %v1074
      %v1077 = vpack.c.bf16 %v1075, %v1075
      %v1078 = vpack.c.bf16 %v1076, %v1076
      %v1081 = vunpack.c.l.b16 %v1077
      %v1082 = vunpack.c.l.b16 %v1078
      %v1083 = vpack.c.b16 %v1082, %v1081
      %1084 = vrot.lane.b32.xlu0 %v655, 44
      %v1085 = vpop.permute.xlu0 %1084
      %v1088 = vsel %vm679, %v1083, 0
      %1090 = vmatpush.bf16.msra.mxu0 0
      %1091 = vmatpush.bf16.msra.mxu0 0
      %1092 = vmatpush.bf16.msra.mxu0 0
      %1093 = vmatpush.bf16.msra.mxu0 0
      %1094 = vmatpush.bf16.msra.mxu0 0
      %1095 = vmatpush.bf16.msra.mxu0 0
      %1096 = vmatpush.bf16.msra.mxu0 0
      %1097 = vmatpush.bf16.msra.mxu0 %v1085
      %1098 = vmatmul.bf16.gmra.mxu0 %v1088
      %v1099 = vpop.f32.mrf.mxu0
      %v1100 = vadd.f32 0.0, %v1099
      %v1101 = vpop.f32.mrf.mxu0
      %v1102 = vadd.f32 0.0, %v1101
      %1103 = vdwg.mxu0
      %v1104 = vpack.c.bf16 %v1100, %v1100
      %v1105 = vpack.c.bf16 %v1102, %v1102
      %1106 = vrot.lane.b32.xlu0 %v655, 104
      %v1107 = vpop.permute.xlu0 %1106
      %1108 = vrot.lane.b32.xlu0 %v655, 72
      %v1109 = vpop.permute.xlu0 %1108
      %v1111 = vsel %vm658, %v1107, 0
      %v1114 = vsel %vm658, %v1109, 0
      %1116 = vmatpush.bf16.xpose.msra.mxu0 0
      %1117 = vmatpush.bf16.xpose.msra.mxu0 0
      %1118 = vmatpush.bf16.xpose.msra.mxu0 0
      %1119 = vmatpush.bf16.xpose.msra.mxu0 0
      %1120 = vmatpush.bf16.xpose.msra.mxu0 0
      %1121 = vmatpush.bf16.xpose.msra.mxu0 0
      %1122 = vmatpush.bf16.xpose.msra.mxu0 0
      %1123 = vmatpush.bf16.xpose.msra.mxu0 %v1114
      %1124 = vmatmul.bf16.gmra.mxu0 %v1111
      %v1125 = vpop.f32.mrf.mxu0
      %v1126 = vadd.f32 %v611, %v1125
      %v1127 = vpop.f32.mrf.mxu0
      %v1128 = vadd.f32 %v611, %v1127
      %1129 = vdwg.mxu0
      %v1130 = vsel %vm679, %v1126, -inf
      %1131 = vmax.xlane.f32.xlu0 %v1130
      %v1132 = vpop.xlane.xlu0 %1131
      %v1133 = vsel %vm679, %v1128, -inf
      %1134 = vmax.xlane.f32.xlu0 %v1133
      %v1135 = vpop.xlane.xlu0 %1134
      %v1136 = vsub.f32 %v1126, %v1132
      %v1137 = vsub.f32 %v1128, %v1135
      %v1138 = vmul.f32 %v1136, 1.442695
      %v1139 = vpow.pop %v1138
      %v1140 = vmul.f32 %v1137, 1.442695
      %v1141 = vpow.pop %v1140
      %v1142 = vsel %vm679, %v1139, 0.0
      %1143 = vadd.xlane.f32.xlu0 %v1142
      %v1144 = vpop.xlane.xlu0 %1143
      %v1145 = vsel %vm679, %v1141, 0.0
      %1146 = vadd.xlane.f32.xlu0 %v1145
      %v1147 = vpop.xlane.xlu0 %1146
      %v1148 = vrcp.pop %v1144
      %v1149 = vrcp.pop %v1147
      %v1150 = vmul.f32 %v1139, %v1148
      %v1151 = vmul.f32 %v1141, %v1149
      %v1152 = vpack.c.bf16 %v1150, %v1150
      %v1153 = vpack.c.bf16 %v1151, %v1151
      %v1156 = vunpack.c.l.b16 %v1152
      %v1157 = vunpack.c.l.b16 %v1153
      %v1158 = vpack.c.b16 %v1157, %v1156
      %1159 = vrot.lane.b32.xlu0 %v655, 40
      %v1160 = vpop.permute.xlu0 %1159
      %v1163 = vsel %vm679, %v1158, 0
      %1165 = vmatpush.bf16.msra.mxu0 0
      %1166 = vmatpush.bf16.msra.mxu0 0
      %1167 = vmatpush.bf16.msra.mxu0 0
      %1168 = vmatpush.bf16.msra.mxu0 0
      %1169 = vmatpush.bf16.msra.mxu0 0
      %1170 = vmatpush.bf16.msra.mxu0 0
      %1171 = vmatpush.bf16.msra.mxu0 0
      %1172 = vmatpush.bf16.msra.mxu0 %v1160
      %1173 = vmatmul.bf16.gmra.mxu0 %v1163
      %v1174 = vpop.f32.mrf.mxu0
      %v1175 = vadd.f32 0.0, %v1174
      %v1176 = vpop.f32.mrf.mxu0
      %v1177 = vadd.f32 0.0, %v1176
      %1178 = vdwg.mxu0
      %v1179 = vpack.c.bf16 %v1175, %v1175
      %v1180 = vpack.c.bf16 %v1177, %v1177
      %1181 = vrot.lane.b32.xlu0 %v655, 100
      %v1182 = vpop.permute.xlu0 %1181
      %1183 = vrot.lane.b32.xlu0 %v655, 68
      %v1184 = vpop.permute.xlu0 %1183
      %v1186 = vsel %vm658, %v1182, 0
      %v1189 = vsel %vm658, %v1184, 0
      %1191 = vmatpush.bf16.xpose.msra.mxu0 0
      %1192 = vmatpush.bf16.xpose.msra.mxu0 0
      %1193 = vmatpush.bf16.xpose.msra.mxu0 0
      %1194 = vmatpush.bf16.xpose.msra.mxu0 0
      %1195 = vmatpush.bf16.xpose.msra.mxu0 0
      %1196 = vmatpush.bf16.xpose.msra.mxu0 0
      %1197 = vmatpush.bf16.xpose.msra.mxu0 0
      %1198 = vmatpush.bf16.xpose.msra.mxu0 %v1189
      %1199 = vmatmul.bf16.gmra.mxu0 %v1186
      %v1200 = vpop.f32.mrf.mxu0
      %v1201 = vadd.f32 %v611, %v1200
      %v1202 = vpop.f32.mrf.mxu0
      %v1203 = vadd.f32 %v611, %v1202
      %1204 = vdwg.mxu0
      %v1205 = vsel %vm679, %v1201, -inf
      %1206 = vmax.xlane.f32.xlu0 %v1205
      %v1207 = vpop.xlane.xlu0 %1206
      %v1208 = vsel %vm679, %v1203, -inf
      %1209 = vmax.xlane.f32.xlu0 %v1208
      %v1210 = vpop.xlane.xlu0 %1209
      %v1211 = vsub.f32 %v1201, %v1207
      %v1212 = vsub.f32 %v1203, %v1210
      %v1213 = vmul.f32 %v1211, 1.442695
      %v1214 = vpow.pop %v1213
      %v1215 = vmul.f32 %v1212, 1.442695
      %v1216 = vpow.pop %v1215
      %v1217 = vsel %vm679, %v1214, 0.0
      %1218 = vadd.xlane.f32.xlu0 %v1217
      %v1219 = vpop.xlane.xlu0 %1218
      %v1220 = vsel %vm679, %v1216, 0.0
      %1221 = vadd.xlane.f32.xlu0 %v1220
      %v1222 = vpop.xlane.xlu0 %1221
      %v1223 = vrcp.pop %v1219
      %v1224 = vrcp.pop %v1222
      %v1225 = vmul.f32 %v1214, %v1223
      %v1226 = vmul.f32 %v1216, %v1224
      %v1227 = vpack.c.bf16 %v1225, %v1225
      %v1228 = vpack.c.bf16 %v1226, %v1226
      %v1231 = vunpack.c.l.b16 %v1227
      %v1232 = vunpack.c.l.b16 %v1228
      %v1233 = vpack.c.b16 %v1232, %v1231
      %1234 = vrot.lane.b32.xlu0 %v655, 36
      %v1235 = vpop.permute.xlu0 %1234
      %v1238 = vsel %vm679, %v1233, 0
      %1240 = vmatpush.bf16.msra.mxu0 0
      %1241 = vmatpush.bf16.msra.mxu0 0
      %1242 = vmatpush.bf16.msra.mxu0 0
      %1243 = vmatpush.bf16.msra.mxu0 0
      %1244 = vmatpush.bf16.msra.mxu0 0
      %1245 = vmatpush.bf16.msra.mxu0 0
      %1246 = vmatpush.bf16.msra.mxu0 0
      %1247 = vmatpush.bf16.msra.mxu0 %v1235
      %1248 = vmatmul.bf16.gmra.mxu0 %v1238
      %v1249 = vpop.f32.mrf.mxu0
      %v1250 = vadd.f32 0.0, %v1249
      %v1251 = vpop.f32.mrf.mxu0
      %v1252 = vadd.f32 0.0, %v1251
      %1253 = vdwg.mxu0
      %v1254 = vpack.c.bf16 %v1250, %v1250
      %v1255 = vpack.c.bf16 %v1252, %v1252
      %v1258 = vunpack.c.l.b16 %v729
      %v1259 = vunpack.c.l.b16 %v730
      %v1260 = vpack.c.b16 %v1259, %v1258
      %v1263 = vunpack.c.l.b16 %v804
      %v1264 = vunpack.c.l.b16 %v805
      %v1265 = vpack.c.b16 %v1264, %v1263
      %1266 = vrot.lane.b32.xlu0 %v1265, 4
      %v1267 = vpop.permute.xlu0 %1266
      %v1270 = vunpack.c.l.b16 %v879
      %v1271 = vunpack.c.l.b16 %v880
      %v1272 = vpack.c.b16 %v1271, %v1270
      %1273 = vrot.lane.b32.xlu0 %v1272, 8
      %v1274 = vpop.permute.xlu0 %1273
      %v1277 = vunpack.c.l.b16 %v954
      %v1278 = vunpack.c.l.b16 %v955
      %v1279 = vpack.c.b16 %v1278, %v1277
      %1280 = vrot.lane.b32.xlu0 %v1279, 12
      %v1281 = vpop.permute.xlu0 %1280
      %v1284 = vunpack.c.l.b16 %v1029
      %v1285 = vunpack.c.l.b16 %v1030
      %v1286 = vpack.c.b16 %v1285, %v1284
      %1287 = vrot.lane.b32.xlu0 %v1286, 16
      %v1288 = vpop.permute.xlu0 %1287
      %v1291 = vunpack.c.l.b16 %v1104
      %v1292 = vunpack.c.l.b16 %v1105
      %v1293 = vpack.c.b16 %v1292, %v1291
      %1294 = vrot.lane.b32.xlu0 %v1293, 20
      %v1295 = vpop.permute.xlu0 %1294
      %v1298 = vunpack.c.l.b16 %v1179
      %v1299 = vunpack.c.l.b16 %v1180
      %v1300 = vpack.c.b16 %v1299, %v1298
      %1301 = vrot.lane.b32.xlu0 %v1300, 24
      %v1302 = vpop.permute.xlu0 %1301
      %v1305 = vunpack.c.l.b16 %v1254
      %v1306 = vunpack.c.l.b16 %v1255
      %v1307 = vpack.c.b16 %v1306, %v1305
      %1308 = vrot.lane.b32.xlu0 %v1307, 28
      %v1309 = vpop.permute.xlu0 %1308
      %v1312 = vsel %vm658, %v1260, %v1267
      %vm1313 = vcmask 64512
      %v1315 = vsel %vm1313, %v1312, %v1274
      %vm1316 = vcmask 97280
      %v1318 = vsel %vm1316, %v1315, %v1281
      %v1320 = vsel %vm679, %v1318, %v1288
      %vm1321 = vcmask 162816
      %v1323 = vsel %vm1321, %v1320, %v1295
      %vm1324 = vcmask 195584
      %v1326 = vsel %vm1324, %v1323, %v1302
      %vm1327 = vcmask 228352
      %v1329 = vsel %vm1327, %v1326, %v1309
      %v1330 = vld [vmem:[%s5] sm:$0xf]
      %v1331 = vld [vmem:[%s5 + $0x4] sm:$0xf]
      %v1332 = vld [vmem:[%s5 + $0x8] sm:$0xf]
      %v1333 = vld [vmem:[%s5 + $0xc] sm:$0xf]
      %v1334 = vld [vmem:[%s6] sm:$0x1]
      %v1335 = vperm.slane %v1334, 0
      %v1340 = vunpack.c.l.b16 %v1330
      %v1341 = vunpack.c.l.b16 %v1331
      %v1342 = vunpack.c.l.b16 %v1332
      %v1343 = vunpack.c.l.b16 %v1333
      %v1344 = vpack.c.b16 %v1341, %v1340
      %v1345 = vpack.c.b16 %v1343, %v1342
      %v1348 = vsel %vm631, %v1329, 0
      %1350 = vmatpush.bf16.msra.mxu0 0
      %1351 = vmatpush.bf16.msra.mxu0 0
      %1352 = vmatpush.bf16.msra.mxu0 0
      %1353 = vmatpush.bf16.msra.mxu0 0
      %1354 = vmatpush.bf16.msra.mxu0 0
      %1355 = vmatpush.bf16.msra.mxu0 0
      %1356 = vmatpush.bf16.msra.mxu0 %v1345
      %1357 = vmatpush.bf16.msra.mxu0 %v1344
      %1358 = vmatmul.bf16.gmra.mxu0 %v1348
      %v1359 = vpop.f32.mrf.mxu0
      %v1360 = vadd.f32 %v1335, %v1359
      %v1361 = vpop.f32.mrf.mxu0
      %v1362 = vadd.f32 %v1335, %v1361
      %1363 = vdwg.mxu0
      %v1364 = vadd.f32 %v602, %v1360
      %v1365 = vadd.f32 %v606, %v1362
      %v1366 = vld [vmem:[%s7] sm:$0x1]
      %v1367 = vld [vmem:[%s8] sm:$0x1]
      %v1368 = vsel %vm631, %v1364, 0.0
      %1369 = vadd.xlane.f32.xlu0 %v1368
      %v1370 = vpop.xlane.xlu0 %1369
      %v1371 = vsel %vm631, %v1365, 0.0
      %1372 = vadd.xlane.f32.xlu0 %v1371
      %v1373 = vpop.xlane.xlu0 %1372
      %v1374 = vrcp.pop 32.0
      %v1375 = vmul.f32 32.0, %v1374
      %v1376 = vsub.f32 1.0, %v1375
      %v1377 = vmul.f32 %v1374, %v1376
      %v1378 = vadd.f32 %v1374, %v1377
      %vm1379 = vweird.f32 %v1374
      %v1380 = vsel %vm1379, %v1374, %v1378
      %v1381 = vmul.f32 %v1370, %v1380
      %v1382 = vmul.f32 %v1373, %v1380
      %v1383 = vsub.f32 %v1364, %v1381
      %v1384 = vsub.f32 %v1365, %v1382
      %v1385 = vmul.f32 %v1383, %v1383
      %v1386 = vmul.f32 %v1384, %v1384
      %v1387 = vsel %vm631, %v1385, 0.0
      %1388 = vadd.xlane.f32.xlu0 %v1387
      %v1389 = vpop.xlane.xlu0 %1388
      %v1390 = vsel %vm631, %v1386, 0.0
      %1391 = vadd.xlane.f32.xlu0 %v1390
      %v1392 = vpop.xlane.xlu0 %1391
      %v1393 = vmul.f32 %v1389, %v1380
      %v1394 = vmul.f32 %v1392, %v1380
      %v1395 = vadd.f32 %v1393, 1e-05
      %v1396 = vadd.f32 %v1394, 1e-05
      %v1397 = vrsqrt.pop %v1395
      %v1398 = vmul.f32 %v1397, %v1395
      %v1399 = vmul.f32 %v1398, %v1397
      %v1400 = vmul.f32 0.5, %v1399
      %v1401 = vsub.f32 1.5, %v1400
      %v1402 = vmul.f32 %v1397, %v1401
      %vm1403 = vweird.f32 %v1395
      %vm1404 = vweird.f32 %v1397
      %vm1405 = vmor %vm1403, %vm1404
      %v1406 = vsel %vm1405, %v1397, %v1402
      %v1407 = vrsqrt.pop %v1396
      %v1408 = vmul.f32 %v1407, %v1396
      %v1409 = vmul.f32 %v1408, %v1407
      %v1410 = vmul.f32 0.5, %v1409
      %v1411 = vsub.f32 1.5, %v1410
      %v1412 = vmul.f32 %v1407, %v1411
      %vm1413 = vweird.f32 %v1396
      %vm1414 = vweird.f32 %v1407
      %vm1415 = vmor %vm1413, %vm1414
      %v1416 = vsel %vm1415, %v1407, %v1412
      %v1417 = vmul.f32 %v1383, %v1406
      %v1418 = vmul.f32 %v1384, %v1416
      %v1419 = vperm.slane %v1366, 0
      %v1420 = vmul.f32 %v1417, %v1419
      %v1421 = vmul.f32 %v1418, %v1419
      %v1422 = vperm.slane %v1367, 0
      %v1423 = vadd.f32 %v1420, %v1422
      %v1424 = vadd.f32 %v1421, %v1422
      %v1425 = vpack.c.bf16 %v1424, %v1423
      %v1426 = vld [vmem:[%s9] sm:$0xf]
      %v1427 = vld [vmem:[%s9 + $0x4] sm:$0xf]
      %v1428 = vld [vmem:[%s9 + $0x8] sm:$0xf]
      %v1429 = vld [vmem:[%s9 + $0xc] sm:$0xf]
      %v1430 = vld [vmem:[%s10] sm:$0x1]
      %v1431 = vperm.slane %v1430, 0
      %v1436 = vunpack.c.l.b16 %v1426
      %v1437 = vunpack.c.l.b16 %v1427
      %v1438 = vunpack.c.l.b16 %v1428
      %v1439 = vunpack.c.l.b16 %v1429
      %v1440 = vpack.c.b16 %v1437, %v1436
      %v1441 = vpack.c.b16 %v1439, %v1438
      %v1445 = vsel %vm631, %v1425, 0
      %1447 = vmatpush.bf16.msra.mxu0 0
      %1448 = vmatpush.bf16.msra.mxu0 0
      %1449 = vmatpush.bf16.msra.mxu0 0
      %1450 = vmatpush.bf16.msra.mxu0 0
      %1451 = vmatpush.bf16.msra.mxu0 0
      %1452 = vmatpush.bf16.msra.mxu0 0
      %1453 = vmatpush.bf16.msra.mxu0 %v1441
      %1454 = vmatpush.bf16.msra.mxu0 %v1440
      %1455 = vmatmul.bf16.gmra.mxu0 %v1445
      %v1456 = vpop.f32.mrf.mxu0
      %v1457 = vadd.f32 %v1431, %v1456
      %v1458 = vpop.f32.mrf.mxu0
      %v1459 = vadd.f32 %v1431, %v1458
      %1460 = vdwg.mxu0
      %v1461 = vmax.f32 %v1457, 0.0
      %v1462 = vmax.f32 %v1459, 0.0
      %v1463 = vpack.c.bf16 %v1462, %v1461
      %v1464 = vld [vmem:[%s11] sm:$0xf]
      %v1465 = vld [vmem:[%s11 + $0x4] sm:$0xf]
      %v1466 = vld [vmem:[%s11 + $0x8] sm:$0xf]
      %v1467 = vld [vmem:[%s11 + $0xc] sm:$0xf]
      %v1468 = vld [vmem:[%s11 + $0x10] sm:$0xf]
      %v1469 = vld [vmem:[%s11 + $0x14] sm:$0xf]
      %v1470 = vld [vmem:[%s11 + $0x18] sm:$0xf]
      %v1471 = vld [vmem:[%s11 + $0x1c] sm:$0xf]
      %v1472 = vld [vmem:[%s11 + $0x20] sm:$0xf]
      %v1473 = vld [vmem:[%s11 + $0x24] sm:$0xf]
      %v1474 = vld [vmem:[%s11 + $0x28] sm:$0xf]
      %v1475 = vld [vmem:[%s11 + $0x2c] sm:$0xf]
      %v1476 = vld [vmem:[%s11 + $0x30] sm:$0xf]
      %v1477 = vld [vmem:[%s11 + $0x34] sm:$0xf]
      %v1478 = vld [vmem:[%s11 + $0x38] sm:$0xf]
      %v1479 = vld [vmem:[%s11 + $0x3c] sm:$0xf]
      %v1480 = vld [vmem:[%s12] sm:$0x1]
      %v1481 = vperm.slane %v1480, 0
      %v1498 = vunpack.c.l.b16 %v1464
      %v1499 = vunpack.c.l.b16 %v1465
      %v1500 = vunpack.c.l.b16 %v1466
      %v1501 = vunpack.c.l.b16 %v1467
      %v1502 = vunpack.c.l.b16 %v1468
      %v1503 = vunpack.c.l.b16 %v1469
      %v1504 = vunpack.c.l.b16 %v1470
      %v1505 = vunpack.c.l.b16 %v1471
      %v1506 = vunpack.c.l.b16 %v1472
      %v1507 = vunpack.c.l.b16 %v1473
      %v1508 = vunpack.c.l.b16 %v1474
      %v1509 = vunpack.c.l.b16 %v1475
      %v1510 = vunpack.c.l.b16 %v1476
      %v1511 = vunpack.c.l.b16 %v1477
      %v1512 = vunpack.c.l.b16 %v1478
      %v1513 = vunpack.c.l.b16 %v1479
      %v1514 = vpack.c.b16 %v1499, %v1498
      %v1515 = vpack.c.b16 %v1501, %v1500
      %v1516 = vpack.c.b16 %v1503, %v1502
      %v1517 = vpack.c.b16 %v1505, %v1504
      %v1518 = vpack.c.b16 %v1507, %v1506
      %v1519 = vpack.c.b16 %v1509, %v1508
      %v1520 = vpack.c.b16 %v1511, %v1510
      %v1521 = vpack.c.b16 %v1513, %v1512
      %1530 = vmatpush.bf16.msra.mxu0 %v1521
      %1531 = vmatpush.bf16.msra.mxu0 %v1520
      %1532 = vmatpush.bf16.msra.mxu0 %v1519
      %1533 = vmatpush.bf16.msra.mxu0 %v1518
      %1534 = vmatpush.bf16.msra.mxu0 %v1517
      %1535 = vmatpush.bf16.msra.mxu0 %v1516
      %1536 = vmatpush.bf16.msra.mxu0 %v1515
      %1537 = vmatpush.bf16.msra.mxu0 %v1514
      %1538 = vmatmul.bf16.gmra.mxu0 %v1463
      %v1539 = vpop.f32.mrf.mxu0
      %v1540 = vadd.f32 %v1481, %v1539
      %v1541 = vpop.f32.mrf.mxu0
      %v1542 = vadd.f32 %v1481, %v1541
      %1543 = vdwg.mxu0
      %v1544 = vadd.f32 %v1423, %v1540
      %v1545 = vadd.f32 %v1424, %v1542
      %v1546 = vld [vmem:[%s13] sm:$0x1]
      %v1547 = vld [vmem:[%s14] sm:$0x1]
      %v1548 = vsel %vm631, %v1544, 0.0
      %1549 = vadd.xlane.f32.xlu0 %v1548
      %v1550 = vpop.xlane.xlu0 %1549
      %v1551 = vsel %vm631, %v1545, 0.0
      %1552 = vadd.xlane.f32.xlu0 %v1551
      %v1553 = vpop.xlane.xlu0 %1552
      %v1554 = vmul.f32 %v1550, %v1380
      %v1555 = vmul.f32 %v1553, %v1380
      %v1556 = vsub.f32 %v1544, %v1554
      %v1557 = vsub.f32 %v1545, %v1555
      %v1558 = vmul.f32 %v1556, %v1556
      %v1559 = vmul.f32 %v1557, %v1557
      %v1560 = vsel %vm631, %v1558, 0.0
      %1561 = vadd.xlane.f32.xlu0 %v1560
      %v1562 = vpop.xlane.xlu0 %1561
      %v1563 = vsel %vm631, %v1559, 0.0
      %1564 = vadd.xlane.f32.xlu0 %v1563
      %v1565 = vpop.xlane.xlu0 %1564
      %v1566 = vmul.f32 %v1562, %v1380
      %v1567 = vmul.f32 %v1565, %v1380
      %v1568 = vadd.f32 %v1566, 1e-05
      %v1569 = vadd.f32 %v1567, 1e-05
      %v1570 = vrsqrt.pop %v1568
      %v1571 = vmul.f32 %v1570, %v1568
      %v1572 = vmul.f32 %v1571, %v1570
      %v1573 = vmul.f32 0.5, %v1572
      %v1574 = vsub.f32 1.5, %v1573
      %v1575 = vmul.f32 %v1570, %v1574
      %vm1576 = vweird.f32 %v1568
      %vm1577 = vweird.f32 %v1570
      %vm1578 = vmor %vm1576, %vm1577
      %v1579 = vsel %vm1578, %v1570, %v1575
      %v1580 = vrsqrt.pop %v1569
      %v1581 = vmul.f32 %v1580, %v1569
      %v1582 = vmul.f32 %v1581, %v1580
      %v1583 = vmul.f32 0.5, %v1582
      %v1584 = vsub.f32 1.5, %v1583
      %v1585 = vmul.f32 %v1580, %v1584
      %vm1586 = vweird.f32 %v1569
      %vm1587 = vweird.f32 %v1580
      %vm1588 = vmor %vm1586, %vm1587
      %v1589 = vsel %vm1588, %v1580, %v1585
      %v1590 = vmul.f32 %v1556, %v1579
      %v1591 = vmul.f32 %v1557, %v1589
      %v1592 = vperm.slane %v1546, 0
      %v1593 = vmul.f32 %v1590, %v1592
      %v1594 = vmul.f32 %v1591, %v1592
      %v1595 = vperm.slane %v1547, 0
      %v1596 = vadd.f32 %v1593, %v1595
      %v1597 = vadd.f32 %v1594, %v1595
      %v1598 = vpack.c.bf16 %v1597, %v1596
      %s1599 = scalar_lea.vmem %s3, 16
      %v1600 = vld [vmem:[%s1599] sm:$0xf]
      %v1601 = vld [vmem:[%s1599 + $0x4] sm:$0xf]
      %v1602 = vld [vmem:[%s1599 + $0x8] sm:$0xf]
      %v1603 = vld [vmem:[%s1599 + $0xc] sm:$0xf]
      %v1604 = vld [vmem:[%s4 + $0x1] sm:$0x1]
      %v1605 = vperm.slane %v1604, 0
      %v1610 = vunpack.c.l.b16 %v1600
      %v1611 = vunpack.c.l.b16 %v1601
      %v1612 = vunpack.c.l.b16 %v1602
      %v1613 = vunpack.c.l.b16 %v1603
      %v1614 = vpack.c.b16 %v1611, %v1610
      %v1615 = vpack.c.b16 %v1613, %v1612
      %v1619 = vsel %vm631, %v1598, 0
      %1621 = vmatpush.bf16.msra.mxu0 0
      %1622 = vmatpush.bf16.msra.mxu0 0
      %1623 = vmatpush.bf16.msra.mxu0 0
      %1624 = vmatpush.bf16.msra.mxu0 0
      %1625 = vmatpush.bf16.msra.mxu0 0
      %1626 = vmatpush.bf16.msra.mxu0 0
      %1627 = vmatpush.bf16.msra.mxu0 %v1615
      %1628 = vmatpush.bf16.msra.mxu0 %v1614
      %1629 = vmatmul.bf16.gmra.mxu0 %v1619
      %v1630 = vpop.f32.mrf.mxu0
      %v1631 = vadd.f32 %v1605, %v1630
      %v1632 = vpop.f32.mrf.mxu0
      %v1633 = vadd.f32 %v1605, %v1632
      %1634 = vdwg.mxu0
      %v1635 = vpack.c.bf16 %v1631, %v1631
      %v1636 = vpack.c.bf16 %v1633, %v1633
      %v1639 = vunpack.c.l.b16 %v1635
      %v1640 = vunpack.c.l.b16 %v1636
      %v1641 = vpack.c.b16 %v1640, %v1639
      %1642 = vrot.lane.b32.xlu0 %v1641, 96
      %v1643 = vpop.permute.xlu0 %1642
      %v1645 = vsel %vm658, %v1641, 0
      %v1648 = vsel %vm658, %v1643, 0
      %1650 = vmatpush.bf16.xpose.msra.mxu0 0
      %1651 = vmatpush.bf16.xpose.msra.mxu0 0
      %1652 = vmatpush.bf16.xpose.msra.mxu0 0
      %1653 = vmatpush.bf16.xpose.msra.mxu0 0
      %1654 = vmatpush.bf16.xpose.msra.mxu0 0
      %1655 = vmatpush.bf16.xpose.msra.mxu0 0
      %1656 = vmatpush.bf16.xpose.msra.mxu0 0
      %1657 = vmatpush.bf16.xpose.msra.mxu0 %v1648
      %1658 = vmatmul.bf16.gmra.mxu0 %v1645
      %v1659 = vpop.f32.mrf.mxu0
      %v1660 = vadd.f32 %v611, %v1659
      %v1661 = vpop.f32.mrf.mxu0
      %v1662 = vadd.f32 %v611, %v1661
      %1663 = vdwg.mxu0
      %v1664 = vsel %vm679, %v1660, -inf
      %1665 = vmax.xlane.f32.xlu0 %v1664
      %v1666 = vpop.xlane.xlu0 %1665
      %v1667 = vsel %vm679, %v1662, -inf
      %1668 = vmax.xlane.f32.xlu0 %v1667
      %v1669 = vpop.xlane.xlu0 %1668
      %v1670 = vsub.f32 %v1660, %v1666
      %v1671 = vsub.f32 %v1662, %v1669
      %v1672 = vmul.f32 %v1670, 1.442695
      %v1673 = vpow.pop %v1672
      %v1674 = vmul.f32 %v1671, 1.442695
      %v1675 = vpow.pop %v1674
      %v1676 = vsel %vm679, %v1673, 0.0
      %1677 = vadd.xlane.f32.xlu0 %v1676
      %v1678 = vpop.xlane.xlu0 %1677
      %v1679 = vsel %vm679, %v1675, 0.0
      %1680 = vadd.xlane.f32.xlu0 %v1679
      %v1681 = vpop.xlane.xlu0 %1680
      %v1682 = vrcp.pop %v1678
      %v1683 = vrcp.pop %v1681
      %v1684 = vmul.f32 %v1673, %v1682
      %v1685 = vmul.f32 %v1675, %v1683
      %v1686 = vpack.c.bf16 %v1684, %v1684
      %v1687 = vpack.c.bf16 %v1685, %v1685
      %v1690 = vunpack.c.l.b16 %v1686
      %v1691 = vunpack.c.l.b16 %v1687
      %v1692 = vpack.c.b16 %v1691, %v1690
      %1693 = vrot.lane.b32.xlu0 %v1641, 64
      %v1694 = vpop.permute.xlu0 %1693
      %v1697 = vsel %vm679, %v1692, 0
      %1699 = vmatpush.bf16.msra.mxu0 0
      %1700 = vmatpush.bf16.msra.mxu0 0
      %1701 = vmatpush.bf16.msra.mxu0 0
      %1702 = vmatpush.bf16.msra.mxu0 0
      %1703 = vmatpush.bf16.msra.mxu0 0
      %1704 = vmatpush.bf16.msra.mxu0 0
      %1705 = vmatpush.bf16.msra.mxu0 0
      %1706 = vmatpush.bf16.msra.mxu0 %v1694
      %1707 = vmatmul.bf16.gmra.mxu0 %v1697
      %v1708 = vpop.f32.mrf.mxu0
      %v1709 = vadd.f32 0.0, %v1708
      %v1710 = vpop.f32.mrf.mxu0
      %v1711 = vadd.f32 0.0, %v1710
      %1712 = vdwg.mxu0
      %v1713 = vpack.c.bf16 %v1709, %v1709
      %v1714 = vpack.c.bf16 %v1711, %v1711
      %1715 = vrot.lane.b32.xlu0 %v1641, 124
      %v1716 = vpop.permute.xlu0 %1715
      %1717 = vrot.lane.b32.xlu0 %v1641, 92
      %v1718 = vpop.permute.xlu0 %1717
      %v1720 = vsel %vm658, %v1716, 0
      %v1723 = vsel %vm658, %v1718, 0
      %1725 = vmatpush.bf16.xpose.msra.mxu0 0
      %1726 = vmatpush.bf16.xpose.msra.mxu0 0
      %1727 = vmatpush.bf16.xpose.msra.mxu0 0
      %1728 = vmatpush.bf16.xpose.msra.mxu0 0
      %1729 = vmatpush.bf16.xpose.msra.mxu0 0
      %1730 = vmatpush.bf16.xpose.msra.mxu0 0
      %1731 = vmatpush.bf16.xpose.msra.mxu0 0
      %1732 = vmatpush.bf16.xpose.msra.mxu0 %v1723
      %1733 = vmatmul.bf16.gmra.mxu0 %v1720
      %v1734 = vpop.f32.mrf.mxu0
      %v1735 = vadd.f32 %v611, %v1734
      %v1736 = vpop.f32.mrf.mxu0
      %v1737 = vadd.f32 %v611, %v1736
      %1738 = vdwg.mxu0
      %v1739 = vsel %vm679, %v1735, -inf
      %1740 = vmax.xlane.f32.xlu0 %v1739
      %v1741 = vpop.xlane.xlu0 %1740
      %v1742 = vsel %vm679, %v1737, -inf
      %1743 = vmax.xlane.f32.xlu0 %v1742
      %v1744 = vpop.xlane.xlu0 %1743
      %v1745 = vsub.f32 %v1735, %v1741
      %v1746 = vsub.f32 %v1737, %v1744
      %v1747 = vmul.f32 %v1745, 1.442695
      %v1748 = vpow.pop %v1747
      %v1749 = vmul.f32 %v1746, 1.442695
      %v1750 = vpow.pop %v1749
      %v1751 = vsel %vm679, %v1748, 0.0
      %1752 = vadd.xlane.f32.xlu0 %v1751
      %v1753 = vpop.xlane.xlu0 %1752
      %v1754 = vsel %vm679, %v1750, 0.0
      %1755 = vadd.xlane.f32.xlu0 %v1754
      %v1756 = vpop.xlane.xlu0 %1755
      %v1757 = vrcp.pop %v1753
      %v1758 = vrcp.pop %v1756
      %v1759 = vmul.f32 %v1748, %v1757
      %v1760 = vmul.f32 %v1750, %v1758
      %v1761 = vpack.c.bf16 %v1759, %v1759
      %v1762 = vpack.c.bf16 %v1760, %v1760
      %v1765 = vunpack.c.l.b16 %v1761
      %v1766 = vunpack.c.l.b16 %v1762
      %v1767 = vpack.c.b16 %v1766, %v1765
      %1768 = vrot.lane.b32.xlu0 %v1641, 60
      %v1769 = vpop.permute.xlu0 %1768
      %v1772 = vsel %vm679, %v1767, 0
      %1774 = vmatpush.bf16.msra.mxu0 0
      %1775 = vmatpush.bf16.msra.mxu0 0
      %1776 = vmatpush.bf16.msra.mxu0 0
      %1777 = vmatpush.bf16.msra.mxu0 0
      %1778 = vmatpush.bf16.msra.mxu0 0
      %1779 = vmatpush.bf16.msra.mxu0 0
      %1780 = vmatpush.bf16.msra.mxu0 0
      %1781 = vmatpush.bf16.msra.mxu0 %v1769
      %1782 = vmatmul.bf16.gmra.mxu0 %v1772
      %v1783 = vpop.f32.mrf.mxu0
      %v1784 = vadd.f32 0.0, %v1783
      %v1785 = vpop.f32.mrf.mxu0
      %v1786 = vadd.f32 0.0, %v1785
      %1787 = vdwg.mxu0
      %v1788 = vpack.c.bf16 %v1784, %v1784
      %v1789 = vpack.c.bf16 %v1786, %v1786
      %1790 = vrot.lane.b32.xlu0 %v1641, 120
      %v1791 = vpop.permute.xlu0 %1790
      %1792 = vrot.lane.b32.xlu0 %v1641, 88
      %v1793 = vpop.permute.xlu0 %1792
      %v1795 = vsel %vm658, %v1791, 0
      %v1798 = vsel %vm658, %v1793, 0
      %1800 = vmatpush.bf16.xpose.msra.mxu0 0
      %1801 = vmatpush.bf16.xpose.msra.mxu0 0
      %1802 = vmatpush.bf16.xpose.msra.mxu0 0
      %1803 = vmatpush.bf16.xpose.msra.mxu0 0
      %1804 = vmatpush.bf16.xpose.msra.mxu0 0
      %1805 = vmatpush.bf16.xpose.msra.mxu0 0
      %1806 = vmatpush.bf16.xpose.msra.mxu0 0
      %1807 = vmatpush.bf16.xpose.msra.mxu0 %v1798
      %1808 = vmatmul.bf16.gmra.mxu0 %v1795
      %v1809 = vpop.f32.mrf.mxu0
      %v1810 = vadd.f32 %v611, %v1809
      %v1811 = vpop.f32.mrf.mxu0
      %v1812 = vadd.f32 %v611, %v1811
      %1813 = vdwg.mxu0
      %v1814 = vsel %vm679, %v1810, -inf
      %1815 = vmax.xlane.f32.xlu0 %v1814
      %v1816 = vpop.xlane.xlu0 %1815
      %v1817 = vsel %vm679, %v1812, -inf
      %1818 = vmax.xlane.f32.xlu0 %v1817
      %v1819 = vpop.xlane.xlu0 %1818
      %v1820 = vsub.f32 %v1810, %v1816
      %v1821 = vsub.f32 %v1812, %v1819
      %v1822 = vmul.f32 %v1820, 1.442695
      %v1823 = vpow.pop %v1822
      %v1824 = vmul.f32 %v1821, 1.442695
      %v1825 = vpow.pop %v1824
      %v1826 = vsel %vm679, %v1823, 0.0
      %1827 = vadd.xlane.f32.xlu0 %v1826
      %v1828 = vpop.xlane.xlu0 %1827
      %v1829 = vsel %vm679, %v1825, 0.0
      %1830 = vadd.xlane.f32.xlu0 %v1829
      %v1831 = vpop.xlane.xlu0 %1830
      %v1832 = vrcp.pop %v1828
      %v1833 = vrcp.pop %v1831
      %v1834 = vmul.f32 %v1823, %v1832
      %v1835 = vmul.f32 %v1825, %v1833
      %v1836 = vpack.c.bf16 %v1834, %v1834
      %v1837 = vpack.c.bf16 %v1835, %v1835
      %v1840 = vunpack.c.l.b16 %v1836
      %v1841 = vunpack.c.l.b16 %v1837
      %v1842 = vpack.c.b16 %v1841, %v1840
      %1843 = vrot.lane.b32.xlu0 %v1641, 56
      %v1844 = vpop.permute.xlu0 %1843
      %v1847 = vsel %vm679, %v1842, 0
      %1849 = vmatpush.bf16.msra.mxu0 0
      %1850 = vmatpush.bf16.msra.mxu0 0
      %1851 = vmatpush.bf16.msra.mxu0 0
      %1852 = vmatpush.bf16.msra.mxu0 0
      %1853 = vmatpush.bf16.msra.mxu0 0
      %1854 = vmatpush.bf16.msra.mxu0 0
      %1855 = vmatpush.bf16.msra.mxu0 0
      %1856 = vmatpush.bf16.msra.mxu0 %v1844
      %1857 = vmatmul.bf16.gmra.mxu0 %v1847
      %v1858 = vpop.f32.mrf.mxu0
      %v1859 = vadd.f32 0.0, %v1858
      %v1860 = vpop.f32.mrf.mxu0
      %v1861 = vadd.f32 0.0, %v1860
      %1862 = vdwg.mxu0
      %v1863 = vpack.c.bf16 %v1859, %v1859
      %v1864 = vpack.c.bf16 %v1861, %v1861
      %1865 = vrot.lane.b32.xlu0 %v1641, 116
      %v1866 = vpop.permute.xlu0 %1865
      %1867 = vrot.lane.b32.xlu0 %v1641, 84
      %v1868 = vpop.permute.xlu0 %1867
      %v1870 = vsel %vm658, %v1866, 0
      %v1873 = vsel %vm658, %v1868, 0
      %1875 = vmatpush.bf16.xpose.msra.mxu0 0
      %1876 = vmatpush.bf16.xpose.msra.mxu0 0
      %1877 = vmatpush.bf16.xpose.msra.mxu0 0
      %1878 = vmatpush.bf16.xpose.msra.mxu0 0
      %1879 = vmatpush.bf16.xpose.msra.mxu0 0
      %1880 = vmatpush.bf16.xpose.msra.mxu0 0
      %1881 = vmatpush.bf16.xpose.msra.mxu0 0
      %1882 = vmatpush.bf16.xpose.msra.mxu0 %v1873
      %1883 = vmatmul.bf16.gmra.mxu0 %v1870
      %v1884 = vpop.f32.mrf.mxu0
      %v1885 = vadd.f32 %v611, %v1884
      %v1886 = vpop.f32.mrf.mxu0
      %v1887 = vadd.f32 %v611, %v1886
      %1888 = vdwg.mxu0
      %v1889 = vsel %vm679, %v1885, -inf
      %1890 = vmax.xlane.f32.xlu0 %v1889
      %v1891 = vpop.xlane.xlu0 %1890
      %v1892 = vsel %vm679, %v1887, -inf
      %1893 = vmax.xlane.f32.xlu0 %v1892
      %v1894 = vpop.xlane.xlu0 %1893
      %v1895 = vsub.f32 %v1885, %v1891
      %v1896 = vsub.f32 %v1887, %v1894
      %v1897 = vmul.f32 %v1895, 1.442695
      %v1898 = vpow.pop %v1897
      %v1899 = vmul.f32 %v1896, 1.442695
      %v1900 = vpow.pop %v1899
      %v1901 = vsel %vm679, %v1898, 0.0
      %1902 = vadd.xlane.f32.xlu0 %v1901
      %v1903 = vpop.xlane.xlu0 %1902
      %v1904 = vsel %vm679, %v1900, 0.0
      %1905 = vadd.xlane.f32.xlu0 %v1904
      %v1906 = vpop.xlane.xlu0 %1905
      %v1907 = vrcp.pop %v1903
      %v1908 = vrcp.pop %v1906
      %v1909 = vmul.f32 %v1898, %v1907
      %v1910 = vmul.f32 %v1900, %v1908
      %v1911 = vpack.c.bf16 %v1909, %v1909
      %v1912 = vpack.c.bf16 %v1910, %v1910
      %v1915 = vunpack.c.l.b16 %v1911
      %v1916 = vunpack.c.l.b16 %v1912
      %v1917 = vpack.c.b16 %v1916, %v1915
      %1918 = vrot.lane.b32.xlu0 %v1641, 52
      %v1919 = vpop.permute.xlu0 %1918
      %v1922 = vsel %vm679, %v1917, 0
      %1924 = vmatpush.bf16.msra.mxu0 0
      %1925 = vmatpush.bf16.msra.mxu0 0
      %1926 = vmatpush.bf16.msra.mxu0 0
      %1927 = vmatpush.bf16.msra.mxu0 0
      %1928 = vmatpush.bf16.msra.mxu0 0
      %1929 = vmatpush.bf16.msra.mxu0 0
      %1930 = vmatpush.bf16.msra.mxu0 0
      %1931 = vmatpush.bf16.msra.mxu0 %v1919
      %1932 = vmatmul.bf16.gmra.mxu0 %v1922
      %v1933 = vpop.f32.mrf.mxu0
      %v1934 = vadd.f32 0.0, %v1933
      %v1935 = vpop.f32.mrf.mxu0
      %v1936 = vadd.f32 0.0, %v1935
      %1937 = vdwg.mxu0
      %v1938 = vpack.c.bf16 %v1934, %v1934
      %v1939 = vpack.c.bf16 %v1936, %v1936
      %1940 = vrot.lane.b32.xlu0 %v1641, 112
      %v1941 = vpop.permute.xlu0 %1940
      %1942 = vrot.lane.b32.xlu0 %v1641, 80
      %v1943 = vpop.permute.xlu0 %1942
      %v1945 = vsel %vm658, %v1941, 0
      %v1948 = vsel %vm658, %v1943, 0
      %1950 = vmatpush.bf16.xpose.msra.mxu0 0
      %1951 = vmatpush.bf16.xpose.msra.mxu0 0
      %1952 = vmatpush.bf16.xpose.msra.mxu0 0
      %1953 = vmatpush.bf16.xpose.msra.mxu0 0
      %1954 = vmatpush.bf16.xpose.msra.mxu0 0
      %1955 = vmatpush.bf16.xpose.msra.mxu0 0
      %1956 = vmatpush.bf16.xpose.msra.mxu0 0
      %1957 = vmatpush.bf16.xpose.msra.mxu0 %v1948
      %1958 = vmatmul.bf16.gmra.mxu0 %v1945
      %v1959 = vpop.f32.mrf.mxu0
      %v1960 = vadd.f32 %v611, %v1959
      %v1961 = vpop.f32.mrf.mxu0
      %v1962 = vadd.f32 %v611, %v1961
      %1963 = vdwg.mxu0
      %v1964 = vsel %vm679, %v1960, -inf
      %1965 = vmax.xlane.f32.xlu0 %v1964
      %v1966 = vpop.xlane.xlu0 %1965
      %v1967 = vsel %vm679, %v1962, -inf
      %1968 = vmax.xlane.f32.xlu0 %v1967
      %v1969 = vpop.xlane.xlu0 %1968
      %v1970 = vsub.f32 %v1960, %v1966
      %v1971 = vsub.f32 %v1962, %v1969
      %v1972 = vmul.f32 %v1970, 1.442695
      %v1973 = vpow.pop %v1972
      %v1974 = vmul.f32 %v1971, 1.442695
      %v1975 = vpow.pop %v1974
      %v1976 = vsel %vm679, %v1973, 0.0
      %1977 = vadd.xlane.f32.xlu0 %v1976
      %v1978 = vpop.xlane.xlu0 %1977
      %v1979 = vsel %vm679, %v1975, 0.0
      %1980 = vadd.xlane.f32.xlu0 %v1979
      %v1981 = vpop.xlane.xlu0 %1980
      %v1982 = vrcp.pop %v1978
      %v1983 = vrcp.pop %v1981
      %v1984 = vmul.f32 %v1973, %v1982
      %v1985 = vmul.f32 %v1975, %v1983
      %v1986 = vpack.c.bf16 %v1984, %v1984
      %v1987 = vpack.c.bf16 %v1985, %v1985
      %v1990 = vunpack.c.l.b16 %v1986
      %v1991 = vunpack.c.l.b16 %v1987
      %v1992 = vpack.c.b16 %v1991, %v1990
      %1993 = vrot.lane.b32.xlu0 %v1641, 48
      %v1994 = vpop.permute.xlu0 %1993
      %v1997 = vsel %vm679, %v1992, 0
      %1999 = vmatpush.bf16.msra.mxu0 0
      %2000 = vmatpush.bf16.msra.mxu0 0
      %2001 = vmatpush.bf16.msra.mxu0 0
      %2002 = vmatpush.bf16.msra.mxu0 0
      %2003 = vmatpush.bf16.msra.mxu0 0
      %2004 = vmatpush.bf16.msra.mxu0 0
      %2005 = vmatpush.bf16.msra.mxu0 0
      %2006 = vmatpush.bf16.msra.mxu0 %v1994
      %2007 = vmatmul.bf16.gmra.mxu0 %v1997
      %v2008 = vpop.f32.mrf.mxu0
      %v2009 = vadd.f32 0.0, %v2008
      %v2010 = vpop.f32.mrf.mxu0
      %v2011 = vadd.f32 0.0, %v2010
      %2012 = vdwg.mxu0
      %v2013 = vpack.c.bf16 %v2009, %v2009
      %v2014 = vpack.c.bf16 %v2011, %v2011
      %2015 = vrot.lane.b32.xlu0 %v1641, 108
      %v2016 = vpop.permute.xlu0 %2015
      %2017 = vrot.lane.b32.xlu0 %v1641, 76
      %v2018 = vpop.permute.xlu0 %2017
      %v2020 = vsel %vm658, %v2016, 0
      %v2023 = vsel %vm658, %v2018, 0
      %2025 = vmatpush.bf16.xpose.msra.mxu0 0
      %2026 = vmatpush.bf16.xpose.msra.mxu0 0
      %2027 = vmatpush.bf16.xpose.msra.mxu0 0
      %2028 = vmatpush.bf16.xpose.msra.mxu0 0
      %2029 = vmatpush.bf16.xpose.msra.mxu0 0
      %2030 = vmatpush.bf16.xpose.msra.mxu0 0
      %2031 = vmatpush.bf16.xpose.msra.mxu0 0
      %2032 = vmatpush.bf16.xpose.msra.mxu0 %v2023
      %2033 = vmatmul.bf16.gmra.mxu0 %v2020
      %v2034 = vpop.f32.mrf.mxu0
      %v2035 = vadd.f32 %v611, %v2034
      %v2036 = vpop.f32.mrf.mxu0
      %v2037 = vadd.f32 %v611, %v2036
      %2038 = vdwg.mxu0
      %v2039 = vsel %vm679, %v2035, -inf
      %2040 = vmax.xlane.f32.xlu0 %v2039
      %v2041 = vpop.xlane.xlu0 %2040
      %v2042 = vsel %vm679, %v2037, -inf
      %2043 = vmax.xlane.f32.xlu0 %v2042
      %v2044 = vpop.xlane.xlu0 %2043
      %v2045 = vsub.f32 %v2035, %v2041
      %v2046 = vsub.f32 %v2037, %v2044
      %v2047 = vmul.f32 %v2045, 1.442695
      %v2048 = vpow.pop %v2047
      %v2049 = vmul.f32 %v2046, 1.442695
      %v2050 = vpow.pop %v2049
      %v2051 = vsel %vm679, %v2048, 0.0
      %2052 = vadd.xlane.f32.xlu0 %v2051
      %v2053 = vpop.xlane.xlu0 %2052
      %v2054 = vsel %vm679, %v2050, 0.0
      %2055 = vadd.xlane.f32.xlu0 %v2054
      %v2056 = vpop.xlane.xlu0 %2055
      %v2057 = vrcp.pop %v2053
      %v2058 = vrcp.pop %v2056
      %v2059 = vmul.f32 %v2048, %v2057
      %v2060 = vmul.f32 %v2050, %v2058
      %v2061 = vpack.c.bf16 %v2059, %v2059
      %v2062 = vpack.c.bf16 %v2060, %v2060
      %v2065 = vunpack.c.l.b16 %v2061
      %v2066 = vunpack.c.l.b16 %v2062
      %v2067 = vpack.c.b16 %v2066, %v2065
      %2068 = vrot.lane.b32.xlu0 %v1641, 44
      %v2069 = vpop.permute.xlu0 %2068
      %v2072 = vsel %vm679, %v2067, 0
      %2074 = vmatpush.bf16.msra.mxu0 0
      %2075 = vmatpush.bf16.msra.mxu0 0
      %2076 = vmatpush.bf16.msra.mxu0 0
      %2077 = vmatpush.bf16.msra.mxu0 0
      %2078 = vmatpush.bf16.msra.mxu0 0
      %2079 = vmatpush.bf16.msra.mxu0 0
      %2080 = vmatpush.bf16.msra.mxu0 0
      %2081 = vmatpush.bf16.msra.mxu0 %v2069
      %2082 = vmatmul.bf16.gmra.mxu0 %v2072
      %v2083 = vpop.f32.mrf.mxu0
      %v2084 = vadd.f32 0.0, %v2083
      %v2085 = vpop.f32.mrf.mxu0
      %v2086 = vadd.f32 0.0, %v2085
      %2087 = vdwg.mxu0
      %v2088 = vpack.c.bf16 %v2084, %v2084
      %v2089 = vpack.c.bf16 %v2086, %v2086
      %2090 = vrot.lane.b32.xlu0 %v1641, 104
      %v2091 = vpop.permute.xlu0 %2090
      %2092 = vrot.lane.b32.xlu0 %v1641, 72
      %v2093 = vpop.permute.xlu0 %2092
      %v2095 = vsel %vm658, %v2091, 0
      %v2098 = vsel %vm658, %v2093, 0
      %2100 = vmatpush.bf16.xpose.msra.mxu0 0
      %2101 = vmatpush.bf16.xpose.msra.mxu0 0
      %2102 = vmatpush.bf16.xpose.msra.mxu0 0
      %2103 = vmatpush.bf16.xpose.msra.mxu0 0
      %2104 = vmatpush.bf16.xpose.msra.mxu0 0
      %2105 = vmatpush.bf16.xpose.msra.mxu0 0
      %2106 = vmatpush.bf16.xpose.msra.mxu0 0
      %2107 = vmatpush.bf16.xpose.msra.mxu0 %v2098
      %2108 = vmatmul.bf16.gmra.mxu0 %v2095
      %v2109 = vpop.f32.mrf.mxu0
      %v2110 = vadd.f32 %v611, %v2109
      %v2111 = vpop.f32.mrf.mxu0
      %v2112 = vadd.f32 %v611, %v2111
      %2113 = vdwg.mxu0
      %v2114 = vsel %vm679, %v2110, -inf
      %2115 = vmax.xlane.f32.xlu0 %v2114
      %v2116 = vpop.xlane.xlu0 %2115
      %v2117 = vsel %vm679, %v2112, -inf
      %2118 = vmax.xlane.f32.xlu0 %v2117
      %v2119 = vpop.xlane.xlu0 %2118
      %v2120 = vsub.f32 %v2110, %v2116
      %v2121 = vsub.f32 %v2112, %v2119
      %v2122 = vmul.f32 %v2120, 1.442695
      %v2123 = vpow.pop %v2122
      %v2124 = vmul.f32 %v2121, 1.442695
      %v2125 = vpow.pop %v2124
      %v2126 = vsel %vm679, %v2123, 0.0
      %2127 = vadd.xlane.f32.xlu0 %v2126
      %v2128 = vpop.xlane.xlu0 %2127
      %v2129 = vsel %vm679, %v2125, 0.0
      %2130 = vadd.xlane.f32.xlu0 %v2129
      %v2131 = vpop.xlane.xlu0 %2130
      %v2132 = vrcp.pop %v2128
      %v2133 = vrcp.pop %v2131
      %v2134 = vmul.f32 %v2123, %v2132
      %v2135 = vmul.f32 %v2125, %v2133
      %v2136 = vpack.c.bf16 %v2134, %v2134
      %v2137 = vpack.c.bf16 %v2135, %v2135
      %v2140 = vunpack.c.l.b16 %v2136
      %v2141 = vunpack.c.l.b16 %v2137
      %v2142 = vpack.c.b16 %v2141, %v2140
      %2143 = vrot.lane.b32.xlu0 %v1641, 40
      %v2144 = vpop.permute.xlu0 %2143
      %v2147 = vsel %vm679, %v2142, 0
      %2149 = vmatpush.bf16.msra.mxu0 0
      %2150 = vmatpush.bf16.msra.mxu0 0
      %2151 = vmatpush.bf16.msra.mxu0 0
      %2152 = vmatpush.bf16.msra.mxu0 0
      %2153 = vmatpush.bf16.msra.mxu0 0
      %2154 = vmatpush.bf16.msra.mxu0 0
      %2155 = vmatpush.bf16.msra.mxu0 0
      %2156 = vmatpush.bf16.msra.mxu0 %v2144
      %2157 = vmatmul.bf16.gmra.mxu0 %v2147
      %v2158 = vpop.f32.mrf.mxu0
      %v2159 = vadd.f32 0.0, %v2158
      %v2160 = vpop.f32.mrf.mxu0
      %v2161 = vadd.f32 0.0, %v2160
      %2162 = vdwg.mxu0
      %v2163 = vpack.c.bf16 %v2159, %v2159
      %v2164 = vpack.c.bf16 %v2161, %v2161
      %2165 = vrot.lane.b32.xlu0 %v1641, 100
      %v2166 = vpop.permute.xlu0 %2165
      %2167 = vrot.lane.b32.xlu0 %v1641, 68
      %v2168 = vpop.permute.xlu0 %2167
      %v2170 = vsel %vm658, %v2166, 0
      %v2173 = vsel %vm658, %v2168, 0
      %2175 = vmatpush.bf16.xpose.msra.mxu0 0
      %2176 = vmatpush.bf16.xpose.msra.mxu0 0
      %2177 = vmatpush.bf16.xpose.msra.mxu0 0
      %2178 = vmatpush.bf16.xpose.msra.mxu0 0
      %2179 = vmatpush.bf16.xpose.msra.mxu0 0
      %2180 = vmatpush.bf16.xpose.msra.mxu0 0
      %2181 = vmatpush.bf16.xpose.msra.mxu0 0
      %2182 = vmatpush.bf16.xpose.msra.mxu0 %v2173
      %2183 = vmatmul.bf16.gmra.mxu0 %v2170
      %v2184 = vpop.f32.mrf.mxu0
      %v2185 = vadd.f32 %v611, %v2184
      %v2186 = vpop.f32.mrf.mxu0
      %v2187 = vadd.f32 %v611, %v2186
      %2188 = vdwg.mxu0
      %v2189 = vsel %vm679, %v2185, -inf
      %2190 = vmax.xlane.f32.xlu0 %v2189
      %v2191 = vpop.xlane.xlu0 %2190
      %v2192 = vsel %vm679, %v2187, -inf
      %2193 = vmax.xlane.f32.xlu0 %v2192
      %v2194 = vpop.xlane.xlu0 %2193
      %v2195 = vsub.f32 %v2185, %v2191
      %v2196 = vsub.f32 %v2187, %v2194
      %v2197 = vmul.f32 %v2195, 1.442695
      %v2198 = vpow.pop %v2197
      %v2199 = vmul.f32 %v2196, 1.442695
      %v2200 = vpow.pop %v2199
      %v2201 = vsel %vm679, %v2198, 0.0
      %2202 = vadd.xlane.f32.xlu0 %v2201
      %v2203 = vpop.xlane.xlu0 %2202
      %v2204 = vsel %vm679, %v2200, 0.0
      %2205 = vadd.xlane.f32.xlu0 %v2204
      %v2206 = vpop.xlane.xlu0 %2205
      %v2207 = vrcp.pop %v2203
      %v2208 = vrcp.pop %v2206
      %v2209 = vmul.f32 %v2198, %v2207
      %v2210 = vmul.f32 %v2200, %v2208
      %v2211 = vpack.c.bf16 %v2209, %v2209
      %v2212 = vpack.c.bf16 %v2210, %v2210
      %v2215 = vunpack.c.l.b16 %v2211
      %v2216 = vunpack.c.l.b16 %v2212
      %v2217 = vpack.c.b16 %v2216, %v2215
      %2218 = vrot.lane.b32.xlu0 %v1641, 36
      %v2219 = vpop.permute.xlu0 %2218
      %v2222 = vsel %vm679, %v2217, 0
      %2224 = vmatpush.bf16.msra.mxu0 0
      %2225 = vmatpush.bf16.msra.mxu0 0
      %2226 = vmatpush.bf16.msra.mxu0 0
      %2227 = vmatpush.bf16.msra.mxu0 0
      %2228 = vmatpush.bf16.msra.mxu0 0
      %2229 = vmatpush.bf16.msra.mxu0 0
      %2230 = vmatpush.bf16.msra.mxu0 0
      %2231 = vmatpush.bf16.msra.mxu0 %v2219
      %2232 = vmatmul.bf16.gmra.mxu0 %v2222
      %v2233 = vpop.f32.mrf.mxu0
      %v2234 = vadd.f32 0.0, %v2233
      %v2235 = vpop.f32.mrf.mxu0
      %v2236 = vadd.f32 0.0, %v2235
      %2237 = vdwg.mxu0
      %v2238 = vpack.c.bf16 %v2234, %v2234
      %v2239 = vpack.c.bf16 %v2236, %v2236
      %v2242 = vunpack.c.l.b16 %v1713
      %v2243 = vunpack.c.l.b16 %v1714
      %v2244 = vpack.c.b16 %v2243, %v2242
      %v2247 = vunpack.c.l.b16 %v1788
      %v2248 = vunpack.c.l.b16 %v1789
      %v2249 = vpack.c.b16 %v2248, %v2247
      %2250 = vrot.lane.b32.xlu0 %v2249, 4
      %v2251 = vpop.permute.xlu0 %2250
      %v2254 = vunpack.c.l.b16 %v1863
      %v2255 = vunpack.c.l.b16 %v1864
      %v2256 = vpack.c.b16 %v2255, %v2254
      %2257 = vrot.lane.b32.xlu0 %v2256, 8
      %v2258 = vpop.permute.xlu0 %2257
      %v2261 = vunpack.c.l.b16 %v1938
      %v2262 = vunpack.c.l.b16 %v1939
      %v2263 = vpack.c.b16 %v2262, %v2261
      %2264 = vrot.lane.b32.xlu0 %v2263, 12
      %v2265 = vpop.permute.xlu0 %2264
      %v2268 = vunpack.c.l.b16 %v2013
      %v2269 = vunpack.c.l.b16 %v2014
      %v2270 = vpack.c.b16 %v2269, %v2268
      %2271 = vrot.lane.b32.xlu0 %v2270, 16
      %v2272 = vpop.permute.xlu0 %2271
      %v2275 = vunpack.c.l.b16 %v2088
      %v2276 = vunpack.c.l.b16 %v2089
      %v2277 = vpack.c.b16 %v2276, %v2275
      %2278 = vrot.lane.b32.xlu0 %v2277, 20
      %v2279 = vpop.permute.xlu0 %2278
      %v2282 = vunpack.c.l.b16 %v2163
      %v2283 = vunpack.c.l.b16 %v2164
      %v2284 = vpack.c.b16 %v2283, %v2282
      %2285 = vrot.lane.b32.xlu0 %v2284, 24
      %v2286 = vpop.permute.xlu0 %2285
      %v2289 = vunpack.c.l.b16 %v2238
      %v2290 = vunpack.c.l.b16 %v2239
      %v2291 = vpack.c.b16 %v2290, %v2289
      %2292 = vrot.lane.b32.xlu0 %v2291, 28
      %v2293 = vpop.permute.xlu0 %2292
      %v2296 = vsel %vm658, %v2244, %v2251
      %v2298 = vsel %vm1313, %v2296, %v2258
      %v2300 = vsel %vm1316, %v2298, %v2265
      %v2302 = vsel %vm679, %v2300, %v2272
      %v2304 = vsel %vm1321, %v2302, %v2279
      %v2306 = vsel %vm1324, %v2304, %v2286
      %v2308 = vsel %vm1327, %v2306, %v2293
      %s2309 = scalar_lea.vmem %s5, 16
      %v2310 = vld [vmem:[%s2309] sm:$0xf]
      %v2311 = vld [vmem:[%s2309 + $0x4] sm:$0xf]
      %v2312 = vld [vmem:[%s2309 + $0x8] sm:$0xf]
      %v2313 = vld [vmem:[%s2309 + $0xc] sm:$0xf]
      %v2314 = vld [vmem:[%s6 + $0x1] sm:$0x1]
      %v2315 = vperm.slane %v2314, 0
      %v2320 = vunpack.c.l.b16 %v2310
      %v2321 = vunpack.c.l.b16 %v2311
      %v2322 = vunpack.c.l.b16 %v2312
      %v2323 = vunpack.c.l.b16 %v2313
      %v2324 = vpack.c.b16 %v2321, %v2320
      %v2325 = vpack.c.b16 %v2323, %v2322
      %v2328 = vsel %vm631, %v2308, 0
      %2330 = vmatpush.bf16.msra.mxu0 0
      %2331 = vmatpush.bf16.msra.mxu0 0
      %2332 = vmatpush.bf16.msra.mxu0 0
      %2333 = vmatpush.bf16.msra.mxu0 0
      %2334 = vmatpush.bf16.msra.mxu0 0
      %2335 = vmatpush.bf16.msra.mxu0 0
      %2336 = vmatpush.bf16.msra.mxu0 %v2325
      %2337 = vmatpush.bf16.msra.mxu0 %v2324
      %2338 = vmatmul.bf16.gmra.mxu0 %v2328
      %v2339 = vpop.f32.mrf.mxu0
      %v2340 = vadd.f32 %v2315, %v2339
      %v2341 = vpop.f32.mrf.mxu0
      %v2342 = vadd.f32 %v2315, %v2341
      %2343 = vdwg.mxu0
      %v2344 = vadd.f32 %v1596, %v2340
      %v2345 = vadd.f32 %v1597, %v2342
      %v2346 = vld [vmem:[%s7 + $0x1] sm:$0x1]
      %v2347 = vld [vmem:[%s8 + $0x1] sm:$0x1]
      %v2348 = vsel %vm631, %v2344, 0.0
      %2349 = vadd.xlane.f32.xlu0 %v2348
      %v2350 = vpop.xlane.xlu0 %2349
      %v2351 = vsel %vm631, %v2345, 0.0
      %2352 = vadd.xlane.f32.xlu0 %v2351
      %v2353 = vpop.xlane.xlu0 %2352
      %v2354 = vmul.f32 %v2350, %v1380
      %v2355 = vmul.f32 %v2353, %v1380
      %v2356 = vsub.f32 %v2344, %v2354
      %v2357 = vsub.f32 %v2345, %v2355
      %v2358 = vmul.f32 %v2356, %v2356
      %v2359 = vmul.f32 %v2357, %v2357
      %v2360 = vsel %vm631, %v2358, 0.0
      %2361 = vadd.xlane.f32.xlu0 %v2360
      %v2362 = vpop.xlane.xlu0 %2361
      %v2363 = vsel %vm631, %v2359, 0.0
      %2364 = vadd.xlane.f32.xlu0 %v2363
      %v2365 = vpop.xlane.xlu0 %2364
      %v2366 = vmul.f32 %v2362, %v1380
      %v2367 = vmul.f32 %v2365, %v1380
      %v2368 = vadd.f32 %v2366, 1e-05
      %v2369 = vadd.f32 %v2367, 1e-05
      %v2370 = vrsqrt.pop %v2368
      %v2371 = vmul.f32 %v2370, %v2368
      %v2372 = vmul.f32 %v2371, %v2370
      %v2373 = vmul.f32 0.5, %v2372
      %v2374 = vsub.f32 1.5, %v2373
      %v2375 = vmul.f32 %v2370, %v2374
      %vm2376 = vweird.f32 %v2368
      %vm2377 = vweird.f32 %v2370
      %vm2378 = vmor %vm2376, %vm2377
      %v2379 = vsel %vm2378, %v2370, %v2375
      %v2380 = vrsqrt.pop %v2369
      %v2381 = vmul.f32 %v2380, %v2369
      %v2382 = vmul.f32 %v2381, %v2380
      %v2383 = vmul.f32 0.5, %v2382
      %v2384 = vsub.f32 1.5, %v2383
      %v2385 = vmul.f32 %v2380, %v2384
      %vm2386 = vweird.f32 %v2369
      %vm2387 = vweird.f32 %v2380
      %vm2388 = vmor %vm2386, %vm2387
      %v2389 = vsel %vm2388, %v2380, %v2385
      %v2390 = vmul.f32 %v2356, %v2379
      %v2391 = vmul.f32 %v2357, %v2389
      %v2392 = vperm.slane %v2346, 0
      %v2393 = vmul.f32 %v2390, %v2392
      %v2394 = vmul.f32 %v2391, %v2392
      %v2395 = vperm.slane %v2347, 0
      %v2396 = vadd.f32 %v2393, %v2395
      %v2397 = vadd.f32 %v2394, %v2395
      %v2398 = vpack.c.bf16 %v2397, %v2396
      %s2399 = scalar_lea.vmem %s9, 16
      %v2400 = vld [vmem:[%s2399] sm:$0xf]
      %v2401 = vld [vmem:[%s2399 + $0x4] sm:$0xf]
      %v2402 = vld [vmem:[%s2399 + $0x8] sm:$0xf]
      %v2403 = vld [vmem:[%s2399 + $0xc] sm:$0xf]
      %v2404 = vld [vmem:[%s10 + $0x1] sm:$0x1]
      %v2405 = vperm.slane %v2404, 0
      %v2410 = vunpack.c.l.b16 %v2400
      %v2411 = vunpack.c.l.b16 %v2401
      %v2412 = vunpack.c.l.b16 %v2402
      %v2413 = vunpack.c.l.b16 %v2403
      %v2414 = vpack.c.b16 %v2411, %v2410
      %v2415 = vpack.c.b16 %v2413, %v2412
      %v2419 = vsel %vm631, %v2398, 0
      %2421 = vmatpush.bf16.msra.mxu0 0
      %2422 = vmatpush.bf16.msra.mxu0 0
      %2423 = vmatpush.bf16.msra.mxu0 0
      %2424 = vmatpush.bf16.msra.mxu0 0
      %2425 = vmatpush.bf16.msra.mxu0 0
      %2426 = vmatpush.bf16.msra.mxu0 0
      %2427 = vmatpush.bf16.msra.mxu0 %v2415
      %2428 = vmatpush.bf16.msra.mxu0 %v2414
      %2429 = vmatmul.bf16.gmra.mxu0 %v2419
      %v2430 = vpop.f32.mrf.mxu0
      %v2431 = vadd.f32 %v2405, %v2430
      %v2432 = vpop.f32.mrf.mxu0
      %v2433 = vadd.f32 %v2405, %v2432
      %2434 = vdwg.mxu0
      %v2435 = vmax.f32 %v2431, 0.0
      %v2436 = vmax.f32 %v2433, 0.0
      %v2437 = vpack.c.bf16 %v2436, %v2435
      %s2438 = scalar_lea.vmem %s11, 64
      %v2439 = vld [vmem:[%s2438] sm:$0xf]
      %v2440 = vld [vmem:[%s2438 + $0x4] sm:$0xf]
      %v2441 = vld [vmem:[%s2438 + $0x8] sm:$0xf]
      %v2442 = vld [vmem:[%s2438 + $0xc] sm:$0xf]
      %v2443 = vld [vmem:[%s2438 + $0x10] sm:$0xf]
      %v2444 = vld [vmem:[%s2438 + $0x14] sm:$0xf]
      %v2445 = vld [vmem:[%s2438 + $0x18] sm:$0xf]
      %v2446 = vld [vmem:[%s2438 + $0x1c] sm:$0xf]
      %v2447 = vld [vmem:[%s2438 + $0x20] sm:$0xf]
      %v2448 = vld [vmem:[%s2438 + $0x24] sm:$0xf]
      %v2449 = vld [vmem:[%s2438 + $0x28] sm:$0xf]
      %v2450 = vld [vmem:[%s2438 + $0x2c] sm:$0xf]
      %v2451 = vld [vmem:[%s2438 + $0x30] sm:$0xf]
      %v2452 = vld [vmem:[%s2438 + $0x34] sm:$0xf]
      %v2453 = vld [vmem:[%s2438 + $0x38] sm:$0xf]
      %v2454 = vld [vmem:[%s2438 + $0x3c] sm:$0xf]
      %v2455 = vld [vmem:[%s12 + $0x1] sm:$0x1]
      %v2456 = vperm.slane %v2455, 0
      %v2473 = vunpack.c.l.b16 %v2439
      %v2474 = vunpack.c.l.b16 %v2440
      %v2475 = vunpack.c.l.b16 %v2441
      %v2476 = vunpack.c.l.b16 %v2442
      %v2477 = vunpack.c.l.b16 %v2443
      %v2478 = vunpack.c.l.b16 %v2444
      %v2479 = vunpack.c.l.b16 %v2445
      %v2480 = vunpack.c.l.b16 %v2446
      %v2481 = vunpack.c.l.b16 %v2447
      %v2482 = vunpack.c.l.b16 %v2448
      %v2483 = vunpack.c.l.b16 %v2449
      %v2484 = vunpack.c.l.b16 %v2450
      %v2485 = vunpack.c.l.b16 %v2451
      %v2486 = vunpack.c.l.b16 %v2452
      %v2487 = vunpack.c.l.b16 %v2453
      %v2488 = vunpack.c.l.b16 %v2454
      %v2489 = vpack.c.b16 %v2474, %v2473
      %v2490 = vpack.c.b16 %v2476, %v2475
      %v2491 = vpack.c.b16 %v2478, %v2477
      %v2492 = vpack.c.b16 %v2480, %v2479
      %v2493 = vpack.c.b16 %v2482, %v2481
      %v2494 = vpack.c.b16 %v2484, %v2483
      %v2495 = vpack.c.b16 %v2486, %v2485
      %v2496 = vpack.c.b16 %v2488, %v2487
      %2505 = vmatpush.bf16.msra.mxu0 %v2496
      %2506 = vmatpush.bf16.msra.mxu0 %v2495
      %2507 = vmatpush.bf16.msra.mxu0 %v2494
      %2508 = vmatpush.bf16.msra.mxu0 %v2493
      %2509 = vmatpush.bf16.msra.mxu0 %v2492
      %2510 = vmatpush.bf16.msra.mxu0 %v2491
      %2511 = vmatpush.bf16.msra.mxu0 %v2490
      %2512 = vmatpush.bf16.msra.mxu0 %v2489
      %2513 = vmatmul.bf16.gmra.mxu0 %v2437
      %v2514 = vpop.f32.mrf.mxu0
      %v2515 = vpop.f32.mrf.mxu0
      %v2516 = vadd.f32 %v2456, %v2515
      %2517 = vdwg.mxu0
      %v2518 = vadd.f32 %v2397, %v2516
      %v2519 = vld [vmem:[%s13 + $0x1] sm:$0x1]
      %v2520 = vld [vmem:[%s14 + $0x1] sm:$0x1]
      %v2521 = vsel %vm631, %v2518, 0.0
      %2522 = vadd.xlane.f32.xlu0 %v2521
      %v2523 = vpop.xlane.xlu0 %2522
      %v2524 = vmul.f32 %v2523, %v1380
      %v2525 = vsub.f32 %v2518, %v2524
      %v2526 = vmul.f32 %v2525, %v2525
      %v2527 = vsel %vm631, %v2526, 0.0
      %2528 = vadd.xlane.f32.xlu0 %v2527
      %v2529 = vpop.xlane.xlu0 %2528
      %v2530 = vmul.f32 %v2529, %v1380
      %v2531 = vadd.f32 %v2530, 1e-05
      %v2532 = vrsqrt.pop %v2531
      %v2533 = vmul.f32 %v2532, %v2531
      %v2534 = vmul.f32 %v2533, %v2532
      %v2535 = vmul.f32 0.5, %v2534
      %v2536 = vsub.f32 1.5, %v2535
      %v2537 = vmul.f32 %v2532, %v2536
      %vm2538 = vweird.f32 %v2531
      %vm2539 = vweird.f32 %v2532
      %vm2540 = vmor %vm2538, %vm2539
      %v2541 = vsel %vm2540, %v2532, %v2537
      %v2542 = vmul.f32 %v2525, %v2541
      %v2543 = vperm.slane %v2519, 0
      %v2544 = vmul.f32 %v2542, %v2543
      %v2545 = vperm.slane %v2520, 0
      %v2546 = vadd.f32 %v2544, %v2545
      %v2547 = vpack.c.bf16 %v2546, %v2546
      %v2548 = vld [vmem:[%s15] sm:$0xf]
      %v2549 = vld [vmem:[%s15 + $0x4] sm:$0xf]
      %v2550 = vld [vmem:[%s15 + $0x8] sm:$0xf]
      %v2551 = vld [vmem:[%s15 + $0xc] sm:$0xf]
      %v2552 = vld [vmem:[%s16] sm:$0x1]
      %v2557 = vunpack.c.l.b16 %v2548
      %v2558 = vunpack.c.l.b16 %v2549
      %v2559 = vunpack.c.l.b16 %v2550
      %v2560 = vunpack.c.l.b16 %v2551
      %v2561 = vpack.c.b16 %v2558, %v2557
      %v2562 = vpack.c.b16 %v2560, %v2559
      %v2566 = vsel %vm631, %v2547, 0
      %2568 = vmatpush.bf16.msra.mxu0 0
      %2569 = vmatpush.bf16.msra.mxu0 0
      %2570 = vmatpush.bf16.msra.mxu0 0
      %2571 = vmatpush.bf16.msra.mxu0 0
      %2572 = vmatpush.bf16.msra.mxu0 0
      %2573 = vmatpush.bf16.msra.mxu0 0
      %2574 = vmatpush.bf16.msra.mxu0 %v2562
      %2575 = vmatpush.bf16.msra.mxu0 %v2561
      %2576 = vmatmul.bf16.gmra.mxu0 %v2566
      %v2577 = vpop.f32.mrf.mxu0
      %v2578 = vadd.f32 %v2552, %v2577
      %v2579 = vpop.f32.mrf.mxu0
      %2580 = vdwg.mxu0
      %v2581 = vmax.f32 %v2578, 0.0
      %v2582 = vld [vmem:[%s17] sm:$0x1]
      %v2583 = vmul.f32 %v2581, %v2582
      %vm2584 = vcmask 253952
      %v2585 = vsel %vm2584, %v2583, 0.0
      %2586 = vadd.xlane.f32.xlu0 %v2585
      %v2587 = vpop.xlane.xlu0 %2586
      %v2588 = vld [vmem:[#allocation2] sm:$0x1]
      %v2589 = vadd.f32 %v2587, %v2588
      %v2590 = vxor.u32 %v2589, 2147483648
      %v2591 = vmul.f32 %v2590, 1.442695
      %v2592 = vpow.pop %v2591
      %v2593 = vadd.f32 %v2592, 1.0
      %v2594 = vrcp.pop %v2593
      %v2595 = vmul.f32 %v2593, %v2594
      %v2596 = vsub.f32 1.0, %v2595
      %v2597 = vmul.f32 %v2594, %v2596
      %v2598 = vadd.f32 %v2594, %v2597
      %vm2599 = vweird.f32 %v2593
      %vm2600 = vweird.f32 %v2594
      %vm2601 = vmor %vm2599, %vm2600
      %v2602 = vsel %vm2601, %v2594, %v2598
      %v2603 = vand.u32 2147483647, %v2593
      %vm2604 = vcmp.eq.f32.partialorder %v2603, 8.507059e+37
      %v2605 = vand.u32 %v2593, 2147483648
      %v2606 = vor.u32 1.1754944e-38, %v2605
      %v2607 = vsel %vm2604, %v2606, %v2602
      %v2608 = vmul.f32 1.0, %v2607
      %vm2609 = vcmask 0
      %2610 = vst.msk [vmem:[%s597] sm:$0x1] %vm2609, %v2608
      %p2611 = scmp.lt.s32.totalorder %s32, 1
      %s2612 = scalar_select %p2611, %s32, 1
      %s2613 = scalar_lea.vmem %s19, %s2612
      // Predicated region
      $region97: #{tpu_custom_call.1} parent=95 // pred_check
        %p2614 = pneg %p454
      $region98: #{tpu_custom_call.1} parent=95 // pred_check_branch
        %2616 = sbr.rel (%p2614) target = $region100
      $region99: #{tpu_custom_call.1} parent=95 // pred_region
        _
      $region100: #{tpu_custom_call.1} parent=95 // pred_fallthru
        _
    $region96: #{tpu_custom_call.1} parent=5 // pred_fallthru
      _
    %p2617 = scmp.le.s32.totalorder 2, %s27
    // Predicated region
    $region101: #{tpu_custom_call.1} parent=5 // pred_check
      %p2618 = pneg %p2617
    $region102: #{tpu_custom_call.1} parent=5 // pred_check_branch
      %2620 = sbr.rel (%p2618) target = $region104
    $region103: #{tpu_custom_call.1} parent=5 // pred_region
      %s2621 = ssub.s32 %s27, 2
      // Predicated region
      $region105: #{tpu_custom_call.1} parent=103 // pred_check
        %p2622 = pneg %p460
      $region106: #{tpu_custom_call.1} parent=103 // pred_check_branch
        %2624 = sbr.rel (%p2622) target = $region108
      $region107: #{tpu_custom_call.1} parent=103 // pred_region
        %p2625 = scmp.lt.s32.totalorder %s33, 1
        %s2626 = scalar_select %p2625, %s33, 1
        %s2627 = scalar_lea.vmem %s19, %s2626
      $region108: #{tpu_custom_call.1} parent=103 // pred_fallthru
        _
    $region104: #{tpu_custom_call.1} parent=5 // pred_fallthru
      _
  $region6: #{tpu_custom_call.1} parent=0 // loop_footer
    %s31 = sadd.s32 1, %s27
  $region7: #{tpu_custom_call.1} parent=0 // loop_footer_branch
    %26 = sbr.rel target = $region3
  $region8: #{tpu_custom_call.1} parent=0 // loop_exit
    _

// kernel: tpu_custom_call.1
$region0: #{tpu_custom_call.1}
  #allocation0 [shape = 'u32[]', space=smem, size = 0x4, offset = 0x4, fixed_abs, tag = 'smem constant byte address 0x4 - core index']
  #allocation1 [shape = 'u32[72,128]{1,0:T(1,128)}', space=vmem, size = 0x9000, scoped, tag = 'internal scratch']
  #allocation2 [shape = 'f32[1,1]{1,0:T(1,128)S(1)}', space=vmem, size = 0x200, scoped, tag = 'scoped memory for tpu_custom_call.1']
  %s0 = inlined_call_operand.vmem [shape: f32[2,8,32], index: 0, kind: input, shape index: {}]
  %s1 = inlined_call_operand.vmem [shape: f32[16,32], index: 1, kind: input, shape index: {}]
  %s2 = inlined_call_operand.vmem [shape: f32[1,32], index: 2, kind: input, shape index: {}]
  %s3 = inlined_call_operand.vmem [shape: bf16[2,32,96], index: 3, kind: input, shape index: {}]
  %s4 = inlined_call_operand.vmem [shape: f32[2,96], index: 4, kind: input, shape index: {}]
  %s5 = inlined_call_operand.vmem [shape: bf16[2,32,32], index: 5, kind: input, shape index: {}]
  %s6 = inlined_call_operand.vmem [shape: f32[2,32], index: 6, kind: input, shape index: {}]
  %s7 = inlined_call_operand.vmem [shape: f32[2,32], index: 7, kind: input, shape index: {}]
  %s8 = inlined_call_operand.vmem [shape: f32[2,32], index: 8, kind: input, shape index: {}]
  %s9 = inlined_call_operand.vmem [shape: bf16[2,32,128], index: 9, kind: input, shape index: {}]
  %s10 = inlined_call_operand.vmem [shape: f32[2,128], index: 10, kind: input, shape index: {}]
  %s11 = inlined_call_operand.vmem [shape: bf16[2,128,32], index: 11, kind: input, shape index: {}]
  %s12 = inlined_call_operand.vmem [shape: f32[2,32], index: 12, kind: input, shape index: {}]
  %s13 = inlined_call_operand.vmem [shape: f32[2,32], index: 13, kind: input, shape index: {}]
  %s14 = inlined_call_operand.vmem [shape: f32[2,32], index: 14, kind: input, shape index: {}]
  %s15 = inlined_call_operand.vmem [shape: bf16[32,32], index: 15, kind: input, shape index: {}]
  %s16 = inlined_call_operand.vmem [shape: f32[1,32], index: 16, kind: input, shape index: {}]
  %s17 = inlined_call_operand.vmem [shape: f32[1,32], index: 17, kind: input, shape index: {}]
  %s18 = inlined_call_operand.<no memory space> [shape: f32[1,1], index: 18, kind: input, shape index: {}]
  %s19 = inlined_call_operand.vmem [shape: f32[2,1,1], index: 19, kind: output, shape index: {}]
  %s20 = sld [smem:[#allocation0]]
  $region109: #{tpu_custom_call.1} parent=0
    _
  %s22 = ssub.s32 1, %s20
  %s23 = scalar_select 0, %s22, %s20
  %v24 = vstv %s18
  %25 = vst [vmem:[#allocation2] sm:$0x1] %v24
  loop: start=0, step=1, limit=4
  $region2: #{tpu_custom_call.1} parent=0 // loop_pre_header
    _
  $region3: #{tpu_custom_call.1} parent=0 // loop_header
    %s27 = sphi 0, %s31
    %p28 = scmp.ge.s32.totalorder %s27, 4
    %s37 = sphi 0, %s39
    %s40 = sphi 0, %s37
    %s41 = sphi 0, %s40
    %s57 = sphi 0, %s41
    %s61 = sphi 0, %s61
    %s63 = sphi 0, %s61
    %s64 = sphi 0, %s63
    %s78 = sphi 0, %s64
    %s82 = sphi 0, %s82
    %s84 = sphi 0, %s82
    %s85 = sphi 0, %s84
    %s99 = sphi 0, %s85
    %s103 = sphi 0, %s103
    %s105 = sphi 0, %s103
    %s106 = sphi 0, %s105
    %s120 = sphi 0, %s106
    %s124 = sphi 0, %s124
    %s126 = sphi 0, %s124
    %s127 = sphi 0, %s126
    %s141 = sphi 0, %s127
    %s145 = sphi 0, %s145
    %s147 = sphi 0, %s145
    %s148 = sphi 0, %s147
    %s162 = sphi 0, %s148
    %s166 = sphi 0, %s166
    %s168 = sphi 0, %s166
    %s169 = sphi 0, %s168
    %s183 = sphi 0, %s169
    %s187 = sphi 0, %s187
    %s189 = sphi 0, %s187
    %s190 = sphi 0, %s189
    %s204 = sphi 0, %s190
    %s208 = sphi 0, %s208
    %s210 = sphi 0, %s208
    %s211 = sphi 0, %s210
    %s225 = sphi 0, %s211
    %s229 = sphi 0, %s229
    %s231 = sphi 0, %s229
    %s232 = sphi 0, %s231
    %s246 = sphi 0, %s232
    %s250 = sphi 0, %s250
    %s252 = sphi 0, %s250
    %s253 = sphi 0, %s252
    %s267 = sphi 0, %s253
    %s271 = sphi 0, %s271
    %s273 = sphi 0, %s271
    %s274 = sphi 0, %s273
    %s288 = sphi 0, %s274
    %s292 = sphi 0, %s292
    %s294 = sphi 0, %s292
    %s295 = sphi 0, %s294
    %s309 = sphi 0, %s295
    %s313 = sphi 0, %s313
    %s315 = sphi 0, %s313
    %s316 = sphi 0, %s315
    %s330 = sphi 0, %s316
    %s334 = sphi 0, %s334
    %s336 = sphi 0, %s334
    %s337 = sphi 0, %s336
    %s351 = sphi 0, %s337
    %s355 = sphi 0, %s355
    %s357 = sphi 0, %s355
    %s358 = sphi 0, %s357
    %s372 = sphi 0, %s358
    %s376 = sphi 0, %s376
    %s378 = sphi 0, %s376
    %s379 = sphi 0, %s378
    %s393 = sphi 0, %s379
    %s397 = sphi 0, %s397
    %s399 = sphi 0, %s397
    %s400 = sphi 0, %s399
    %s414 = sphi 0, %s400
    %s418 = sphi 0, %s418
    %s420 = sphi 0, %s418
    %s421 = sphi 0, %s420
    %s435 = sphi 0, %s421
    %s441 = sphi 0, %s443
    %s444 = sphi 0, %s441
    %s445 = sphi 0, %s444
    %s461 = sphi 0, %s445
  $region4: #{tpu_custom_call.1} parent=0 // loop_header_branch
    %30 = sbr.rel (%p28) target = $region8
  $region5: #{tpu_custom_call.1} parent=0 // loop_body
    %s32 = ssub.s32 %s27, 1
    %s33 = ssub.s32 %s27, 2
    %s34 = sadd.s32 %s27, 1
    %s35 = ssub.s32 %s27, %s34
    %p36 = scmp.eq.s32.totalorder %s35, 0
    %s38 = sadd.s32 %s37, 1
    %s39 = scalar_select %p36, %s37, %s38
    %p42 = pneg %p36
    %p43 = scmp.eq.s32.totalorder %s27, 1
    %p44 = por %p42, %p43
    %p45 = scmp.ne.s32.totalorder %s37, %s40
    %p46 = scmp.eq.s32.totalorder %s27, 0
    %p47 = por %p45, %p46
    %p48 = scmp.ne.s32.totalorder %s37, %s40
    %p49 = scmp.eq.s32.totalorder %s32, 1
    %p50 = por %p48, %p49
    %p51 = scmp.ne.s32.totalorder %s40, %s41
    %p52 = scmp.eq.s32.totalorder %s32, 0
    %p53 = por %p51, %p52
    %p54 = scmp.ne.s32.totalorder %s40, %s41
    %p55 = scmp.eq.s32.totalorder %s33, 1
    %p56 = por %p54, %p55
    %p58 = scmp.ne.s32.totalorder %s41, %s57
    %p59 = scmp.eq.s32.totalorder %s33, 0
    %p60 = por %p58, %p59
    %s62 = sadd.s32 %s61, 1
    %p65 = scmp.eq.s32.totalorder %s27, 1
    %p66 = scmp.ne.s32.totalorder %s61, %s63
    %p67 = scmp.eq.s32.totalorder %s27, 0
    %p68 = por %p66, %p67
    %p69 = scmp.ne.s32.totalorder %s61, %s63
    %p70 = scmp.eq.s32.totalorder %s32, 1
    %p71 = por %p69, %p70
    %p72 = scmp.ne.s32.totalorder %s63, %s64
    %p73 = scmp.eq.s32.totalorder %s32, 0
    %p74 = por %p72, %p73
    %p75 = scmp.ne.s32.totalorder %s63, %s64
    %p76 = scmp.eq.s32.totalorder %s33, 1
    %p77 = por %p75, %p76
    %p79 = scmp.ne.s32.totalorder %s64, %s78
    %p80 = scmp.eq.s32.totalorder %s33, 0
    %p81 = por %p79, %p80
    %s83 = sadd.s32 %s82, 1
    %p86 = scmp.eq.s32.totalorder %s27, 1
    %p87 = scmp.ne.s32.totalorder %s82, %s84
    %p88 = scmp.eq.s32.totalorder %s27, 0
    %p89 = por %p87, %p88
    %p90 = scmp.ne.s32.totalorder %s82, %s84
    %p91 = scmp.eq.s32.totalorder %s32, 1
    %p92 = por %p90, %p91
    %p93 = scmp.ne.s32.totalorder %s84, %s85
    %p94 = scmp.eq.s32.totalorder %s32, 0
    %p95 = por %p93, %p94
    %p96 = scmp.ne.s32.totalorder %s84, %s85
    %p97 = scmp.eq.s32.totalorder %s33, 1
    %p98 = por %p96, %p97
    %p100 = scmp.ne.s32.totalorder %s85, %s99
    %p101 = scmp.eq.s32.totalorder %s33, 0
    %p102 = por %p100, %p101
    %s104 = sadd.s32 %s103, 1
    %p107 = scmp.eq.s32.totalorder %s27, 1
    %p108 = scmp.ne.s32.totalorder %s103, %s105
    %p109 = scmp.eq.s32.totalorder %s27, 0
    %p110 = por %p108, %p109
    %p111 = scmp.ne.s32.totalorder %s103, %s105
    %p112 = scmp.eq.s32.totalorder %s32, 1
    %p113 = por %p111, %p112
    %p114 = scmp.ne.s32.totalorder %s105, %s106
    %p115 = scmp.eq.s32.totalorder %s32, 0
    %p116 = por %p114, %p115
    %p117 = scmp.ne.s32.totalorder %s105, %s106
    %p118 = scmp.eq.s32.totalorder %s33, 1
    %p119 = por %p117, %p118
    %p121 = scmp.ne.s32.totalorder %s106, %s120
    %p122 = scmp.eq.s32.totalorder %s33, 0
    %p123 = por %p121, %p122
    %s125 = sadd.s32 %s124, 1
    %p128 = scmp.eq.s32.totalorder %s27, 1
    %p129 = scmp.ne.s32.totalorder %s124, %s126
    %p130 = scmp.eq.s32.totalorder %s27, 0
    %p131 = por %p129, %p130
    %p132 = scmp.ne.s32.totalorder %s124, %s126
    %p133 = scmp.eq.s32.totalorder %s32, 1
    %p134 = por %p132, %p133
    %p135 = scmp.ne.s32.totalorder %s126, %s127
    %p136 = scmp.eq.s32.totalorder %s32, 0
    %p137 = por %p135, %p136
    %p138 = scmp.ne.s32.totalorder %s126, %s127
    %p139 = scmp.eq.s32.totalorder %s33, 1
    %p140 = por %p138, %p139
    %p142 = scmp.ne.s32.totalorder %s127, %s141
    %p143 = scmp.eq.s32.totalorder %s33, 0
    %p144 = por %p142, %p143
    %s146 = sadd.s32 %s145, 1
    %p149 = scmp.eq.s32.totalorder %s27, 1
    %p150 = scmp.ne.s32.totalorder %s145, %s147
    %p151 = scmp.eq.s32.totalorder %s27, 0
    %p152 = por %p150, %p151
    %p153 = scmp.ne.s32.totalorder %s145, %s147
    %p154 = scmp.eq.s32.totalorder %s32, 1
    %p155 = por %p153, %p154
    %p156 = scmp.ne.s32.totalorder %s147, %s148
    %p157 = scmp.eq.s32.totalorder %s32, 0
    %p158 = por %p156, %p157
    %p159 = scmp.ne.s32.totalorder %s147, %s148
    %p160 = scmp.eq.s32.totalorder %s33, 1
    %p161 = por %p159, %p160
    %p163 = scmp.ne.s32.totalorder %s148, %s162
    %p164 = scmp.eq.s32.totalorder %s33, 0
    %p165 = por %p163, %p164
    %s167 = sadd.s32 %s166, 1
    %p170 = scmp.eq.s32.totalorder %s27, 1
    %p171 = scmp.ne.s32.totalorder %s166, %s168
    %p172 = scmp.eq.s32.totalorder %s27, 0
    %p173 = por %p171, %p172
    %p174 = scmp.ne.s32.totalorder %s166, %s168
    %p175 = scmp.eq.s32.totalorder %s32, 1
    %p176 = por %p174, %p175
    %p177 = scmp.ne.s32.totalorder %s168, %s169
    %p178 = scmp.eq.s32.totalorder %s32, 0
    %p179 = por %p177, %p178
    %p180 = scmp.ne.s32.totalorder %s168, %s169
    %p181 = scmp.eq.s32.totalorder %s33, 1
    %p182 = por %p180, %p181
    %p184 = scmp.ne.s32.totalorder %s169, %s183
    %p185 = scmp.eq.s32.totalorder %s33, 0
    %p186 = por %p184, %p185
    %s188 = sadd.s32 %s187, 1
    %p191 = scmp.eq.s32.totalorder %s27, 1
    %p192 = scmp.ne.s32.totalorder %s187, %s189
    %p193 = scmp.eq.s32.totalorder %s27, 0
    %p194 = por %p192, %p193
    %p195 = scmp.ne.s32.totalorder %s187, %s189
    %p196 = scmp.eq.s32.totalorder %s32, 1
    %p197 = por %p195, %p196
    %p198 = scmp.ne.s32.totalorder %s189, %s190
    %p199 = scmp.eq.s32.totalorder %s32, 0
    %p200 = por %p198, %p199
    %p201 = scmp.ne.s32.totalorder %s189, %s190
    %p202 = scmp.eq.s32.totalorder %s33, 1
    %p203 = por %p201, %p202
    %p205 = scmp.ne.s32.totalorder %s190, %s204
    %p206 = scmp.eq.s32.totalorder %s33, 0
    %p207 = por %p205, %p206
    %s209 = sadd.s32 %s208, 1
    %p212 = scmp.eq.s32.totalorder %s27, 1
    %p213 = scmp.ne.s32.totalorder %s208, %s210
    %p214 = scmp.eq.s32.totalorder %s27, 0
    %p215 = por %p213, %p214
    %p216 = scmp.ne.s32.totalorder %s208, %s210
    %p217 = scmp.eq.s32.totalorder %s32, 1
    %p218 = por %p216, %p217
    %p219 = scmp.ne.s32.totalorder %s210, %s211
    %p220 = scmp.eq.s32.totalorder %s32, 0
    %p221 = por %p219, %p220
    %p222 = scmp.ne.s32.totalorder %s210, %s211
    %p223 = scmp.eq.s32.totalorder %s33, 1
    %p224 = por %p222, %p223
    %p226 = scmp.ne.s32.totalorder %s211, %s225
    %p227 = scmp.eq.s32.totalorder %s33, 0
    %p228 = por %p226, %p227
    %s230 = sadd.s32 %s229, 1
    %p233 = scmp.eq.s32.totalorder %s27, 1
    %p234 = scmp.ne.s32.totalorder %s229, %s231
    %p235 = scmp.eq.s32.totalorder %s27, 0
    %p236 = por %p234, %p235
    %p237 = scmp.ne.s32.totalorder %s229, %s231
    %p238 = scmp.eq.s32.totalorder %s32, 1
    %p239 = por %p237, %p238
    %p240 = scmp.ne.s32.totalorder %s231, %s232
    %p241 = scmp.eq.s32.totalorder %s32, 0
    %p242 = por %p240, %p241
    %p243 = scmp.ne.s32.totalorder %s231, %s232
    %p244 = scmp.eq.s32.totalorder %s33, 1
    %p245 = por %p243, %p244
    %p247 = scmp.ne.s32.totalorder %s232, %s246
    %p248 = scmp.eq.s32.totalorder %s33, 0
    %p249 = por %p247, %p248
    %s251 = sadd.s32 %s250, 1
    %p254 = scmp.eq.s32.totalorder %s27, 1
    %p255 = scmp.ne.s32.totalorder %s250, %s252
    %p256 = scmp.eq.s32.totalorder %s27, 0
    %p257 = por %p255, %p256
    %p258 = scmp.ne.s32.totalorder %s250, %s252
    %p259 = scmp.eq.s32.totalorder %s32, 1
    %p260 = por %p258, %p259
    %p261 = scmp.ne.s32.totalorder %s252, %s253
    %p262 = scmp.eq.s32.totalorder %s32, 0
    %p263 = por %p261, %p262
    %p264 = scmp.ne.s32.totalorder %s252, %s253
    %p265 = scmp.eq.s32.totalorder %s33, 1
    %p266 = por %p264, %p265
    %p268 = scmp.ne.s32.totalorder %s253, %s267
    %p269 = scmp.eq.s32.totalorder %s33, 0
    %p270 = por %p268, %p269
    %s272 = sadd.s32 %s271, 1
    %p275 = scmp.eq.s32.totalorder %s27, 1
    %p276 = scmp.ne.s32.totalorder %s271, %s273
    %p277 = scmp.eq.s32.totalorder %s27, 0
    %p278 = por %p276, %p277
    %p279 = scmp.ne.s32.totalorder %s271, %s273
    %p280 = scmp.eq.s32.totalorder %s32, 1
    %p281 = por %p279, %p280
    %p282 = scmp.ne.s32.totalorder %s273, %s274
    %p283 = scmp.eq.s32.totalorder %s32, 0
    %p284 = por %p282, %p283
    %p285 = scmp.ne.s32.totalorder %s273, %s274
    %p286 = scmp.eq.s32.totalorder %s33, 1
    %p287 = por %p285, %p286
    %p289 = scmp.ne.s32.totalorder %s274, %s288
    %p290 = scmp.eq.s32.totalorder %s33, 0
    %p291 = por %p289, %p290
    %s293 = sadd.s32 %s292, 1
    %p296 = scmp.eq.s32.totalorder %s27, 1
    %p297 = scmp.ne.s32.totalorder %s292, %s294
    %p298 = scmp.eq.s32.totalorder %s27, 0
    %p299 = por %p297, %p298
    %p300 = scmp.ne.s32.totalorder %s292, %s294
    %p301 = scmp.eq.s32.totalorder %s32, 1
    %p302 = por %p300, %p301
    %p303 = scmp.ne.s32.totalorder %s294, %s295
    %p304 = scmp.eq.s32.totalorder %s32, 0
    %p305 = por %p303, %p304
    %p306 = scmp.ne.s32.totalorder %s294, %s295
    %p307 = scmp.eq.s32.totalorder %s33, 1
    %p308 = por %p306, %p307
    %p310 = scmp.ne.s32.totalorder %s295, %s309
    %p311 = scmp.eq.s32.totalorder %s33, 0
    %p312 = por %p310, %p311
    %s314 = sadd.s32 %s313, 1
    %p317 = scmp.eq.s32.totalorder %s27, 1
    %p318 = scmp.ne.s32.totalorder %s313, %s315
    %p319 = scmp.eq.s32.totalorder %s27, 0
    %p320 = por %p318, %p319
    %p321 = scmp.ne.s32.totalorder %s313, %s315
    %p322 = scmp.eq.s32.totalorder %s32, 1
    %p323 = por %p321, %p322
    %p324 = scmp.ne.s32.totalorder %s315, %s316
    %p325 = scmp.eq.s32.totalorder %s32, 0
    %p326 = por %p324, %p325
    %p327 = scmp.ne.s32.totalorder %s315, %s316
    %p328 = scmp.eq.s32.totalorder %s33, 1
    %p329 = por %p327, %p328
    %p331 = scmp.ne.s32.totalorder %s316, %s330
    %p332 = scmp.eq.s32.totalorder %s33, 0
    %p333 = por %p331, %p332
    %s335 = sadd.s32 %s334, 1
    %p338 = scmp.eq.s32.totalorder %s27, 1
    %p339 = scmp.ne.s32.totalorder %s334, %s336
    %p340 = scmp.eq.s32.totalorder %s27, 0
    %p341 = por %p339, %p340
    %p342 = scmp.ne.s32.totalorder %s334, %s336
    %p343 = scmp.eq.s32.totalorder %s32, 1
    %p344 = por %p342, %p343
    %p345 = scmp.ne.s32.totalorder %s336, %s337
    %p346 = scmp.eq.s32.totalorder %s32, 0
    %p347 = por %p345, %p346
    %p348 = scmp.ne.s32.totalorder %s336, %s337
    %p349 = scmp.eq.s32.totalorder %s33, 1
    %p350 = por %p348, %p349
    %p352 = scmp.ne.s32.totalorder %s337, %s351
    %p353 = scmp.eq.s32.totalorder %s33, 0
    %p354 = por %p352, %p353
    %s356 = sadd.s32 %s355, 1
    %p359 = scmp.eq.s32.totalorder %s27, 1
    %p360 = scmp.ne.s32.totalorder %s355, %s357
    %p361 = scmp.eq.s32.totalorder %s27, 0
    %p362 = por %p360, %p361
    %p363 = scmp.ne.s32.totalorder %s355, %s357
    %p364 = scmp.eq.s32.totalorder %s32, 1
    %p365 = por %p363, %p364
    %p366 = scmp.ne.s32.totalorder %s357, %s358
    %p367 = scmp.eq.s32.totalorder %s32, 0
    %p368 = por %p366, %p367
    %p369 = scmp.ne.s32.totalorder %s357, %s358
    %p370 = scmp.eq.s32.totalorder %s33, 1
    %p371 = por %p369, %p370
    %p373 = scmp.ne.s32.totalorder %s358, %s372
    %p374 = scmp.eq.s32.totalorder %s33, 0
    %p375 = por %p373, %p374
    %s377 = sadd.s32 %s376, 1
    %p380 = scmp.eq.s32.totalorder %s27, 1
    %p381 = scmp.ne.s32.totalorder %s376, %s378
    %p382 = scmp.eq.s32.totalorder %s27, 0
    %p383 = por %p381, %p382
    %p384 = scmp.ne.s32.totalorder %s376, %s378
    %p385 = scmp.eq.s32.totalorder %s32, 1
    %p386 = por %p384, %p385
    %p387 = scmp.ne.s32.totalorder %s378, %s379
    %p388 = scmp.eq.s32.totalorder %s32, 0
    %p389 = por %p387, %p388
    %p390 = scmp.ne.s32.totalorder %s378, %s379
    %p391 = scmp.eq.s32.totalorder %s33, 1
    %p392 = por %p390, %p391
    %p394 = scmp.ne.s32.totalorder %s379, %s393
    %p395 = scmp.eq.s32.totalorder %s33, 0
    %p396 = por %p394, %p395
    %s398 = sadd.s32 %s397, 1
    %p401 = scmp.eq.s32.totalorder %s27, 1
    %p402 = scmp.ne.s32.totalorder %s397, %s399
    %p403 = scmp.eq.s32.totalorder %s27, 0
    %p404 = por %p402, %p403
    %p405 = scmp.ne.s32.totalorder %s397, %s399
    %p406 = scmp.eq.s32.totalorder %s32, 1
    %p407 = por %p405, %p406
    %p408 = scmp.ne.s32.totalorder %s399, %s400
    %p409 = scmp.eq.s32.totalorder %s32, 0
    %p410 = por %p408, %p409
    %p411 = scmp.ne.s32.totalorder %s399, %s400
    %p412 = scmp.eq.s32.totalorder %s33, 1
    %p413 = por %p411, %p412
    %p415 = scmp.ne.s32.totalorder %s400, %s414
    %p416 = scmp.eq.s32.totalorder %s33, 0
    %p417 = por %p415, %p416
    %s419 = sadd.s32 %s418, 1
    %p422 = scmp.eq.s32.totalorder %s27, 1
    %p423 = scmp.ne.s32.totalorder %s418, %s420
    %p424 = scmp.eq.s32.totalorder %s27, 0
    %p425 = por %p423, %p424
    %p426 = scmp.ne.s32.totalorder %s418, %s420
    %p427 = scmp.eq.s32.totalorder %s32, 1
    %p428 = por %p426, %p427
    %p429 = scmp.ne.s32.totalorder %s420, %s421
    %p430 = scmp.eq.s32.totalorder %s32, 0
    %p431 = por %p429, %p430
    %p432 = scmp.ne.s32.totalorder %s420, %s421
    %p433 = scmp.eq.s32.totalorder %s33, 1
    %p434 = por %p432, %p433
    %p436 = scmp.ne.s32.totalorder %s421, %s435
    %p437 = scmp.eq.s32.totalorder %s33, 0
    %p438 = por %p436, %p437
    %s439 = ssub.s32 %s27, %s34
    %p440 = scmp.eq.s32.totalorder %s439, 0
    %s442 = sadd.s32 %s441, 1
    %s443 = scalar_select %p440, %s441, %s442
    %p446 = pneg %p440
    %p447 = scmp.eq.s32.totalorder %s27, 1
    %p448 = por %p446, %p447
    %p449 = scmp.ne.s32.totalorder %s441, %s444
    %p450 = scmp.eq.s32.totalorder %s27, 0
    %p451 = por %p449, %p450
    %p452 = scmp.ne.s32.totalorder %s441, %s444
    %p453 = scmp.eq.s32.totalorder %s32, 1
    %p454 = por %p452, %p453
    %p455 = scmp.ne.s32.totalorder %s444, %s445
    %p456 = scmp.eq.s32.totalorder %s32, 0
    %p457 = por %p455, %p456
    %p458 = scmp.ne.s32.totalorder %s444, %s445
    %p459 = scmp.eq.s32.totalorder %s33, 1
    %p460 = por %p458, %p459
    %p462 = scmp.ne.s32.totalorder %s445, %s461
    %p463 = scmp.eq.s32.totalorder %s33, 0
    %p464 = por %p462, %p463
    %p465 = scmp.le.s32.totalorder 1, %s27
    %p466 = scmp.lt.s32.totalorder %s27, 3
    %p467 = pnand %p465, %p466
    %p468 = pneg %p467
    // Predicated region
    $region9: #{tpu_custom_call.1} parent=5 // pred_check
      _
    $region10: #{tpu_custom_call.1} parent=5 // pred_check_branch
      %470 = sbr.rel (%p467) target = $region12
    $region11: #{tpu_custom_call.1} parent=5 // pred_region
      %s471 = ssub.s32 %s27, 1
      // Predicated region
      $region13: #{tpu_custom_call.1} parent=11 // pred_check
        %p472 = pneg %p74
      $region14: #{tpu_custom_call.1} parent=11 // pred_check_branch
        %474 = sbr.rel (%p472) target = $region16
      $region15: #{tpu_custom_call.1} parent=11 // pred_region
        _
      $region16: #{tpu_custom_call.1} parent=11 // pred_fallthru
        _
      // Predicated region
      $region17: #{tpu_custom_call.1} parent=11 // pred_check
        %p475 = pneg %p95
      $region18: #{tpu_custom_call.1} parent=11 // pred_check_branch
        %477 = sbr.rel (%p475) target = $region20
      $region19: #{tpu_custom_call.1} parent=11 // pred_region
        _
      $region20: #{tpu_custom_call.1} parent=11 // pred_fallthru
        _
      // Predicated region
      $region21: #{tpu_custom_call.1} parent=11 // pred_check
        %p478 = pneg %p116
      $region22: #{tpu_custom_call.1} parent=11 // pred_check_branch
        %480 = sbr.rel (%p478) target = $region24
      $region23: #{tpu_custom_call.1} parent=11 // pred_region
        _
      $region24: #{tpu_custom_call.1} parent=11 // pred_fallthru
        _
      // Predicated region
      $region25: #{tpu_custom_call.1} parent=11 // pred_check
        %p481 = pneg %p137
      $region26: #{tpu_custom_call.1} parent=11 // pred_check_branch
        %483 = sbr.rel (%p481) target = $region28
      $region27: #{tpu_custom_call.1} parent=11 // pred_region
        _
      $region28: #{tpu_custom_call.1} parent=11 // pred_fallthru
        _
      // Predicated region
      $region29: #{tpu_custom_call.1} parent=11 // pred_check
        %p484 = pneg %p158
      $region30: #{tpu_custom_call.1} parent=11 // pred_check_branch
        %486 = sbr.rel (%p484) target = $region32
      $region31: #{tpu_custom_call.1} parent=11 // pred_region
        _
      $region32: #{tpu_custom_call.1} parent=11 // pred_fallthru
        _
      // Predicated region
      $region33: #{tpu_custom_call.1} parent=11 // pred_check
        %p487 = pneg %p179
      $region34: #{tpu_custom_call.1} parent=11 // pred_check_branch
        %489 = sbr.rel (%p487) target = $region36
      $region35: #{tpu_custom_call.1} parent=11 // pred_region
        _
      $region36: #{tpu_custom_call.1} parent=11 // pred_fallthru
        _
      // Predicated region
      $region37: #{tpu_custom_call.1} parent=11 // pred_check
        %p490 = pneg %p200
      $region38: #{tpu_custom_call.1} parent=11 // pred_check_branch
        %492 = sbr.rel (%p490) target = $region40
      $region39: #{tpu_custom_call.1} parent=11 // pred_region
        _
      $region40: #{tpu_custom_call.1} parent=11 // pred_fallthru
        _
      // Predicated region
      $region41: #{tpu_custom_call.1} parent=11 // pred_check
        %p493 = pneg %p221
      $region42: #{tpu_custom_call.1} parent=11 // pred_check_branch
        %495 = sbr.rel (%p493) target = $region44
      $region43: #{tpu_custom_call.1} parent=11 // pred_region
        _
      $region44: #{tpu_custom_call.1} parent=11 // pred_fallthru
        _
      // Predicated region
      $region45: #{tpu_custom_call.1} parent=11 // pred_check
        %p496 = pneg %p242
      $region46: #{tpu_custom_call.1} parent=11 // pred_check_branch
        %498 = sbr.rel (%p496) target = $region48
      $region47: #{tpu_custom_call.1} parent=11 // pred_region
        _
      $region48: #{tpu_custom_call.1} parent=11 // pred_fallthru
        _
      // Predicated region
      $region49: #{tpu_custom_call.1} parent=11 // pred_check
        %p499 = pneg %p263
      $region50: #{tpu_custom_call.1} parent=11 // pred_check_branch
        %501 = sbr.rel (%p499) target = $region52
      $region51: #{tpu_custom_call.1} parent=11 // pred_region
        _
      $region52: #{tpu_custom_call.1} parent=11 // pred_fallthru
        _
      // Predicated region
      $region53: #{tpu_custom_call.1} parent=11 // pred_check
        %p502 = pneg %p284
      $region54: #{tpu_custom_call.1} parent=11 // pred_check_branch
        %504 = sbr.rel (%p502) target = $region56
      $region55: #{tpu_custom_call.1} parent=11 // pred_region
        _
      $region56: #{tpu_custom_call.1} parent=11 // pred_fallthru
        _
      // Predicated region
      $region57: #{tpu_custom_call.1} parent=11 // pred_check
        %p505 = pneg %p305
      $region58: #{tpu_custom_call.1} parent=11 // pred_check_branch
        %507 = sbr.rel (%p505) target = $region60
      $region59: #{tpu_custom_call.1} parent=11 // pred_region
        _
      $region60: #{tpu_custom_call.1} parent=11 // pred_fallthru
        _
      // Predicated region
      $region61: #{tpu_custom_call.1} parent=11 // pred_check
        %p508 = pneg %p326
      $region62: #{tpu_custom_call.1} parent=11 // pred_check_branch
        %510 = sbr.rel (%p508) target = $region64
      $region63: #{tpu_custom_call.1} parent=11 // pred_region
        _
      $region64: #{tpu_custom_call.1} parent=11 // pred_fallthru
        _
      // Predicated region
      $region65: #{tpu_custom_call.1} parent=11 // pred_check
        %p511 = pneg %p347
      $region66: #{tpu_custom_call.1} parent=11 // pred_check_branch
        %513 = sbr.rel (%p511) target = $region68
      $region67: #{tpu_custom_call.1} parent=11 // pred_region
        _
      $region68: #{tpu_custom_call.1} parent=11 // pred_fallthru
        _
      // Predicated region
      $region69: #{tpu_custom_call.1} parent=11 // pred_check
        %p514 = pneg %p368
      $region70: #{tpu_custom_call.1} parent=11 // pred_check_branch
        %516 = sbr.rel (%p514) target = $region72
      $region71: #{tpu_custom_call.1} parent=11 // pred_region
        _
      $region72: #{tpu_custom_call.1} parent=11 // pred_fallthru
        _
      // Predicated region
      $region73: #{tpu_custom_call.1} parent=11 // pred_check
        %p517 = pneg %p389
      $region74: #{tpu_custom_call.1} parent=11 // pred_check_branch
        %519 = sbr.rel (%p517) target = $region76
      $region75: #{tpu_custom_call.1} parent=11 // pred_region
        _
      $region76: #{tpu_custom_call.1} parent=11 // pred_fallthru
        _
      // Predicated region
      $region77: #{tpu_custom_call.1} parent=11 // pred_check
        %p520 = pneg %p410
      $region78: #{tpu_custom_call.1} parent=11 // pred_check_branch
        %522 = sbr.rel (%p520) target = $region80
      $region79: #{tpu_custom_call.1} parent=11 // pred_region
        _
      $region80: #{tpu_custom_call.1} parent=11 // pred_fallthru
        _
      // Predicated region
      $region81: #{tpu_custom_call.1} parent=11 // pred_check
        %p523 = pneg %p431
      $region82: #{tpu_custom_call.1} parent=11 // pred_check_branch
        %525 = sbr.rel (%p523) target = $region84
      $region83: #{tpu_custom_call.1} parent=11 // pred_region
        _
      $region84: #{tpu_custom_call.1} parent=11 // pred_fallthru
        _
    $region12: #{tpu_custom_call.1} parent=5 // pred_fallthru
      _
    %p526 = scmp.lt.s32.totalorder %s27, 2
    // Predicated region
    $region85: #{tpu_custom_call.1} parent=5 // pred_check
      %p527 = pneg %p526
    $region86: #{tpu_custom_call.1} parent=5 // pred_check_branch
      %529 = sbr.rel (%p527) target = $region88
    $region87: #{tpu_custom_call.1} parent=5 // pred_region
      // Predicated region
      $region89: #{tpu_custom_call.1} parent=87 // pred_check
        %p530 = pneg %p47
      $region90: #{tpu_custom_call.1} parent=87 // pred_check_branch
        %532 = sbr.rel (%p530) target = $region92
      $region91: #{tpu_custom_call.1} parent=87 // pred_region
        %p533 = scmp.lt.s32.totalorder %s27, 1
        %s534 = scalar_select %p533, %s27, 1
        %s535 = smul.addr %s534, 8
        %s536 = scalar_lea.vmem %s0, %s535
      $region92: #{tpu_custom_call.1} parent=87 // pred_fallthru
        _
    $region88: #{tpu_custom_call.1} parent=5 // pred_fallthru
      _
    %p537 = scmp.le.s32.totalorder 1, %s27
    %p538 = scmp.lt.s32.totalorder %s27, 3
    %p539 = pnand %p537, %p538
    %p540 = pneg %p539
    // Predicated region
    $region93: #{tpu_custom_call.1} parent=5 // pred_check
      _
    $region94: #{tpu_custom_call.1} parent=5 // pred_check_branch
      %542 = sbr.rel (%p539) target = $region96
    $region95: #{tpu_custom_call.1} parent=5 // pred_region
      %s543 = ssub.s32 %s27, 1
      %p544 = scmp.lt.s32.totalorder %s32, 1
      %s545 = scalar_select %p544, %s32, 1
      %s546 = smul.addr %s545, 8
      %s547 = scalar_lea.vmem %s0, %s546
      %p548 = pneg %p53
      %p549 = pneg %p50
      %p550 = pneg %p74
      %p551 = pneg %p71
      %p552 = pneg %p95
      %p553 = pneg %p92
      %p554 = pneg %p116
      %p555 = pneg %p113
      %p556 = pneg %p137
      %p557 = pneg %p134
      %p558 = pneg %p158
      %p559 = pneg %p155
      %p560 = pneg %p179
      %p561 = pneg %p176
      %p562 = pneg %p200
      %p563 = pneg %p197
      %p564 = pneg %p221
      %p565 = pneg %p218
      %p566 = pneg %p242
      %p567 = pneg %p239
      %p568 = pneg %p263
      %p569 = pneg %p260
      %p570 = pneg %p284
      %p571 = pneg %p281
      %p572 = pneg %p305
      %p573 = pneg %p302
      %p574 = pneg %p326
      %p575 = pneg %p323
      %p576 = pneg %p347
      %p577 = pneg %p344
      %p578 = pneg %p368
      %p579 = pneg %p365
      %p580 = pneg %p389
      %p581 = pneg %p386
      %p582 = pneg %p410
      %p583 = pneg %p407
      %p584 = pneg %p431
      %p585 = pneg %p428
      %p586 = pneg %p457
      %p587 = pneg %p454
      %p588 = scmp.lt.s32.totalorder %s32, 1
      %s589 = scalar_select %p588, %s32, 1
      %s590 = scalar_lea.vmem %s19, %s589
      %p591 = scmp.lt.s32.totalorder %s32, 1
      %s592 = scalar_select %p591, %s32, 1
      %s593 = smul.addr %s592, 8
      %s594 = scalar_lea.vmem %s0, %s593
      %p595 = scmp.lt.s32.totalorder %s32, 1
      %s596 = scalar_select %p595, %s32, 1
      %s597 = scalar_lea.vmem %s19, %s596
      %v599 = vld [vmem:[%s1] sm:$0xff]
      %v600 = vld [vmem:[%s1 + $0x8] sm:$0xff]
      %v601 = vld [vmem:[%s594] sm:$0xff]
      %v602 = vadd.f32 %v601, %v599
      %v603 = vld [vmem:[%s2] sm:$0x1]
      %v604 = vadd.f32 %v603, %v600
      %v606 = vperm.slane %v604, 0
      %v608 = vlaneseq
      %v609 = vand.u32 %v608, 127
      %vm610 = vcmp.lt.s32.totalorder %v609, 9
      %v611 = vsel %vm610, 0.0, -1e+30
      %v612 = vpack.c.bf16 %v606, %v602
      %v613 = vld [vmem:[%s3] sm:$0xf]
      %v614 = vld [vmem:[%s3 + $0x4] sm:$0xf]
      %v615 = vld [vmem:[%s3 + $0x8] sm:$0xf]
      %v616 = vld [vmem:[%s3 + $0xc] sm:$0xf]
      %v617 = vld [vmem:[%s4] sm:$0x1]
      %v618 = vperm.slane %v617, 0
      %v623 = vunpack.c.l.b16 %v613
      %v624 = vunpack.c.l.b16 %v614
      %v625 = vunpack.c.l.b16 %v615
      %v626 = vunpack.c.l.b16 %v616
      %v627 = vpack.c.b16 %v624, %v623
      %v628 = vpack.c.b16 %v626, %v625
      %vm631 = vcmask 261120
      %v633 = vsel %vm631, %v612, 0
      %635 = vmatpush.bf16.msra.mxu0 0
      %636 = vmatpush.bf16.msra.mxu0 0
      %637 = vmatpush.bf16.msra.mxu0 0
      %638 = vmatpush.bf16.msra.mxu0 0
      %639 = vmatpush.bf16.msra.mxu0 0
      %640 = vmatpush.bf16.msra.mxu0 0
      %641 = vmatpush.bf16.msra.mxu0 %v628
      %642 = vmatpush.bf16.msra.mxu0 %v627
      %643 = vmatmul.bf16.gmra.mxu0 %v633
      %v644 = vpop.f32.mrf.mxu0
      %v645 = vadd.f32 %v618, %v644
      %v646 = vpop.f32.mrf.mxu0
      %v647 = vadd.f32 %v618, %v646
      %648 = vdwg.mxu0
      %v649 = vpack.c.bf16 %v645, %v645
      %v650 = vpack.c.bf16 %v647, %v647
      %v653 = vunpack.c.l.b16 %v649
      %v654 = vunpack.c.l.b16 %v650
      %v655 = vpack.c.b16 %v654, %v653
      %656 = vrot.lane.b32.xlu0 %v655, 96
      %v657 = vpop.permute.xlu0 %656
      %vm658 = vcmask 31744
      %v660 = vsel %vm658, %v655, 0
      %v663 = vsel %vm658, %v657, 0
      %665 = vmatpush.bf16.xpose.msra.mxu0 0
      %666 = vmatpush.bf16.xpose.msra.mxu0 0
      %667 = vmatpush.bf16.xpose.msra.mxu0 0
      %668 = vmatpush.bf16.xpose.msra.mxu0 0
      %669 = vmatpush.bf16.xpose.msra.mxu0 0
      %670 = vmatpush.bf16.xpose.msra.mxu0 0
      %671 = vmatpush.bf16.xpose.msra.mxu0 0
      %672 = vmatpush.bf16.xpose.msra.mxu0 %v663
      %673 = vmatmul.bf16.gmra.mxu0 %v660
      %v674 = vpop.f32.mrf.mxu0
      %v675 = vadd.f32 %v611, %v674
      %v676 = vpop.f32.mrf.mxu0
      %v677 = vadd.f32 %v611, %v676
      %678 = vdwg.mxu0
      %vm679 = vcmask 130048
      %v680 = vsel %vm679, %v675, -inf
      %681 = vmax.xlane.f32.xlu0 %v680
      %v682 = vpop.xlane.xlu0 %681
      %v683 = vsel %vm679, %v677, -inf
      %684 = vmax.xlane.f32.xlu0 %v683
      %v685 = vpop.xlane.xlu0 %684
      %v686 = vsub.f32 %v675, %v682
      %v687 = vsub.f32 %v677, %v685
      %v688 = vmul.f32 %v686, 1.442695
      %v689 = vpow.pop %v688
      %v690 = vmul.f32 %v687, 1.442695
      %v691 = vpow.pop %v690
      %v692 = vsel %vm679, %v689, 0.0
      %693 = vadd.xlane.f32.xlu0 %v692
      %v694 = vpop.xlane.xlu0 %693
      %v695 = vsel %vm679, %v691, 0.0
      %696 = vadd.xlane.f32.xlu0 %v695
      %v697 = vpop.xlane.xlu0 %696
      %v698 = vrcp.pop %v694
      %v699 = vrcp.pop %v697
      %v700 = vmul.f32 %v689, %v698
      %v701 = vmul.f32 %v691, %v699
      %v702 = vpack.c.bf16 %v700, %v700
      %v703 = vpack.c.bf16 %v701, %v701
      %v706 = vunpack.c.l.b16 %v702
      %v707 = vunpack.c.l.b16 %v703
      %v708 = vpack.c.b16 %v707, %v706
      %709 = vrot.lane.b32.xlu0 %v655, 64
      %v710 = vpop.permute.xlu0 %709
      %v713 = vsel %vm679, %v708, 0
      %715 = vmatpush.bf16.msra.mxu0 0
      %716 = vmatpush.bf16.msra.mxu0 0
      %717 = vmatpush.bf16.msra.mxu0 0
      %718 = vmatpush.bf16.msra.mxu0 0
      %719 = vmatpush.bf16.msra.mxu0 0
      %720 = vmatpush.bf16.msra.mxu0 0
      %721 = vmatpush.bf16.msra.mxu0 0
      %722 = vmatpush.bf16.msra.mxu0 %v710
      %723 = vmatmul.bf16.gmra.mxu0 %v713
      %v724 = vpop.f32.mrf.mxu0
      %v725 = vadd.f32 0.0, %v724
      %v726 = vpop.f32.mrf.mxu0
      %v727 = vadd.f32 0.0, %v726
      %728 = vdwg.mxu0
      %v729 = vpack.c.bf16 %v725, %v725
      %v730 = vpack.c.bf16 %v727, %v727
      %731 = vrot.lane.b32.xlu0 %v655, 124
      %v732 = vpop.permute.xlu0 %731
      %733 = vrot.lane.b32.xlu0 %v655, 92
      %v734 = vpop.permute.xlu0 %733
      %v736 = vsel %vm658, %v732, 0
      %v739 = vsel %vm658, %v734, 0
      %741 = vmatpush.bf16.xpose.msra.mxu0 0
      %742 = vmatpush.bf16.xpose.msra.mxu0 0
      %743 = vmatpush.bf16.xpose.msra.mxu0 0
      %744 = vmatpush.bf16.xpose.msra.mxu0 0
      %745 = vmatpush.bf16.xpose.msra.mxu0 0
      %746 = vmatpush.bf16.xpose.msra.mxu0 0
      %747 = vmatpush.bf16.xpose.msra.mxu0 0
      %748 = vmatpush.bf16.xpose.msra.mxu0 %v739
      %749 = vmatmul.bf16.gmra.mxu0 %v736
      %v750 = vpop.f32.mrf.mxu0
      %v751 = vadd.f32 %v611, %v750
      %v752 = vpop.f32.mrf.mxu0
      %v753 = vadd.f32 %v611, %v752
      %754 = vdwg.mxu0
      %v755 = vsel %vm679, %v751, -inf
      %756 = vmax.xlane.f32.xlu0 %v755
      %v757 = vpop.xlane.xlu0 %756
      %v758 = vsel %vm679, %v753, -inf
      %759 = vmax.xlane.f32.xlu0 %v758
      %v760 = vpop.xlane.xlu0 %759
      %v761 = vsub.f32 %v751, %v757
      %v762 = vsub.f32 %v753, %v760
      %v763 = vmul.f32 %v761, 1.442695
      %v764 = vpow.pop %v763
      %v765 = vmul.f32 %v762, 1.442695
      %v766 = vpow.pop %v765
      %v767 = vsel %vm679, %v764, 0.0
      %768 = vadd.xlane.f32.xlu0 %v767
      %v769 = vpop.xlane.xlu0 %768
      %v770 = vsel %vm679, %v766, 0.0
      %771 = vadd.xlane.f32.xlu0 %v770
      %v772 = vpop.xlane.xlu0 %771
      %v773 = vrcp.pop %v769
      %v774 = vrcp.pop %v772
      %v775 = vmul.f32 %v764, %v773
      %v776 = vmul.f32 %v766, %v774
      %v777 = vpack.c.bf16 %v775, %v775
      %v778 = vpack.c.bf16 %v776, %v776
      %v781 = vunpack.c.l.b16 %v777
      %v782 = vunpack.c.l.b16 %v778
      %v783 = vpack.c.b16 %v782, %v781
      %784 = vrot.lane.b32.xlu0 %v655, 60
      %v785 = vpop.permute.xlu0 %784
      %v788 = vsel %vm679, %v783, 0
      %790 = vmatpush.bf16.msra.mxu0 0
      %791 = vmatpush.bf16.msra.mxu0 0
      %792 = vmatpush.bf16.msra.mxu0 0
      %793 = vmatpush.bf16.msra.mxu0 0
      %794 = vmatpush.bf16.msra.mxu0 0
      %795 = vmatpush.bf16.msra.mxu0 0
      %796 = vmatpush.bf16.msra.mxu0 0
      %797 = vmatpush.bf16.msra.mxu0 %v785
      %798 = vmatmul.bf16.gmra.mxu0 %v788
      %v799 = vpop.f32.mrf.mxu0
      %v800 = vadd.f32 0.0, %v799
      %v801 = vpop.f32.mrf.mxu0
      %v802 = vadd.f32 0.0, %v801
      %803 = vdwg.mxu0
      %v804 = vpack.c.bf16 %v800, %v800
      %v805 = vpack.c.bf16 %v802, %v802
      %806 = vrot.lane.b32.xlu0 %v655, 120
      %v807 = vpop.permute.xlu0 %806
      %808 = vrot.lane.b32.xlu0 %v655, 88
      %v809 = vpop.permute.xlu0 %808
      %v811 = vsel %vm658, %v807, 0
      %v814 = vsel %vm658, %v809, 0
      %816 = vmatpush.bf16.xpose.msra.mxu0 0
      %817 = vmatpush.bf16.xpose.msra.mxu0 0
      %818 = vmatpush.bf16.xpose.msra.mxu0 0
      %819 = vmatpush.bf16.xpose.msra.mxu0 0
      %820 = vmatpush.bf16.xpose.msra.mxu0 0
      %821 = vmatpush.bf16.xpose.msra.mxu0 0
      %822 = vmatpush.bf16.xpose.msra.mxu0 0
      %823 = vmatpush.bf16.xpose.msra.mxu0 %v814
      %824 = vmatmul.bf16.gmra.mxu0 %v811
      %v825 = vpop.f32.mrf.mxu0
      %v826 = vadd.f32 %v611, %v825
      %v827 = vpop.f32.mrf.mxu0
      %v828 = vadd.f32 %v611, %v827
      %829 = vdwg.mxu0
      %v830 = vsel %vm679, %v826, -inf
      %831 = vmax.xlane.f32.xlu0 %v830
      %v832 = vpop.xlane.xlu0 %831
      %v833 = vsel %vm679, %v828, -inf
      %834 = vmax.xlane.f32.xlu0 %v833
      %v835 = vpop.xlane.xlu0 %834
      %v836 = vsub.f32 %v826, %v832
      %v837 = vsub.f32 %v828, %v835
      %v838 = vmul.f32 %v836, 1.442695
      %v839 = vpow.pop %v838
      %v840 = vmul.f32 %v837, 1.442695
      %v841 = vpow.pop %v840
      %v842 = vsel %vm679, %v839, 0.0
      %843 = vadd.xlane.f32.xlu0 %v842
      %v844 = vpop.xlane.xlu0 %843
      %v845 = vsel %vm679, %v841, 0.0
      %846 = vadd.xlane.f32.xlu0 %v845
      %v847 = vpop.xlane.xlu0 %846
      %v848 = vrcp.pop %v844
      %v849 = vrcp.pop %v847
      %v850 = vmul.f32 %v839, %v848
      %v851 = vmul.f32 %v841, %v849
      %v852 = vpack.c.bf16 %v850, %v850
      %v853 = vpack.c.bf16 %v851, %v851
      %v856 = vunpack.c.l.b16 %v852
      %v857 = vunpack.c.l.b16 %v853
      %v858 = vpack.c.b16 %v857, %v856
      %859 = vrot.lane.b32.xlu0 %v655, 56
      %v860 = vpop.permute.xlu0 %859
      %v863 = vsel %vm679, %v858, 0
      %865 = vmatpush.bf16.msra.mxu0 0
      %866 = vmatpush.bf16.msra.mxu0 0
      %867 = vmatpush.bf16.msra.mxu0 0
      %868 = vmatpush.bf16.msra.mxu0 0
      %869 = vmatpush.bf16.msra.mxu0 0
      %870 = vmatpush.bf16.msra.mxu0 0
      %871 = vmatpush.bf16.msra.mxu0 0
      %872 = vmatpush.bf16.msra.mxu0 %v860
      %873 = vmatmul.bf16.gmra.mxu0 %v863
      %v874 = vpop.f32.mrf.mxu0
      %v875 = vadd.f32 0.0, %v874
      %v876 = vpop.f32.mrf.mxu0
      %v877 = vadd.f32 0.0, %v876
      %878 = vdwg.mxu0
      %v879 = vpack.c.bf16 %v875, %v875
      %v880 = vpack.c.bf16 %v877, %v877
      %881 = vrot.lane.b32.xlu0 %v655, 116
      %v882 = vpop.permute.xlu0 %881
      %883 = vrot.lane.b32.xlu0 %v655, 84
      %v884 = vpop.permute.xlu0 %883
      %v886 = vsel %vm658, %v882, 0
      %v889 = vsel %vm658, %v884, 0
      %891 = vmatpush.bf16.xpose.msra.mxu0 0
      %892 = vmatpush.bf16.xpose.msra.mxu0 0
      %893 = vmatpush.bf16.xpose.msra.mxu0 0
      %894 = vmatpush.bf16.xpose.msra.mxu0 0
      %895 = vmatpush.bf16.xpose.msra.mxu0 0
      %896 = vmatpush.bf16.xpose.msra.mxu0 0
      %897 = vmatpush.bf16.xpose.msra.mxu0 0
      %898 = vmatpush.bf16.xpose.msra.mxu0 %v889
      %899 = vmatmul.bf16.gmra.mxu0 %v886
      %v900 = vpop.f32.mrf.mxu0
      %v901 = vadd.f32 %v611, %v900
      %v902 = vpop.f32.mrf.mxu0
      %v903 = vadd.f32 %v611, %v902
      %904 = vdwg.mxu0
      %v905 = vsel %vm679, %v901, -inf
      %906 = vmax.xlane.f32.xlu0 %v905
      %v907 = vpop.xlane.xlu0 %906
      %v908 = vsel %vm679, %v903, -inf
      %909 = vmax.xlane.f32.xlu0 %v908
      %v910 = vpop.xlane.xlu0 %909
      %v911 = vsub.f32 %v901, %v907
      %v912 = vsub.f32 %v903, %v910
      %v913 = vmul.f32 %v911, 1.442695
      %v914 = vpow.pop %v913
      %v915 = vmul.f32 %v912, 1.442695
      %v916 = vpow.pop %v915
      %v917 = vsel %vm679, %v914, 0.0
      %918 = vadd.xlane.f32.xlu0 %v917
      %v919 = vpop.xlane.xlu0 %918
      %v920 = vsel %vm679, %v916, 0.0
      %921 = vadd.xlane.f32.xlu0 %v920
      %v922 = vpop.xlane.xlu0 %921
      %v923 = vrcp.pop %v919
      %v924 = vrcp.pop %v922
      %v925 = vmul.f32 %v914, %v923
      %v926 = vmul.f32 %v916, %v924
      %v927 = vpack.c.bf16 %v925, %v925
      %v928 = vpack.c.bf16 %v926, %v926
      %v931 = vunpack.c.l.b16 %v927
      %v932 = vunpack.c.l.b16 %v928
      %v933 = vpack.c.b16 %v932, %v931
      %934 = vrot.lane.b32.xlu0 %v655, 52
      %v935 = vpop.permute.xlu0 %934
      %v938 = vsel %vm679, %v933, 0
      %940 = vmatpush.bf16.msra.mxu0 0
      %941 = vmatpush.bf16.msra.mxu0 0
      %942 = vmatpush.bf16.msra.mxu0 0
      %943 = vmatpush.bf16.msra.mxu0 0
      %944 = vmatpush.bf16.msra.mxu0 0
      %945 = vmatpush.bf16.msra.mxu0 0
      %946 = vmatpush.bf16.msra.mxu0 0
      %947 = vmatpush.bf16.msra.mxu0 %v935
      %948 = vmatmul.bf16.gmra.mxu0 %v938
      %v949 = vpop.f32.mrf.mxu0
      %v950 = vadd.f32 0.0, %v949
      %v951 = vpop.f32.mrf.mxu0
      %v952 = vadd.f32 0.0, %v951
      %953 = vdwg.mxu0
      %v954 = vpack.c.bf16 %v950, %v950
      %v955 = vpack.c.bf16 %v952, %v952
      %956 = vrot.lane.b32.xlu0 %v655, 112
      %v957 = vpop.permute.xlu0 %956
      %958 = vrot.lane.b32.xlu0 %v655, 80
      %v959 = vpop.permute.xlu0 %958
      %v961 = vsel %vm658, %v957, 0
      %v964 = vsel %vm658, %v959, 0
      %966 = vmatpush.bf16.xpose.msra.mxu0 0
      %967 = vmatpush.bf16.xpose.msra.mxu0 0
      %968 = vmatpush.bf16.xpose.msra.mxu0 0
      %969 = vmatpush.bf16.xpose.msra.mxu0 0
      %970 = vmatpush.bf16.xpose.msra.mxu0 0
      %971 = vmatpush.bf16.xpose.msra.mxu0 0
      %972 = vmatpush.bf16.xpose.msra.mxu0 0
      %973 = vmatpush.bf16.xpose.msra.mxu0 %v964
      %974 = vmatmul.bf16.gmra.mxu0 %v961
      %v975 = vpop.f32.mrf.mxu0
      %v976 = vadd.f32 %v611, %v975
      %v977 = vpop.f32.mrf.mxu0
      %v978 = vadd.f32 %v611, %v977
      %979 = vdwg.mxu0
      %v980 = vsel %vm679, %v976, -inf
      %981 = vmax.xlane.f32.xlu0 %v980
      %v982 = vpop.xlane.xlu0 %981
      %v983 = vsel %vm679, %v978, -inf
      %984 = vmax.xlane.f32.xlu0 %v983
      %v985 = vpop.xlane.xlu0 %984
      %v986 = vsub.f32 %v976, %v982
      %v987 = vsub.f32 %v978, %v985
      %v988 = vmul.f32 %v986, 1.442695
      %v989 = vpow.pop %v988
      %v990 = vmul.f32 %v987, 1.442695
      %v991 = vpow.pop %v990
      %v992 = vsel %vm679, %v989, 0.0
      %993 = vadd.xlane.f32.xlu0 %v992
      %v994 = vpop.xlane.xlu0 %993
      %v995 = vsel %vm679, %v991, 0.0
      %996 = vadd.xlane.f32.xlu0 %v995
      %v997 = vpop.xlane.xlu0 %996
      %v998 = vrcp.pop %v994
      %v999 = vrcp.pop %v997
      %v1000 = vmul.f32 %v989, %v998
      %v1001 = vmul.f32 %v991, %v999
      %v1002 = vpack.c.bf16 %v1000, %v1000
      %v1003 = vpack.c.bf16 %v1001, %v1001
      %v1006 = vunpack.c.l.b16 %v1002
      %v1007 = vunpack.c.l.b16 %v1003
      %v1008 = vpack.c.b16 %v1007, %v1006
      %1009 = vrot.lane.b32.xlu0 %v655, 48
      %v1010 = vpop.permute.xlu0 %1009
      %v1013 = vsel %vm679, %v1008, 0
      %1015 = vmatpush.bf16.msra.mxu0 0
      %1016 = vmatpush.bf16.msra.mxu0 0
      %1017 = vmatpush.bf16.msra.mxu0 0
      %1018 = vmatpush.bf16.msra.mxu0 0
      %1019 = vmatpush.bf16.msra.mxu0 0
      %1020 = vmatpush.bf16.msra.mxu0 0
      %1021 = vmatpush.bf16.msra.mxu0 0
      %1022 = vmatpush.bf16.msra.mxu0 %v1010
      %1023 = vmatmul.bf16.gmra.mxu0 %v1013
      %v1024 = vpop.f32.mrf.mxu0
      %v1025 = vadd.f32 0.0, %v1024
      %v1026 = vpop.f32.mrf.mxu0
      %v1027 = vadd.f32 0.0, %v1026
      %1028 = vdwg.mxu0
      %v1029 = vpack.c.bf16 %v1025, %v1025
      %v1030 = vpack.c.bf16 %v1027, %v1027
      %1031 = vrot.lane.b32.xlu0 %v655, 108
      %v1032 = vpop.permute.xlu0 %1031
      %1033 = vrot.lane.b32.xlu0 %v655, 76
      %v1034 = vpop.permute.xlu0 %1033
      %v1036 = vsel %vm658, %v1032, 0
      %v1039 = vsel %vm658, %v1034, 0
      %1041 = vmatpush.bf16.xpose.msra.mxu0 0
      %1042 = vmatpush.bf16.xpose.msra.mxu0 0
      %1043 = vmatpush.bf16.xpose.msra.mxu0 0
      %1044 = vmatpush.bf16.xpose.msra.mxu0 0
      %1045 = vmatpush.bf16.xpose.msra.mxu0 0
      %1046 = vmatpush.bf16.xpose.msra.mxu0 0
      %1047 = vmatpush.bf16.xpose.msra.mxu0 0
      %1048 = vmatpush.bf16.xpose.msra.mxu0 %v1039
      %1049 = vmatmul.bf16.gmra.mxu0 %v1036
      %v1050 = vpop.f32.mrf.mxu0
      %v1051 = vadd.f32 %v611, %v1050
      %v1052 = vpop.f32.mrf.mxu0
      %v1053 = vadd.f32 %v611, %v1052
      %1054 = vdwg.mxu0
      %v1055 = vsel %vm679, %v1051, -inf
      %1056 = vmax.xlane.f32.xlu0 %v1055
      %v1057 = vpop.xlane.xlu0 %1056
      %v1058 = vsel %vm679, %v1053, -inf
      %1059 = vmax.xlane.f32.xlu0 %v1058
      %v1060 = vpop.xlane.xlu0 %1059
      %v1061 = vsub.f32 %v1051, %v1057
      %v1062 = vsub.f32 %v1053, %v1060
      %v1063 = vmul.f32 %v1061, 1.442695
      %v1064 = vpow.pop %v1063
      %v1065 = vmul.f32 %v1062, 1.442695
      %v1066 = vpow.pop %v1065
      %v1067 = vsel %vm679, %v1064, 0.0
      %1068 = vadd.xlane.f32.xlu0 %v1067
      %v1069 = vpop.xlane.xlu0 %1068
      %v1070 = vsel %vm679, %v1066, 0.0
      %1071 = vadd.xlane.f32.xlu0 %v1070
      %v1072 = vpop.xlane.xlu0 %1071
      %v1073 = vrcp.pop %v1069
      %v1074 = vrcp.pop %v1072
      %v1075 = vmul.f32 %v1064, %v1073
      %v1076 = vmul.f32 %v1066, %v1074
      %v1077 = vpack.c.bf16 %v1075, %v1075
      %v1078 = vpack.c.bf16 %v1076, %v1076
      %v1081 = vunpack.c.l.b16 %v1077
      %v1082 = vunpack.c.l.b16 %v1078
      %v1083 = vpack.c.b16 %v1082, %v1081
      %1084 = vrot.lane.b32.xlu0 %v655, 44
      %v1085 = vpop.permute.xlu0 %1084
      %v1088 = vsel %vm679, %v1083, 0
      %1090 = vmatpush.bf16.msra.mxu0 0
      %1091 = vmatpush.bf16.msra.mxu0 0
      %1092 = vmatpush.bf16.msra.mxu0 0
      %1093 = vmatpush.bf16.msra.mxu0 0
      %1094 = vmatpush.bf16.msra.mxu0 0
      %1095 = vmatpush.bf16.msra.mxu0 0
      %1096 = vmatpush.bf16.msra.mxu0 0
      %1097 = vmatpush.bf16.msra.mxu0 %v1085
      %1098 = vmatmul.bf16.gmra.mxu0 %v1088
      %v1099 = vpop.f32.mrf.mxu0
      %v1100 = vadd.f32 0.0, %v1099
      %v1101 = vpop.f32.mrf.mxu0
      %v1102 = vadd.f32 0.0, %v1101
      %1103 = vdwg.mxu0
      %v1104 = vpack.c.bf16 %v1100, %v1100
      %v1105 = vpack.c.bf16 %v1102, %v1102
      %1106 = vrot.lane.b32.xlu0 %v655, 104
      %v1107 = vpop.permute.xlu0 %1106
      %1108 = vrot.lane.b32.xlu0 %v655, 72
      %v1109 = vpop.permute.xlu0 %1108
      %v1111 = vsel %vm658, %v1107, 0
      %v1114 = vsel %vm658, %v1109, 0
      %1116 = vmatpush.bf16.xpose.msra.mxu0 0
      %1117 = vmatpush.bf16.xpose.msra.mxu0 0
      %1118 = vmatpush.bf16.xpose.msra.mxu0 0
      %1119 = vmatpush.bf16.xpose.msra.mxu0 0
      %1120 = vmatpush.bf16.xpose.msra.mxu0 0
      %1121 = vmatpush.bf16.xpose.msra.mxu0 0
      %1122 = vmatpush.bf16.xpose.msra.mxu0 0
      %1123 = vmatpush.bf16.xpose.msra.mxu0 %v1114
      %1124 = vmatmul.bf16.gmra.mxu0 %v1111
      %v1125 = vpop.f32.mrf.mxu0
      %v1126 = vadd.f32 %v611, %v1125
      %v1127 = vpop.f32.mrf.mxu0
      %v1128 = vadd.f32 %v611, %v1127
      %1129 = vdwg.mxu0
      %v1130 = vsel %vm679, %v1126, -inf
      %1131 = vmax.xlane.f32.xlu0 %v1130
      %v1132 = vpop.xlane.xlu0 %1131
      %v1133 = vsel %vm679, %v1128, -inf
      %1134 = vmax.xlane.f32.xlu0 %v1133
      %v1135 = vpop.xlane.xlu0 %1134
      %v1136 = vsub.f32 %v1126, %v1132
      %v1137 = vsub.f32 %v1128, %v1135
      %v1138 = vmul.f32 %v1136, 1.442695
      %v1139 = vpow.pop %v1138
      %v1140 = vmul.f32 %v1137, 1.442695
      %v1141 = vpow.pop %v1140
      %v1142 = vsel %vm679, %v1139, 0.0
      %1143 = vadd.xlane.f32.xlu0 %v1142
      %v1144 = vpop.xlane.xlu0 %1143
      %v1145 = vsel %vm679, %v1141, 0.0
      %1146 = vadd.xlane.f32.xlu0 %v1145
      %v1147 = vpop.xlane.xlu0 %1146
      %v1148 = vrcp.pop %v1144
      %v1149 = vrcp.pop %v1147
      %v1150 = vmul.f32 %v1139, %v1148
      %v1151 = vmul.f32 %v1141, %v1149
      %v1152 = vpack.c.bf16 %v1150, %v1150
      %v1153 = vpack.c.bf16 %v1151, %v1151
      %v1156 = vunpack.c.l.b16 %v1152
      %v1157 = vunpack.c.l.b16 %v1153
      %v1158 = vpack.c.b16 %v1157, %v1156
      %1159 = vrot.lane.b32.xlu0 %v655, 40
      %v1160 = vpop.permute.xlu0 %1159
      %v1163 = vsel %vm679, %v1158, 0
      %1165 = vmatpush.bf16.msra.mxu0 0
      %1166 = vmatpush.bf16.msra.mxu0 0
      %1167 = vmatpush.bf16.msra.mxu0 0
      %1168 = vmatpush.bf16.msra.mxu0 0
      %1169 = vmatpush.bf16.msra.mxu0 0
      %1170 = vmatpush.bf16.msra.mxu0 0
      %1171 = vmatpush.bf16.msra.mxu0 0
      %1172 = vmatpush.bf16.msra.mxu0 %v1160
      %1173 = vmatmul.bf16.gmra.mxu0 %v1163
      %v1174 = vpop.f32.mrf.mxu0
      %v1175 = vadd.f32 0.0, %v1174
      %v1176 = vpop.f32.mrf.mxu0
      %v1177 = vadd.f32 0.0, %v1176
      %1178 = vdwg.mxu0
      %v1179 = vpack.c.bf16 %v1175, %v1175
      %v1180 = vpack.c.bf16 %v1177, %v1177
      %1181 = vrot.lane.b32.xlu0 %v655, 100
      %v1182 = vpop.permute.xlu0 %1181
      %1183 = vrot.lane.b32.xlu0 %v655, 68
      %v1184 = vpop.permute.xlu0 %1183
      %v1186 = vsel %vm658, %v1182, 0
      %v1189 = vsel %vm658, %v1184, 0
      %1191 = vmatpush.bf16.xpose.msra.mxu0 0
      %1192 = vmatpush.bf16.xpose.msra.mxu0 0
      %1193 = vmatpush.bf16.xpose.msra.mxu0 0
      %1194 = vmatpush.bf16.xpose.msra.mxu0 0
      %1195 = vmatpush.bf16.xpose.msra.mxu0 0
      %1196 = vmatpush.bf16.xpose.msra.mxu0 0
      %1197 = vmatpush.bf16.xpose.msra.mxu0 0
      %1198 = vmatpush.bf16.xpose.msra.mxu0 %v1189
      %1199 = vmatmul.bf16.gmra.mxu0 %v1186
      %v1200 = vpop.f32.mrf.mxu0
      %v1201 = vadd.f32 %v611, %v1200
      %v1202 = vpop.f32.mrf.mxu0
      %v1203 = vadd.f32 %v611, %v1202
      %1204 = vdwg.mxu0
      %v1205 = vsel %vm679, %v1201, -inf
      %1206 = vmax.xlane.f32.xlu0 %v1205
      %v1207 = vpop.xlane.xlu0 %1206
      %v1208 = vsel %vm679, %v1203, -inf
      %1209 = vmax.xlane.f32.xlu0 %v1208
      %v1210 = vpop.xlane.xlu0 %1209
      %v1211 = vsub.f32 %v1201, %v1207
      %v1212 = vsub.f32 %v1203, %v1210
      %v1213 = vmul.f32 %v1211, 1.442695
      %v1214 = vpow.pop %v1213
      %v1215 = vmul.f32 %v1212, 1.442695
      %v1216 = vpow.pop %v1215
      %v1217 = vsel %vm679, %v1214, 0.0
      %1218 = vadd.xlane.f32.xlu0 %v1217
      %v1219 = vpop.xlane.xlu0 %1218
      %v1220 = vsel %vm679, %v1216, 0.0
      %1221 = vadd.xlane.f32.xlu0 %v1220
      %v1222 = vpop.xlane.xlu0 %1221
      %v1223 = vrcp.pop %v1219
      %v1224 = vrcp.pop %v1222
      %v1225 = vmul.f32 %v1214, %v1223
      %v1226 = vmul.f32 %v1216, %v1224
      %v1227 = vpack.c.bf16 %v1225, %v1225
      %v1228 = vpack.c.bf16 %v1226, %v1226
      %v1231 = vunpack.c.l.b16 %v1227
      %v1232 = vunpack.c.l.b16 %v1228
      %v1233 = vpack.c.b16 %v1232, %v1231
      %1234 = vrot.lane.b32.xlu0 %v655, 36
      %v1235 = vpop.permute.xlu0 %1234
      %v1238 = vsel %vm679, %v1233, 0
      %1240 = vmatpush.bf16.msra.mxu0 0
      %1241 = vmatpush.bf16.msra.mxu0 0
      %1242 = vmatpush.bf16.msra.mxu0 0
      %1243 = vmatpush.bf16.msra.mxu0 0
      %1244 = vmatpush.bf16.msra.mxu0 0
      %1245 = vmatpush.bf16.msra.mxu0 0
      %1246 = vmatpush.bf16.msra.mxu0 0
      %1247 = vmatpush.bf16.msra.mxu0 %v1235
      %1248 = vmatmul.bf16.gmra.mxu0 %v1238
      %v1249 = vpop.f32.mrf.mxu0
      %v1250 = vadd.f32 0.0, %v1249
      %v1251 = vpop.f32.mrf.mxu0
      %v1252 = vadd.f32 0.0, %v1251
      %1253 = vdwg.mxu0
      %v1254 = vpack.c.bf16 %v1250, %v1250
      %v1255 = vpack.c.bf16 %v1252, %v1252
      %v1258 = vunpack.c.l.b16 %v729
      %v1259 = vunpack.c.l.b16 %v730
      %v1260 = vpack.c.b16 %v1259, %v1258
      %v1263 = vunpack.c.l.b16 %v804
      %v1264 = vunpack.c.l.b16 %v805
      %v1265 = vpack.c.b16 %v1264, %v1263
      %1266 = vrot.lane.b32.xlu0 %v1265, 4
      %v1267 = vpop.permute.xlu0 %1266
      %v1270 = vunpack.c.l.b16 %v879
      %v1271 = vunpack.c.l.b16 %v880
      %v1272 = vpack.c.b16 %v1271, %v1270
      %1273 = vrot.lane.b32.xlu0 %v1272, 8
      %v1274 = vpop.permute.xlu0 %1273
      %v1277 = vunpack.c.l.b16 %v954
      %v1278 = vunpack.c.l.b16 %v955
      %v1279 = vpack.c.b16 %v1278, %v1277
      %1280 = vrot.lane.b32.xlu0 %v1279, 12
      %v1281 = vpop.permute.xlu0 %1280
      %v1284 = vunpack.c.l.b16 %v1029
      %v1285 = vunpack.c.l.b16 %v1030
      %v1286 = vpack.c.b16 %v1285, %v1284
      %1287 = vrot.lane.b32.xlu0 %v1286, 16
      %v1288 = vpop.permute.xlu0 %1287
      %v1291 = vunpack.c.l.b16 %v1104
      %v1292 = vunpack.c.l.b16 %v1105
      %v1293 = vpack.c.b16 %v1292, %v1291
      %1294 = vrot.lane.b32.xlu0 %v1293, 20
      %v1295 = vpop.permute.xlu0 %1294
      %v1298 = vunpack.c.l.b16 %v1179
      %v1299 = vunpack.c.l.b16 %v1180
      %v1300 = vpack.c.b16 %v1299, %v1298
      %1301 = vrot.lane.b32.xlu0 %v1300, 24
      %v1302 = vpop.permute.xlu0 %1301
      %v1305 = vunpack.c.l.b16 %v1254
      %v1306 = vunpack.c.l.b16 %v1255
      %v1307 = vpack.c.b16 %v1306, %v1305
      %1308 = vrot.lane.b32.xlu0 %v1307, 28
      %v1309 = vpop.permute.xlu0 %1308
      %v1312 = vsel %vm658, %v1260, %v1267
      %vm1313 = vcmask 64512
      %v1315 = vsel %vm1313, %v1312, %v1274
      %vm1316 = vcmask 97280
      %v1318 = vsel %vm1316, %v1315, %v1281
      %v1320 = vsel %vm679, %v1318, %v1288
      %vm1321 = vcmask 162816
      %v1323 = vsel %vm1321, %v1320, %v1295
      %vm1324 = vcmask 195584
      %v1326 = vsel %vm1324, %v1323, %v1302
      %vm1327 = vcmask 228352
      %v1329 = vsel %vm1327, %v1326, %v1309
      %v1330 = vld [vmem:[%s5] sm:$0xf]
      %v1331 = vld [vmem:[%s5 + $0x4] sm:$0xf]
      %v1332 = vld [vmem:[%s5 + $0x8] sm:$0xf]
      %v1333 = vld [vmem:[%s5 + $0xc] sm:$0xf]
      %v1334 = vld [vmem:[%s6] sm:$0x1]
      %v1335 = vperm.slane %v1334, 0
      %v1340 = vunpack.c.l.b16 %v1330
      %v1341 = vunpack.c.l.b16 %v1331
      %v1342 = vunpack.c.l.b16 %v1332
      %v1343 = vunpack.c.l.b16 %v1333
      %v1344 = vpack.c.b16 %v1341, %v1340
      %v1345 = vpack.c.b16 %v1343, %v1342
      %v1348 = vsel %vm631, %v1329, 0
      %1350 = vmatpush.bf16.msra.mxu0 0
      %1351 = vmatpush.bf16.msra.mxu0 0
      %1352 = vmatpush.bf16.msra.mxu0 0
      %1353 = vmatpush.bf16.msra.mxu0 0
      %1354 = vmatpush.bf16.msra.mxu0 0
      %1355 = vmatpush.bf16.msra.mxu0 0
      %1356 = vmatpush.bf16.msra.mxu0 %v1345
      %1357 = vmatpush.bf16.msra.mxu0 %v1344
      %1358 = vmatmul.bf16.gmra.mxu0 %v1348
      %v1359 = vpop.f32.mrf.mxu0
      %v1360 = vadd.f32 %v1335, %v1359
      %v1361 = vpop.f32.mrf.mxu0
      %v1362 = vadd.f32 %v1335, %v1361
      %1363 = vdwg.mxu0
      %v1364 = vadd.f32 %v602, %v1360
      %v1365 = vadd.f32 %v606, %v1362
      %v1366 = vld [vmem:[%s7] sm:$0x1]
      %v1367 = vld [vmem:[%s8] sm:$0x1]
      %v1368 = vsel %vm631, %v1364, 0.0
      %1369 = vadd.xlane.f32.xlu0 %v1368
      %v1370 = vpop.xlane.xlu0 %1369
      %v1371 = vsel %vm631, %v1365, 0.0
      %1372 = vadd.xlane.f32.xlu0 %v1371
      %v1373 = vpop.xlane.xlu0 %1372
      %v1374 = vrcp.pop 32.0
      %v1375 = vmul.f32 32.0, %v1374
      %v1376 = vsub.f32 1.0, %v1375
      %v1377 = vmul.f32 %v1374, %v1376
      %v1378 = vadd.f32 %v1374, %v1377
      %vm1379 = vweird.f32 %v1374
      %v1380 = vsel %vm1379, %v1374, %v1378
      %v1381 = vmul.f32 %v1370, %v1380
      %v1382 = vmul.f32 %v1373, %v1380
      %v1383 = vsub.f32 %v1364, %v1381
      %v1384 = vsub.f32 %v1365, %v1382
      %v1385 = vmul.f32 %v1383, %v1383
      %v1386 = vmul.f32 %v1384, %v1384
      %v1387 = vsel %vm631, %v1385, 0.0
      %1388 = vadd.xlane.f32.xlu0 %v1387
      %v1389 = vpop.xlane.xlu0 %1388
      %v1390 = vsel %vm631, %v1386, 0.0
      %1391 = vadd.xlane.f32.xlu0 %v1390
      %v1392 = vpop.xlane.xlu0 %1391
      %v1393 = vmul.f32 %v1389, %v1380
      %v1394 = vmul.f32 %v1392, %v1380
      %v1395 = vadd.f32 %v1393, 1e-05
      %v1396 = vadd.f32 %v1394, 1e-05
      %v1397 = vrsqrt.pop %v1395
      %v1398 = vmul.f32 %v1397, %v1395
      %v1399 = vmul.f32 %v1398, %v1397
      %v1400 = vmul.f32 0.5, %v1399
      %v1401 = vsub.f32 1.5, %v1400
      %v1402 = vmul.f32 %v1397, %v1401
      %vm1403 = vweird.f32 %v1395
      %vm1404 = vweird.f32 %v1397
      %vm1405 = vmor %vm1403, %vm1404
      %v1406 = vsel %vm1405, %v1397, %v1402
      %v1407 = vrsqrt.pop %v1396
      %v1408 = vmul.f32 %v1407, %v1396
      %v1409 = vmul.f32 %v1408, %v1407
      %v1410 = vmul.f32 0.5, %v1409
      %v1411 = vsub.f32 1.5, %v1410
      %v1412 = vmul.f32 %v1407, %v1411
      %vm1413 = vweird.f32 %v1396
      %vm1414 = vweird.f32 %v1407
      %vm1415 = vmor %vm1413, %vm1414
      %v1416 = vsel %vm1415, %v1407, %v1412
      %v1417 = vmul.f32 %v1383, %v1406
      %v1418 = vmul.f32 %v1384, %v1416
      %v1419 = vperm.slane %v1366, 0
      %v1420 = vmul.f32 %v1417, %v1419
      %v1421 = vmul.f32 %v1418, %v1419
      %v1422 = vperm.slane %v1367, 0
      %v1423 = vadd.f32 %v1420, %v1422
      %v1424 = vadd.f32 %v1421, %v1422
      %v1425 = vpack.c.bf16 %v1424, %v1423
      %v1426 = vld [vmem:[%s9] sm:$0xf]
      %v1427 = vld [vmem:[%s9 + $0x4] sm:$0xf]
      %v1428 = vld [vmem:[%s9 + $0x8] sm:$0xf]
      %v1429 = vld [vmem:[%s9 + $0xc] sm:$0xf]
      %v1430 = vld [vmem:[%s10] sm:$0x1]
      %v1431 = vperm.slane %v1430, 0
      %v1436 = vunpack.c.l.b16 %v1426
      %v1437 = vunpack.c.l.b16 %v1427
      %v1438 = vunpack.c.l.b16 %v1428
      %v1439 = vunpack.c.l.b16 %v1429
      %v1440 = vpack.c.b16 %v1437, %v1436
      %v1441 = vpack.c.b16 %v1439, %v1438
      %v1445 = vsel %vm631, %v1425, 0
      %1447 = vmatpush.bf16.msra.mxu0 0
      %1448 = vmatpush.bf16.msra.mxu0 0
      %1449 = vmatpush.bf16.msra.mxu0 0
      %1450 = vmatpush.bf16.msra.mxu0 0
      %1451 = vmatpush.bf16.msra.mxu0 0
      %1452 = vmatpush.bf16.msra.mxu0 0
      %1453 = vmatpush.bf16.msra.mxu0 %v1441
      %1454 = vmatpush.bf16.msra.mxu0 %v1440
      %1455 = vmatmul.bf16.gmra.mxu0 %v1445
      %v1456 = vpop.f32.mrf.mxu0
      %v1457 = vadd.f32 %v1431, %v1456
      %v1458 = vpop.f32.mrf.mxu0
      %v1459 = vadd.f32 %v1431, %v1458
      %1460 = vdwg.mxu0
      %v1461 = vmax.f32 %v1457, 0.0
      %v1462 = vmax.f32 %v1459, 0.0
      %v1463 = vpack.c.bf16 %v1462, %v1461
      %v1464 = vld [vmem:[%s11] sm:$0xf]
      %v1465 = vld [vmem:[%s11 + $0x4] sm:$0xf]
      %v1466 = vld [vmem:[%s11 + $0x8] sm:$0xf]
      %v1467 = vld [vmem:[%s11 + $0xc] sm:$0xf]
      %v1468 = vld [vmem:[%s11 + $0x10] sm:$0xf]
      %v1469 = vld [vmem:[%s11 + $0x14] sm:$0xf]
      %v1470 = vld [vmem:[%s11 + $0x18] sm:$0xf]
      %v1471 = vld [vmem:[%s11 + $0x1c] sm:$0xf]
      %v1472 = vld [vmem:[%s11 + $0x20] sm:$0xf]
      %v1473 = vld [vmem:[%s11 + $0x24] sm:$0xf]
      %v1474 = vld [vmem:[%s11 + $0x28] sm:$0xf]
      %v1475 = vld [vmem:[%s11 + $0x2c] sm:$0xf]
      %v1476 = vld [vmem:[%s11 + $0x30] sm:$0xf]
      %v1477 = vld [vmem:[%s11 + $0x34] sm:$0xf]
      %v1478 = vld [vmem:[%s11 + $0x38] sm:$0xf]
      %v1479 = vld [vmem:[%s11 + $0x3c] sm:$0xf]
      %v1480 = vld [vmem:[%s12] sm:$0x1]
      %v1481 = vperm.slane %v1480, 0
      %v1498 = vunpack.c.l.b16 %v1464
      %v1499 = vunpack.c.l.b16 %v1465
      %v1500 = vunpack.c.l.b16 %v1466
      %v1501 = vunpack.c.l.b16 %v1467
      %v1502 = vunpack.c.l.b16 %v1468
      %v1503 = vunpack.c.l.b16 %v1469
      %v1504 = vunpack.c.l.b16 %v1470
      %v1505 = vunpack.c.l.b16 %v1471
      %v1506 = vunpack.c.l.b16 %v1472
      %v1507 = vunpack.c.l.b16 %v1473
      %v1508 = vunpack.c.l.b16 %v1474
      %v1509 = vunpack.c.l.b16 %v1475
      %v1510 = vunpack.c.l.b16 %v1476
      %v1511 = vunpack.c.l.b16 %v1477
      %v1512 = vunpack.c.l.b16 %v1478
      %v1513 = vunpack.c.l.b16 %v1479
      %v1514 = vpack.c.b16 %v1499, %v1498
      %v1515 = vpack.c.b16 %v1501, %v1500
      %v1516 = vpack.c.b16 %v1503, %v1502
      %v1517 = vpack.c.b16 %v1505, %v1504
      %v1518 = vpack.c.b16 %v1507, %v1506
      %v1519 = vpack.c.b16 %v1509, %v1508
      %v1520 = vpack.c.b16 %v1511, %v1510
      %v1521 = vpack.c.b16 %v1513, %v1512
      %1530 = vmatpush.bf16.msra.mxu0 %v1521
      %1531 = vmatpush.bf16.msra.mxu0 %v1520
      %1532 = vmatpush.bf16.msra.mxu0 %v1519
      %1533 = vmatpush.bf16.msra.mxu0 %v1518
      %1534 = vmatpush.bf16.msra.mxu0 %v1517
      %1535 = vmatpush.bf16.msra.mxu0 %v1516
      %1536 = vmatpush.bf16.msra.mxu0 %v1515
      %1537 = vmatpush.bf16.msra.mxu0 %v1514
      %1538 = vmatmul.bf16.gmra.mxu0 %v1463
      %v1539 = vpop.f32.mrf.mxu0
      %v1540 = vadd.f32 %v1481, %v1539
      %v1541 = vpop.f32.mrf.mxu0
      %v1542 = vadd.f32 %v1481, %v1541
      %1543 = vdwg.mxu0
      %v1544 = vadd.f32 %v1423, %v1540
      %v1545 = vadd.f32 %v1424, %v1542
      %v1546 = vld [vmem:[%s13] sm:$0x1]
      %v1547 = vld [vmem:[%s14] sm:$0x1]
      %v1548 = vsel %vm631, %v1544, 0.0
      %1549 = vadd.xlane.f32.xlu0 %v1548
      %v1550 = vpop.xlane.xlu0 %1549
      %v1551 = vsel %vm631, %v1545, 0.0
      %1552 = vadd.xlane.f32.xlu0 %v1551
      %v1553 = vpop.xlane.xlu0 %1552
      %v1554 = vmul.f32 %v1550, %v1380
      %v1555 = vmul.f32 %v1553, %v1380
      %v1556 = vsub.f32 %v1544, %v1554
      %v1557 = vsub.f32 %v1545, %v1555
      %v1558 = vmul.f32 %v1556, %v1556
      %v1559 = vmul.f32 %v1557, %v1557
      %v1560 = vsel %vm631, %v1558, 0.0
      %1561 = vadd.xlane.f32.xlu0 %v1560
      %v1562 = vpop.xlane.xlu0 %1561
      %v1563 = vsel %vm631, %v1559, 0.0
      %1564 = vadd.xlane.f32.xlu0 %v1563
      %v1565 = vpop.xlane.xlu0 %1564
      %v1566 = vmul.f32 %v1562, %v1380
      %v1567 = vmul.f32 %v1565, %v1380
      %v1568 = vadd.f32 %v1566, 1e-05
      %v1569 = vadd.f32 %v1567, 1e-05
      %v1570 = vrsqrt.pop %v1568
      %v1571 = vmul.f32 %v1570, %v1568
      %v1572 = vmul.f32 %v1571, %v1570
      %v1573 = vmul.f32 0.5, %v1572
      %v1574 = vsub.f32 1.5, %v1573
      %v1575 = vmul.f32 %v1570, %v1574
      %vm1576 = vweird.f32 %v1568
      %vm1577 = vweird.f32 %v1570
      %vm1578 = vmor %vm1576, %vm1577
      %v1579 = vsel %vm1578, %v1570, %v1575
      %v1580 = vrsqrt.pop %v1569
      %v1581 = vmul.f32 %v1580, %v1569
      %v1582 = vmul.f32 %v1581, %v1580
      %v1583 = vmul.f32 0.5, %v1582
      %v1584 = vsub.f32 1.5, %v1583
      %v1585 = vmul.f32 %v1580, %v1584
      %vm1586 = vweird.f32 %v1569
      %vm1587 = vweird.f32 %v1580
      %vm1588 = vmor %vm1586, %vm1587
      %v1589 = vsel %vm1588, %v1580, %v1585
      %v1590 = vmul.f32 %v1556, %v1579
      %v1591 = vmul.f32 %v1557, %v1589
      %v1592 = vperm.slane %v1546, 0
      %v1593 = vmul.f32 %v1590, %v1592
      %v1594 = vmul.f32 %v1591, %v1592
      %v1595 = vperm.slane %v1547, 0
      %v1596 = vadd.f32 %v1593, %v1595
      %v1597 = vadd.f32 %v1594, %v1595
      %v1598 = vpack.c.bf16 %v1597, %v1596
      %s1599 = scalar_lea.vmem %s3, 16
      %v1600 = vld [vmem:[%s1599] sm:$0xf]
      %v1601 = vld [vmem:[%s1599 + $0x4] sm:$0xf]
      %v1602 = vld [vmem:[%s1599 + $0x8] sm:$0xf]
      %v1603 = vld [vmem:[%s1599 + $0xc] sm:$0xf]
      %v1604 = vld [vmem:[%s4 + $0x1] sm:$0x1]
      %v1605 = vperm.slane %v1604, 0
      %v1610 = vunpack.c.l.b16 %v1600
      %v1611 = vunpack.c.l.b16 %v1601
      %v1612 = vunpack.c.l.b16 %v1602
      %v1613 = vunpack.c.l.b16 %v1603
      %v1614 = vpack.c.b16 %v1611, %v1610
      %v1615 = vpack.c.b16 %v1613, %v1612
      %v1619 = vsel %vm631, %v1598, 0
      %1621 = vmatpush.bf16.msra.mxu0 0
      %1622 = vmatpush.bf16.msra.mxu0 0
      %1623 = vmatpush.bf16.msra.mxu0 0
      %1624 = vmatpush.bf16.msra.mxu0 0
      %1625 = vmatpush.bf16.msra.mxu0 0
      %1626 = vmatpush.bf16.msra.mxu0 0
      %1627 = vmatpush.bf16.msra.mxu0 %v1615
      %1628 = vmatpush.bf16.msra.mxu0 %v1614
      %1629 = vmatmul.bf16.gmra.mxu0 %v1619
      %v1630 = vpop.f32.mrf.mxu0
      %v1631 = vadd.f32 %v1605, %v1630
      %v1632 = vpop.f32.mrf.mxu0
      %v1633 = vadd.f32 %v1605, %v1632
      %1634 = vdwg.mxu0
      %v1635 = vpack.c.bf16 %v1631, %v1631
      %v1636 = vpack.c.bf16 %v1633, %v1633
      %v1639 = vunpack.c.l.b16 %v1635
      %v1640 = vunpack.c.l.b16 %v1636
      %v1641 = vpack.c.b16 %v1640, %v1639
      %1642 = vrot.lane.b32.xlu0 %v1641, 96
      %v1643 = vpop.permute.xlu0 %1642
      %v1645 = vsel %vm658, %v1641, 0
      %v1648 = vsel %vm658, %v1643, 0
      %1650 = vmatpush.bf16.xpose.msra.mxu0 0
      %1651 = vmatpush.bf16.xpose.msra.mxu0 0
      %1652 = vmatpush.bf16.xpose.msra.mxu0 0
      %1653 = vmatpush.bf16.xpose.msra.mxu0 0
      %1654 = vmatpush.bf16.xpose.msra.mxu0 0
      %1655 = vmatpush.bf16.xpose.msra.mxu0 0
      %1656 = vmatpush.bf16.xpose.msra.mxu0 0
      %1657 = vmatpush.bf16.xpose.msra.mxu0 %v1648
      %1658 = vmatmul.bf16.gmra.mxu0 %v1645
      %v1659 = vpop.f32.mrf.mxu0
      %v1660 = vadd.f32 %v611, %v1659
      %v1661 = vpop.f32.mrf.mxu0
      %v1662 = vadd.f32 %v611, %v1661
      %1663 = vdwg.mxu0
      %v1664 = vsel %vm679, %v1660, -inf
      %1665 = vmax.xlane.f32.xlu0 %v1664
      %v1666 = vpop.xlane.xlu0 %1665
      %v1667 = vsel %vm679, %v1662, -inf
      %1668 = vmax.xlane.f32.xlu0 %v1667
      %v1669 = vpop.xlane.xlu0 %1668
      %v1670 = vsub.f32 %v1660, %v1666
      %v1671 = vsub.f32 %v1662, %v1669
      %v1672 = vmul.f32 %v1670, 1.442695
      %v1673 = vpow.pop %v1672
      %v1674 = vmul.f32 %v1671, 1.442695
      %v1675 = vpow.pop %v1674
      %v1676 = vsel %vm679, %v1673, 0.0
      %1677 = vadd.xlane.f32.xlu0 %v1676
      %v1678 = vpop.xlane.xlu0 %1677
      %v1679 = vsel %vm679, %v1675, 0.0
      %1680 = vadd.xlane.f32.xlu0 %v1679
      %v1681 = vpop.xlane.xlu0 %1680
      %v1682 = vrcp.pop %v1678
      %v1683 = vrcp.pop %v1681
      %v1684 = vmul.f32 %v1673, %v1682
      %v1685 = vmul.f32 %v1675, %v1683
      %v1686 = vpack.c.bf16 %v1684, %v1684
      %v1687 = vpack.c.bf16 %v1685, %v1685
      %v1690 = vunpack.c.l.b16 %v1686
      %v1691 = vunpack.c.l.b16 %v1687
      %v1692 = vpack.c.b16 %v1691, %v1690
      %1693 = vrot.lane.b32.xlu0 %v1641, 64
      %v1694 = vpop.permute.xlu0 %1693
      %v1697 = vsel %vm679, %v1692, 0
      %1699 = vmatpush.bf16.msra.mxu0 0
      %1700 = vmatpush.bf16.msra.mxu0 0
      %1701 = vmatpush.bf16.msra.mxu0 0
      %1702 = vmatpush.bf16.msra.mxu0 0
      %1703 = vmatpush.bf16.msra.mxu0 0
      %1704 = vmatpush.bf16.msra.mxu0 0
      %1705 = vmatpush.bf16.msra.mxu0 0
      %1706 = vmatpush.bf16.msra.mxu0 %v1694
      %1707 = vmatmul.bf16.gmra.mxu0 %v1697
      %v1708 = vpop.f32.mrf.mxu0
      %v1709 = vadd.f32 0.0, %v1708
      %v1710 = vpop.f32.mrf.mxu0
      %v1711 = vadd.f32 0.0, %v1710
      %1712 = vdwg.mxu0
      %v1713 = vpack.c.bf16 %v1709, %v1709
      %v1714 = vpack.c.bf16 %v1711, %v1711
      %1715 = vrot.lane.b32.xlu0 %v1641, 124
      %v1716 = vpop.permute.xlu0 %1715
      %1717 = vrot.lane.b32.xlu0 %v1641, 92
      %v1718 = vpop.permute.xlu0 %1717
      %v1720 = vsel %vm658, %v1716, 0
      %v1723 = vsel %vm658, %v1718, 0
      %1725 = vmatpush.bf16.xpose.msra.mxu0 0
      %1726 = vmatpush.bf16.xpose.msra.mxu0 0
      %1727 = vmatpush.bf16.xpose.msra.mxu0 0
      %1728 = vmatpush.bf16.xpose.msra.mxu0 0
      %1729 = vmatpush.bf16.xpose.msra.mxu0 0
      %1730 = vmatpush.bf16.xpose.msra.mxu0 0
      %1731 = vmatpush.bf16.xpose.msra.mxu0 0
      %1732 = vmatpush.bf16.xpose.msra.mxu0 %v1723
      %1733 = vmatmul.bf16.gmra.mxu0 %v1720
      %v1734 = vpop.f32.mrf.mxu0
      %v1735 = vadd.f32 %v611, %v1734
      %v1736 = vpop.f32.mrf.mxu0
      %v1737 = vadd.f32 %v611, %v1736
      %1738 = vdwg.mxu0
      %v1739 = vsel %vm679, %v1735, -inf
      %1740 = vmax.xlane.f32.xlu0 %v1739
      %v1741 = vpop.xlane.xlu0 %1740
      %v1742 = vsel %vm679, %v1737, -inf
      %1743 = vmax.xlane.f32.xlu0 %v1742
      %v1744 = vpop.xlane.xlu0 %1743
      %v1745 = vsub.f32 %v1735, %v1741
      %v1746 = vsub.f32 %v1737, %v1744
      %v1747 = vmul.f32 %v1745, 1.442695
      %v1748 = vpow.pop %v1747
      %v1749 = vmul.f32 %v1746, 1.442695
      %v1750 = vpow.pop %v1749
      %v1751 = vsel %vm679, %v1748, 0.0
      %1752 = vadd.xlane.f32.xlu0 %v1751
      %v1753 = vpop.xlane.xlu0 %1752
      %v1754 = vsel %vm679, %v1750, 0.0
      %1755 = vadd.xlane.f32.xlu0 %v1754
      %v1756 = vpop.xlane.xlu0 %1755
      %v1757 = vrcp.pop %v1753
      %v1758 = vrcp.pop %v1756
      %v1759 = vmul.f32 %v1748, %v1757
      %v1760 = vmul.f32 %v1750, %v1758
      %v1761 = vpack.c.bf16 %v1759, %v1759
      %v1762 = vpack.c.bf16 %v1760, %v1760
      %v1765 = vunpack.c.l.b16 %v1761
      %v1766 = vunpack.c.l.b16 %v1762
      %v1767 = vpack.c.b16 %v1766, %v1765
      %1768 = vrot.lane.b32.xlu0 %v1641, 60
      %v1769 = vpop.permute.xlu0 %1768
      %v1772 = vsel %vm679, %v1767, 0
      %1774 = vmatpush.bf16.msra.mxu0 0
      %1775 = vmatpush.bf16.msra.mxu0 0
      %1776 = vmatpush.bf16.msra.mxu0 0
      %1777 = vmatpush.bf16.msra.mxu0 0
      %1778 = vmatpush.bf16.msra.mxu0 0
      %1779 = vmatpush.bf16.msra.mxu0 0
      %1780 = vmatpush.bf16.msra.mxu0 0
      %1781 = vmatpush.bf16.msra.mxu0 %v1769
      %1782 = vmatmul.bf16.gmra.mxu0 %v1772
      %v1783 = vpop.f32.mrf.mxu0
      %v1784 = vadd.f32 0.0, %v1783
      %v1785 = vpop.f32.mrf.mxu0
      %v1786 = vadd.f32 0.0, %v1785
      %1787 = vdwg.mxu0
      %v1788 = vpack.c.bf16 %v1784, %v1784
      %v1789 = vpack.c.bf16 %v1786, %v1786
      %1790 = vrot.lane.b32.xlu0 %v1641, 120
      %v1791 = vpop.permute.xlu0 %1790
      %1792 = vrot.lane.b32.xlu0 %v1641, 88
      %v1793 = vpop.permute.xlu0 %1792
      %v1795 = vsel %vm658, %v1791, 0
      %v1798 = vsel %vm658, %v1793, 0
      %1800 = vmatpush.bf16.xpose.msra.mxu0 0
      %1801 = vmatpush.bf16.xpose.msra.mxu0 0
      %1802 = vmatpush.bf16.xpose.msra.mxu0 0
      %1803 = vmatpush.bf16.xpose.msra.mxu0 0
      %1804 = vmatpush.bf16.xpose.msra.mxu0 0
      %1805 = vmatpush.bf16.xpose.msra.mxu0 0
      %1806 = vmatpush.bf16.xpose.msra.mxu0 0
      %1807 = vmatpush.bf16.xpose.msra.mxu0 %v1798
      %1808 = vmatmul.bf16.gmra.mxu0 %v1795
      %v1809 = vpop.f32.mrf.mxu0
      %v1810 = vadd.f32 %v611, %v1809
      %v1811 = vpop.f32.mrf.mxu0
      %v1812 = vadd.f32 %v611, %v1811
      %1813 = vdwg.mxu0
      %v1814 = vsel %vm679, %v1810, -inf
      %1815 = vmax.xlane.f32.xlu0 %v1814
      %v1816 = vpop.xlane.xlu0 %1815
      %v1817 = vsel %vm679, %v1812, -inf
      %1818 = vmax.xlane.f32.xlu0 %v1817
      %v1819 = vpop.xlane.xlu0 %1818
      %v1820 = vsub.f32 %v1810, %v1816
      %v1821 = vsub.f32 %v1812, %v1819
      %v1822 = vmul.f32 %v1820, 1.442695
      %v1823 = vpow.pop %v1822
      %v1824 = vmul.f32 %v1821, 1.442695
      %v1825 = vpow.pop %v1824
      %v1826 = vsel %vm679, %v1823, 0.0
      %1827 = vadd.xlane.f32.xlu0 %v1826
      %v1828 = vpop.xlane.xlu0 %1827
      %v1829 = vsel %vm679, %v1825, 0.0
      %1830 = vadd.xlane.f32.xlu0 %v1829
      %v1831 = vpop.xlane.xlu0 %1830
      %v1832 = vrcp.pop %v1828
      %v1833 = vrcp.pop %v1831
      %v1834 = vmul.f32 %v1823, %v1832
      %v1835 = vmul.f32 %v1825, %v1833
      %v1836 = vpack.c.bf16 %v1834, %v1834
      %v1837 = vpack.c.bf16 %v1835, %v1835
      %v1840 = vunpack.c.l.b16 %v1836
      %v1841 = vunpack.c.l.b16 %v1837
      %v1842 = vpack.c.b16 %v1841, %v1840
      %1843 = vrot.lane.b32.xlu0 %v1641, 56
      %v1844 = vpop.permute.xlu0 %1843
      %v1847 = vsel %vm679, %v1842, 0
      %1849 = vmatpush.bf16.msra.mxu0 0
      %1850 = vmatpush.bf16.msra.mxu0 0
      %1851 = vmatpush.bf16.msra.mxu0 0
      %1852 = vmatpush.bf16.msra.mxu0 0
      %1853 = vmatpush.bf16.msra.mxu0 0
      %1854 = vmatpush.bf16.msra.mxu0 0
      %1855 = vmatpush.bf16.msra.mxu0 0
      %1856 = vmatpush.bf16.msra.mxu0 %v1844
      %1857 = vmatmul.bf16.gmra.mxu0 %v1847
      %v1858 = vpop.f32.mrf.mxu0
      %v1859 = vadd.f32 0.0, %v1858
      %v1860 = vpop.f32.mrf.mxu0
      %v1861 = vadd.f32 0.0, %v1860
      %1862 = vdwg.mxu0
      %v1863 = vpack.c.bf16 %v1859, %v1859
      %v1864 = vpack.c.bf16 %v1861, %v1861
      %1865 = vrot.lane.b32.xlu0 %v1641, 116
      %v1866 = vpop.permute.xlu0 %1865
      %1867 = vrot.lane.b32.xlu0 %v1641, 84
      %v1868 = vpop.permute.xlu0 %1867
      %v1870 = vsel %vm658, %v1866, 0
      %v1873 = vsel %vm658, %v1868, 0
      %1875 = vmatpush.bf16.xpose.msra.mxu0 0
      %1876 = vmatpush.bf16.xpose.msra.mxu0 0
      %1877 = vmatpush.bf16.xpose.msra.mxu0 0
      %1878 = vmatpush.bf16.xpose.msra.mxu0 0
      %1879 = vmatpush.bf16.xpose.msra.mxu0 0
      %1880 = vmatpush.bf16.xpose.msra.mxu0 0
      %1881 = vmatpush.bf16.xpose.msra.mxu0 0
      %1882 = vmatpush.bf16.xpose.msra.mxu0 %v1873
      %1883 = vmatmul.bf16.gmra.mxu0 %v1870
      %v1884 = vpop.f32.mrf.mxu0
      %v1885 = vadd.f32 %v611, %v1884
      %v1886 = vpop.f32.mrf.mxu0
      %v1887 = vadd.f32 %v611, %v1886
      %1888 = vdwg.mxu0
      %v1889 = vsel %vm679, %v1885, -inf
      %1890 = vmax.xlane.f32.xlu0 %v1889
      %v1891 = vpop.xlane.xlu0 %1890
      %v1892 = vsel %vm679, %v1887, -inf
      %1893 = vmax.xlane.f32.xlu0 %v1892
      %v1894 = vpop.xlane.xlu0 %1893
      %v1895 = vsub.f32 %v1885, %v1891
      %v1896 = vsub.f32 %v1887, %v1894
      %v1897 = vmul.f32 %v1895, 1.442695
      %v1898 = vpow.pop %v1897
      %v1899 = vmul.f32 %v1896, 1.442695
      %v1900 = vpow.pop %v1899
      %v1901 = vsel %vm679, %v1898, 0.0
      %1902 = vadd.xlane.f32.xlu0 %v1901
      %v1903 = vpop.xlane.xlu0 %1902
      %v1904 = vsel %vm679, %v1900, 0.0
      %1905 = vadd.xlane.f32.xlu0 %v1904
      %v1906 = vpop.xlane.xlu0 %1905
      %v1907 = vrcp.pop %v1903
      %v1908 = vrcp.pop %v1906
      %v1909 = vmul.f32 %v1898, %v1907
      %v1910 = vmul.f32 %v1900, %v1908
      %v1911 = vpack.c.bf16 %v1909, %v1909
      %v1912 = vpack.c.bf16 %v1910, %v1910
      %v1915 = vunpack.c.l.b16 %v1911
      %v1916 = vunpack.c.l.b16 %v1912
      %v1917 = vpack.c.b16 %v1916, %v1915
      %1918 = vrot.lane.b32.xlu0 %v1641, 52
      %v1919 = vpop.permute.xlu0 %1918
      %v1922 = vsel %vm679, %v1917, 0
      %1924 = vmatpush.bf16.msra.mxu0 0
      %1925 = vmatpush.bf16.msra.mxu0 0
      %1926 = vmatpush.bf16.msra.mxu0 0
      %1927 = vmatpush.bf16.msra.mxu0 0
      %1928 = vmatpush.bf16.msra.mxu0 0
      %1929 = vmatpush.bf16.msra.mxu0 0
      %1930 = vmatpush.bf16.msra.mxu0 0
      %1931 = vmatpush.bf16.msra.mxu0 %v1919
      %1932 = vmatmul.bf16.gmra.mxu0 %v1922
      %v1933 = vpop.f32.mrf.mxu0
      %v1934 = vadd.f32 0.0, %v1933
      %v1935 = vpop.f32.mrf.mxu0
      %v1936 = vadd.f32 0.0, %v1935
      %1937 = vdwg.mxu0
      %v1938 = vpack.c.bf16 %v1934, %v1934
      %v1939 = vpack.c.bf16 %v1936, %v1936
      %1940 = vrot.lane.b32.xlu0 %v1641, 112
      %v1941 = vpop.permute.xlu0 %1940
      %1942 = vrot.lane.b32.xlu0 %v1641, 80
      %v1943 = vpop.permute.xlu0 %1942
      %v1945 = vsel %vm658, %v1941, 0
      %v1948 = vsel %vm658, %v1943, 0
      %1950 = vmatpush.bf16.xpose.msra.mxu0 0
      %1951 = vmatpush.bf16.xpose.msra.mxu0 0
      %1952 = vmatpush.bf16.xpose.msra.mxu0 0
      %1953 = vmatpush.bf16.xpose.msra.mxu0 0
      %1954 = vmatpush.bf16.xpose.msra.mxu0 0
      %1955 = vmatpush.bf16.xpose.msra.mxu0 0
      %1956 = vmatpush.bf16.xpose.msra.mxu0 0
      %1957 = vmatpush.bf16.xpose.msra.mxu0 %v1948
      %1958 = vmatmul.bf16.gmra.mxu0 %v1945
      %v1959 = vpop.f32.mrf.mxu0
      %v1960 = vadd.f32 %v611, %v1959
      %v1961 = vpop.f32.mrf.mxu0
      %v1962 = vadd.f32 %v611, %v1961
      %1963 = vdwg.mxu0
      %v1964 = vsel %vm679, %v1960, -inf
      %1965 = vmax.xlane.f32.xlu0 %v1964
      %v1966 = vpop.xlane.xlu0 %1965
      %v1967 = vsel %vm679, %v1962, -inf
      %1968 = vmax.xlane.f32.xlu0 %v1967
      %v1969 = vpop.xlane.xlu0 %1968
      %v1970 = vsub.f32 %v1960, %v1966
      %v1971 = vsub.f32 %v1962, %v1969
      %v1972 = vmul.f32 %v1970, 1.442695
      %v1973 = vpow.pop %v1972
      %v1974 = vmul.f32 %v1971, 1.442695
      %v1975 = vpow.pop %v1974
      %v1976 = vsel %vm679, %v1973, 0.0
      %1977 = vadd.xlane.f32.xlu0 %v1976
      %v1978 = vpop.xlane.xlu0 %1977
      %v1979 = vsel %vm679, %v1975, 0.0
      %1980 = vadd.xlane.f32.xlu0 %v1979
      %v1981 = vpop.xlane.xlu0 %1980
      %v1982 = vrcp.pop %v1978
      %v1983 = vrcp.pop %v1981
      %v1984 = vmul.f32 %v1973, %v1982
      %v1985 = vmul.f32 %v1975, %v1983
      %v1986 = vpack.c.bf16 %v1984, %v1984
      %v1987 = vpack.c.bf16 %v1985, %v1985
      %v1990 = vunpack.c.l.b16 %v1986
      %v1991 = vunpack.c.l.b16 %v1987
      %v1992 = vpack.c.b16 %v1991, %v1990
      %1993 = vrot.lane.b32.xlu0 %v1641, 48
      %v1994 = vpop.permute.xlu0 %1993
      %v1997 = vsel %vm679, %v1992, 0
      %1999 = vmatpush.bf16.msra.mxu0 0
      %2000 = vmatpush.bf16.msra.mxu0 0
      %2001 = vmatpush.bf16.msra.mxu0 0
      %2002 = vmatpush.bf16.msra.mxu0 0
      %2003 = vmatpush.bf16.msra.mxu0 0
      %2004 = vmatpush.bf16.msra.mxu0 0
      %2005 = vmatpush.bf16.msra.mxu0 0
      %2006 = vmatpush.bf16.msra.mxu0 %v1994
      %2007 = vmatmul.bf16.gmra.mxu0 %v1997
      %v2008 = vpop.f32.mrf.mxu0
      %v2009 = vadd.f32 0.0, %v2008
      %v2010 = vpop.f32.mrf.mxu0
      %v2011 = vadd.f32 0.0, %v2010
      %2012 = vdwg.mxu0
      %v2013 = vpack.c.bf16 %v2009, %v2009
      %v2014 = vpack.c.bf16 %v2011, %v2011
      %2015 = vrot.lane.b32.xlu0 %v1641, 108
      %v2016 = vpop.permute.xlu0 %2015
      %2017 = vrot.lane.b32.xlu0 %v1641, 76
      %v2018 = vpop.permute.xlu0 %2017
      %v2020 = vsel %vm658, %v2016, 0
      %v2023 = vsel %vm658, %v2018, 0
      %2025 = vmatpush.bf16.xpose.msra.mxu0 0
      %2026 = vmatpush.bf16.xpose.msra.mxu0 0
      %2027 = vmatpush.bf16.xpose.msra.mxu0 0
      %2028 = vmatpush.bf16.xpose.msra.mxu0 0
      %2029 = vmatpush.bf16.xpose.msra.mxu0 0
      %2030 = vmatpush.bf16.xpose.msra.mxu0 0
      %2031 = vmatpush.bf16.xpose.msra.mxu0 0
      %2032 = vmatpush.bf16.xpose.msra.mxu0 %v2023
      %2033 = vmatmul.bf16.gmra.mxu0 %v2020
      %v2034 = vpop.f32.mrf.mxu0
      %v2035 = vadd.f32 %v611, %v2034
      %v2036 = vpop.f32.mrf.mxu0
      %v2037 = vadd.f32 %v611, %v2036
      %2038 = vdwg.mxu0
      %v2039 = vsel %vm679, %v2035, -inf
      %2040 = vmax.xlane.f32.xlu0 %v2039
      %v2041 = vpop.xlane.xlu0 %2040
      %v2042 = vsel %vm679, %v2037, -inf
      %2043 = vmax.xlane.f32.xlu0 %v2042
      %v2044 = vpop.xlane.xlu0 %2043
      %v2045 = vsub.f32 %v2035, %v2041
      %v2046 = vsub.f32 %v2037, %v2044
      %v2047 = vmul.f32 %v2045, 1.442695
      %v2048 = vpow.pop %v2047
      %v2049 = vmul.f32 %v2046, 1.442695
      %v2050 = vpow.pop %v2049
      %v2051 = vsel %vm679, %v2048, 0.0
      %2052 = vadd.xlane.f32.xlu0 %v2051
      %v2053 = vpop.xlane.xlu0 %2052
      %v2054 = vsel %vm679, %v2050, 0.0
      %2055 = vadd.xlane.f32.xlu0 %v2054
      %v2056 = vpop.xlane.xlu0 %2055
      %v2057 = vrcp.pop %v2053
      %v2058 = vrcp.pop %v2056
      %v2059 = vmul.f32 %v2048, %v2057
      %v2060 = vmul.f32 %v2050, %v2058
      %v2061 = vpack.c.bf16 %v2059, %v2059
      %v2062 = vpack.c.bf16 %v2060, %v2060
      %v2065 = vunpack.c.l.b16 %v2061
      %v2066 = vunpack.c.l.b16 %v2062
      %v2067 = vpack.c.b16 %v2066, %v2065
      %2068 = vrot.lane.b32.xlu0 %v1641, 44
      %v2069 = vpop.permute.xlu0 %2068
      %v2072 = vsel %vm679, %v2067, 0
      %2074 = vmatpush.bf16.msra.mxu0 0
      %2075 = vmatpush.bf16.msra.mxu0 0
      %2076 = vmatpush.bf16.msra.mxu0 0
      %2077 = vmatpush.bf16.msra.mxu0 0
      %2078 = vmatpush.bf16.msra.mxu0 0
      %2079 = vmatpush.bf16.msra.mxu0 0
      %2080 = vmatpush.bf16.msra.mxu0 0
      %2081 = vmatpush.bf16.msra.mxu0 %v2069
      %2082 = vmatmul.bf16.gmra.mxu0 %v2072
      %v2083 = vpop.f32.mrf.mxu0
      %v2084 = vadd.f32 0.0, %v2083
      %v2085 = vpop.f32.mrf.mxu0
      %v2086 = vadd.f32 0.0, %v2085
      %2087 = vdwg.mxu0
      %v2088 = vpack.c.bf16 %v2084, %v2084
      %v2089 = vpack.c.bf16 %v2086, %v2086
      %2090 = vrot.lane.b32.xlu0 %v1641, 104
      %v2091 = vpop.permute.xlu0 %2090
      %2092 = vrot.lane.b32.xlu0 %v1641, 72
      %v2093 = vpop.permute.xlu0 %2092
      %v2095 = vsel %vm658, %v2091, 0
      %v2098 = vsel %vm658, %v2093, 0
      %2100 = vmatpush.bf16.xpose.msra.mxu0 0
      %2101 = vmatpush.bf16.xpose.msra.mxu0 0
      %2102 = vmatpush.bf16.xpose.msra.mxu0 0
      %2103 = vmatpush.bf16.xpose.msra.mxu0 0
      %2104 = vmatpush.bf16.xpose.msra.mxu0 0
      %2105 = vmatpush.bf16.xpose.msra.mxu0 0
      %2106 = vmatpush.bf16.xpose.msra.mxu0 0
      %2107 = vmatpush.bf16.xpose.msra.mxu0 %v2098
      %2108 = vmatmul.bf16.gmra.mxu0 %v2095
      %v2109 = vpop.f32.mrf.mxu0
      %v2110 = vadd.f32 %v611, %v2109
      %v2111 = vpop.f32.mrf.mxu0
      %v2112 = vadd.f32 %v611, %v2111
      %2113 = vdwg.mxu0
      %v2114 = vsel %vm679, %v2110, -inf
      %2115 = vmax.xlane.f32.xlu0 %v2114
      %v2116 = vpop.xlane.xlu0 %2115
      %v2117 = vsel %vm679, %v2112, -inf
      %2118 = vmax.xlane.f32.xlu0 %v2117
      %v2119 = vpop.xlane.xlu0 %2118
      %v2120 = vsub.f32 %v2110, %v2116
      %v2121 = vsub.f32 %v2112, %v2119
      %v2122 = vmul.f32 %v2120, 1.442695
      %v2123 = vpow.pop %v2122
      %v2124 = vmul.f32 %v2121, 1.442695
      %v2125 = vpow.pop %v2124
      %v2126 = vsel %vm679, %v2123, 0.0
      %2127 = vadd.xlane.f32.xlu0 %v2126
      %v2128 = vpop.xlane.xlu0 %2127
      %v2129 = vsel %vm679, %v2125, 0.0
      %2130 = vadd.xlane.f32.xlu0 %v2129
      %v2131 = vpop.xlane.xlu0 %2130
      %v2132 = vrcp.pop %v2128
      %v2133 = vrcp.pop %v2131
      %v2134 = vmul.f32 %v2123, %v2132
      %v2135 = vmul.f32 %v2125, %v2133
      %v2136 = vpack.c.bf16 %v2134, %v2134
      %v2137 = vpack.c.bf16 %v2135, %v2135
      %v2140 = vunpack.c.l.b16 %v2136
      %v2141 = vunpack.c.l.b16 %v2137
      %v2142 = vpack.c.b16 %v2141, %v2140
      %2143 = vrot.lane.b32.xlu0 %v1641, 40
      %v2144 = vpop.permute.xlu0 %2143
      %v2147 = vsel %vm679, %v2142, 0
      %2149 = vmatpush.bf16.msra.mxu0 0
      %2150 = vmatpush.bf16.msra.mxu0 0
      %2151 = vmatpush.bf16.msra.mxu0 0
      %2152 = vmatpush.bf16.msra.mxu0 0
      %2153 = vmatpush.bf16.msra.mxu0 0
      %2154 = vmatpush.bf16.msra.mxu0 0
      %2155 = vmatpush.bf16.msra.mxu0 0
      %2156 = vmatpush.bf16.msra.mxu0 %v2144
      %2157 = vmatmul.bf16.gmra.mxu0 %v2147
      %v2158 = vpop.f32.mrf.mxu0
      %v2159 = vadd.f32 0.0, %v2158
      %v2160 = vpop.f32.mrf.mxu0
      %v2161 = vadd.f32 0.0, %v2160
      %2162 = vdwg.mxu0
      %v2163 = vpack.c.bf16 %v2159, %v2159
      %v2164 = vpack.c.bf16 %v2161, %v2161
      %2165 = vrot.lane.b32.xlu0 %v1641, 100
      %v2166 = vpop.permute.xlu0 %2165
      %2167 = vrot.lane.b32.xlu0 %v1641, 68
      %v2168 = vpop.permute.xlu0 %2167
      %v2170 = vsel %vm658, %v2166, 0
      %v2173 = vsel %vm658, %v2168, 0
      %2175 = vmatpush.bf16.xpose.msra.mxu0 0
      %2176 = vmatpush.bf16.xpose.msra.mxu0 0
      %2177 = vmatpush.bf16.xpose.msra.mxu0 0
      %2178 = vmatpush.bf16.xpose.msra.mxu0 0
      %2179 = vmatpush.bf16.xpose.msra.mxu0 0
      %2180 = vmatpush.bf16.xpose.msra.mxu0 0
      %2181 = vmatpush.bf16.xpose.msra.mxu0 0
      %2182 = vmatpush.bf16.xpose.msra.mxu0 %v2173
      %2183 = vmatmul.bf16.gmra.mxu0 %v2170
      %v2184 = vpop.f32.mrf.mxu0
      %v2185 = vadd.f32 %v611, %v2184
      %v2186 = vpop.f32.mrf.mxu0
      %v2187 = vadd.f32 %v611, %v2186
      %2188 = vdwg.mxu0
      %v2189 = vsel %vm679, %v2185, -inf
      %2190 = vmax.xlane.f32.xlu0 %v2189
      %v2191 = vpop.xlane.xlu0 %2190
      %v2192 = vsel %vm679, %v2187, -inf
      %2193 = vmax.xlane.f32.xlu0 %v2192
      %v2194 = vpop.xlane.xlu0 %2193
      %v2195 = vsub.f32 %v2185, %v2191
      %v2196 = vsub.f32 %v2187, %v2194
      %v2197 = vmul.f32 %v2195, 1.442695
      %v2198 = vpow.pop %v2197
      %v2199 = vmul.f32 %v2196, 1.442695
      %v2200 = vpow.pop %v2199
      %v2201 = vsel %vm679, %v2198, 0.0
      %2202 = vadd.xlane.f32.xlu0 %v2201
      %v2203 = vpop.xlane.xlu0 %2202
      %v2204 = vsel %vm679, %v2200, 0.0
      %2205 = vadd.xlane.f32.xlu0 %v2204
      %v2206 = vpop.xlane.xlu0 %2205
      %v2207 = vrcp.pop %v2203
      %v2208 = vrcp.pop %v2206
      %v2209 = vmul.f32 %v2198, %v2207
      %v2210 = vmul.f32 %v2200, %v2208
      %v2211 = vpack.c.bf16 %v2209, %v2209
      %v2212 = vpack.c.bf16 %v2210, %v2210
      %v2215 = vunpack.c.l.b16 %v2211
      %v2216 = vunpack.c.l.b16 %v2212
      %v2217 = vpack.c.b16 %v2216, %v2215
      %2218 = vrot.lane.b32.xlu0 %v1641, 36
      %v2219 = vpop.permute.xlu0 %2218
      %v2222 = vsel %vm679, %v2217, 0
      %2224 = vmatpush.bf16.msra.mxu0 0
      %2225 = vmatpush.bf16.msra.mxu0 0
      %2226 = vmatpush.bf16.msra.mxu0 0
      %2227 = vmatpush.bf16.msra.mxu0 0
      %2228 = vmatpush.bf16.msra.mxu0 0
      %2229 = vmatpush.bf16.msra.mxu0 0
      %2230 = vmatpush.bf16.msra.mxu0 0
      %2231 = vmatpush.bf16.msra.mxu0 %v2219
      %2232 = vmatmul.bf16.gmra.mxu0 %v2222
      %v2233 = vpop.f32.mrf.mxu0
      %v2234 = vadd.f32 0.0, %v2233
      %v2235 = vpop.f32.mrf.mxu0
      %v2236 = vadd.f32 0.0, %v2235
      %2237 = vdwg.mxu0
      %v2238 = vpack.c.bf16 %v2234, %v2234
      %v2239 = vpack.c.bf16 %v2236, %v2236
      %v2242 = vunpack.c.l.b16 %v1713
      %v2243 = vunpack.c.l.b16 %v1714
      %v2244 = vpack.c.b16 %v2243, %v2242
      %v2247 = vunpack.c.l.b16 %v1788
      %v2248 = vunpack.c.l.b16 %v1789
      %v2249 = vpack.c.b16 %v2248, %v2247
      %2250 = vrot.lane.b32.xlu0 %v2249, 4
      %v2251 = vpop.permute.xlu0 %2250
      %v2254 = vunpack.c.l.b16 %v1863
      %v2255 = vunpack.c.l.b16 %v1864
      %v2256 = vpack.c.b16 %v2255, %v2254
      %2257 = vrot.lane.b32.xlu0 %v2256, 8
      %v2258 = vpop.permute.xlu0 %2257
      %v2261 = vunpack.c.l.b16 %v1938
      %v2262 = vunpack.c.l.b16 %v1939
      %v2263 = vpack.c.b16 %v2262, %v2261
      %2264 = vrot.lane.b32.xlu0 %v2263, 12
      %v2265 = vpop.permute.xlu0 %2264
      %v2268 = vunpack.c.l.b16 %v2013
      %v2269 = vunpack.c.l.b16 %v2014
      %v2270 = vpack.c.b16 %v2269, %v2268
      %2271 = vrot.lane.b32.xlu0 %v2270, 16
      %v2272 = vpop.permute.xlu0 %2271
      %v2275 = vunpack.c.l.b16 %v2088
      %v2276 = vunpack.c.l.b16 %v2089
      %v2277 = vpack.c.b16 %v2276, %v2275
      %2278 = vrot.lane.b32.xlu0 %v2277, 20
      %v2279 = vpop.permute.xlu0 %2278
      %v2282 = vunpack.c.l.b16 %v2163
      %v2283 = vunpack.c.l.b16 %v2164
      %v2284 = vpack.c.b16 %v2283, %v2282
      %2285 = vrot.lane.b32.xlu0 %v2284, 24
      %v2286 = vpop.permute.xlu0 %2285
      %v2289 = vunpack.c.l.b16 %v2238
      %v2290 = vunpack.c.l.b16 %v2239
      %v2291 = vpack.c.b16 %v2290, %v2289
      %2292 = vrot.lane.b32.xlu0 %v2291, 28
      %v2293 = vpop.permute.xlu0 %2292
      %v2296 = vsel %vm658, %v2244, %v2251
      %v2298 = vsel %vm1313, %v2296, %v2258
      %v2300 = vsel %vm1316, %v2298, %v2265
      %v2302 = vsel %vm679, %v2300, %v2272
      %v2304 = vsel %vm1321, %v2302, %v2279
      %v2306 = vsel %vm1324, %v2304, %v2286
      %v2308 = vsel %vm1327, %v2306, %v2293
      %s2309 = scalar_lea.vmem %s5, 16
      %v2310 = vld [vmem:[%s2309] sm:$0xf]
      %v2311 = vld [vmem:[%s2309 + $0x4] sm:$0xf]
      %v2312 = vld [vmem:[%s2309 + $0x8] sm:$0xf]
      %v2313 = vld [vmem:[%s2309 + $0xc] sm:$0xf]
      %v2314 = vld [vmem:[%s6 + $0x1] sm:$0x1]
      %v2315 = vperm.slane %v2314, 0
      %v2320 = vunpack.c.l.b16 %v2310
      %v2321 = vunpack.c.l.b16 %v2311
      %v2322 = vunpack.c.l.b16 %v2312
      %v2323 = vunpack.c.l.b16 %v2313
      %v2324 = vpack.c.b16 %v2321, %v2320
      %v2325 = vpack.c.b16 %v2323, %v2322
      %v2328 = vsel %vm631, %v2308, 0
      %2330 = vmatpush.bf16.msra.mxu0 0
      %2331 = vmatpush.bf16.msra.mxu0 0
      %2332 = vmatpush.bf16.msra.mxu0 0
      %2333 = vmatpush.bf16.msra.mxu0 0
      %2334 = vmatpush.bf16.msra.mxu0 0
      %2335 = vmatpush.bf16.msra.mxu0 0
      %2336 = vmatpush.bf16.msra.mxu0 %v2325
      %2337 = vmatpush.bf16.msra.mxu0 %v2324
      %2338 = vmatmul.bf16.gmra.mxu0 %v2328
      %v2339 = vpop.f32.mrf.mxu0
      %v2340 = vadd.f32 %v2315, %v2339
      %v2341 = vpop.f32.mrf.mxu0
      %v2342 = vadd.f32 %v2315, %v2341
      %2343 = vdwg.mxu0
      %v2344 = vadd.f32 %v1596, %v2340
      %v2345 = vadd.f32 %v1597, %v2342
      %v2346 = vld [vmem:[%s7 + $0x1] sm:$0x1]
      %v2347 = vld [vmem:[%s8 + $0x1] sm:$0x1]
      %v2348 = vsel %vm631, %v2344, 0.0
      %2349 = vadd.xlane.f32.xlu0 %v2348
      %v2350 = vpop.xlane.xlu0 %2349
      %v2351 = vsel %vm631, %v2345, 0.0
      %2352 = vadd.xlane.f32.xlu0 %v2351
      %v2353 = vpop.xlane.xlu0 %2352
      %v2354 = vmul.f32 %v2350, %v1380
      %v2355 = vmul.f32 %v2353, %v1380
      %v2356 = vsub.f32 %v2344, %v2354
      %v2357 = vsub.f32 %v2345, %v2355
      %v2358 = vmul.f32 %v2356, %v2356
      %v2359 = vmul.f32 %v2357, %v2357
      %v2360 = vsel %vm631, %v2358, 0.0
      %2361 = vadd.xlane.f32.xlu0 %v2360
      %v2362 = vpop.xlane.xlu0 %2361
      %v2363 = vsel %vm631, %v2359, 0.0
      %2364 = vadd.xlane.f32.xlu0 %v2363
      %v2365 = vpop.xlane.xlu0 %2364
      %v2366 = vmul.f32 %v2362, %v1380
      %v2367 = vmul.f32 %v2365, %v1380
      %v2368 = vadd.f32 %v2366, 1e-05
      %v2369 = vadd.f32 %v2367, 1e-05
      %v2370 = vrsqrt.pop %v2368
      %v2371 = vmul.f32 %v2370, %v2368
      %v2372 = vmul.f32 %v2371, %v2370
      %v2373 = vmul.f32 0.5, %v2372
      %v2374 = vsub.f32 1.5, %v2373
      %v2375 = vmul.f32 %v2370, %v2374
      %vm2376 = vweird.f32 %v2368
      %vm2377 = vweird.f32 %v2370
      %vm2378 = vmor %vm2376, %vm2377
      %v2379 = vsel %vm2378, %v2370, %v2375
      %v2380 = vrsqrt.pop %v2369
      %v2381 = vmul.f32 %v2380, %v2369
      %v2382 = vmul.f32 %v2381, %v2380
      %v2383 = vmul.f32 0.5, %v2382
      %v2384 = vsub.f32 1.5, %v2383
      %v2385 = vmul.f32 %v2380, %v2384
      %vm2386 = vweird.f32 %v2369
      %vm2387 = vweird.f32 %v2380
      %vm2388 = vmor %vm2386, %vm2387
      %v2389 = vsel %vm2388, %v2380, %v2385
      %v2390 = vmul.f32 %v2356, %v2379
      %v2391 = vmul.f32 %v2357, %v2389
      %v2392 = vperm.slane %v2346, 0
      %v2393 = vmul.f32 %v2390, %v2392
      %v2394 = vmul.f32 %v2391, %v2392
      %v2395 = vperm.slane %v2347, 0
      %v2396 = vadd.f32 %v2393, %v2395
      %v2397 = vadd.f32 %v2394, %v2395
      %v2398 = vpack.c.bf16 %v2397, %v2396
      %s2399 = scalar_lea.vmem %s9, 16
      %v2400 = vld [vmem:[%s2399] sm:$0xf]
      %v2401 = vld [vmem:[%s2399 + $0x4] sm:$0xf]
      %v2402 = vld [vmem:[%s2399 + $0x8] sm:$0xf]
      %v2403 = vld [vmem:[%s2399 + $0xc] sm:$0xf]
      %v2404 = vld [vmem:[%s10 + $0x1] sm:$0x1]
      %v2405 = vperm.slane %v2404, 0
      %v2410 = vunpack.c.l.b16 %v2400
      %v2411 = vunpack.c.l.b16 %v2401
      %v2412 = vunpack.c.l.b16 %v2402
      %v2413 = vunpack.c.l.b16 %v2403
      %v2414 = vpack.c.b16 %v2411, %v2410
      %v2415 = vpack.c.b16 %v2413, %v2412
      %v2419 = vsel %vm631, %v2398, 0
      %2421 = vmatpush.bf16.msra.mxu0 0
      %2422 = vmatpush.bf16.msra.mxu0 0
      %2423 = vmatpush.bf16.msra.mxu0 0
      %2424 = vmatpush.bf16.msra.mxu0 0
      %2425 = vmatpush.bf16.msra.mxu0 0
      %2426 = vmatpush.bf16.msra.mxu0 0
      %2427 = vmatpush.bf16.msra.mxu0 %v2415
      %2428 = vmatpush.bf16.msra.mxu0 %v2414
      %2429 = vmatmul.bf16.gmra.mxu0 %v2419
      %v2430 = vpop.f32.mrf.mxu0
      %v2431 = vadd.f32 %v2405, %v2430
      %v2432 = vpop.f32.mrf.mxu0
      %v2433 = vadd.f32 %v2405, %v2432
      %2434 = vdwg.mxu0
      %v2435 = vmax.f32 %v2431, 0.0
      %v2436 = vmax.f32 %v2433, 0.0
      %v2437 = vpack.c.bf16 %v2436, %v2435
      %s2438 = scalar_lea.vmem %s11, 64
      %v2439 = vld [vmem:[%s2438] sm:$0xf]
      %v2440 = vld [vmem:[%s2438 + $0x4] sm:$0xf]
      %v2441 = vld [vmem:[%s2438 + $0x8] sm:$0xf]
      %v2442 = vld [vmem:[%s2438 + $0xc] sm:$0xf]
      %v2443 = vld [vmem:[%s2438 + $0x10] sm:$0xf]
      %v2444 = vld [vmem:[%s2438 + $0x14] sm:$0xf]
      %v2445 = vld [vmem:[%s2438 + $0x18] sm:$0xf]
      %v2446 = vld [vmem:[%s2438 + $0x1c] sm:$0xf]
      %v2447 = vld [vmem:[%s2438 + $0x20] sm:$0xf]
      %v2448 = vld [vmem:[%s2438 + $0x24] sm:$0xf]
      %v2449 = vld [vmem:[%s2438 + $0x28] sm:$0xf]
      %v2450 = vld [vmem:[%s2438 + $0x2c] sm:$0xf]
      %v2451 = vld [vmem:[%s2438 + $0x30] sm:$0xf]
      %v2452 = vld [vmem:[%s2438 + $0x34] sm:$0xf]
      %v2453 = vld [vmem:[%s2438 + $0x38] sm:$0xf]
      %v2454 = vld [vmem:[%s2438 + $0x3c] sm:$0xf]
      %v2455 = vld [vmem:[%s12 + $0x1] sm:$0x1]
      %v2456 = vperm.slane %v2455, 0
      %v2473 = vunpack.c.l.b16 %v2439
      %v2474 = vunpack.c.l.b16 %v2440
      %v2475 = vunpack.c.l.b16 %v2441
      %v2476 = vunpack.c.l.b16 %v2442
      %v2477 = vunpack.c.l.b16 %v2443
      %v2478 = vunpack.c.l.b16 %v2444
      %v2479 = vunpack.c.l.b16 %v2445
      %v2480 = vunpack.c.l.b16 %v2446
      %v2481 = vunpack.c.l.b16 %v2447
      %v2482 = vunpack.c.l.b16 %v2448
      %v2483 = vunpack.c.l.b16 %v2449
      %v2484 = vunpack.c.l.b16 %v2450
      %v2485 = vunpack.c.l.b16 %v2451
      %v2486 = vunpack.c.l.b16 %v2452
      %v2487 = vunpack.c.l.b16 %v2453
      %v2488 = vunpack.c.l.b16 %v2454
      %v2489 = vpack.c.b16 %v2474, %v2473
      %v2490 = vpack.c.b16 %v2476, %v2475
      %v2491 = vpack.c.b16 %v2478, %v2477
      %v2492 = vpack.c.b16 %v2480, %v2479
      %v2493 = vpack.c.b16 %v2482, %v2481
      %v2494 = vpack.c.b16 %v2484, %v2483
      %v2495 = vpack.c.b16 %v2486, %v2485
      %v2496 = vpack.c.b16 %v2488, %v2487
      %2505 = vmatpush.bf16.msra.mxu0 %v2496
      %2506 = vmatpush.bf16.msra.mxu0 %v2495
      %2507 = vmatpush.bf16.msra.mxu0 %v2494
      %2508 = vmatpush.bf16.msra.mxu0 %v2493
      %2509 = vmatpush.bf16.msra.mxu0 %v2492
      %2510 = vmatpush.bf16.msra.mxu0 %v2491
      %2511 = vmatpush.bf16.msra.mxu0 %v2490
      %2512 = vmatpush.bf16.msra.mxu0 %v2489
      %2513 = vmatmul.bf16.gmra.mxu0 %v2437
      %v2514 = vpop.f32.mrf.mxu0
      %v2515 = vpop.f32.mrf.mxu0
      %v2516 = vadd.f32 %v2456, %v2515
      %2517 = vdwg.mxu0
      %v2518 = vadd.f32 %v2397, %v2516
      %v2519 = vld [vmem:[%s13 + $0x1] sm:$0x1]
      %v2520 = vld [vmem:[%s14 + $0x1] sm:$0x1]
      %v2521 = vsel %vm631, %v2518, 0.0
      %2522 = vadd.xlane.f32.xlu0 %v2521
      %v2523 = vpop.xlane.xlu0 %2522
      %v2524 = vmul.f32 %v2523, %v1380
      %v2525 = vsub.f32 %v2518, %v2524
      %v2526 = vmul.f32 %v2525, %v2525
      %v2527 = vsel %vm631, %v2526, 0.0
      %2528 = vadd.xlane.f32.xlu0 %v2527
      %v2529 = vpop.xlane.xlu0 %2528
      %v2530 = vmul.f32 %v2529, %v1380
      %v2531 = vadd.f32 %v2530, 1e-05
      %v2532 = vrsqrt.pop %v2531
      %v2533 = vmul.f32 %v2532, %v2531
      %v2534 = vmul.f32 %v2533, %v2532
      %v2535 = vmul.f32 0.5, %v2534
      %v2536 = vsub.f32 1.5, %v2535
      %v2537 = vmul.f32 %v2532, %v2536
      %vm2538 = vweird.f32 %v2531
      %vm2539 = vweird.f32 %v2532
      %vm2540 = vmor %vm2538, %vm2539
      %v2541 = vsel %vm2540, %v2532, %v2537
      %v2542 = vmul.f32 %v2525, %v2541
      %v2543 = vperm.slane %v2519, 0
      %v2544 = vmul.f32 %v2542, %v2543
      %v2545 = vperm.slane %v2520, 0
      %v2546 = vadd.f32 %v2544, %v2545
      %v2547 = vpack.c.bf16 %v2546, %v2546
      %v2548 = vld [vmem:[%s15] sm:$0xf]
      %v2549 = vld [vmem:[%s15 + $0x4] sm:$0xf]
      %v2550 = vld [vmem:[%s15 + $0x8] sm:$0xf]
      %v2551 = vld [vmem:[%s15 + $0xc] sm:$0xf]
      %v2552 = vld [vmem:[%s16] sm:$0x1]
      %v2557 = vunpack.c.l.b16 %v2548
      %v2558 = vunpack.c.l.b16 %v2549
      %v2559 = vunpack.c.l.b16 %v2550
      %v2560 = vunpack.c.l.b16 %v2551
      %v2561 = vpack.c.b16 %v2558, %v2557
      %v2562 = vpack.c.b16 %v2560, %v2559
      %v2566 = vsel %vm631, %v2547, 0
      %2568 = vmatpush.bf16.msra.mxu0 0
      %2569 = vmatpush.bf16.msra.mxu0 0
      %2570 = vmatpush.bf16.msra.mxu0 0
      %2571 = vmatpush.bf16.msra.mxu0 0
      %2572 = vmatpush.bf16.msra.mxu0 0
      %2573 = vmatpush.bf16.msra.mxu0 0
      %2574 = vmatpush.bf16.msra.mxu0 %v2562
      %2575 = vmatpush.bf16.msra.mxu0 %v2561
      %2576 = vmatmul.bf16.gmra.mxu0 %v2566
      %v2577 = vpop.f32.mrf.mxu0
      %v2578 = vadd.f32 %v2552, %v2577
      %v2579 = vpop.f32.mrf.mxu0
      %2580 = vdwg.mxu0
      %v2581 = vmax.f32 %v2578, 0.0
      %v2582 = vld [vmem:[%s17] sm:$0x1]
      %v2583 = vmul.f32 %v2581, %v2582
      %vm2584 = vcmask 253952
      %v2585 = vsel %vm2584, %v2583, 0.0
      %2586 = vadd.xlane.f32.xlu0 %v2585
      %v2587 = vpop.xlane.xlu0 %2586
      %v2588 = vld [vmem:[#allocation2] sm:$0x1]
      %v2589 = vadd.f32 %v2587, %v2588
      %v2590 = vxor.u32 %v2589, 2147483648
      %v2591 = vmul.f32 %v2590, 1.442695
      %v2592 = vpow.pop %v2591
      %v2593 = vadd.f32 %v2592, 1.0
      %v2594 = vrcp.pop %v2593
      %v2595 = vmul.f32 %v2593, %v2594
      %v2596 = vsub.f32 1.0, %v2595
      %v2597 = vmul.f32 %v2594, %v2596
      %v2598 = vadd.f32 %v2594, %v2597
      %vm2599 = vweird.f32 %v2593
      %vm2600 = vweird.f32 %v2594
      %vm2601 = vmor %vm2599, %vm2600
      %v2602 = vsel %vm2601, %v2594, %v2598
      %v2603 = vand.u32 2147483647, %v2593
      %vm2604 = vcmp.eq.f32.partialorder %v2603, 8.507059e+37
      %v2605 = vand.u32 %v2593, 2147483648
      %v2606 = vor.u32 1.1754944e-38, %v2605
      %v2607 = vsel %vm2604, %v2606, %v2602
      %v2608 = vmul.f32 1.0, %v2607
      %vm2609 = vcmask 0
      %2610 = vst.msk [vmem:[%s597] sm:$0x1] %vm2609, %v2608
      %p2611 = scmp.lt.s32.totalorder %s32, 1
      %s2612 = scalar_select %p2611, %s32, 1
      %s2613 = scalar_lea.vmem %s19, %s2612
      // Predicated region
      $region97: #{tpu_custom_call.1} parent=95 // pred_check
        %p2614 = pneg %p454
      $region98: #{tpu_custom_call.1} parent=95 // pred_check_branch
        %2616 = sbr.rel (%p2614) target = $region100
      $region99: #{tpu_custom_call.1} parent=95 // pred_region
        _
      $region100: #{tpu_custom_call.1} parent=95 // pred_fallthru
        _
    $region96: #{tpu_custom_call.1} parent=5 // pred_fallthru
      _
    %p2617 = scmp.le.s32.totalorder 2, %s27
    // Predicated region
    $region101: #{tpu_custom_call.1} parent=5 // pred_check
      %p2618 = pneg %p2617
    $region102: #{tpu_custom_call.1} parent=5 // pred_check_branch
      %2620 = sbr.rel (%p2618) target = $region104
    $region103: #{tpu_custom_call.1} parent=5 // pred_region
      %s2621 = ssub.s32 %s27, 2
      // Predicated region
      $region105: #{tpu_custom_call.1} parent=103 // pred_check
        %p2622 = pneg %p460
      $region106: #{tpu_custom_call.1} parent=103 // pred_check_branch
        %2624 = sbr.rel (%p2622) target = $region108
      $region107: #{tpu_custom_call.1} parent=103 // pred_region
        %p2625 = scmp.lt.s32.totalorder %s33, 1
        %s2626 = scalar_select %p2625, %s33, 1
        %s2627 = scalar_lea.vmem %s19, %s2626
      $region108: #{tpu_custom_call.1} parent=103 // pred_fallthru
        _
    $region104: #{tpu_custom_call.1} parent=5 // pred_fallthru
      _
  $region6: #{tpu_custom_call.1} parent=0 // loop_footer
    %s31 = sadd.s32 1, %s27
  $region7: #{tpu_custom_call.1} parent=0 // loop_footer_branch
    %26 = sbr.rel target = $region3
  $region8: #{tpu_custom_call.1} parent=0 // loop_exit
    _

</llo_original>
